<compile_context>
chip_gen: v6e
topology: v6e:2x2x1
jax: 0.10.0
libtpu: 0.0.40
codegen_flags: <defaults>
</compile_context>

<pallas_src>
import jax
import jax.numpy as jnp
from jax.experimental import pallas as pl
from jax.experimental.pallas import tpu as pltpu

IMG_SIZE = 16
NUM_CLASSES = 2
C_IN, C1, C2 = 3, 8, 16
FC1_OUT = 32


# --------------------------------------------------------------------------
# Fused Pallas kernel: whole forward pass, everything resident in VMEM.
# --------------------------------------------------------------------------
def _fused_cnn_kernel(x_ref, w1_ref, b1_ref, w2_ref, b2_ref,
                      fw1_ref, fb1_ref, fw2_ref, fb2_ref,
                      o_ref,
                      xpad_ref, p1pad_ref, flat_ref):
    N = x_ref.shape[0]
    H = W = IMG_SIZE            # 16
    H2 = W2 = H // 2            # 8
    H4 = W4 = H // 4            # 4
    f32 = jnp.float32

    def conv3x3_relu(pad_ref, w_ref, b_ref, hh, ww, cin, cout):
        """3x3 SAME conv + bias + ReLU: 9 tap-wise MXU matmuls over static
        shifted views of the zero-padded VMEM scratch (in-kernel im2col)."""
        acc = jnp.zeros((N * hh * ww, cout), f32)
        for kh in range(3):
            for kw in range(3):
                tap = pad_ref[:, kh:kh + hh, kw:kw + ww, :]
                tap = tap.reshape(N * hh * ww, cin)
                wblk = w_ref[(kh * 3 + kw) * cin:(kh * 3 + kw + 1) * cin, :]
                acc = acc + jnp.dot(tap, wblk, preferred_element_type=f32)
        return jnp.maximum(acc + b_ref[...], 0.0)             # (N*hh*ww, cout)

    # ---------------- conv1 (3x3, pad 1) + ReLU -----------------------------
    xpad_ref[...] = jnp.zeros_like(xpad_ref)
    xpad_ref[:, 1:1 + H, 1:1 + W, :] = x_ref[...]
    y1 = conv3x3_relu(xpad_ref, w1_ref, b1_ref, H, W, C_IN, C1)   # (512, 8)

    # ---------------- pool1 (2x2 max) -> zero-padded conv2 input ------------
    # Row pairs: split a major axis (layout no-op) and take one max.
    y1 = y1.reshape(N, H2, 2, W, C1)                              # (N,8,2,16,8)
    y1h = jnp.maximum(y1[:, :, 0, :, :], y1[:, :, 1, :, :])       # (N,8,16,8)
    p1pad_ref[...] = jnp.zeros_like(p1pad_ref)
    for w in range(W2):  # column pairs -> straight into the padded conv2 input
        p1pad_ref[:, 1:1 + H2, 1 + w:2 + w, :] = jnp.maximum(
            y1h[:, :, 2 * w:2 * w + 1, :], y1h[:, :, 2 * w + 1:2 * w + 2, :])

    # ---------------- conv2 (3x3, pad 1) + ReLU -----------------------------
    y2 = conv3x3_relu(p1pad_ref, w2_ref, b2_ref, H2, W2, C1, C2)  # (128, 16)

    # ---------------- pool2 (2x2 max) fused with flatten ---------------------
    y2 = y2.reshape(N, H4, 2, W2, C2)                             # (N,4,2,8,16)
    y2h = jnp.maximum(y2[:, :, 0, :, :], y2[:, :, 1, :, :])       # (N,4,8,16)
    # Flatten in (h, w, c) order; fc1 weight rows were pre-permuted to match.
    for h in range(H4):
        for w in range(W4):
            m = jnp.maximum(y2h[:, h:h + 1, 2 * w:2 * w + 1, :],
                            y2h[:, h:h + 1, 2 * w + 1:2 * w + 2, :])  # (N,1,1,16)
            off = (h * W4 + w) * C2
            flat_ref[:, off:off + C2] = m.reshape(N, C2)

    # ---------------- fc1 + ReLU, fc2 ----------------------------------------
    z = jnp.dot(flat_ref[...], fw1_ref[...], preferred_element_type=f32)
    z = jnp.maximum(z + fb1_ref[...], 0.0)                        # (N, 32)
    logits = jnp.dot(z, fw2_ref[...], preferred_element_type=f32)
    o_ref[...] = (logits + fb2_ref[...]).astype(o_ref.dtype)      # (N, 2)


# --------------------------------------------------------------------------
# Wrapper: single pallas_call, whole arrays in VMEM, scratch for intermediates
# --------------------------------------------------------------------------
def simple_cnn_forward(params, x_nchw):
    # x_nchw: (N, 3, IMG_SIZE, IMG_SIZE) float32
    x = jnp.transpose(x_nchw, (0, 2, 3, 1))                       # NCHW -> NHWC
    # TODO(synk): the NCHW->NHWC input transpose stays in XLA; doing it in-kernel
    # would require a lane<->sublane relayout for negligible gain at this size.
    N = x.shape[0]
    H4 = IMG_SIZE // 4

    w1 = params["conv1_w"].reshape(9 * C_IN, C1)                  # (27, 8)
    b1 = params["conv1_b"].reshape(1, C1)
    w2 = params["conv2_w"].reshape(9 * C1, C2)                    # (72, 16)
    b2 = params["conv2_b"].reshape(1, C2)
    # fc1 rows are in PyTorch (c, h, w) flatten order; permute once to the
    # kernel's (h, w, c) order.
    fw1 = (params["fc1_w"]
           .reshape(C2, H4, H4, FC1_OUT)
           .transpose(1, 2, 0, 3)
           .reshape(C2 * H4 * H4, FC1_OUT))                       # (256, 32)
    fb1 = params["fc1_b"].reshape(1, FC1_OUT)
    fw2 = params["fc2_w"]                                         # (32, 2)
    fb2 = params["fc2_b"].reshape(1, NUM_CLASSES)

    vmem_spec = lambda: pl.BlockSpec(memory_space=pltpu.MemorySpace.VMEM)
    return pl.pallas_call(
        _fused_cnn_kernel,
        out_shape=jax.ShapeDtypeStruct((N, NUM_CLASSES), jnp.float32),
        in_specs=[vmem_spec() for _ in range(9)],
        out_specs=vmem_spec(),
        scratch_shapes=[
            pltpu.VMEM((N, IMG_SIZE + 2, IMG_SIZE + 2, C_IN), jnp.float32),
            pltpu.VMEM((N, IMG_SIZE // 2 + 2, IMG_SIZE // 2 + 2, C1), jnp.float32),
            pltpu.VMEM((N, C2 * H4 * H4), jnp.float32),
        ],
    )(x, w1, b1, w2, b2, fw1, fb1, fw2, fb2)


# --------------------------------------------------------------------------
# Params + pure-JAX reference (for correctness check)
# --------------------------------------------------------------------------
def init_params(key):
    ks = jax.random.split(key, 8)
    return {
        "conv1_w": 0.1 * jax.random.normal(ks[0], (3, 3, C_IN, C1), jnp.float32),
        "conv1_b": 0.1 * jax.random.normal(ks[1], (C1,), jnp.float32),
        "conv2_w": 0.1 * jax.random.normal(ks[2], (3, 3, C1, C2), jnp.float32),
        "conv2_b": 0.1 * jax.random.normal(ks[3], (C2,), jnp.float32),
        "fc1_w": 0.05 * jax.random.normal(
            ks[4], (C2 * (IMG_SIZE // 4) * (IMG_SIZE // 4), FC1_OUT), jnp.float32),
        "fc1_b": 0.05 * jax.random.normal(ks[5], (FC1_OUT,), jnp.float32),
        "fc2_w": 0.05 * jax.random.normal(ks[6], (FC1_OUT, NUM_CLASSES), jnp.float32),
        "fc2_b": 0.05 * jax.random.normal(ks[7], (NUM_CLASSES,), jnp.float32),
    }


def _reference_forward(params, x_nchw):
    hi = jax.lax.Precision.HIGHEST
    x = jnp.transpose(x_nchw, (0, 2, 3, 1))

    def conv(x, w, b):
        y = jax.lax.conv_general_dilated(
            x, w, window_strides=(1, 1), padding="SAME",
            dimension_numbers=("NHWC", "HWIO", "NHWC"), precision=hi)
        return jax.nn.relu(y + b)

    def pool(x):
        return jax.lax.reduce_window(x, -jnp.inf, jax.lax.max,
                                     (1, 2, 2, 1), (1, 2, 2, 1), "VALID")

    x = pool(conv(x, params["conv1_w"], params["conv1_b"]))
    x = pool(conv(x, params["conv2_w"], params["conv2_b"]))
    N = x.shape[0]
    x = jnp.transpose(x, (0, 3, 1, 2)).reshape(N, -1)             # (C,H,W) flatten
    x = jax.nn.relu(jnp.dot(x, params["fc1_w"], precision=hi) + params["fc1_b"])
    return jnp.dot(x, params["fc2_w"], precision=hi) + params["fc2_b"]


if __name__ == "__main__":
    key = jax.random.PRNGKey(0)
    k_param, k_input = jax.random.split(key)
    params = init_params(k_param)
    x = jax.random.normal(k_input, (2, C_IN, IMG_SIZE, IMG_SIZE), jnp.float32)

    fwd = jax.jit(simple_cnn_forward)
    out = jax.block_until_ready(fwd(params, x))

    assert out.shape == (2, NUM_CLASSES), out.shape
    assert out.dtype == jnp.float32

    ref = jax.block_until_ready(jax.jit(_reference_forward)(params, x))
    assert jnp.allclose(out, ref, rtol=1e-3, atol=1e-3), (out, ref)

    print("KERNEL_OK")
</pallas_src>

<mosaic_0001>
module attributes {stable_mosaic.version = 11 : i64} {
  func.func @_fused_cnn_kernel(%arg0: memref<2x16x16x3xf32, #tpu.memory_space<vmem>>, %arg1: memref<27x8xf32, #tpu.memory_space<vmem>>, %arg2: memref<1x8xf32, #tpu.memory_space<vmem>>, %arg3: memref<72x16xf32, #tpu.memory_space<vmem>>, %arg4: memref<1x16xf32, #tpu.memory_space<vmem>>, %arg5: memref<256x32xf32, #tpu.memory_space<vmem>>, %arg6: memref<1x32xf32, #tpu.memory_space<vmem>>, %arg7: memref<32x2xf32, #tpu.memory_space<vmem>>, %arg8: memref<1x2xf32, #tpu.memory_space<vmem>>, %arg9: memref<2x2xf32, #tpu.memory_space<vmem>>, %arg10: memref<2x18x18x3xf32, #tpu.memory_space<vmem>>, %arg11: memref<2x10x10x8xf32, #tpu.memory_space<vmem>>, %arg12: memref<2x256xf32, #tpu.memory_space<vmem>>) attributes {dimension_semantics = [], scalar_prefetch = 0 : i64, scratch_operands = 3 : i64, tpu.core_type = #tpu.core_type<tc>} {
    %cst = arith.constant 0.000000e+00 : f32
    %0 = vector.broadcast %cst : f32 to vector<2x18x18x3xf32>
    %c0 = arith.constant 0 : index
    %c0_0 = arith.constant 0 : index
    %c0_1 = arith.constant 0 : index
    %c0_2 = arith.constant 0 : index
    %1 = vector.load %arg10[%c0, %c0_0, %c0_1, %c0_2] : memref<2x18x18x3xf32, #tpu.memory_space<vmem>>, vector<2x18x18x3xf32>
    tpu.vector_store %arg10[%c0, %c0_0, %c0_1, %c0_2], %0 {strides = array<i32>} : memref<2x18x18x3xf32, #tpu.memory_space<vmem>>, vector<2x18x18x3xf32>,
    %c0_3 = arith.constant 0 : index
    %c0_4 = arith.constant 0 : index
    %c0_5 = arith.constant 0 : index
    %c0_6 = arith.constant 0 : index
    %2 = vector.load %arg0[%c0_3, %c0_4, %c0_5, %c0_6] : memref<2x16x16x3xf32, #tpu.memory_space<vmem>>, vector<2x16x16x3xf32>
    %c0_7 = arith.constant 0 : index
    %c1 = arith.constant 1 : index
    %c1_8 = arith.constant 1 : index
    %c0_9 = arith.constant 0 : index
    %3 = vector.load %arg10[%c0_7, %c1, %c1_8, %c0_9] : memref<2x18x18x3xf32, #tpu.memory_space<vmem>>, vector<2x16x16x3xf32>
    tpu.vector_store %arg10[%c0_7, %c1, %c1_8, %c0_9], %2 {strides = array<i32>} : memref<2x18x18x3xf32, #tpu.memory_space<vmem>>, vector<2x16x16x3xf32>,
    %cst_10 = arith.constant 0.000000e+00 : f32
    %4 = vector.broadcast %cst_10 : f32 to vector<512x8xf32>
    %c0_11 = arith.constant 0 : index
    %c0_12 = arith.constant 0 : index
    %c0_13 = arith.constant 0 : index
    %c0_14 = arith.constant 0 : index
    %5 = vector.load %arg10[%c0_11, %c0_12, %c0_13, %c0_14] : memref<2x18x18x3xf32, #tpu.memory_space<vmem>>, vector<2x16x16x3xf32>
    %6 = vector.shape_cast %5 : vector<2x16x16x3xf32> to vector<512x3xf32>
    %c0_15 = arith.constant 0 : index
    %c0_16 = arith.constant 0 : index
    %7 = vector.load %arg1[%c0_15, %c0_16] : memref<27x8xf32, #tpu.memory_space<vmem>>, vector<3x8xf32>
    %cst_17 = arith.constant dense<0.000000e+00> : vector<512x8xf32>
    %8 = tpu.matmul %6, %7, %cst_17 {dimension_numbers = #tpu.dot_dimension_numbers<[1], [0], [0], [1], [0, 0, 1, 1], [], []>} : vector<512x3xf32>, vector<3x8xf32>, vector<512x8xf32> -> vector<512x8xf32>
    %9 = arith.addf %4, %8 : vector<512x8xf32>
    %c0_18 = arith.constant 0 : index
    %c0_19 = arith.constant 0 : index
    %c1_20 = arith.constant 1 : index
    %c0_21 = arith.constant 0 : index
    %10 = vector.load %arg10[%c0_18, %c0_19, %c1_20, %c0_21] : memref<2x18x18x3xf32, #tpu.memory_space<vmem>>, vector<2x16x16x3xf32>
    %11 = vector.shape_cast %10 : vector<2x16x16x3xf32> to vector<512x3xf32>
    %c3 = arith.constant 3 : index
    %c0_22 = arith.constant 0 : index
    %12 = vector.load %arg1[%c3, %c0_22] : memref<27x8xf32, #tpu.memory_space<vmem>>, vector<3x8xf32>
    %cst_23 = arith.constant dense<0.000000e+00> : vector<512x8xf32>
    %13 = tpu.matmul %11, %12, %cst_23 {dimension_numbers = #tpu.dot_dimension_numbers<[1], [0], [0], [1], [0, 0, 1, 1], [], []>} : vector<512x3xf32>, vector<3x8xf32>, vector<512x8xf32> -> vector<512x8xf32>
    %14 = arith.addf %9, %13 : vector<512x8xf32>
    %c0_24 = arith.constant 0 : index
    %c0_25 = arith.constant 0 : index
    %c2 = arith.constant 2 : index
    %c0_26 = arith.constant 0 : index
    %15 = vector.load %arg10[%c0_24, %c0_25, %c2, %c0_26] : memref<2x18x18x3xf32, #tpu.memory_space<vmem>>, vector<2x16x16x3xf32>
    %16 = vector.shape_cast %15 : vector<2x16x16x3xf32> to vector<512x3xf32>
    %c6 = arith.constant 6 : index
    %c0_27 = arith.constant 0 : index
    %17 = vector.load %arg1[%c6, %c0_27] : memref<27x8xf32, #tpu.memory_space<vmem>>, vector<3x8xf32>
    %cst_28 = arith.constant dense<0.000000e+00> : vector<512x8xf32>
    %18 = tpu.matmul %16, %17, %cst_28 {dimension_numbers = #tpu.dot_dimension_numbers<[1], [0], [0], [1], [0, 0, 1, 1], [], []>} : vector<512x3xf32>, vector<3x8xf32>, vector<512x8xf32> -> vector<512x8xf32>
    %19 = arith.addf %14, %18 : vector<512x8xf32>
    %c0_29 = arith.constant 0 : index
    %c1_30 = arith.constant 1 : index
    %c0_31 = arith.constant 0 : index
    %c0_32 = arith.constant 0 : index
    %20 = vector.load %arg10[%c0_29, %c1_30, %c0_31, %c0_32] : memref<2x18x18x3xf32, #tpu.memory_space<vmem>>, vector<2x16x16x3xf32>
    %21 = vector.shape_cast %20 : vector<2x16x16x3xf32> to vector<512x3xf32>
    %c9 = arith.constant 9 : index
    %c0_33 = arith.constant 0 : index
    %22 = vector.load %arg1[%c9, %c0_33] : memref<27x8xf32, #tpu.memory_space<vmem>>, vector<3x8xf32>
    %cst_34 = arith.constant dense<0.000000e+00> : vector<512x8xf32>
    %23 = tpu.matmul %21, %22, %cst_34 {dimension_numbers = #tpu.dot_dimension_numbers<[1], [0], [0], [1], [0, 0, 1, 1], [], []>} : vector<512x3xf32>, vector<3x8xf32>, vector<512x8xf32> -> vector<512x8xf32>
    %24 = arith.addf %19, %23 : vector<512x8xf32>
    %c0_35 = arith.constant 0 : index
    %c1_36 = arith.constant 1 : index
    %c1_37 = arith.constant 1 : index
    %c0_38 = arith.constant 0 : index
    %25 = vector.load %arg10[%c0_35, %c1_36, %c1_37, %c0_38] : memref<2x18x18x3xf32, #tpu.memory_space<vmem>>, vector<2x16x16x3xf32>
    %26 = vector.shape_cast %25 : vector<2x16x16x3xf32> to vector<512x3xf32>
    %c12 = arith.constant 12 : index
    %c0_39 = arith.constant 0 : index
    %27 = vector.load %arg1[%c12, %c0_39] : memref<27x8xf32, #tpu.memory_space<vmem>>, vector<3x8xf32>
    %cst_40 = arith.constant dense<0.000000e+00> : vector<512x8xf32>
    %28 = tpu.matmul %26, %27, %cst_40 {dimension_numbers = #tpu.dot_dimension_numbers<[1], [0], [0], [1], [0, 0, 1, 1], [], []>} : vector<512x3xf32>, vector<3x8xf32>, vector<512x8xf32> -> vector<512x8xf32>
    %29 = arith.addf %24, %28 : vector<512x8xf32>
    %c0_41 = arith.constant 0 : index
    %c1_42 = arith.constant 1 : index
    %c2_43 = arith.constant 2 : index
    %c0_44 = arith.constant 0 : index
    %30 = vector.load %arg10[%c0_41, %c1_42, %c2_43, %c0_44] : memref<2x18x18x3xf32, #tpu.memory_space<vmem>>, vector<2x16x16x3xf32>
    %31 = vector.shape_cast %30 : vector<2x16x16x3xf32> to vector<512x3xf32>
    %c15 = arith.constant 15 : index
    %c0_45 = arith.constant 0 : index
    %32 = vector.load %arg1[%c15, %c0_45] : memref<27x8xf32, #tpu.memory_space<vmem>>, vector<3x8xf32>
    %cst_46 = arith.constant dense<0.000000e+00> : vector<512x8xf32>
    %33 = tpu.matmul %31, %32, %cst_46 {dimension_numbers = #tpu.dot_dimension_numbers<[1], [0], [0], [1], [0, 0, 1, 1], [], []>} : vector<512x3xf32>, vector<3x8xf32>, vector<512x8xf32> -> vector<512x8xf32>
    %34 = arith.addf %29, %33 : vector<512x8xf32>
    %c0_47 = arith.constant 0 : index
    %c2_48 = arith.constant 2 : index
    %c0_49 = arith.constant 0 : index
    %c0_50 = arith.constant 0 : index
    %35 = vector.load %arg10[%c0_47, %c2_48, %c0_49, %c0_50] : memref<2x18x18x3xf32, #tpu.memory_space<vmem>>, vector<2x16x16x3xf32>
    %36 = vector.shape_cast %35 : vector<2x16x16x3xf32> to vector<512x3xf32>
    %c18 = arith.constant 18 : index
    %c0_51 = arith.constant 0 : index
    %37 = vector.load %arg1[%c18, %c0_51] : memref<27x8xf32, #tpu.memory_space<vmem>>, vector<3x8xf32>
    %cst_52 = arith.constant dense<0.000000e+00> : vector<512x8xf32>
    %38 = tpu.matmul %36, %37, %cst_52 {dimension_numbers = #tpu.dot_dimension_numbers<[1], [0], [0], [1], [0, 0, 1, 1], [], []>} : vector<512x3xf32>, vector<3x8xf32>, vector<512x8xf32> -> vector<512x8xf32>
    %39 = arith.addf %34, %38 : vector<512x8xf32>
    %c0_53 = arith.constant 0 : index
    %c2_54 = arith.constant 2 : index
    %c1_55 = arith.constant 1 : index
    %c0_56 = arith.constant 0 : index
    %40 = vector.load %arg10[%c0_53, %c2_54, %c1_55, %c0_56] : memref<2x18x18x3xf32, #tpu.memory_space<vmem>>, vector<2x16x16x3xf32>
    %41 = vector.shape_cast %40 : vector<2x16x16x3xf32> to vector<512x3xf32>
    %c21 = arith.constant 21 : index
    %c0_57 = arith.constant 0 : index
    %42 = vector.load %arg1[%c21, %c0_57] : memref<27x8xf32, #tpu.memory_space<vmem>>, vector<3x8xf32>
    %cst_58 = arith.constant dense<0.000000e+00> : vector<512x8xf32>
    %43 = tpu.matmul %41, %42, %cst_58 {dimension_numbers = #tpu.dot_dimension_numbers<[1], [0], [0], [1], [0, 0, 1, 1], [], []>} : vector<512x3xf32>, vector<3x8xf32>, vector<512x8xf32> -> vector<512x8xf32>
    %44 = arith.addf %39, %43 : vector<512x8xf32>
    %c0_59 = arith.constant 0 : index
    %c2_60 = arith.constant 2 : index
    %c2_61 = arith.constant 2 : index
    %c0_62 = arith.constant 0 : index
    %45 = vector.load %arg10[%c0_59, %c2_60, %c2_61, %c0_62] : memref<2x18x18x3xf32, #tpu.memory_space<vmem>>, vector<2x16x16x3xf32>
    %46 = vector.shape_cast %45 : vector<2x16x16x3xf32> to vector<512x3xf32>
    %c24 = arith.constant 24 : index
    %c0_63 = arith.constant 0 : index
    %47 = vector.load %arg1[%c24, %c0_63] : memref<27x8xf32, #tpu.memory_space<vmem>>, vector<3x8xf32>
    %cst_64 = arith.constant dense<0.000000e+00> : vector<512x8xf32>
    %48 = tpu.matmul %46, %47, %cst_64 {dimension_numbers = #tpu.dot_dimension_numbers<[1], [0], [0], [1], [0, 0, 1, 1], [], []>} : vector<512x3xf32>, vector<3x8xf32>, vector<512x8xf32> -> vector<512x8xf32>
    %49 = arith.addf %44, %48 : vector<512x8xf32>
    %c0_65 = arith.constant 0 : index
    %c0_66 = arith.constant 0 : index
    %50 = vector.load %arg2[%c0_65, %c0_66] : memref<1x8xf32, #tpu.memory_space<vmem>>, vector<1x8xf32>
    %51 = vector.broadcast %50 : vector<1x8xf32> to vector<512x8xf32>
    %52 = arith.addf %49, %51 : vector<512x8xf32>
    %cst_67 = arith.constant 0.000000e+00 : f32
    %53 = vector.broadcast %cst_67 : f32 to vector<512x8xf32>
    %54 = arith.maximumf %52, %53 : vector<512x8xf32>
    %55 = vector.shape_cast %54 : vector<512x8xf32> to vector<2x8x2x16x8xf32>
    %56 = vector.extract_strided_slice %55 {offsets = [0, 0, 0, 0, 0], sizes = [2, 8, 1, 16, 8], strides = [1, 1, 1, 1, 1]} : vector<2x8x2x16x8xf32> to vector<2x8x1x16x8xf32>
    %57 = vector.shape_cast %56 : vector<2x8x1x16x8xf32> to vector<2x8x16x8xf32>
    %58 = vector.extract_strided_slice %55 {offsets = [0, 0, 1, 0, 0], sizes = [2, 8, 1, 16, 8], strides = [1, 1, 1, 1, 1]} : vector<2x8x2x16x8xf32> to vector<2x8x1x16x8xf32>
    %59 = vector.shape_cast %58 : vector<2x8x1x16x8xf32> to vector<2x8x16x8xf32>
    %60 = arith.maximumf %57, %59 : vector<2x8x16x8xf32>
    %cst_68 = arith.constant 0.000000e+00 : f32
    %61 = vector.broadcast %cst_68 : f32 to vector<2x10x10x8xf32>
    %c0_69 = arith.constant 0 : index
    %c0_70 = arith.constant 0 : index
    %c0_71 = arith.constant 0 : index
    %c0_72 = arith.constant 0 : index
    %62 = vector.load %arg11[%c0_69, %c0_70, %c0_71, %c0_72] : memref<2x10x10x8xf32, #tpu.memory_space<vmem>>, vector<2x10x10x8xf32>
    tpu.vector_store %arg11[%c0_69, %c0_70, %c0_71, %c0_72], %61 {strides = array<i32>} : memref<2x10x10x8xf32, #tpu.memory_space<vmem>>, vector<2x10x10x8xf32>,
    %63 = vector.extract_strided_slice %60 {offsets = [0, 0, 0, 0], sizes = [2, 8, 1, 8], strides = [1, 1, 1, 1]} : vector<2x8x16x8xf32> to vector<2x8x1x8xf32>
    %64 = vector.extract_strided_slice %60 {offsets = [0, 0, 1, 0], sizes = [2, 8, 1, 8], strides = [1, 1, 1, 1]} : vector<2x8x16x8xf32> to vector<2x8x1x8xf32>
    %65 = arith.maximumf %63, %64 : vector<2x8x1x8xf32>
    %c0_73 = arith.constant 0 : index
    %c1_74 = arith.constant 1 : index
    %c1_75 = arith.constant 1 : index
    %c0_76 = arith.constant 0 : index
    %66 = vector.load %arg11[%c0_73, %c1_74, %c1_75, %c0_76] : memref<2x10x10x8xf32, #tpu.memory_space<vmem>>, vector<2x8x1x8xf32>
    tpu.vector_store %arg11[%c0_73, %c1_74, %c1_75, %c0_76], %65 {strides = array<i32>} : memref<2x10x10x8xf32, #tpu.memory_space<vmem>>, vector<2x8x1x8xf32>,
    %67 = vector.extract_strided_slice %60 {offsets = [0, 0, 2, 0], sizes = [2, 8, 1, 8], strides = [1, 1, 1, 1]} : vector<2x8x16x8xf32> to vector<2x8x1x8xf32>
    %68 = vector.extract_strided_slice %60 {offsets = [0, 0, 3, 0], sizes = [2, 8, 1, 8], strides = [1, 1, 1, 1]} : vector<2x8x16x8xf32> to vector<2x8x1x8xf32>
    %69 = arith.maximumf %67, %68 : vector<2x8x1x8xf32>
    %c0_77 = arith.constant 0 : index
    %c1_78 = arith.constant 1 : index
    %c2_79 = arith.constant 2 : index
    %c0_80 = arith.constant 0 : index
    %70 = vector.load %arg11[%c0_77, %c1_78, %c2_79, %c0_80] : memref<2x10x10x8xf32, #tpu.memory_space<vmem>>, vector<2x8x1x8xf32>
    tpu.vector_store %arg11[%c0_77, %c1_78, %c2_79, %c0_80], %69 {strides = array<i32>} : memref<2x10x10x8xf32, #tpu.memory_space<vmem>>, vector<2x8x1x8xf32>,
    %71 = vector.extract_strided_slice %60 {offsets = [0, 0, 4, 0], sizes = [2, 8, 1, 8], strides = [1, 1, 1, 1]} : vector<2x8x16x8xf32> to vector<2x8x1x8xf32>
    %72 = vector.extract_strided_slice %60 {offsets = [0, 0, 5, 0], sizes = [2, 8, 1, 8], strides = [1, 1, 1, 1]} : vector<2x8x16x8xf32> to vector<2x8x1x8xf32>
    %73 = arith.maximumf %71, %72 : vector<2x8x1x8xf32>
    %c0_81 = arith.constant 0 : index
    %c1_82 = arith.constant 1 : index
    %c3_83 = arith.constant 3 : index
    %c0_84 = arith.constant 0 : index
    %74 = vector.load %arg11[%c0_81, %c1_82, %c3_83, %c0_84] : memref<2x10x10x8xf32, #tpu.memory_space<vmem>>, vector<2x8x1x8xf32>
    tpu.vector_store %arg11[%c0_81, %c1_82, %c3_83, %c0_84], %73 {strides = array<i32>} : memref<2x10x10x8xf32, #tpu.memory_space<vmem>>, vector<2x8x1x8xf32>,
    %75 = vector.extract_strided_slice %60 {offsets = [0, 0, 6, 0], sizes = [2, 8, 1, 8], strides = [1, 1, 1, 1]} : vector<2x8x16x8xf32> to vector<2x8x1x8xf32>
    %76 = vector.extract_strided_slice %60 {offsets = [0, 0, 7, 0], sizes = [2, 8, 1, 8], strides = [1, 1, 1, 1]} : vector<2x8x16x8xf32> to vector<2x8x1x8xf32>
    %77 = arith.maximumf %75, %76 : vector<2x8x1x8xf32>
    %c0_85 = arith.constant 0 : index
    %c1_86 = arith.constant 1 : index
    %c4 = arith.constant 4 : index
    %c0_87 = arith.constant 0 : index
    %78 = vector.load %arg11[%c0_85, %c1_86, %c4, %c0_87] : memref<2x10x10x8xf32, #tpu.memory_space<vmem>>, vector<2x8x1x8xf32>
    tpu.vector_store %arg11[%c0_85, %c1_86, %c4, %c0_87], %77 {strides = array<i32>} : memref<2x10x10x8xf32, #tpu.memory_space<vmem>>, vector<2x8x1x8xf32>,
    %79 = vector.extract_strided_slice %60 {offsets = [0, 0, 8, 0], sizes = [2, 8, 1, 8], strides = [1, 1, 1, 1]} : vector<2x8x16x8xf32> to vector<2x8x1x8xf32>
    %80 = vector.extract_strided_slice %60 {offsets = [0, 0, 9, 0], sizes = [2, 8, 1, 8], strides = [1, 1, 1, 1]} : vector<2x8x16x8xf32> to vector<2x8x1x8xf32>
    %81 = arith.maximumf %79, %80 : vector<2x8x1x8xf32>
    %c0_88 = arith.constant 0 : index
    %c1_89 = arith.constant 1 : index
    %c5 = arith.constant 5 : index
    %c0_90 = arith.constant 0 : index
    %82 = vector.load %arg11[%c0_88, %c1_89, %c5, %c0_90] : memref<2x10x10x8xf32, #tpu.memory_space<vmem>>, vector<2x8x1x8xf32>
    tpu.vector_store %arg11[%c0_88, %c1_89, %c5, %c0_90], %81 {strides = array<i32>} : memref<2x10x10x8xf32, #tpu.memory_space<vmem>>, vector<2x8x1x8xf32>,
    %83 = vector.extract_strided_slice %60 {offsets = [0, 0, 10, 0], sizes = [2, 8, 1, 8], strides = [1, 1, 1, 1]} : vector<2x8x16x8xf32> to vector<2x8x1x8xf32>
    %84 = vector.extract_strided_slice %60 {offsets = [0, 0, 11, 0], sizes = [2, 8, 1, 8], strides = [1, 1, 1, 1]} : vector<2x8x16x8xf32> to vector<2x8x1x8xf32>
    %85 = arith.maximumf %83, %84 : vector<2x8x1x8xf32>
    %c0_91 = arith.constant 0 : index
    %c1_92 = arith.constant 1 : index
    %c6_93 = arith.constant 6 : index
    %c0_94 = arith.constant 0 : index
    %86 = vector.load %arg11[%c0_91, %c1_92, %c6_93, %c0_94] : memref<2x10x10x8xf32, #tpu.memory_space<vmem>>, vector<2x8x1x8xf32>
    tpu.vector_store %arg11[%c0_91, %c1_92, %c6_93, %c0_94], %85 {strides = array<i32>} : memref<2x10x10x8xf32, #tpu.memory_space<vmem>>, vector<2x8x1x8xf32>,
    %87 = vector.extract_strided_slice %60 {offsets = [0, 0, 12, 0], sizes = [2, 8, 1, 8], strides = [1, 1, 1, 1]} : vector<2x8x16x8xf32> to vector<2x8x1x8xf32>
    %88 = vector.extract_strided_slice %60 {offsets = [0, 0, 13, 0], sizes = [2, 8, 1, 8], strides = [1, 1, 1, 1]} : vector<2x8x16x8xf32> to vector<2x8x1x8xf32>
    %89 = arith.maximumf %87, %88 : vector<2x8x1x8xf32>
    %c0_95 = arith.constant 0 : index
    %c1_96 = arith.constant 1 : index
    %c7 = arith.constant 7 : index
    %c0_97 = arith.constant 0 : index
    %90 = vector.load %arg11[%c0_95, %c1_96, %c7, %c0_97] : memref<2x10x10x8xf32, #tpu.memory_space<vmem>>, vector<2x8x1x8xf32>
    tpu.vector_store %arg11[%c0_95, %c1_96, %c7, %c0_97], %89 {strides = array<i32>} : memref<2x10x10x8xf32, #tpu.memory_space<vmem>>, vector<2x8x1x8xf32>,
    %91 = vector.extract_strided_slice %60 {offsets = [0, 0, 14, 0], sizes = [2, 8, 1, 8], strides = [1, 1, 1, 1]} : vector<2x8x16x8xf32> to vector<2x8x1x8xf32>
    %92 = vector.extract_strided_slice %60 {offsets = [0, 0, 15, 0], sizes = [2, 8, 1, 8], strides = [1, 1, 1, 1]} : vector<2x8x16x8xf32> to vector<2x8x1x8xf32>
    %93 = arith.maximumf %91, %92 : vector<2x8x1x8xf32>
    %c0_98 = arith.constant 0 : index
    %c1_99 = arith.constant 1 : index
    %c8 = arith.constant 8 : index
    %c0_100 = arith.constant 0 : index
    %94 = vector.load %arg11[%c0_98, %c1_99, %c8, %c0_100] : memref<2x10x10x8xf32, #tpu.memory_space<vmem>>, vector<2x8x1x8xf32>
    tpu.vector_store %arg11[%c0_98, %c1_99, %c8, %c0_100], %93 {strides = array<i32>} : memref<2x10x10x8xf32, #tpu.memory_space<vmem>>, vector<2x8x1x8xf32>,
    %cst_101 = arith.constant 0.000000e+00 : f32
    %95 = vector.broadcast %cst_101 : f32 to vector<128x16xf32>
    %c0_102 = arith.constant 0 : index
    %c0_103 = arith.constant 0 : index
    %c0_104 = arith.constant 0 : index
    %c0_105 = arith.constant 0 : index
    %96 = vector.load %arg11[%c0_102, %c0_103, %c0_104, %c0_105] : memref<2x10x10x8xf32, #tpu.memory_space<vmem>>, vector<2x8x8x8xf32>
    %97 = vector.shape_cast %96 : vector<2x8x8x8xf32> to vector<128x8xf32>
    %c0_106 = arith.constant 0 : index
    %c0_107 = arith.constant 0 : index
    %98 = vector.load %arg3[%c0_106, %c0_107] : memref<72x16xf32, #tpu.memory_space<vmem>>, vector<8x16xf32>
    %cst_108 = arith.constant dense<0.000000e+00> : vector<128x16xf32>
    %99 = tpu.matmul %97, %98, %cst_108 {dimension_numbers = #tpu.dot_dimension_numbers<[1], [0], [0], [1], [0, 0, 1, 1], [], []>} : vector<128x8xf32>, vector<8x16xf32>, vector<128x16xf32> -> vector<128x16xf32>
    %100 = arith.addf %95, %99 : vector<128x16xf32>
    %c0_109 = arith.constant 0 : index
    %c0_110 = arith.constant 0 : index
    %c1_111 = arith.constant 1 : index
    %c0_112 = arith.constant 0 : index
    %101 = vector.load %arg11[%c0_109, %c0_110, %c1_111, %c0_112] : memref<2x10x10x8xf32, #tpu.memory_space<vmem>>, vector<2x8x8x8xf32>
    %102 = vector.shape_cast %101 : vector<2x8x8x8xf32> to vector<128x8xf32>
    %c8_113 = arith.constant 8 : index
    %c0_114 = arith.constant 0 : index
    %103 = vector.load %arg3[%c8_113, %c0_114] : memref<72x16xf32, #tpu.memory_space<vmem>>, vector<8x16xf32>
    %cst_115 = arith.constant dense<0.000000e+00> : vector<128x16xf32>
    %104 = tpu.matmul %102, %103, %cst_115 {dimension_numbers = #tpu.dot_dimension_numbers<[1], [0], [0], [1], [0, 0, 1, 1], [], []>} : vector<128x8xf32>, vector<8x16xf32>, vector<128x16xf32> -> vector<128x16xf32>
    %105 = arith.addf %100, %104 : vector<128x16xf32>
    %c0_116 = arith.constant 0 : index
    %c0_117 = arith.constant 0 : index
    %c2_118 = arith.constant 2 : index
    %c0_119 = arith.constant 0 : index
    %106 = vector.load %arg11[%c0_116, %c0_117, %c2_118, %c0_119] : memref<2x10x10x8xf32, #tpu.memory_space<vmem>>, vector<2x8x8x8xf32>
    %107 = vector.shape_cast %106 : vector<2x8x8x8xf32> to vector<128x8xf32>
    %c16 = arith.constant 16 : index
    %c0_120 = arith.constant 0 : index
    %108 = vector.load %arg3[%c16, %c0_120] : memref<72x16xf32, #tpu.memory_space<vmem>>, vector<8x16xf32>
    %cst_121 = arith.constant dense<0.000000e+00> : vector<128x16xf32>
    %109 = tpu.matmul %107, %108, %cst_121 {dimension_numbers = #tpu.dot_dimension_numbers<[1], [0], [0], [1], [0, 0, 1, 1], [], []>} : vector<128x8xf32>, vector<8x16xf32>, vector<128x16xf32> -> vector<128x16xf32>
    %110 = arith.addf %105, %109 : vector<128x16xf32>
    %c0_122 = arith.constant 0 : index
    %c1_123 = arith.constant 1 : index
    %c0_124 = arith.constant 0 : index
    %c0_125 = arith.constant 0 : index
    %111 = vector.load %arg11[%c0_122, %c1_123, %c0_124, %c0_125] : memref<2x10x10x8xf32, #tpu.memory_space<vmem>>, vector<2x8x8x8xf32>
    %112 = vector.shape_cast %111 : vector<2x8x8x8xf32> to vector<128x8xf32>
    %c24_126 = arith.constant 24 : index
    %c0_127 = arith.constant 0 : index
    %113 = vector.load %arg3[%c24_126, %c0_127] : memref<72x16xf32, #tpu.memory_space<vmem>>, vector<8x16xf32>
    %cst_128 = arith.constant dense<0.000000e+00> : vector<128x16xf32>
    %114 = tpu.matmul %112, %113, %cst_128 {dimension_numbers = #tpu.dot_dimension_numbers<[1], [0], [0], [1], [0, 0, 1, 1], [], []>} : vector<128x8xf32>, vector<8x16xf32>, vector<128x16xf32> -> vector<128x16xf32>
    %115 = arith.addf %110, %114 : vector<128x16xf32>
    %c0_129 = arith.constant 0 : index
    %c1_130 = arith.constant 1 : index
    %c1_131 = arith.constant 1 : index
    %c0_132 = arith.constant 0 : index
    %116 = vector.load %arg11[%c0_129, %c1_130, %c1_131, %c0_132] : memref<2x10x10x8xf32, #tpu.memory_space<vmem>>, vector<2x8x8x8xf32>
    %117 = vector.shape_cast %116 : vector<2x8x8x8xf32> to vector<128x8xf32>
    %c32 = arith.constant 32 : index
    %c0_133 = arith.constant 0 : index
    %118 = vector.load %arg3[%c32, %c0_133] : memref<72x16xf32, #tpu.memory_space<vmem>>, vector<8x16xf32>
    %cst_134 = arith.constant dense<0.000000e+00> : vector<128x16xf32>
    %119 = tpu.matmul %117, %118, %cst_134 {dimension_numbers = #tpu.dot_dimension_numbers<[1], [0], [0], [1], [0, 0, 1, 1], [], []>} : vector<128x8xf32>, vector<8x16xf32>, vector<128x16xf32> -> vector<128x16xf32>
    %120 = arith.addf %115, %119 : vector<128x16xf32>
    %c0_135 = arith.constant 0 : index
    %c1_136 = arith.constant 1 : index
    %c2_137 = arith.constant 2 : index
    %c0_138 = arith.constant 0 : index
    %121 = vector.load %arg11[%c0_135, %c1_136, %c2_137, %c0_138] : memref<2x10x10x8xf32, #tpu.memory_space<vmem>>, vector<2x8x8x8xf32>
    %122 = vector.shape_cast %121 : vector<2x8x8x8xf32> to vector<128x8xf32>
    %c40 = arith.constant 40 : index
    %c0_139 = arith.constant 0 : index
    %123 = vector.load %arg3[%c40, %c0_139] : memref<72x16xf32, #tpu.memory_space<vmem>>, vector<8x16xf32>
    %cst_140 = arith.constant dense<0.000000e+00> : vector<128x16xf32>
    %124 = tpu.matmul %122, %123, %cst_140 {dimension_numbers = #tpu.dot_dimension_numbers<[1], [0], [0], [1], [0, 0, 1, 1], [], []>} : vector<128x8xf32>, vector<8x16xf32>, vector<128x16xf32> -> vector<128x16xf32>
    %125 = arith.addf %120, %124 : vector<128x16xf32>
    %c0_141 = arith.constant 0 : index
    %c2_142 = arith.constant 2 : index
    %c0_143 = arith.constant 0 : index
    %c0_144 = arith.constant 0 : index
    %126 = vector.load %arg11[%c0_141, %c2_142, %c0_143, %c0_144] : memref<2x10x10x8xf32, #tpu.memory_space<vmem>>, vector<2x8x8x8xf32>
    %127 = vector.shape_cast %126 : vector<2x8x8x8xf32> to vector<128x8xf32>
    %c48 = arith.constant 48 : index
    %c0_145 = arith.constant 0 : index
    %128 = vector.load %arg3[%c48, %c0_145] : memref<72x16xf32, #tpu.memory_space<vmem>>, vector<8x16xf32>
    %cst_146 = arith.constant dense<0.000000e+00> : vector<128x16xf32>
    %129 = tpu.matmul %127, %128, %cst_146 {dimension_numbers = #tpu.dot_dimension_numbers<[1], [0], [0], [1], [0, 0, 1, 1], [], []>} : vector<128x8xf32>, vector<8x16xf32>, vector<128x16xf32> -> vector<128x16xf32>
    %130 = arith.addf %125, %129 : vector<128x16xf32>
    %c0_147 = arith.constant 0 : index
    %c2_148 = arith.constant 2 : index
    %c1_149 = arith.constant 1 : index
    %c0_150 = arith.constant 0 : index
    %131 = vector.load %arg11[%c0_147, %c2_148, %c1_149, %c0_150] : memref<2x10x10x8xf32, #tpu.memory_space<vmem>>, vector<2x8x8x8xf32>
    %132 = vector.shape_cast %131 : vector<2x8x8x8xf32> to vector<128x8xf32>
    %c56 = arith.constant 56 : index
    %c0_151 = arith.constant 0 : index
    %133 = vector.load %arg3[%c56, %c0_151] : memref<72x16xf32, #tpu.memory_space<vmem>>, vector<8x16xf32>
    %cst_152 = arith.constant dense<0.000000e+00> : vector<128x16xf32>
    %134 = tpu.matmul %132, %133, %cst_152 {dimension_numbers = #tpu.dot_dimension_numbers<[1], [0], [0], [1], [0, 0, 1, 1], [], []>} : vector<128x8xf32>, vector<8x16xf32>, vector<128x16xf32> -> vector<128x16xf32>
    %135 = arith.addf %130, %134 : vector<128x16xf32>
    %c0_153 = arith.constant 0 : index
    %c2_154 = arith.constant 2 : index
    %c2_155 = arith.constant 2 : index
    %c0_156 = arith.constant 0 : index
    %136 = vector.load %arg11[%c0_153, %c2_154, %c2_155, %c0_156] : memref<2x10x10x8xf32, #tpu.memory_space<vmem>>, vector<2x8x8x8xf32>
    %137 = vector.shape_cast %136 : vector<2x8x8x8xf32> to vector<128x8xf32>
    %c64 = arith.constant 64 : index
    %c0_157 = arith.constant 0 : index
    %138 = vector.load %arg3[%c64, %c0_157] : memref<72x16xf32, #tpu.memory_space<vmem>>, vector<8x16xf32>
    %cst_158 = arith.constant dense<0.000000e+00> : vector<128x16xf32>
    %139 = tpu.matmul %137, %138, %cst_158 {dimension_numbers = #tpu.dot_dimension_numbers<[1], [0], [0], [1], [0, 0, 1, 1], [], []>} : vector<128x8xf32>, vector<8x16xf32>, vector<128x16xf32> -> vector<128x16xf32>
    %140 = arith.addf %135, %139 : vector<128x16xf32>
    %c0_159 = arith.constant 0 : index
    %c0_160 = arith.constant 0 : index
    %141 = vector.load %arg4[%c0_159, %c0_160] : memref<1x16xf32, #tpu.memory_space<vmem>>, vector<1x16xf32>
    %142 = vector.broadcast %141 : vector<1x16xf32> to vector<128x16xf32>
    %143 = arith.addf %140, %142 : vector<128x16xf32>
    %cst_161 = arith.constant 0.000000e+00 : f32
    %144 = vector.broadcast %cst_161 : f32 to vector<128x16xf32>
    %145 = arith.maximumf %143, %144 : vector<128x16xf32>
    %146 = vector.shape_cast %145 : vector<128x16xf32> to vector<2x4x2x8x16xf32>
    %147 = vector.extract_strided_slice %146 {offsets = [0, 0, 0, 0, 0], sizes = [2, 4, 1, 8, 16], strides = [1, 1, 1, 1, 1]} : vector<2x4x2x8x16xf32> to vector<2x4x1x8x16xf32>
    %148 = vector.shape_cast %147 : vector<2x4x1x8x16xf32> to vector<2x4x8x16xf32>
    %149 = vector.extract_strided_slice %146 {offsets = [0, 0, 1, 0, 0], sizes = [2, 4, 1, 8, 16], strides = [1, 1, 1, 1, 1]} : vector<2x4x2x8x16xf32> to vector<2x4x1x8x16xf32>
    %150 = vector.shape_cast %149 : vector<2x4x1x8x16xf32> to vector<2x4x8x16xf32>
    %151 = arith.maximumf %148, %150 : vector<2x4x8x16xf32>
    %152 = vector.extract_strided_slice %151 {offsets = [0, 0, 0, 0], sizes = [2, 1, 1, 16], strides = [1, 1, 1, 1]} : vector<2x4x8x16xf32> to vector<2x1x1x16xf32>
    %153 = vector.extract_strided_slice %151 {offsets = [0, 0, 1, 0], sizes = [2, 1, 1, 16], strides = [1, 1, 1, 1]} : vector<2x4x8x16xf32> to vector<2x1x1x16xf32>
    %154 = arith.maximumf %152, %153 : vector<2x1x1x16xf32>
    %155 = vector.shape_cast %154 : vector<2x1x1x16xf32> to vector<2x16xf32>
    %c0_162 = arith.constant 0 : index
    %c0_163 = arith.constant 0 : index
    %156 = vector.load %arg12[%c0_162, %c0_163] : memref<2x256xf32, #tpu.memory_space<vmem>>, vector<2x16xf32>
    tpu.vector_store %arg12[%c0_162, %c0_163], %155 {strides = array<i32>} : memref<2x256xf32, #tpu.memory_space<vmem>>, vector<2x16xf32>,
    %157 = vector.extract_strided_slice %151 {offsets = [0, 0, 2, 0], sizes = [2, 1, 1, 16], strides = [1, 1, 1, 1]} : vector<2x4x8x16xf32> to vector<2x1x1x16xf32>
    %158 = vector.extract_strided_slice %151 {offsets = [0, 0, 3, 0], sizes = [2, 1, 1, 16], strides = [1, 1, 1, 1]} : vector<2x4x8x16xf32> to vector<2x1x1x16xf32>
    %159 = arith.maximumf %157, %158 : vector<2x1x1x16xf32>
    %160 = vector.shape_cast %159 : vector<2x1x1x16xf32> to vector<2x16xf32>
    %c0_164 = arith.constant 0 : index
    %c16_165 = arith.constant 16 : index
    %161 = vector.load %arg12[%c0_164, %c16_165] : memref<2x256xf32, #tpu.memory_space<vmem>>, vector<2x16xf32>
    tpu.vector_store %arg12[%c0_164, %c16_165], %160 {strides = array<i32>} : memref<2x256xf32, #tpu.memory_space<vmem>>, vector<2x16xf32>,
    %162 = vector.extract_strided_slice %151 {offsets = [0, 0, 4, 0], sizes = [2, 1, 1, 16], strides = [1, 1, 1, 1]} : vector<2x4x8x16xf32> to vector<2x1x1x16xf32>
    %163 = vector.extract_strided_slice %151 {offsets = [0, 0, 5, 0], sizes = [2, 1, 1, 16], strides = [1, 1, 1, 1]} : vector<2x4x8x16xf32> to vector<2x1x1x16xf32>
    %164 = arith.maximumf %162, %163 : vector<2x1x1x16xf32>
    %165 = vector.shape_cast %164 : vector<2x1x1x16xf32> to vector<2x16xf32>
    %c0_166 = arith.constant 0 : index
    %c32_167 = arith.constant 32 : index
    %166 = vector.load %arg12[%c0_166, %c32_167] : memref<2x256xf32, #tpu.memory_space<vmem>>, vector<2x16xf32>
    tpu.vector_store %arg12[%c0_166, %c32_167], %165 {strides = array<i32>} : memref<2x256xf32, #tpu.memory_space<vmem>>, vector<2x16xf32>,
    %167 = vector.extract_strided_slice %151 {offsets = [0, 0, 6, 0], sizes = [2, 1, 1, 16], strides = [1, 1, 1, 1]} : vector<2x4x8x16xf32> to vector<2x1x1x16xf32>
    %168 = vector.extract_strided_slice %151 {offsets = [0, 0, 7, 0], sizes = [2, 1, 1, 16], strides = [1, 1, 1, 1]} : vector<2x4x8x16xf32> to vector<2x1x1x16xf32>
    %169 = arith.maximumf %167, %168 : vector<2x1x1x16xf32>
    %170 = vector.shape_cast %169 : vector<2x1x1x16xf32> to vector<2x16xf32>
    %c0_168 = arith.constant 0 : index
    %c48_169 = arith.constant 48 : index
    %171 = vector.load %arg12[%c0_168, %c48_169] : memref<2x256xf32, #tpu.memory_space<vmem>>, vector<2x16xf32>
    tpu.vector_store %arg12[%c0_168, %c48_169], %170 {strides = array<i32>} : memref<2x256xf32, #tpu.memory_space<vmem>>, vector<2x16xf32>,
    %172 = vector.extract_strided_slice %151 {offsets = [0, 1, 0, 0], sizes = [2, 1, 1, 16], strides = [1, 1, 1, 1]} : vector<2x4x8x16xf32> to vector<2x1x1x16xf32>
    %173 = vector.extract_strided_slice %151 {offsets = [0, 1, 1, 0], sizes = [2, 1, 1, 16], strides = [1, 1, 1, 1]} : vector<2x4x8x16xf32> to vector<2x1x1x16xf32>
    %174 = arith.maximumf %172, %173 : vector<2x1x1x16xf32>
    %175 = vector.shape_cast %174 : vector<2x1x1x16xf32> to vector<2x16xf32>
    %c0_170 = arith.constant 0 : index
    %c64_171 = arith.constant 64 : index
    %176 = vector.load %arg12[%c0_170, %c64_171] : memref<2x256xf32, #tpu.memory_space<vmem>>, vector<2x16xf32>
    tpu.vector_store %arg12[%c0_170, %c64_171], %175 {strides = array<i32>} : memref<2x256xf32, #tpu.memory_space<vmem>>, vector<2x16xf32>,
    %177 = vector.extract_strided_slice %151 {offsets = [0, 1, 2, 0], sizes = [2, 1, 1, 16], strides = [1, 1, 1, 1]} : vector<2x4x8x16xf32> to vector<2x1x1x16xf32>
    %178 = vector.extract_strided_slice %151 {offsets = [0, 1, 3, 0], sizes = [2, 1, 1, 16], strides = [1, 1, 1, 1]} : vector<2x4x8x16xf32> to vector<2x1x1x16xf32>
    %179 = arith.maximumf %177, %178 : vector<2x1x1x16xf32>
    %180 = vector.shape_cast %179 : vector<2x1x1x16xf32> to vector<2x16xf32>
    %c0_172 = arith.constant 0 : index
    %c80 = arith.constant 80 : index
    %181 = vector.load %arg12[%c0_172, %c80] : memref<2x256xf32, #tpu.memory_space<vmem>>, vector<2x16xf32>
    tpu.vector_store %arg12[%c0_172, %c80], %180 {strides = array<i32>} : memref<2x256xf32, #tpu.memory_space<vmem>>, vector<2x16xf32>,
    %182 = vector.extract_strided_slice %151 {offsets = [0, 1, 4, 0], sizes = [2, 1, 1, 16], strides = [1, 1, 1, 1]} : vector<2x4x8x16xf32> to vector<2x1x1x16xf32>
    %183 = vector.extract_strided_slice %151 {offsets = [0, 1, 5, 0], sizes = [2, 1, 1, 16], strides = [1, 1, 1, 1]} : vector<2x4x8x16xf32> to vector<2x1x1x16xf32>
    %184 = arith.maximumf %182, %183 : vector<2x1x1x16xf32>
    %185 = vector.shape_cast %184 : vector<2x1x1x16xf32> to vector<2x16xf32>
    %c0_173 = arith.constant 0 : index
    %c96 = arith.constant 96 : index
    %186 = vector.load %arg12[%c0_173, %c96] : memref<2x256xf32, #tpu.memory_space<vmem>>, vector<2x16xf32>
    tpu.vector_store %arg12[%c0_173, %c96], %185 {strides = array<i32>} : memref<2x256xf32, #tpu.memory_space<vmem>>, vector<2x16xf32>,
    %187 = vector.extract_strided_slice %151 {offsets = [0, 1, 6, 0], sizes = [2, 1, 1, 16], strides = [1, 1, 1, 1]} : vector<2x4x8x16xf32> to vector<2x1x1x16xf32>
    %188 = vector.extract_strided_slice %151 {offsets = [0, 1, 7, 0], sizes = [2, 1, 1, 16], strides = [1, 1, 1, 1]} : vector<2x4x8x16xf32> to vector<2x1x1x16xf32>
    %189 = arith.maximumf %187, %188 : vector<2x1x1x16xf32>
    %190 = vector.shape_cast %189 : vector<2x1x1x16xf32> to vector<2x16xf32>
    %c0_174 = arith.constant 0 : index
    %c112 = arith.constant 112 : index
    %191 = vector.load %arg12[%c0_174, %c112] : memref<2x256xf32, #tpu.memory_space<vmem>>, vector<2x16xf32>
    tpu.vector_store %arg12[%c0_174, %c112], %190 {strides = array<i32>} : memref<2x256xf32, #tpu.memory_space<vmem>>, vector<2x16xf32>,
    %192 = vector.extract_strided_slice %151 {offsets = [0, 2, 0, 0], sizes = [2, 1, 1, 16], strides = [1, 1, 1, 1]} : vector<2x4x8x16xf32> to vector<2x1x1x16xf32>
    %193 = vector.extract_strided_slice %151 {offsets = [0, 2, 1, 0], sizes = [2, 1, 1, 16], strides = [1, 1, 1, 1]} : vector<2x4x8x16xf32> to vector<2x1x1x16xf32>
    %194 = arith.maximumf %192, %193 : vector<2x1x1x16xf32>
    %195 = vector.shape_cast %194 : vector<2x1x1x16xf32> to vector<2x16xf32>
    %c0_175 = arith.constant 0 : index
    %c128 = arith.constant 128 : index
    %196 = vector.load %arg12[%c0_175, %c128] : memref<2x256xf32, #tpu.memory_space<vmem>>, vector<2x16xf32>
    tpu.vector_store %arg12[%c0_175, %c128], %195 {strides = array<i32>} : memref<2x256xf32, #tpu.memory_space<vmem>>, vector<2x16xf32>,
    %197 = vector.extract_strided_slice %151 {offsets = [0, 2, 2, 0], sizes = [2, 1, 1, 16], strides = [1, 1, 1, 1]} : vector<2x4x8x16xf32> to vector<2x1x1x16xf32>
    %198 = vector.extract_strided_slice %151 {offsets = [0, 2, 3, 0], sizes = [2, 1, 1, 16], strides = [1, 1, 1, 1]} : vector<2x4x8x16xf32> to vector<2x1x1x16xf32>
    %199 = arith.maximumf %197, %198 : vector<2x1x1x16xf32>
    %200 = vector.shape_cast %199 : vector<2x1x1x16xf32> to vector<2x16xf32>
    %c0_176 = arith.constant 0 : index
    %c144 = arith.constant 144 : index
    %201 = vector.load %arg12[%c0_176, %c144] : memref<2x256xf32, #tpu.memory_space<vmem>>, vector<2x16xf32>
    tpu.vector_store %arg12[%c0_176, %c144], %200 {strides = array<i32>} : memref<2x256xf32, #tpu.memory_space<vmem>>, vector<2x16xf32>,
    %202 = vector.extract_strided_slice %151 {offsets = [0, 2, 4, 0], sizes = [2, 1, 1, 16], strides = [1, 1, 1, 1]} : vector<2x4x8x16xf32> to vector<2x1x1x16xf32>
    %203 = vector.extract_strided_slice %151 {offsets = [0, 2, 5, 0], sizes = [2, 1, 1, 16], strides = [1, 1, 1, 1]} : vector<2x4x8x16xf32> to vector<2x1x1x16xf32>
    %204 = arith.maximumf %202, %203 : vector<2x1x1x16xf32>
    %205 = vector.shape_cast %204 : vector<2x1x1x16xf32> to vector<2x16xf32>
    %c0_177 = arith.constant 0 : index
    %c160 = arith.constant 160 : index
    %206 = vector.load %arg12[%c0_177, %c160] : memref<2x256xf32, #tpu.memory_space<vmem>>, vector<2x16xf32>
    tpu.vector_store %arg12[%c0_177, %c160], %205 {strides = array<i32>} : memref<2x256xf32, #tpu.memory_space<vmem>>, vector<2x16xf32>,
    %207 = vector.extract_strided_slice %151 {offsets = [0, 2, 6, 0], sizes = [2, 1, 1, 16], strides = [1, 1, 1, 1]} : vector<2x4x8x16xf32> to vector<2x1x1x16xf32>
    %208 = vector.extract_strided_slice %151 {offsets = [0, 2, 7, 0], sizes = [2, 1, 1, 16], strides = [1, 1, 1, 1]} : vector<2x4x8x16xf32> to vector<2x1x1x16xf32>
    %209 = arith.maximumf %207, %208 : vector<2x1x1x16xf32>
    %210 = vector.shape_cast %209 : vector<2x1x1x16xf32> to vector<2x16xf32>
    %c0_178 = arith.constant 0 : index
    %c176 = arith.constant 176 : index
    %211 = vector.load %arg12[%c0_178, %c176] : memref<2x256xf32, #tpu.memory_space<vmem>>, vector<2x16xf32>
    tpu.vector_store %arg12[%c0_178, %c176], %210 {strides = array<i32>} : memref<2x256xf32, #tpu.memory_space<vmem>>, vector<2x16xf32>,
    %212 = vector.extract_strided_slice %151 {offsets = [0, 3, 0, 0], sizes = [2, 1, 1, 16], strides = [1, 1, 1, 1]} : vector<2x4x8x16xf32> to vector<2x1x1x16xf32>
    %213 = vector.extract_strided_slice %151 {offsets = [0, 3, 1, 0], sizes = [2, 1, 1, 16], strides = [1, 1, 1, 1]} : vector<2x4x8x16xf32> to vector<2x1x1x16xf32>
    %214 = arith.maximumf %212, %213 : vector<2x1x1x16xf32>
    %215 = vector.shape_cast %214 : vector<2x1x1x16xf32> to vector<2x16xf32>
    %c0_179 = arith.constant 0 : index
    %c192 = arith.constant 192 : index
    %216 = vector.load %arg12[%c0_179, %c192] : memref<2x256xf32, #tpu.memory_space<vmem>>, vector<2x16xf32>
    tpu.vector_store %arg12[%c0_179, %c192], %215 {strides = array<i32>} : memref<2x256xf32, #tpu.memory_space<vmem>>, vector<2x16xf32>,
    %217 = vector.extract_strided_slice %151 {offsets = [0, 3, 2, 0], sizes = [2, 1, 1, 16], strides = [1, 1, 1, 1]} : vector<2x4x8x16xf32> to vector<2x1x1x16xf32>
    %218 = vector.extract_strided_slice %151 {offsets = [0, 3, 3, 0], sizes = [2, 1, 1, 16], strides = [1, 1, 1, 1]} : vector<2x4x8x16xf32> to vector<2x1x1x16xf32>
    %219 = arith.maximumf %217, %218 : vector<2x1x1x16xf32>
    %220 = vector.shape_cast %219 : vector<2x1x1x16xf32> to vector<2x16xf32>
    %c0_180 = arith.constant 0 : index
    %c208 = arith.constant 208 : index
    %221 = vector.load %arg12[%c0_180, %c208] : memref<2x256xf32, #tpu.memory_space<vmem>>, vector<2x16xf32>
    tpu.vector_store %arg12[%c0_180, %c208], %220 {strides = array<i32>} : memref<2x256xf32, #tpu.memory_space<vmem>>, vector<2x16xf32>,
    %222 = vector.extract_strided_slice %151 {offsets = [0, 3, 4, 0], sizes = [2, 1, 1, 16], strides = [1, 1, 1, 1]} : vector<2x4x8x16xf32> to vector<2x1x1x16xf32>
    %223 = vector.extract_strided_slice %151 {offsets = [0, 3, 5, 0], sizes = [2, 1, 1, 16], strides = [1, 1, 1, 1]} : vector<2x4x8x16xf32> to vector<2x1x1x16xf32>
    %224 = arith.maximumf %222, %223 : vector<2x1x1x16xf32>
    %225 = vector.shape_cast %224 : vector<2x1x1x16xf32> to vector<2x16xf32>
    %c0_181 = arith.constant 0 : index
    %c224 = arith.constant 224 : index
    %226 = vector.load %arg12[%c0_181, %c224] : memref<2x256xf32, #tpu.memory_space<vmem>>, vector<2x16xf32>
    tpu.vector_store %arg12[%c0_181, %c224], %225 {strides = array<i32>} : memref<2x256xf32, #tpu.memory_space<vmem>>, vector<2x16xf32>,
    %227 = vector.extract_strided_slice %151 {offsets = [0, 3, 6, 0], sizes = [2, 1, 1, 16], strides = [1, 1, 1, 1]} : vector<2x4x8x16xf32> to vector<2x1x1x16xf32>
    %228 = vector.extract_strided_slice %151 {offsets = [0, 3, 7, 0], sizes = [2, 1, 1, 16], strides = [1, 1, 1, 1]} : vector<2x4x8x16xf32> to vector<2x1x1x16xf32>
    %229 = arith.maximumf %227, %228 : vector<2x1x1x16xf32>
    %230 = vector.shape_cast %229 : vector<2x1x1x16xf32> to vector<2x16xf32>
    %c0_182 = arith.constant 0 : index
    %c240 = arith.constant 240 : index
    %231 = vector.load %arg12[%c0_182, %c240] : memref<2x256xf32, #tpu.memory_space<vmem>>, vector<2x16xf32>
    tpu.vector_store %arg12[%c0_182, %c240], %230 {strides = array<i32>} : memref<2x256xf32, #tpu.memory_space<vmem>>, vector<2x16xf32>,
    %c0_183 = arith.constant 0 : index
    %c0_184 = arith.constant 0 : index
    %232 = vector.load %arg12[%c0_183, %c0_184] : memref<2x256xf32, #tpu.memory_space<vmem>>, vector<2x256xf32>
    %c0_185 = arith.constant 0 : index
    %c0_186 = arith.constant 0 : index
    %233 = vector.load %arg5[%c0_185, %c0_186] : memref<256x32xf32, #tpu.memory_space<vmem>>, vector<256x32xf32>
    %cst_187 = arith.constant dense<0.000000e+00> : vector<2x32xf32>
    %234 = tpu.matmul %232, %233, %cst_187 {dimension_numbers = #tpu.dot_dimension_numbers<[1], [0], [0], [1], [0, 0, 1, 1], [], []>} : vector<2x256xf32>, vector<256x32xf32>, vector<2x32xf32> -> vector<2x32xf32>
    %c0_188 = arith.constant 0 : index
    %c0_189 = arith.constant 0 : index
    %235 = vector.load %arg6[%c0_188, %c0_189] : memref<1x32xf32, #tpu.memory_space<vmem>>, vector<1x32xf32>
    %236 = vector.broadcast %235 : vector<1x32xf32> to vector<2x32xf32>
    %237 = arith.addf %234, %236 : vector<2x32xf32>
    %cst_190 = arith.constant 0.000000e+00 : f32
    %238 = vector.broadcast %cst_190 : f32 to vector<2x32xf32>
    %239 = arith.maximumf %237, %238 : vector<2x32xf32>
    %c0_191 = arith.constant 0 : index
    %c0_192 = arith.constant 0 : index
    %240 = vector.load %arg7[%c0_191, %c0_192] : memref<32x2xf32, #tpu.memory_space<vmem>>, vector<32x2xf32>
    %cst_193 = arith.constant dense<0.000000e+00> : vector<2x2xf32>
    %241 = tpu.matmul %239, %240, %cst_193 {dimension_numbers = #tpu.dot_dimension_numbers<[1], [0], [0], [1], [0, 0, 1, 1], [], []>} : vector<2x32xf32>, vector<32x2xf32>, vector<2x2xf32> -> vector<2x2xf32>
    %c0_194 = arith.constant 0 : index
    %c0_195 = arith.constant 0 : index
    %242 = vector.load %arg8[%c0_194, %c0_195] : memref<1x2xf32, #tpu.memory_space<vmem>>, vector<1x2xf32>
    %243 = vector.broadcast %242 : vector<1x2xf32> to vector<2x2xf32>
    %244 = arith.addf %241, %243 : vector<2x2xf32>
    %c0_196 = arith.constant 0 : index
    %c0_197 = arith.constant 0 : index
    %245 = vector.load %arg9[%c0_196, %c0_197] : memref<2x2xf32, #tpu.memory_space<vmem>>, vector<2x2xf32>
    tpu.vector_store %arg9[%c0_196, %c0_197], %244 {strides = array<i32>} : memref<2x2xf32, #tpu.memory_space<vmem>>, vector<2x2xf32>,
    return
  }
}

</mosaic_0001>

<llo_original>
// kernel: simple_cnn_forward.1
$region0: #{simple_cnn_forward.1}
  #allocation0 [shape = 'u32[]', space=smem, size = 0x4, offset = 0x4, fixed_abs, tag = 'smem constant byte address 0x4 - core index']
  #allocation1 [shape = 'u32[144,128]{1,0:T(1,128)}', space=vmem, size = 0x12000, scoped, tag = 'internal scratch']
  #allocation2 [shape = 'f32[2,18,18,3]{3,2,1,0:T(8,128)}', space=vmem, size = 0x6c000, scoped, tag = 'scratch operand']
  #allocation3 [shape = 'f32[2,10,10,8]{3,2,1,0:T(8,128)}', space=vmem, size = 0x28000, scoped, tag = 'scratch operand']
  #allocation4 [shape = 'f32[2,256]{1,0:T(2,128)}', space=vmem, size = 0x800, scoped, tag = 'scratch operand']
  %s0 = inlined_call_operand.vmem [shape: f32[2,16,16,3], index: 0, kind: input, shape index: {}]
  %s1 = inlined_call_operand.vmem [shape: f32[27,8], index: 1, kind: input, shape index: {}]
  %s2 = inlined_call_operand.vmem [shape: f32[1,8], index: 2, kind: input, shape index: {}]
  %s3 = inlined_call_operand.vmem [shape: f32[72,16], index: 3, kind: input, shape index: {}]
  %s4 = inlined_call_operand.vmem [shape: f32[1,16], index: 4, kind: input, shape index: {}]
  %s5 = inlined_call_operand.vmem [shape: f32[256,32], index: 5, kind: input, shape index: {}]
  %s6 = inlined_call_operand.vmem [shape: f32[1,32], index: 6, kind: input, shape index: {}]
  %s7 = inlined_call_operand.vmem [shape: f32[32,2], index: 7, kind: input, shape index: {}]
  %s8 = inlined_call_operand.vmem [shape: f32[1,2], index: 8, kind: input, shape index: {}]
  %s9 = inlined_call_operand.hbm [shape: f32[2,2], index: 9, kind: output, shape index: {}]
  %s10 = sld [smem:[#allocation0]]
  $region46: #{simple_cnn_forward.1} parent=0
    _
  %s12 = ssub.s32 1, %s10
  %s13 = scalar_select 0, %s12, %s10
  $region1: #{simple_cnn_forward.1} parent=0
    #allocation5 [shape = 'u8[1024]{0}', space=vmem, size = 0x400, scoped, tag = 'output window, operand 0, single buffered']
    #allocation6 [shape = 's32[1]{0}', space=sflag, size = 0x4, scoped, tag = 'scoped memory for simple_cnn_forward.1']
    %14 = vsyncpa [#allocation6], 0
    // Predicated region
    $region2: #{simple_cnn_forward.1} parent=1 // pred_check
      _
    $region3: #{simple_cnn_forward.1} parent=1 // pred_check_branch
      %16 = sbr.rel (0) target = $region5
    $region4: #{simple_cnn_forward.1} parent=1 // pred_region
      _
    $region5: #{simple_cnn_forward.1} parent=1 // pred_fallthru
      _
    // Predicated region
    $region6: #{simple_cnn_forward.1} parent=1 // pred_check
      _
    $region7: #{simple_cnn_forward.1} parent=1 // pred_check_branch
      %18 = sbr.rel (0) target = $region9
    $region8: #{simple_cnn_forward.1} parent=1 // pred_region
      _
    $region9: #{simple_cnn_forward.1} parent=1 // pred_fallthru
      _
    // Predicated region
    $region10: #{simple_cnn_forward.1} parent=1 // pred_check
      _
    $region11: #{simple_cnn_forward.1} parent=1 // pred_check_branch
      %20 = sbr.rel (0) target = $region13
    $region12: #{simple_cnn_forward.1} parent=1 // pred_region
      _
    $region13: #{simple_cnn_forward.1} parent=1 // pred_fallthru
      _
    // Predicated region
    $region14: #{simple_cnn_forward.1} parent=1 // pred_check
      _
    $region15: #{simple_cnn_forward.1} parent=1 // pred_check_branch
      %22 = sbr.rel (0) target = $region17
    $region16: #{simple_cnn_forward.1} parent=1 // pred_region
      _
    $region17: #{simple_cnn_forward.1} parent=1 // pred_fallthru
      _
    // Predicated region
    $region18: #{simple_cnn_forward.1} parent=1 // pred_check
      _
    $region19: #{simple_cnn_forward.1} parent=1 // pred_check_branch
      %24 = sbr.rel (0) target = $region21
    $region20: #{simple_cnn_forward.1} parent=1 // pred_region
      _
    $region21: #{simple_cnn_forward.1} parent=1 // pred_fallthru
      _
    // Predicated region
    $region22: #{simple_cnn_forward.1} parent=1 // pred_check
      _
    $region23: #{simple_cnn_forward.1} parent=1 // pred_check_branch
      %26 = sbr.rel (0) target = $region25
    $region24: #{simple_cnn_forward.1} parent=1 // pred_region
      _
    $region25: #{simple_cnn_forward.1} parent=1 // pred_fallthru
      _
    // Predicated region
    $region26: #{simple_cnn_forward.1} parent=1 // pred_check
      _
    $region27: #{simple_cnn_forward.1} parent=1 // pred_check_branch
      %28 = sbr.rel (0) target = $region29
    $region28: #{simple_cnn_forward.1} parent=1 // pred_region
      _
    $region29: #{simple_cnn_forward.1} parent=1 // pred_fallthru
      _
    // Predicated region
    $region30: #{simple_cnn_forward.1} parent=1 // pred_check
      _
    $region31: #{simple_cnn_forward.1} parent=1 // pred_check_branch
      %30 = sbr.rel (0) target = $region33
    $region32: #{simple_cnn_forward.1} parent=1 // pred_region
      _
    $region33: #{simple_cnn_forward.1} parent=1 // pred_fallthru
      _
    // Predicated region
    $region34: #{simple_cnn_forward.1} parent=1 // pred_check
      _
    $region35: #{simple_cnn_forward.1} parent=1 // pred_check_branch
      %32 = sbr.rel (0) target = $region37
    $region36: #{simple_cnn_forward.1} parent=1 // pred_region
      _
    $region37: #{simple_cnn_forward.1} parent=1 // pred_fallthru
      _
    %vm33 = vcmask 23552
    %34 = vst.msk [vmem:[#allocation2] sm:$0xff] %vm33, 0.0
    %35 = vst.msk [vmem:[#allocation2 + $0x8] sm:$0xff] %vm33, 0.0
    %vm36 = vcmask 17408
    %37 = vst.msk [vmem:[#allocation2 + $0x10] sm:$0x3] %vm36, 0.0
    %38 = vst.msk [vmem:[#allocation2 + $0x18] sm:$0xff] %vm33, 0.0
    %39 = vst.msk [vmem:[#allocation2 + $0x20] sm:$0xff] %vm33, 0.0
    %40 = vst.msk [vmem:[#allocation2 + $0x28] sm:$0x3] %vm36, 0.0
    %41 = vst.msk [vmem:[#allocation2 + $0x30] sm:$0xff] %vm33, 0.0
    %42 = vst.msk [vmem:[#allocation2 + $0x38] sm:$0xff] %vm33, 0.0
    %43 = vst.msk [vmem:[#allocation2 + $0x40] sm:$0x3] %vm36, 0.0
    %44 = vst.msk [vmem:[#allocation2 + $0x48] sm:$0xff] %vm33, 0.0
    %45 = vst.msk [vmem:[#allocation2 + $0x50] sm:$0xff] %vm33, 0.0
    %46 = vst.msk [vmem:[#allocation2 + $0x58] sm:$0x3] %vm36, 0.0
    %47 = vst.msk [vmem:[#allocation2 + $0x60] sm:$0xff] %vm33, 0.0
    %48 = vst.msk [vmem:[#allocation2 + $0x68] sm:$0xff] %vm33, 0.0
    %49 = vst.msk [vmem:[#allocation2 + $0x70] sm:$0x3] %vm36, 0.0
    %50 = vst.msk [vmem:[#allocation2 + $0x78] sm:$0xff] %vm33, 0.0
    %51 = vst.msk [vmem:[#allocation2 + $0x80] sm:$0xff] %vm33, 0.0
    %52 = vst.msk [vmem:[#allocation2 + $0x88] sm:$0x3] %vm36, 0.0
    %53 = vst.msk [vmem:[#allocation2 + $0x90] sm:$0xff] %vm33, 0.0
    %54 = vst.msk [vmem:[#allocation2 + $0x98] sm:$0xff] %vm33, 0.0
    %55 = vst.msk [vmem:[#allocation2 + $0xa0] sm:$0x3] %vm36, 0.0
    %56 = vst.msk [vmem:[#allocation2 + $0xa8] sm:$0xff] %vm33, 0.0
    %57 = vst.msk [vmem:[#allocation2 + $0xb0] sm:$0xff] %vm33, 0.0
    %58 = vst.msk [vmem:[#allocation2 + $0xb8] sm:$0x3] %vm36, 0.0
    %59 = vst.msk [vmem:[#allocation2 + $0xc0] sm:$0xff] %vm33, 0.0
    %60 = vst.msk [vmem:[#allocation2 + $0xc8] sm:$0xff] %vm33, 0.0
    %61 = vst.msk [vmem:[#allocation2 + $0xd0] sm:$0x3] %vm36, 0.0
    %62 = vst.msk [vmem:[#allocation2 + $0xd8] sm:$0xff] %vm33, 0.0
    %63 = vst.msk [vmem:[#allocation2 + $0xe0] sm:$0xff] %vm33, 0.0
    %64 = vst.msk [vmem:[#allocation2 + $0xe8] sm:$0x3] %vm36, 0.0
    %65 = vst.msk [vmem:[#allocation2 + $0xf0] sm:$0xff] %vm33, 0.0
    %66 = vst.msk [vmem:[#allocation2 + $0xf8] sm:$0xff] %vm33, 0.0
    %67 = vst.msk [vmem:[#allocation2 + $0x100] sm:$0x3] %vm36, 0.0
    %68 = vst.msk [vmem:[#allocation2 + $0x108] sm:$0xff] %vm33, 0.0
    %69 = vst.msk [vmem:[#allocation2 + $0x110] sm:$0xff] %vm33, 0.0
    %70 = vst.msk [vmem:[#allocation2 + $0x118] sm:$0x3] %vm36, 0.0
    %71 = vst.msk [vmem:[#allocation2 + $0x120] sm:$0xff] %vm33, 0.0
    %72 = vst.msk [vmem:[#allocation2 + $0x128] sm:$0xff] %vm33, 0.0
    %73 = vst.msk [vmem:[#allocation2 + $0x130] sm:$0x3] %vm36, 0.0
    %74 = vst.msk [vmem:[#allocation2 + $0x138] sm:$0xff] %vm33, 0.0
    %75 = vst.msk [vmem:[#allocation2 + $0x140] sm:$0xff] %vm33, 0.0
    %76 = vst.msk [vmem:[#allocation2 + $0x148] sm:$0x3] %vm36, 0.0
    %77 = vst.msk [vmem:[#allocation2 + $0x150] sm:$0xff] %vm33, 0.0
    %78 = vst.msk [vmem:[#allocation2 + $0x158] sm:$0xff] %vm33, 0.0
    %79 = vst.msk [vmem:[#allocation2 + $0x160] sm:$0x3] %vm36, 0.0
    %80 = vst.msk [vmem:[#allocation2 + $0x168] sm:$0xff] %vm33, 0.0
    %81 = vst.msk [vmem:[#allocation2 + $0x170] sm:$0xff] %vm33, 0.0
    %82 = vst.msk [vmem:[#allocation2 + $0x178] sm:$0x3] %vm36, 0.0
    %83 = vst.msk [vmem:[#allocation2 + $0x180] sm:$0xff] %vm33, 0.0
    %84 = vst.msk [vmem:[#allocation2 + $0x188] sm:$0xff] %vm33, 0.0
    %85 = vst.msk [vmem:[#allocation2 + $0x190] sm:$0x3] %vm36, 0.0
    %86 = vst.msk [vmem:[#allocation2 + $0x198] sm:$0xff] %vm33, 0.0
    %87 = vst.msk [vmem:[#allocation2 + $0x1a0] sm:$0xff] %vm33, 0.0
    %88 = vst.msk [vmem:[#allocation2 + $0x1a8] sm:$0x3] %vm36, 0.0
    %89 = vst.msk [vmem:[#allocation2 + $0x1b0] sm:$0xff] %vm33, 0.0
    %90 = vst.msk [vmem:[#allocation2 + $0x1b8] sm:$0xff] %vm33, 0.0
    %91 = vst.msk [vmem:[#allocation2 + $0x1c0] sm:$0x3] %vm36, 0.0
    %92 = vst.msk [vmem:[#allocation2 + $0x1c8] sm:$0xff] %vm33, 0.0
    %93 = vst.msk [vmem:[#allocation2 + $0x1d0] sm:$0xff] %vm33, 0.0
    %94 = vst.msk [vmem:[#allocation2 + $0x1d8] sm:$0x3] %vm36, 0.0
    %95 = vst.msk [vmem:[#allocation2 + $0x1e0] sm:$0xff] %vm33, 0.0
    %96 = vst.msk [vmem:[#allocation2 + $0x1e8] sm:$0xff] %vm33, 0.0
    %97 = vst.msk [vmem:[#allocation2 + $0x1f0] sm:$0x3] %vm36, 0.0
    %98 = vst.msk [vmem:[#allocation2 + $0x1f8] sm:$0xff] %vm33, 0.0
    %99 = vst.msk [vmem:[#allocation2 + $0x200] sm:$0xff] %vm33, 0.0
    %100 = vst.msk [vmem:[#allocation2 + $0x208] sm:$0x3] %vm36, 0.0
    %101 = vst.msk [vmem:[#allocation2 + $0x210] sm:$0xff] %vm33, 0.0
    %102 = vst.msk [vmem:[#allocation2 + $0x218] sm:$0xff] %vm33, 0.0
    %103 = vst.msk [vmem:[#allocation2 + $0x220] sm:$0x3] %vm36, 0.0
    %104 = vst.msk [vmem:[#allocation2 + $0x228] sm:$0xff] %vm33, 0.0
    %105 = vst.msk [vmem:[#allocation2 + $0x230] sm:$0xff] %vm33, 0.0
    %106 = vst.msk [vmem:[#allocation2 + $0x238] sm:$0x3] %vm36, 0.0
    %107 = vst.msk [vmem:[#allocation2 + $0x240] sm:$0xff] %vm33, 0.0
    %108 = vst.msk [vmem:[#allocation2 + $0x248] sm:$0xff] %vm33, 0.0
    %109 = vst.msk [vmem:[#allocation2 + $0x250] sm:$0x3] %vm36, 0.0
    %110 = vst.msk [vmem:[#allocation2 + $0x258] sm:$0xff] %vm33, 0.0
    %111 = vst.msk [vmem:[#allocation2 + $0x260] sm:$0xff] %vm33, 0.0
    %112 = vst.msk [vmem:[#allocation2 + $0x268] sm:$0x3] %vm36, 0.0
    %113 = vst.msk [vmem:[#allocation2 + $0x270] sm:$0xff] %vm33, 0.0
    %114 = vst.msk [vmem:[#allocation2 + $0x278] sm:$0xff] %vm33, 0.0
    %115 = vst.msk [vmem:[#allocation2 + $0x280] sm:$0x3] %vm36, 0.0
    %116 = vst.msk [vmem:[#allocation2 + $0x288] sm:$0xff] %vm33, 0.0
    %117 = vst.msk [vmem:[#allocation2 + $0x290] sm:$0xff] %vm33, 0.0
    %118 = vst.msk [vmem:[#allocation2 + $0x298] sm:$0x3] %vm36, 0.0
    %119 = vst.msk [vmem:[#allocation2 + $0x2a0] sm:$0xff] %vm33, 0.0
    %120 = vst.msk [vmem:[#allocation2 + $0x2a8] sm:$0xff] %vm33, 0.0
    %121 = vst.msk [vmem:[#allocation2 + $0x2b0] sm:$0x3] %vm36, 0.0
    %122 = vst.msk [vmem:[#allocation2 + $0x2b8] sm:$0xff] %vm33, 0.0
    %123 = vst.msk [vmem:[#allocation2 + $0x2c0] sm:$0xff] %vm33, 0.0
    %124 = vst.msk [vmem:[#allocation2 + $0x2c8] sm:$0x3] %vm36, 0.0
    %125 = vst.msk [vmem:[#allocation2 + $0x2d0] sm:$0xff] %vm33, 0.0
    %126 = vst.msk [vmem:[#allocation2 + $0x2d8] sm:$0xff] %vm33, 0.0
    %127 = vst.msk [vmem:[#allocation2 + $0x2e0] sm:$0x3] %vm36, 0.0
    %128 = vst.msk [vmem:[#allocation2 + $0x2e8] sm:$0xff] %vm33, 0.0
    %129 = vst.msk [vmem:[#allocation2 + $0x2f0] sm:$0xff] %vm33, 0.0
    %130 = vst.msk [vmem:[#allocation2 + $0x2f8] sm:$0x3] %vm36, 0.0
    %131 = vst.msk [vmem:[#allocation2 + $0x300] sm:$0xff] %vm33, 0.0
    %132 = vst.msk [vmem:[#allocation2 + $0x308] sm:$0xff] %vm33, 0.0
    %133 = vst.msk [vmem:[#allocation2 + $0x310] sm:$0x3] %vm36, 0.0
    %134 = vst.msk [vmem:[#allocation2 + $0x318] sm:$0xff] %vm33, 0.0
    %135 = vst.msk [vmem:[#allocation2 + $0x320] sm:$0xff] %vm33, 0.0
    %136 = vst.msk [vmem:[#allocation2 + $0x328] sm:$0x3] %vm36, 0.0
    %137 = vst.msk [vmem:[#allocation2 + $0x330] sm:$0xff] %vm33, 0.0
    %138 = vst.msk [vmem:[#allocation2 + $0x338] sm:$0xff] %vm33, 0.0
    %139 = vst.msk [vmem:[#allocation2 + $0x340] sm:$0x3] %vm36, 0.0
    %140 = vst.msk [vmem:[#allocation2 + $0x348] sm:$0xff] %vm33, 0.0
    %141 = vst.msk [vmem:[#allocation2 + $0x350] sm:$0xff] %vm33, 0.0
    %142 = vst.msk [vmem:[#allocation2 + $0x358] sm:$0x3] %vm36, 0.0
    %v143 = vld [vmem:[%s0] sm:$0xff]
    %v144 = vld [vmem:[%s0 + $0x8] sm:$0xff]
    %v145 = vld [vmem:[%s0 + $0x10] sm:$0xff]
    %v146 = vld [vmem:[%s0 + $0x18] sm:$0xff]
    %v147 = vld [vmem:[%s0 + $0x20] sm:$0xff]
    %v148 = vld [vmem:[%s0 + $0x28] sm:$0xff]
    %v149 = vld [vmem:[%s0 + $0x30] sm:$0xff]
    %v150 = vld [vmem:[%s0 + $0x38] sm:$0xff]
    %v151 = vld [vmem:[%s0 + $0x40] sm:$0xff]
    %v152 = vld [vmem:[%s0 + $0x48] sm:$0xff]
    %v153 = vld [vmem:[%s0 + $0x50] sm:$0xff]
    %v154 = vld [vmem:[%s0 + $0x58] sm:$0xff]
    %v155 = vld [vmem:[%s0 + $0x60] sm:$0xff]
    %v156 = vld [vmem:[%s0 + $0x68] sm:$0xff]
    %v157 = vld [vmem:[%s0 + $0x70] sm:$0xff]
    %v158 = vld [vmem:[%s0 + $0x78] sm:$0xff]
    %v159 = vld [vmem:[%s0 + $0x80] sm:$0xff]
    %v160 = vld [vmem:[%s0 + $0x88] sm:$0xff]
    %v161 = vld [vmem:[%s0 + $0x90] sm:$0xff]
    %v162 = vld [vmem:[%s0 + $0x98] sm:$0xff]
    %v163 = vld [vmem:[%s0 + $0xa0] sm:$0xff]
    %v164 = vld [vmem:[%s0 + $0xa8] sm:$0xff]
    %v165 = vld [vmem:[%s0 + $0xb0] sm:$0xff]
    %v166 = vld [vmem:[%s0 + $0xb8] sm:$0xff]
    %v167 = vld [vmem:[%s0 + $0xc0] sm:$0xff]
    %v168 = vld [vmem:[%s0 + $0xc8] sm:$0xff]
    %v169 = vld [vmem:[%s0 + $0xd0] sm:$0xff]
    %v170 = vld [vmem:[%s0 + $0xd8] sm:$0xff]
    %v171 = vld [vmem:[%s0 + $0xe0] sm:$0xff]
    %v172 = vld [vmem:[%s0 + $0xe8] sm:$0xff]
    %v173 = vld [vmem:[%s0 + $0xf0] sm:$0xff]
    %v174 = vld [vmem:[%s0 + $0xf8] sm:$0xff]
    %v175 = vld [vmem:[%s0 + $0x100] sm:$0xff]
    %v176 = vld [vmem:[%s0 + $0x108] sm:$0xff]
    %v177 = vld [vmem:[%s0 + $0x110] sm:$0xff]
    %v178 = vld [vmem:[%s0 + $0x118] sm:$0xff]
    %v179 = vld [vmem:[%s0 + $0x120] sm:$0xff]
    %v180 = vld [vmem:[%s0 + $0x128] sm:$0xff]
    %v181 = vld [vmem:[%s0 + $0x130] sm:$0xff]
    %v182 = vld [vmem:[%s0 + $0x138] sm:$0xff]
    %v183 = vld [vmem:[%s0 + $0x140] sm:$0xff]
    %v184 = vld [vmem:[%s0 + $0x148] sm:$0xff]
    %v185 = vld [vmem:[%s0 + $0x150] sm:$0xff]
    %v186 = vld [vmem:[%s0 + $0x158] sm:$0xff]
    %v187 = vld [vmem:[%s0 + $0x160] sm:$0xff]
    %v188 = vld [vmem:[%s0 + $0x168] sm:$0xff]
    %v189 = vld [vmem:[%s0 + $0x170] sm:$0xff]
    %v190 = vld [vmem:[%s0 + $0x178] sm:$0xff]
    %v191 = vld [vmem:[%s0 + $0x180] sm:$0xff]
    %v192 = vld [vmem:[%s0 + $0x188] sm:$0xff]
    %v193 = vld [vmem:[%s0 + $0x190] sm:$0xff]
    %v194 = vld [vmem:[%s0 + $0x198] sm:$0xff]
    %v195 = vld [vmem:[%s0 + $0x1a0] sm:$0xff]
    %v196 = vld [vmem:[%s0 + $0x1a8] sm:$0xff]
    %v197 = vld [vmem:[%s0 + $0x1b0] sm:$0xff]
    %v198 = vld [vmem:[%s0 + $0x1b8] sm:$0xff]
    %v199 = vld [vmem:[%s0 + $0x1c0] sm:$0xff]
    %v200 = vld [vmem:[%s0 + $0x1c8] sm:$0xff]
    %v201 = vld [vmem:[%s0 + $0x1d0] sm:$0xff]
    %v202 = vld [vmem:[%s0 + $0x1d8] sm:$0xff]
    %v203 = vld [vmem:[%s0 + $0x1e0] sm:$0xff]
    %v204 = vld [vmem:[%s0 + $0x1e8] sm:$0xff]
    %v205 = vld [vmem:[%s0 + $0x1f0] sm:$0xff]
    %v206 = vld [vmem:[%s0 + $0x1f8] sm:$0xff]
    %s207 = scalar_lea.vmem [#allocation2], 24
    %208 = vst.msk [vmem:[%s207 + $0x1] sm:$0xff] %vm33, %v143
    %209 = vst.msk [vmem:[%s207 + $0x9] sm:$0xff] %vm33, %v144
    %210 = vst.msk [vmem:[%s207 + $0x19] sm:$0xff] %vm33, %v145
    %211 = vst.msk [vmem:[%s207 + $0x21] sm:$0xff] %vm33, %v146
    %212 = vst.msk [vmem:[%s207 + $0x31] sm:$0xff] %vm33, %v147
    %213 = vst.msk [vmem:[%s207 + $0x39] sm:$0xff] %vm33, %v148
    %214 = vst.msk [vmem:[%s207 + $0x49] sm:$0xff] %vm33, %v149
    %215 = vst.msk [vmem:[%s207 + $0x51] sm:$0xff] %vm33, %v150
    %216 = vst.msk [vmem:[%s207 + $0x61] sm:$0xff] %vm33, %v151
    %217 = vst.msk [vmem:[%s207 + $0x69] sm:$0xff] %vm33, %v152
    %218 = vst.msk [vmem:[%s207 + $0x79] sm:$0xff] %vm33, %v153
    %219 = vst.msk [vmem:[%s207 + $0x81] sm:$0xff] %vm33, %v154
    %220 = vst.msk [vmem:[%s207 + $0x91] sm:$0xff] %vm33, %v155
    %221 = vst.msk [vmem:[%s207 + $0x99] sm:$0xff] %vm33, %v156
    %222 = vst.msk [vmem:[%s207 + $0xa9] sm:$0xff] %vm33, %v157
    %223 = vst.msk [vmem:[%s207 + $0xb1] sm:$0xff] %vm33, %v158
    %224 = vst.msk [vmem:[%s207 + $0xc1] sm:$0xff] %vm33, %v159
    %225 = vst.msk [vmem:[%s207 + $0xc9] sm:$0xff] %vm33, %v160
    %226 = vst.msk [vmem:[%s207 + $0xd9] sm:$0xff] %vm33, %v161
    %227 = vst.msk [vmem:[%s207 + $0xe1] sm:$0xff] %vm33, %v162
    %228 = vst.msk [vmem:[%s207 + $0xf1] sm:$0xff] %vm33, %v163
    %229 = vst.msk [vmem:[%s207 + $0xf9] sm:$0xff] %vm33, %v164
    %230 = vst.msk [vmem:[%s207 + $0x109] sm:$0xff] %vm33, %v165
    %231 = vst.msk [vmem:[%s207 + $0x111] sm:$0xff] %vm33, %v166
    %232 = vst.msk [vmem:[%s207 + $0x121] sm:$0xff] %vm33, %v167
    %233 = vst.msk [vmem:[%s207 + $0x129] sm:$0xff] %vm33, %v168
    %234 = vst.msk [vmem:[%s207 + $0x139] sm:$0xff] %vm33, %v169
    %235 = vst.msk [vmem:[%s207 + $0x141] sm:$0xff] %vm33, %v170
    %236 = vst.msk [vmem:[%s207 + $0x151] sm:$0xff] %vm33, %v171
    %237 = vst.msk [vmem:[%s207 + $0x159] sm:$0xff] %vm33, %v172
    %238 = vst.msk [vmem:[%s207 + $0x169] sm:$0xff] %vm33, %v173
    %239 = vst.msk [vmem:[%s207 + $0x171] sm:$0xff] %vm33, %v174
    %240 = vst.msk [vmem:[%s207 + $0x1b1] sm:$0xff] %vm33, %v175
    %241 = vst.msk [vmem:[%s207 + $0x1b9] sm:$0xff] %vm33, %v176
    %242 = vst.msk [vmem:[%s207 + $0x1c9] sm:$0xff] %vm33, %v177
    %243 = vst.msk [vmem:[%s207 + $0x1d1] sm:$0xff] %vm33, %v178
    %244 = vst.msk [vmem:[%s207 + $0x1e1] sm:$0xff] %vm33, %v179
    %245 = vst.msk [vmem:[%s207 + $0x1e9] sm:$0xff] %vm33, %v180
    %246 = vst.msk [vmem:[%s207 + $0x1f9] sm:$0xff] %vm33, %v181
    %247 = vst.msk [vmem:[%s207 + $0x201] sm:$0xff] %vm33, %v182
    %248 = vst.msk [vmem:[%s207 + $0x211] sm:$0xff] %vm33, %v183
    %249 = vst.msk [vmem:[%s207 + $0x219] sm:$0xff] %vm33, %v184
    %250 = vst.msk [vmem:[%s207 + $0x229] sm:$0xff] %vm33, %v185
    %251 = vst.msk [vmem:[%s207 + $0x231] sm:$0xff] %vm33, %v186
    %252 = vst.msk [vmem:[%s207 + $0x241] sm:$0xff] %vm33, %v187
    %253 = vst.msk [vmem:[%s207 + $0x249] sm:$0xff] %vm33, %v188
    %254 = vst.msk [vmem:[%s207 + $0x259] sm:$0xff] %vm33, %v189
    %255 = vst.msk [vmem:[%s207 + $0x261] sm:$0xff] %vm33, %v190
    %256 = vst.msk [vmem:[%s207 + $0x271] sm:$0xff] %vm33, %v191
    %257 = vst.msk [vmem:[%s207 + $0x279] sm:$0xff] %vm33, %v192
    %258 = vst.msk [vmem:[%s207 + $0x289] sm:$0xff] %vm33, %v193
    %259 = vst.msk [vmem:[%s207 + $0x291] sm:$0xff] %vm33, %v194
    %260 = vst.msk [vmem:[%s207 + $0x2a1] sm:$0xff] %vm33, %v195
    %261 = vst.msk [vmem:[%s207 + $0x2a9] sm:$0xff] %vm33, %v196
    %262 = vst.msk [vmem:[%s207 + $0x2b9] sm:$0xff] %vm33, %v197
    %263 = vst.msk [vmem:[%s207 + $0x2c1] sm:$0xff] %vm33, %v198
    %264 = vst.msk [vmem:[%s207 + $0x2d1] sm:$0xff] %vm33, %v199
    %265 = vst.msk [vmem:[%s207 + $0x2d9] sm:$0xff] %vm33, %v200
    %266 = vst.msk [vmem:[%s207 + $0x2e9] sm:$0xff] %vm33, %v201
    %267 = vst.msk [vmem:[%s207 + $0x2f1] sm:$0xff] %vm33, %v202
    %268 = vst.msk [vmem:[%s207 + $0x301] sm:$0xff] %vm33, %v203
    %269 = vst.msk [vmem:[%s207 + $0x309] sm:$0xff] %vm33, %v204
    %270 = vst.msk [vmem:[%s207 + $0x319] sm:$0xff] %vm33, %v205
    %271 = vst.msk [vmem:[%s207 + $0x321] sm:$0xff] %vm33, %v206
    %v272 = vld [vmem:[#allocation2] sm:$0xff]
    %v273 = vld [vmem:[#allocation2 + $0x8] sm:$0xff]
    %v274 = vld [vmem:[#allocation2 + $0x18] sm:$0xff]
    %v275 = vld [vmem:[#allocation2 + $0x20] sm:$0xff]
    %v276 = vld [vmem:[#allocation2 + $0x30] sm:$0xff]
    %v277 = vld [vmem:[#allocation2 + $0x38] sm:$0xff]
    %v278 = vld [vmem:[#allocation2 + $0x48] sm:$0xff]
    %v279 = vld [vmem:[#allocation2 + $0x50] sm:$0xff]
    %v280 = vld [vmem:[#allocation2 + $0x60] sm:$0xff]
    %v281 = vld [vmem:[#allocation2 + $0x68] sm:$0xff]
    %v282 = vld [vmem:[#allocation2 + $0x78] sm:$0xff]
    %v283 = vld [vmem:[#allocation2 + $0x80] sm:$0xff]
    %v284 = vld [vmem:[#allocation2 + $0x90] sm:$0xff]
    %v285 = vld [vmem:[#allocation2 + $0x98] sm:$0xff]
    %v286 = vld [vmem:[#allocation2 + $0xa8] sm:$0xff]
    %v287 = vld [vmem:[#allocation2 + $0xb0] sm:$0xff]
    %v288 = vld [vmem:[#allocation2 + $0xc0] sm:$0xff]
    %v289 = vld [vmem:[#allocation2 + $0xc8] sm:$0xff]
    %v290 = vld [vmem:[#allocation2 + $0xd8] sm:$0xff]
    %v291 = vld [vmem:[#allocation2 + $0xe0] sm:$0xff]
    %v292 = vld [vmem:[#allocation2 + $0xf0] sm:$0xff]
    %v293 = vld [vmem:[#allocation2 + $0xf8] sm:$0xff]
    %v294 = vld [vmem:[#allocation2 + $0x108] sm:$0xff]
    %v295 = vld [vmem:[#allocation2 + $0x110] sm:$0xff]
    %v296 = vld [vmem:[#allocation2 + $0x120] sm:$0xff]
    %v297 = vld [vmem:[#allocation2 + $0x128] sm:$0xff]
    %v298 = vld [vmem:[#allocation2 + $0x138] sm:$0xff]
    %v299 = vld [vmem:[#allocation2 + $0x140] sm:$0xff]
    %v300 = vld [vmem:[#allocation2 + $0x150] sm:$0xff]
    %v301 = vld [vmem:[#allocation2 + $0x158] sm:$0xff]
    %v302 = vld [vmem:[#allocation2 + $0x168] sm:$0xff]
    %v303 = vld [vmem:[#allocation2 + $0x170] sm:$0xff]
    %v304 = vld [vmem:[#allocation2 + $0x1b0] sm:$0xff]
    %v305 = vld [vmem:[#allocation2 + $0x1b8] sm:$0xff]
    %v306 = vld [vmem:[#allocation2 + $0x1c8] sm:$0xff]
    %v307 = vld [vmem:[#allocation2 + $0x1d0] sm:$0xff]
    %v308 = vld [vmem:[#allocation2 + $0x1e0] sm:$0xff]
    %v309 = vld [vmem:[#allocation2 + $0x1e8] sm:$0xff]
    %v310 = vld [vmem:[#allocation2 + $0x1f8] sm:$0xff]
    %v311 = vld [vmem:[#allocation2 + $0x200] sm:$0xff]
    %v312 = vld [vmem:[#allocation2 + $0x210] sm:$0xff]
    %v313 = vld [vmem:[#allocation2 + $0x218] sm:$0xff]
    %v314 = vld [vmem:[#allocation2 + $0x228] sm:$0xff]
    %v315 = vld [vmem:[#allocation2 + $0x230] sm:$0xff]
    %v316 = vld [vmem:[#allocation2 + $0x240] sm:$0xff]
    %v317 = vld [vmem:[#allocation2 + $0x248] sm:$0xff]
    %v318 = vld [vmem:[#allocation2 + $0x258] sm:$0xff]
    %v319 = vld [vmem:[#allocation2 + $0x260] sm:$0xff]
    %v320 = vld [vmem:[#allocation2 + $0x270] sm:$0xff]
    %v321 = vld [vmem:[#allocation2 + $0x278] sm:$0xff]
    %v322 = vld [vmem:[#allocation2 + $0x288] sm:$0xff]
    %v323 = vld [vmem:[#allocation2 + $0x290] sm:$0xff]
    %v324 = vld [vmem:[#allocation2 + $0x2a0] sm:$0xff]
    %v325 = vld [vmem:[#allocation2 + $0x2a8] sm:$0xff]
    %v326 = vld [vmem:[#allocation2 + $0x2b8] sm:$0xff]
    %v327 = vld [vmem:[#allocation2 + $0x2c0] sm:$0xff]
    %v328 = vld [vmem:[#allocation2 + $0x2d0] sm:$0xff]
    %v329 = vld [vmem:[#allocation2 + $0x2d8] sm:$0xff]
    %v330 = vld [vmem:[#allocation2 + $0x2e8] sm:$0xff]
    %v331 = vld [vmem:[#allocation2 + $0x2f0] sm:$0xff]
    %v332 = vld [vmem:[#allocation2 + $0x300] sm:$0xff]
    %v333 = vld [vmem:[#allocation2 + $0x308] sm:$0xff]
    %v334 = vld [vmem:[#allocation2 + $0x318] sm:$0xff]
    %v335 = vld [vmem:[#allocation2 + $0x320] sm:$0xff]
    %v336 = vld [vmem:[%s1] sm:$0x7]
    %v337 = vld [vmem:[#allocation2 + $0x1] sm:$0xff]
    %v338 = vld [vmem:[#allocation2 + $0x9] sm:$0xff]
    %v339 = vld [vmem:[#allocation2 + $0x19] sm:$0xff]
    %v340 = vld [vmem:[#allocation2 + $0x21] sm:$0xff]
    %v341 = vld [vmem:[#allocation2 + $0x31] sm:$0xff]
    %v342 = vld [vmem:[#allocation2 + $0x39] sm:$0xff]
    %v343 = vld [vmem:[#allocation2 + $0x49] sm:$0xff]
    %v344 = vld [vmem:[#allocation2 + $0x51] sm:$0xff]
    %v345 = vld [vmem:[#allocation2 + $0x61] sm:$0xff]
    %v346 = vld [vmem:[#allocation2 + $0x69] sm:$0xff]
    %v347 = vld [vmem:[#allocation2 + $0x79] sm:$0xff]
    %v348 = vld [vmem:[#allocation2 + $0x81] sm:$0xff]
    %v349 = vld [vmem:[#allocation2 + $0x91] sm:$0xff]
    %v350 = vld [vmem:[#allocation2 + $0x99] sm:$0xff]
    %v351 = vld [vmem:[#allocation2 + $0xa9] sm:$0xff]
    %v352 = vld [vmem:[#allocation2 + $0xb1] sm:$0xff]
    %v353 = vld [vmem:[#allocation2 + $0xc1] sm:$0xff]
    %v354 = vld [vmem:[#allocation2 + $0xc9] sm:$0xff]
    %v355 = vld [vmem:[#allocation2 + $0xd9] sm:$0xff]
    %v356 = vld [vmem:[#allocation2 + $0xe1] sm:$0xff]
    %v357 = vld [vmem:[#allocation2 + $0xf1] sm:$0xff]
    %v358 = vld [vmem:[#allocation2 + $0xf9] sm:$0xff]
    %v359 = vld [vmem:[#allocation2 + $0x109] sm:$0xff]
    %v360 = vld [vmem:[#allocation2 + $0x111] sm:$0xff]
    %v361 = vld [vmem:[#allocation2 + $0x121] sm:$0xff]
    %v362 = vld [vmem:[#allocation2 + $0x129] sm:$0xff]
    %v363 = vld [vmem:[#allocation2 + $0x139] sm:$0xff]
    %v364 = vld [vmem:[#allocation2 + $0x141] sm:$0xff]
    %v365 = vld [vmem:[#allocation2 + $0x151] sm:$0xff]
    %v366 = vld [vmem:[#allocation2 + $0x159] sm:$0xff]
    %v367 = vld [vmem:[#allocation2 + $0x169] sm:$0xff]
    %v368 = vld [vmem:[#allocation2 + $0x171] sm:$0xff]
    %v369 = vld [vmem:[#allocation2 + $0x1b1] sm:$0xff]
    %v370 = vld [vmem:[#allocation2 + $0x1b9] sm:$0xff]
    %v371 = vld [vmem:[#allocation2 + $0x1c9] sm:$0xff]
    %v372 = vld [vmem:[#allocation2 + $0x1d1] sm:$0xff]
    %v373 = vld [vmem:[#allocation2 + $0x1e1] sm:$0xff]
    %v374 = vld [vmem:[#allocation2 + $0x1e9] sm:$0xff]
    %v375 = vld [vmem:[#allocation2 + $0x1f9] sm:$0xff]
    %v376 = vld [vmem:[#allocation2 + $0x201] sm:$0xff]
    %v377 = vld [vmem:[#allocation2 + $0x211] sm:$0xff]
    %v378 = vld [vmem:[#allocation2 + $0x219] sm:$0xff]
    %v379 = vld [vmem:[#allocation2 + $0x229] sm:$0xff]
    %v380 = vld [vmem:[#allocation2 + $0x231] sm:$0xff]
    %v381 = vld [vmem:[#allocation2 + $0x241] sm:$0xff]
    %v382 = vld [vmem:[#allocation2 + $0x249] sm:$0xff]
    %v383 = vld [vmem:[#allocation2 + $0x259] sm:$0xff]
    %v384 = vld [vmem:[#allocation2 + $0x261] sm:$0xff]
    %v385 = vld [vmem:[#allocation2 + $0x271] sm:$0xff]
    %v386 = vld [vmem:[#allocation2 + $0x279] sm:$0xff]
    %v387 = vld [vmem:[#allocation2 + $0x289] sm:$0xff]
    %v388 = vld [vmem:[#allocation2 + $0x291] sm:$0xff]
    %v389 = vld [vmem:[#allocation2 + $0x2a1] sm:$0xff]
    %v390 = vld [vmem:[#allocation2 + $0x2a9] sm:$0xff]
    %v391 = vld [vmem:[#allocation2 + $0x2b9] sm:$0xff]
    %v392 = vld [vmem:[#allocation2 + $0x2c1] sm:$0xff]
    %v393 = vld [vmem:[#allocation2 + $0x2d1] sm:$0xff]
    %v394 = vld [vmem:[#allocation2 + $0x2d9] sm:$0xff]
    %v395 = vld [vmem:[#allocation2 + $0x2e9] sm:$0xff]
    %v396 = vld [vmem:[#allocation2 + $0x2f1] sm:$0xff]
    %v397 = vld [vmem:[#allocation2 + $0x301] sm:$0xff]
    %v398 = vld [vmem:[#allocation2 + $0x309] sm:$0xff]
    %v399 = vld [vmem:[#allocation2 + $0x319] sm:$0xff]
    %v400 = vld [vmem:[#allocation2 + $0x321] sm:$0xff]
    %v401 = vld [vmem:[%s1 + $0x3] sm:$0x7]
    %v403 = vsel %vm33, %v337, 0
    %v406 = vsel %vm33, %v338, 0
    %v409 = vsel %vm33, %v339, 0
    %v412 = vsel %vm33, %v340, 0
    %v415 = vsel %vm33, %v341, 0
    %v418 = vsel %vm33, %v342, 0
    %v421 = vsel %vm33, %v343, 0
    %v424 = vsel %vm33, %v344, 0
    %v427 = vsel %vm33, %v345, 0
    %v430 = vsel %vm33, %v346, 0
    %v433 = vsel %vm33, %v347, 0
    %v436 = vsel %vm33, %v348, 0
    %v439 = vsel %vm33, %v349, 0
    %v442 = vsel %vm33, %v350, 0
    %v445 = vsel %vm33, %v351, 0
    %v448 = vsel %vm33, %v352, 0
    %v451 = vsel %vm33, %v353, 0
    %v454 = vsel %vm33, %v354, 0
    %v457 = vsel %vm33, %v355, 0
    %v460 = vsel %vm33, %v356, 0
    %v463 = vsel %vm33, %v357, 0
    %v466 = vsel %vm33, %v358, 0
    %v469 = vsel %vm33, %v359, 0
    %v472 = vsel %vm33, %v360, 0
    %v475 = vsel %vm33, %v361, 0
    %v478 = vsel %vm33, %v362, 0
    %v481 = vsel %vm33, %v363, 0
    %v484 = vsel %vm33, %v364, 0
    %v487 = vsel %vm33, %v365, 0
    %v490 = vsel %vm33, %v366, 0
    %v493 = vsel %vm33, %v367, 0
    %v496 = vsel %vm33, %v368, 0
    %v499 = vsel %vm33, %v369, 0
    %v502 = vsel %vm33, %v370, 0
    %v505 = vsel %vm33, %v371, 0
    %v508 = vsel %vm33, %v372, 0
    %v511 = vsel %vm33, %v373, 0
    %v514 = vsel %vm33, %v374, 0
    %v517 = vsel %vm33, %v375, 0
    %v520 = vsel %vm33, %v376, 0
    %v523 = vsel %vm33, %v377, 0
    %v526 = vsel %vm33, %v378, 0
    %v529 = vsel %vm33, %v379, 0
    %v532 = vsel %vm33, %v380, 0
    %v535 = vsel %vm33, %v381, 0
    %v538 = vsel %vm33, %v382, 0
    %v541 = vsel %vm33, %v383, 0
    %v544 = vsel %vm33, %v384, 0
    %v547 = vsel %vm33, %v385, 0
    %v550 = vsel %vm33, %v386, 0
    %v553 = vsel %vm33, %v387, 0
    %v556 = vsel %vm33, %v388, 0
    %v559 = vsel %vm33, %v389, 0
    %v562 = vsel %vm33, %v390, 0
    %v565 = vsel %vm33, %v391, 0
    %v568 = vsel %vm33, %v392, 0
    %v571 = vsel %vm33, %v393, 0
    %v574 = vsel %vm33, %v394, 0
    %v577 = vsel %vm33, %v395, 0
    %v580 = vsel %vm33, %v396, 0
    %v583 = vsel %vm33, %v397, 0
    %v586 = vsel %vm33, %v398, 0
    %v589 = vsel %vm33, %v399, 0
    %v592 = vsel %vm33, %v400, 0
    %vm594 = vcmask 1042432
    %v596 = vsel %vm594, %v401, 0
    %598 = vmatprep.subr.mxu0 0.0
    %599 = vmatpush1.msra.mxu0 0.0
    %600 = vmatprep.subr.mxu0 0.0
    %601 = vmatpush1.msra.mxu0 0.0
    %602 = vmatprep.subr.mxu0 0.0
    %603 = vmatpush1.msra.mxu0 0.0
    %604 = vmatprep.subr.mxu0 0.0
    %605 = vmatpush1.msra.mxu0 0.0
    %606 = vmatprep.subr.mxu0 0.0
    %607 = vmatpush1.msra.mxu0 0.0
    %608 = vmatprep.subr.mxu0 0.0
    %609 = vmatpush1.msra.mxu0 0.0
    %610 = vmatprep.subr.mxu0 0.0
    %611 = vmatpush1.msra.mxu0 0.0
    %612 = vmatprep.subr.mxu0 0.0
    %613 = vmatpush1.msra.mxu0 0.0
    %614 = vmatprep.subr.mxu0 0.0
    %615 = vmatpush1.msra.mxu0 0.0
    %616 = vmatprep.subr.mxu0 0.0
    %617 = vmatpush1.msra.mxu0 0.0
    %618 = vmatprep.subr.mxu0 0.0
    %619 = vmatpush1.msra.mxu0 0.0
    %620 = vmatprep.subr.mxu0 0.0
    %621 = vmatpush1.msra.mxu0 0.0
    %622 = vmatprep.subr.mxu0 0.0
    %623 = vmatpush1.msra.mxu0 0.0
    %624 = vmatprep.subr.mxu0 0.0
    %625 = vmatpush1.msra.mxu0 0.0
    %626 = vmatprep.subr.mxu0 0.0
    %627 = vmatpush1.msra.mxu0 0.0
    %628 = vmatprep.subr.mxu0 0.0
    %629 = vmatpush1.msra.mxu0 %v596
    %630 = vmatprep.subr.mxu0 0.0
    %631 = vmatpush2.msra.mxu0 0.0
    %632 = vmatprep.subr.mxu0 0.0
    %633 = vmatpush2.msra.mxu0 0.0
    %634 = vmatprep.subr.mxu0 0.0
    %635 = vmatpush2.msra.mxu0 0.0
    %636 = vmatprep.subr.mxu0 0.0
    %637 = vmatpush2.msra.mxu0 0.0
    %638 = vmatprep.subr.mxu0 0.0
    %639 = vmatpush2.msra.mxu0 0.0
    %640 = vmatprep.subr.mxu0 0.0
    %641 = vmatpush2.msra.mxu0 0.0
    %642 = vmatprep.subr.mxu0 0.0
    %643 = vmatpush2.msra.mxu0 0.0
    %644 = vmatprep.subr.mxu0 0.0
    %645 = vmatpush2.msra.mxu0 0.0
    %646 = vmatprep.subr.mxu0 0.0
    %647 = vmatpush2.msra.mxu0 0.0
    %648 = vmatprep.subr.mxu0 0.0
    %649 = vmatpush2.msra.mxu0 0.0
    %650 = vmatprep.subr.mxu0 0.0
    %651 = vmatpush2.msra.mxu0 0.0
    %652 = vmatprep.subr.mxu0 0.0
    %653 = vmatpush2.msra.mxu0 0.0
    %654 = vmatprep.subr.mxu0 0.0
    %655 = vmatpush2.msra.mxu0 0.0
    %656 = vmatprep.subr.mxu0 0.0
    %657 = vmatpush2.msra.mxu0 0.0
    %658 = vmatprep.subr.mxu0 0.0
    %659 = vmatpush2.msra.mxu0 0.0
    %660 = vmatprep.subr.mxu0 0.0
    %661 = vmatpush2.msra.mxu0 0.0
    %662 = vmatprep.mubr.f32.mxu0 0.0
    %663 = vmatmul.mubr.f32.gmra.mxu0 %v403
    %v664 = vpop.f32.mrf.mxu0
    %v665 = vadd.f32 0.0, %v664
    %v666 = vpop.f32.mrf.mxu0
    %667 = vmatprep.mubr.f32.mxu0 0.0
    %668 = vmatmul.mubr.f32.gmra.mxu0 %v406
    %v669 = vpop.f32.mrf.mxu0
    %v670 = vadd.f32 0.0, %v669
    %v671 = vpop.f32.mrf.mxu0
    %672 = vmatprep.mubr.f32.mxu0 0.0
    %673 = vmatmul.mubr.f32.gmra.mxu0 %v409
    %v674 = vpop.f32.mrf.mxu0
    %v675 = vadd.f32 0.0, %v674
    %v676 = vpop.f32.mrf.mxu0
    %677 = vmatprep.mubr.f32.mxu0 0.0
    %678 = vmatmul.mubr.f32.gmra.mxu0 %v412
    %v679 = vpop.f32.mrf.mxu0
    %v680 = vadd.f32 0.0, %v679
    %v681 = vpop.f32.mrf.mxu0
    %682 = vmatprep.mubr.f32.mxu0 0.0
    %683 = vmatmul.mubr.f32.gmra.mxu0 %v415
    %v684 = vpop.f32.mrf.mxu0
    %v685 = vadd.f32 0.0, %v684
    %v686 = vpop.f32.mrf.mxu0
    %687 = vmatprep.mubr.f32.mxu0 0.0
    %688 = vmatmul.mubr.f32.gmra.mxu0 %v418
    %v689 = vpop.f32.mrf.mxu0
    %v690 = vadd.f32 0.0, %v689
    %v691 = vpop.f32.mrf.mxu0
    %692 = vmatprep.mubr.f32.mxu0 0.0
    %693 = vmatmul.mubr.f32.gmra.mxu0 %v421
    %v694 = vpop.f32.mrf.mxu0
    %v695 = vadd.f32 0.0, %v694
    %v696 = vpop.f32.mrf.mxu0
    %697 = vmatprep.mubr.f32.mxu0 0.0
    %698 = vmatmul.mubr.f32.gmra.mxu0 %v424
    %v699 = vpop.f32.mrf.mxu0
    %v700 = vadd.f32 0.0, %v699
    %v701 = vpop.f32.mrf.mxu0
    %702 = vmatprep.mubr.f32.mxu0 0.0
    %703 = vmatmul.mubr.f32.gmra.mxu0 %v427
    %v704 = vpop.f32.mrf.mxu0
    %v705 = vadd.f32 0.0, %v704
    %v706 = vpop.f32.mrf.mxu0
    %707 = vmatprep.mubr.f32.mxu0 0.0
    %708 = vmatmul.mubr.f32.gmra.mxu0 %v430
    %v709 = vpop.f32.mrf.mxu0
    %v710 = vadd.f32 0.0, %v709
    %v711 = vpop.f32.mrf.mxu0
    %712 = vmatprep.mubr.f32.mxu0 0.0
    %713 = vmatmul.mubr.f32.gmra.mxu0 %v433
    %v714 = vpop.f32.mrf.mxu0
    %v715 = vadd.f32 0.0, %v714
    %v716 = vpop.f32.mrf.mxu0
    %717 = vmatprep.mubr.f32.mxu0 0.0
    %718 = vmatmul.mubr.f32.gmra.mxu0 %v436
    %v719 = vpop.f32.mrf.mxu0
    %v720 = vadd.f32 0.0, %v719
    %v721 = vpop.f32.mrf.mxu0
    %722 = vmatprep.mubr.f32.mxu0 0.0
    %723 = vmatmul.mubr.f32.gmra.mxu0 %v439
    %v724 = vpop.f32.mrf.mxu0
    %v725 = vadd.f32 0.0, %v724
    %v726 = vpop.f32.mrf.mxu0
    %727 = vmatprep.mubr.f32.mxu0 0.0
    %728 = vmatmul.mubr.f32.gmra.mxu0 %v442
    %v729 = vpop.f32.mrf.mxu0
    %v730 = vadd.f32 0.0, %v729
    %v731 = vpop.f32.mrf.mxu0
    %732 = vmatprep.mubr.f32.mxu0 0.0
    %733 = vmatmul.mubr.f32.gmra.mxu0 %v445
    %v734 = vpop.f32.mrf.mxu0
    %v735 = vadd.f32 0.0, %v734
    %v736 = vpop.f32.mrf.mxu0
    %737 = vmatprep.mubr.f32.mxu0 0.0
    %738 = vmatmul.mubr.f32.gmra.mxu0 %v448
    %v739 = vpop.f32.mrf.mxu0
    %v740 = vadd.f32 0.0, %v739
    %v741 = vpop.f32.mrf.mxu0
    %742 = vmatprep.mubr.f32.mxu0 0.0
    %743 = vmatmul.mubr.f32.gmra.mxu0 %v451
    %v744 = vpop.f32.mrf.mxu0
    %v745 = vadd.f32 0.0, %v744
    %v746 = vpop.f32.mrf.mxu0
    %747 = vmatprep.mubr.f32.mxu0 0.0
    %748 = vmatmul.mubr.f32.gmra.mxu0 %v454
    %v749 = vpop.f32.mrf.mxu0
    %v750 = vadd.f32 0.0, %v749
    %v751 = vpop.f32.mrf.mxu0
    %752 = vmatprep.mubr.f32.mxu0 0.0
    %753 = vmatmul.mubr.f32.gmra.mxu0 %v457
    %v754 = vpop.f32.mrf.mxu0
    %v755 = vadd.f32 0.0, %v754
    %v756 = vpop.f32.mrf.mxu0
    %757 = vmatprep.mubr.f32.mxu0 0.0
    %758 = vmatmul.mubr.f32.gmra.mxu0 %v460
    %v759 = vpop.f32.mrf.mxu0
    %v760 = vadd.f32 0.0, %v759
    %v761 = vpop.f32.mrf.mxu0
    %762 = vmatprep.mubr.f32.mxu0 0.0
    %763 = vmatmul.mubr.f32.gmra.mxu0 %v463
    %v764 = vpop.f32.mrf.mxu0
    %v765 = vadd.f32 0.0, %v764
    %v766 = vpop.f32.mrf.mxu0
    %767 = vmatprep.mubr.f32.mxu0 0.0
    %768 = vmatmul.mubr.f32.gmra.mxu0 %v466
    %v769 = vpop.f32.mrf.mxu0
    %v770 = vadd.f32 0.0, %v769
    %v771 = vpop.f32.mrf.mxu0
    %772 = vmatprep.mubr.f32.mxu0 0.0
    %773 = vmatmul.mubr.f32.gmra.mxu0 %v469
    %v774 = vpop.f32.mrf.mxu0
    %v775 = vadd.f32 0.0, %v774
    %v776 = vpop.f32.mrf.mxu0
    %777 = vmatprep.mubr.f32.mxu0 0.0
    %778 = vmatmul.mubr.f32.gmra.mxu0 %v472
    %v779 = vpop.f32.mrf.mxu0
    %v780 = vadd.f32 0.0, %v779
    %v781 = vpop.f32.mrf.mxu0
    %782 = vmatprep.mubr.f32.mxu0 0.0
    %783 = vmatmul.mubr.f32.gmra.mxu0 %v475
    %v784 = vpop.f32.mrf.mxu0
    %v785 = vadd.f32 0.0, %v784
    %v786 = vpop.f32.mrf.mxu0
    %787 = vmatprep.mubr.f32.mxu0 0.0
    %788 = vmatmul.mubr.f32.gmra.mxu0 %v478
    %v789 = vpop.f32.mrf.mxu0
    %v790 = vadd.f32 0.0, %v789
    %v791 = vpop.f32.mrf.mxu0
    %792 = vmatprep.mubr.f32.mxu0 0.0
    %793 = vmatmul.mubr.f32.gmra.mxu0 %v481
    %v794 = vpop.f32.mrf.mxu0
    %v795 = vadd.f32 0.0, %v794
    %v796 = vpop.f32.mrf.mxu0
    %797 = vmatprep.mubr.f32.mxu0 0.0
    %798 = vmatmul.mubr.f32.gmra.mxu0 %v484
    %v799 = vpop.f32.mrf.mxu0
    %v800 = vadd.f32 0.0, %v799
    %v801 = vpop.f32.mrf.mxu0
    %802 = vmatprep.mubr.f32.mxu0 0.0
    %803 = vmatmul.mubr.f32.gmra.mxu0 %v487
    %v804 = vpop.f32.mrf.mxu0
    %v805 = vadd.f32 0.0, %v804
    %v806 = vpop.f32.mrf.mxu0
    %807 = vmatprep.mubr.f32.mxu0 0.0
    %808 = vmatmul.mubr.f32.gmra.mxu0 %v490
    %v809 = vpop.f32.mrf.mxu0
    %v810 = vadd.f32 0.0, %v809
    %v811 = vpop.f32.mrf.mxu0
    %812 = vmatprep.mubr.f32.mxu0 0.0
    %813 = vmatmul.mubr.f32.gmra.mxu0 %v493
    %v814 = vpop.f32.mrf.mxu0
    %v815 = vadd.f32 0.0, %v814
    %v816 = vpop.f32.mrf.mxu0
    %817 = vmatprep.mubr.f32.mxu0 0.0
    %818 = vmatmul.mubr.f32.gmra.mxu0 %v496
    %v819 = vpop.f32.mrf.mxu0
    %v820 = vadd.f32 0.0, %v819
    %v821 = vpop.f32.mrf.mxu0
    %822 = vmatprep.mubr.f32.mxu0 0.0
    %823 = vmatmul.mubr.f32.gmra.mxu0 %v499
    %v824 = vpop.f32.mrf.mxu0
    %v825 = vadd.f32 0.0, %v824
    %v826 = vpop.f32.mrf.mxu0
    %827 = vmatprep.mubr.f32.mxu0 0.0
    %828 = vmatmul.mubr.f32.gmra.mxu0 %v502
    %v829 = vpop.f32.mrf.mxu0
    %v830 = vadd.f32 0.0, %v829
    %v831 = vpop.f32.mrf.mxu0
    %832 = vmatprep.mubr.f32.mxu0 0.0
    %833 = vmatmul.mubr.f32.gmra.mxu0 %v505
    %v834 = vpop.f32.mrf.mxu0
    %v835 = vadd.f32 0.0, %v834
    %v836 = vpop.f32.mrf.mxu0
    %837 = vmatprep.mubr.f32.mxu0 0.0
    %838 = vmatmul.mubr.f32.gmra.mxu0 %v508
    %v839 = vpop.f32.mrf.mxu0
    %v840 = vadd.f32 0.0, %v839
    %v841 = vpop.f32.mrf.mxu0
    %842 = vmatprep.mubr.f32.mxu0 0.0
    %843 = vmatmul.mubr.f32.gmra.mxu0 %v511
    %v844 = vpop.f32.mrf.mxu0
    %v845 = vadd.f32 0.0, %v844
    %v846 = vpop.f32.mrf.mxu0
    %847 = vmatprep.mubr.f32.mxu0 0.0
    %848 = vmatmul.mubr.f32.gmra.mxu0 %v514
    %v849 = vpop.f32.mrf.mxu0
    %v850 = vadd.f32 0.0, %v849
    %v851 = vpop.f32.mrf.mxu0
    %852 = vmatprep.mubr.f32.mxu0 0.0
    %853 = vmatmul.mubr.f32.gmra.mxu0 %v517
    %v854 = vpop.f32.mrf.mxu0
    %v855 = vadd.f32 0.0, %v854
    %v856 = vpop.f32.mrf.mxu0
    %857 = vmatprep.mubr.f32.mxu0 0.0
    %858 = vmatmul.mubr.f32.gmra.mxu0 %v520
    %v859 = vpop.f32.mrf.mxu0
    %v860 = vadd.f32 0.0, %v859
    %v861 = vpop.f32.mrf.mxu0
    %862 = vmatprep.mubr.f32.mxu0 0.0
    %863 = vmatmul.mubr.f32.gmra.mxu0 %v523
    %v864 = vpop.f32.mrf.mxu0
    %v865 = vadd.f32 0.0, %v864
    %v866 = vpop.f32.mrf.mxu0
    %867 = vmatprep.mubr.f32.mxu0 0.0
    %868 = vmatmul.mubr.f32.gmra.mxu0 %v526
    %v869 = vpop.f32.mrf.mxu0
    %v870 = vadd.f32 0.0, %v869
    %v871 = vpop.f32.mrf.mxu0
    %872 = vmatprep.mubr.f32.mxu0 0.0
    %873 = vmatmul.mubr.f32.gmra.mxu0 %v529
    %v874 = vpop.f32.mrf.mxu0
    %v875 = vadd.f32 0.0, %v874
    %v876 = vpop.f32.mrf.mxu0
    %877 = vmatprep.mubr.f32.mxu0 0.0
    %878 = vmatmul.mubr.f32.gmra.mxu0 %v532
    %v879 = vpop.f32.mrf.mxu0
    %v880 = vadd.f32 0.0, %v879
    %v881 = vpop.f32.mrf.mxu0
    %882 = vmatprep.mubr.f32.mxu0 0.0
    %883 = vmatmul.mubr.f32.gmra.mxu0 %v535
    %v884 = vpop.f32.mrf.mxu0
    %v885 = vadd.f32 0.0, %v884
    %v886 = vpop.f32.mrf.mxu0
    %887 = vmatprep.mubr.f32.mxu0 0.0
    %888 = vmatmul.mubr.f32.gmra.mxu0 %v538
    %v889 = vpop.f32.mrf.mxu0
    %v890 = vadd.f32 0.0, %v889
    %v891 = vpop.f32.mrf.mxu0
    %892 = vmatprep.mubr.f32.mxu0 0.0
    %893 = vmatmul.mubr.f32.gmra.mxu0 %v541
    %v894 = vpop.f32.mrf.mxu0
    %v895 = vadd.f32 0.0, %v894
    %v896 = vpop.f32.mrf.mxu0
    %897 = vmatprep.mubr.f32.mxu0 0.0
    %898 = vmatmul.mubr.f32.gmra.mxu0 %v544
    %v899 = vpop.f32.mrf.mxu0
    %v900 = vadd.f32 0.0, %v899
    %v901 = vpop.f32.mrf.mxu0
    %902 = vmatprep.mubr.f32.mxu0 0.0
    %903 = vmatmul.mubr.f32.gmra.mxu0 %v547
    %v904 = vpop.f32.mrf.mxu0
    %v905 = vadd.f32 0.0, %v904
    %v906 = vpop.f32.mrf.mxu0
    %907 = vmatprep.mubr.f32.mxu0 0.0
    %908 = vmatmul.mubr.f32.gmra.mxu0 %v550
    %v909 = vpop.f32.mrf.mxu0
    %v910 = vadd.f32 0.0, %v909
    %v911 = vpop.f32.mrf.mxu0
    %912 = vmatprep.mubr.f32.mxu0 0.0
    %913 = vmatmul.mubr.f32.gmra.mxu0 %v553
    %v914 = vpop.f32.mrf.mxu0
    %v915 = vadd.f32 0.0, %v914
    %v916 = vpop.f32.mrf.mxu0
    %917 = vmatprep.mubr.f32.mxu0 0.0
    %918 = vmatmul.mubr.f32.gmra.mxu0 %v556
    %v919 = vpop.f32.mrf.mxu0
    %v920 = vadd.f32 0.0, %v919
    %v921 = vpop.f32.mrf.mxu0
    %922 = vmatprep.mubr.f32.mxu0 0.0
    %923 = vmatmul.mubr.f32.gmra.mxu0 %v559
    %v924 = vpop.f32.mrf.mxu0
    %v925 = vadd.f32 0.0, %v924
    %v926 = vpop.f32.mrf.mxu0
    %927 = vmatprep.mubr.f32.mxu0 0.0
    %928 = vmatmul.mubr.f32.gmra.mxu0 %v562
    %v929 = vpop.f32.mrf.mxu0
    %v930 = vadd.f32 0.0, %v929
    %v931 = vpop.f32.mrf.mxu0
    %932 = vmatprep.mubr.f32.mxu0 0.0
    %933 = vmatmul.mubr.f32.gmra.mxu0 %v565
    %v934 = vpop.f32.mrf.mxu0
    %v935 = vadd.f32 0.0, %v934
    %v936 = vpop.f32.mrf.mxu0
    %937 = vmatprep.mubr.f32.mxu0 0.0
    %938 = vmatmul.mubr.f32.gmra.mxu0 %v568
    %v939 = vpop.f32.mrf.mxu0
    %v940 = vadd.f32 0.0, %v939
    %v941 = vpop.f32.mrf.mxu0
    %942 = vmatprep.mubr.f32.mxu0 0.0
    %943 = vmatmul.mubr.f32.gmra.mxu0 %v571
    %v944 = vpop.f32.mrf.mxu0
    %v945 = vadd.f32 0.0, %v944
    %v946 = vpop.f32.mrf.mxu0
    %947 = vmatprep.mubr.f32.mxu0 0.0
    %948 = vmatmul.mubr.f32.gmra.mxu0 %v574
    %v949 = vpop.f32.mrf.mxu0
    %v950 = vadd.f32 0.0, %v949
    %v951 = vpop.f32.mrf.mxu0
    %952 = vmatprep.mubr.f32.mxu0 0.0
    %953 = vmatmul.mubr.f32.gmra.mxu0 %v577
    %v954 = vpop.f32.mrf.mxu0
    %v955 = vadd.f32 0.0, %v954
    %v956 = vpop.f32.mrf.mxu0
    %957 = vmatprep.mubr.f32.mxu0 0.0
    %958 = vmatmul.mubr.f32.gmra.mxu0 %v580
    %v959 = vpop.f32.mrf.mxu0
    %v960 = vadd.f32 0.0, %v959
    %v961 = vpop.f32.mrf.mxu0
    %962 = vmatprep.mubr.f32.mxu0 0.0
    %963 = vmatmul.mubr.f32.gmra.mxu0 %v583
    %v964 = vpop.f32.mrf.mxu0
    %v965 = vadd.f32 0.0, %v964
    %v966 = vpop.f32.mrf.mxu0
    %967 = vmatprep.mubr.f32.mxu0 0.0
    %968 = vmatmul.mubr.f32.gmra.mxu0 %v586
    %v969 = vpop.f32.mrf.mxu0
    %v970 = vadd.f32 0.0, %v969
    %v971 = vpop.f32.mrf.mxu0
    %972 = vmatprep.mubr.f32.mxu0 0.0
    %973 = vmatmul.mubr.f32.gmra.mxu0 %v589
    %v974 = vpop.f32.mrf.mxu0
    %v975 = vadd.f32 0.0, %v974
    %v976 = vpop.f32.mrf.mxu0
    %977 = vmatprep.mubr.f32.mxu0 0.0
    %978 = vmatmul.mubr.f32.gmra.mxu0 %v592
    %v979 = vpop.f32.mrf.mxu0
    %v980 = vadd.f32 0.0, %v979
    %v981 = vpop.f32.mrf.mxu0
    %982 = vdwg.mxu0
    %v984 = vsel %vm33, %v272, 0
    %v987 = vsel %vm33, %v273, 0
    %v990 = vsel %vm33, %v274, 0
    %v993 = vsel %vm33, %v275, 0
    %v996 = vsel %vm33, %v276, 0
    %v999 = vsel %vm33, %v277, 0
    %v1002 = vsel %vm33, %v278, 0
    %v1005 = vsel %vm33, %v279, 0
    %v1008 = vsel %vm33, %v280, 0
    %v1011 = vsel %vm33, %v281, 0
    %v1014 = vsel %vm33, %v282, 0
    %v1017 = vsel %vm33, %v283, 0
    %v1020 = vsel %vm33, %v284, 0
    %v1023 = vsel %vm33, %v285, 0
    %v1026 = vsel %vm33, %v286, 0
    %v1029 = vsel %vm33, %v287, 0
    %v1032 = vsel %vm33, %v288, 0
    %v1035 = vsel %vm33, %v289, 0
    %v1038 = vsel %vm33, %v290, 0
    %v1041 = vsel %vm33, %v291, 0
    %v1044 = vsel %vm33, %v292, 0
    %v1047 = vsel %vm33, %v293, 0
    %v1050 = vsel %vm33, %v294, 0
    %v1053 = vsel %vm33, %v295, 0
    %v1056 = vsel %vm33, %v296, 0
    %v1059 = vsel %vm33, %v297, 0
    %v1062 = vsel %vm33, %v298, 0
    %v1065 = vsel %vm33, %v299, 0
    %v1068 = vsel %vm33, %v300, 0
    %v1071 = vsel %vm33, %v301, 0
    %v1074 = vsel %vm33, %v302, 0
    %v1077 = vsel %vm33, %v303, 0
    %v1080 = vsel %vm33, %v304, 0
    %v1083 = vsel %vm33, %v305, 0
    %v1086 = vsel %vm33, %v306, 0
    %v1089 = vsel %vm33, %v307, 0
    %v1092 = vsel %vm33, %v308, 0
    %v1095 = vsel %vm33, %v309, 0
    %v1098 = vsel %vm33, %v310, 0
    %v1101 = vsel %vm33, %v311, 0
    %v1104 = vsel %vm33, %v312, 0
    %v1107 = vsel %vm33, %v313, 0
    %v1110 = vsel %vm33, %v314, 0
    %v1113 = vsel %vm33, %v315, 0
    %v1116 = vsel %vm33, %v316, 0
    %v1119 = vsel %vm33, %v317, 0
    %v1122 = vsel %vm33, %v318, 0
    %v1125 = vsel %vm33, %v319, 0
    %v1128 = vsel %vm33, %v320, 0
    %v1131 = vsel %vm33, %v321, 0
    %v1134 = vsel %vm33, %v322, 0
    %v1137 = vsel %vm33, %v323, 0
    %v1140 = vsel %vm33, %v324, 0
    %v1143 = vsel %vm33, %v325, 0
    %v1146 = vsel %vm33, %v326, 0
    %v1149 = vsel %vm33, %v327, 0
    %v1152 = vsel %vm33, %v328, 0
    %v1155 = vsel %vm33, %v329, 0
    %v1158 = vsel %vm33, %v330, 0
    %v1161 = vsel %vm33, %v331, 0
    %v1164 = vsel %vm33, %v332, 0
    %v1167 = vsel %vm33, %v333, 0
    %v1170 = vsel %vm33, %v334, 0
    %v1173 = vsel %vm33, %v335, 0
    %v1176 = vsel %vm594, %v336, 0
    %1178 = vmatprep.subr.mxu0 0.0
    %1179 = vmatpush1.msra.mxu0 0.0
    %1180 = vmatprep.subr.mxu0 0.0
    %1181 = vmatpush1.msra.mxu0 0.0
    %1182 = vmatprep.subr.mxu0 0.0
    %1183 = vmatpush1.msra.mxu0 0.0
    %1184 = vmatprep.subr.mxu0 0.0
    %1185 = vmatpush1.msra.mxu0 0.0
    %1186 = vmatprep.subr.mxu0 0.0
    %1187 = vmatpush1.msra.mxu0 0.0
    %1188 = vmatprep.subr.mxu0 0.0
    %1189 = vmatpush1.msra.mxu0 0.0
    %1190 = vmatprep.subr.mxu0 0.0
    %1191 = vmatpush1.msra.mxu0 0.0
    %1192 = vmatprep.subr.mxu0 0.0
    %1193 = vmatpush1.msra.mxu0 0.0
    %1194 = vmatprep.subr.mxu0 0.0
    %1195 = vmatpush1.msra.mxu0 0.0
    %1196 = vmatprep.subr.mxu0 0.0
    %1197 = vmatpush1.msra.mxu0 0.0
    %1198 = vmatprep.subr.mxu0 0.0
    %1199 = vmatpush1.msra.mxu0 0.0
    %1200 = vmatprep.subr.mxu0 0.0
    %1201 = vmatpush1.msra.mxu0 0.0
    %1202 = vmatprep.subr.mxu0 0.0
    %1203 = vmatpush1.msra.mxu0 0.0
    %1204 = vmatprep.subr.mxu0 0.0
    %1205 = vmatpush1.msra.mxu0 0.0
    %1206 = vmatprep.subr.mxu0 0.0
    %1207 = vmatpush1.msra.mxu0 0.0
    %1208 = vmatprep.subr.mxu0 0.0
    %1209 = vmatpush1.msra.mxu0 %v1176
    %1210 = vmatprep.subr.mxu0 0.0
    %1211 = vmatpush2.msra.mxu0 0.0
    %1212 = vmatprep.subr.mxu0 0.0
    %1213 = vmatpush2.msra.mxu0 0.0
    %1214 = vmatprep.subr.mxu0 0.0
    %1215 = vmatpush2.msra.mxu0 0.0
    %1216 = vmatprep.subr.mxu0 0.0
    %1217 = vmatpush2.msra.mxu0 0.0
    %1218 = vmatprep.subr.mxu0 0.0
    %1219 = vmatpush2.msra.mxu0 0.0
    %1220 = vmatprep.subr.mxu0 0.0
    %1221 = vmatpush2.msra.mxu0 0.0
    %1222 = vmatprep.subr.mxu0 0.0
    %1223 = vmatpush2.msra.mxu0 0.0
    %1224 = vmatprep.subr.mxu0 0.0
    %1225 = vmatpush2.msra.mxu0 0.0
    %1226 = vmatprep.subr.mxu0 0.0
    %1227 = vmatpush2.msra.mxu0 0.0
    %1228 = vmatprep.subr.mxu0 0.0
    %1229 = vmatpush2.msra.mxu0 0.0
    %1230 = vmatprep.subr.mxu0 0.0
    %1231 = vmatpush2.msra.mxu0 0.0
    %1232 = vmatprep.subr.mxu0 0.0
    %1233 = vmatpush2.msra.mxu0 0.0
    %1234 = vmatprep.subr.mxu0 0.0
    %1235 = vmatpush2.msra.mxu0 0.0
    %1236 = vmatprep.subr.mxu0 0.0
    %1237 = vmatpush2.msra.mxu0 0.0
    %1238 = vmatprep.subr.mxu0 0.0
    %1239 = vmatpush2.msra.mxu0 0.0
    %1240 = vmatprep.subr.mxu0 0.0
    %1241 = vmatpush2.msra.mxu0 0.0
    %1242 = vmatprep.mubr.f32.mxu0 0.0
    %1243 = vmatmul.mubr.f32.gmra.mxu0 %v984
    %v1244 = vpop.f32.mrf.mxu0
    %v1245 = vadd.f32 %v665, %v1244
    %v1246 = vpop.f32.mrf.mxu0
    %1247 = vmatprep.mubr.f32.mxu0 0.0
    %1248 = vmatmul.mubr.f32.gmra.mxu0 %v987
    %v1249 = vpop.f32.mrf.mxu0
    %v1250 = vadd.f32 %v670, %v1249
    %v1251 = vpop.f32.mrf.mxu0
    %1252 = vmatprep.mubr.f32.mxu0 0.0
    %1253 = vmatmul.mubr.f32.gmra.mxu0 %v990
    %v1254 = vpop.f32.mrf.mxu0
    %v1255 = vadd.f32 %v675, %v1254
    %v1256 = vpop.f32.mrf.mxu0
    %1257 = vmatprep.mubr.f32.mxu0 0.0
    %1258 = vmatmul.mubr.f32.gmra.mxu0 %v993
    %v1259 = vpop.f32.mrf.mxu0
    %v1260 = vadd.f32 %v680, %v1259
    %v1261 = vpop.f32.mrf.mxu0
    %1262 = vmatprep.mubr.f32.mxu0 0.0
    %1263 = vmatmul.mubr.f32.gmra.mxu0 %v996
    %v1264 = vpop.f32.mrf.mxu0
    %v1265 = vadd.f32 %v685, %v1264
    %v1266 = vpop.f32.mrf.mxu0
    %1267 = vmatprep.mubr.f32.mxu0 0.0
    %1268 = vmatmul.mubr.f32.gmra.mxu0 %v999
    %v1269 = vpop.f32.mrf.mxu0
    %v1270 = vadd.f32 %v690, %v1269
    %v1271 = vpop.f32.mrf.mxu0
    %1272 = vmatprep.mubr.f32.mxu0 0.0
    %1273 = vmatmul.mubr.f32.gmra.mxu0 %v1002
    %v1274 = vpop.f32.mrf.mxu0
    %v1275 = vadd.f32 %v695, %v1274
    %v1276 = vpop.f32.mrf.mxu0
    %1277 = vmatprep.mubr.f32.mxu0 0.0
    %1278 = vmatmul.mubr.f32.gmra.mxu0 %v1005
    %v1279 = vpop.f32.mrf.mxu0
    %v1280 = vadd.f32 %v700, %v1279
    %v1281 = vpop.f32.mrf.mxu0
    %1282 = vmatprep.mubr.f32.mxu0 0.0
    %1283 = vmatmul.mubr.f32.gmra.mxu0 %v1008
    %v1284 = vpop.f32.mrf.mxu0
    %v1285 = vadd.f32 %v705, %v1284
    %v1286 = vpop.f32.mrf.mxu0
    %1287 = vmatprep.mubr.f32.mxu0 0.0
    %1288 = vmatmul.mubr.f32.gmra.mxu0 %v1011
    %v1289 = vpop.f32.mrf.mxu0
    %v1290 = vadd.f32 %v710, %v1289
    %v1291 = vpop.f32.mrf.mxu0
    %1292 = vmatprep.mubr.f32.mxu0 0.0
    %1293 = vmatmul.mubr.f32.gmra.mxu0 %v1014
    %v1294 = vpop.f32.mrf.mxu0
    %v1295 = vadd.f32 %v715, %v1294
    %v1296 = vpop.f32.mrf.mxu0
    %1297 = vmatprep.mubr.f32.mxu0 0.0
    %1298 = vmatmul.mubr.f32.gmra.mxu0 %v1017
    %v1299 = vpop.f32.mrf.mxu0
    %v1300 = vadd.f32 %v720, %v1299
    %v1301 = vpop.f32.mrf.mxu0
    %1302 = vmatprep.mubr.f32.mxu0 0.0
    %1303 = vmatmul.mubr.f32.gmra.mxu0 %v1020
    %v1304 = vpop.f32.mrf.mxu0
    %v1305 = vadd.f32 %v725, %v1304
    %v1306 = vpop.f32.mrf.mxu0
    %1307 = vmatprep.mubr.f32.mxu0 0.0
    %1308 = vmatmul.mubr.f32.gmra.mxu0 %v1023
    %v1309 = vpop.f32.mrf.mxu0
    %v1310 = vadd.f32 %v730, %v1309
    %v1311 = vpop.f32.mrf.mxu0
    %1312 = vmatprep.mubr.f32.mxu0 0.0
    %1313 = vmatmul.mubr.f32.gmra.mxu0 %v1026
    %v1314 = vpop.f32.mrf.mxu0
    %v1315 = vadd.f32 %v735, %v1314
    %v1316 = vpop.f32.mrf.mxu0
    %1317 = vmatprep.mubr.f32.mxu0 0.0
    %1318 = vmatmul.mubr.f32.gmra.mxu0 %v1029
    %v1319 = vpop.f32.mrf.mxu0
    %v1320 = vadd.f32 %v740, %v1319
    %v1321 = vpop.f32.mrf.mxu0
    %1322 = vmatprep.mubr.f32.mxu0 0.0
    %1323 = vmatmul.mubr.f32.gmra.mxu0 %v1032
    %v1324 = vpop.f32.mrf.mxu0
    %v1325 = vadd.f32 %v745, %v1324
    %v1326 = vpop.f32.mrf.mxu0
    %1327 = vmatprep.mubr.f32.mxu0 0.0
    %1328 = vmatmul.mubr.f32.gmra.mxu0 %v1035
    %v1329 = vpop.f32.mrf.mxu0
    %v1330 = vadd.f32 %v750, %v1329
    %v1331 = vpop.f32.mrf.mxu0
    %1332 = vmatprep.mubr.f32.mxu0 0.0
    %1333 = vmatmul.mubr.f32.gmra.mxu0 %v1038
    %v1334 = vpop.f32.mrf.mxu0
    %v1335 = vadd.f32 %v755, %v1334
    %v1336 = vpop.f32.mrf.mxu0
    %1337 = vmatprep.mubr.f32.mxu0 0.0
    %1338 = vmatmul.mubr.f32.gmra.mxu0 %v1041
    %v1339 = vpop.f32.mrf.mxu0
    %v1340 = vadd.f32 %v760, %v1339
    %v1341 = vpop.f32.mrf.mxu0
    %1342 = vmatprep.mubr.f32.mxu0 0.0
    %1343 = vmatmul.mubr.f32.gmra.mxu0 %v1044
    %v1344 = vpop.f32.mrf.mxu0
    %v1345 = vadd.f32 %v765, %v1344
    %v1346 = vpop.f32.mrf.mxu0
    %1347 = vmatprep.mubr.f32.mxu0 0.0
    %1348 = vmatmul.mubr.f32.gmra.mxu0 %v1047
    %v1349 = vpop.f32.mrf.mxu0
    %v1350 = vadd.f32 %v770, %v1349
    %v1351 = vpop.f32.mrf.mxu0
    %1352 = vmatprep.mubr.f32.mxu0 0.0
    %1353 = vmatmul.mubr.f32.gmra.mxu0 %v1050
    %v1354 = vpop.f32.mrf.mxu0
    %v1355 = vadd.f32 %v775, %v1354
    %v1356 = vpop.f32.mrf.mxu0
    %1357 = vmatprep.mubr.f32.mxu0 0.0
    %1358 = vmatmul.mubr.f32.gmra.mxu0 %v1053
    %v1359 = vpop.f32.mrf.mxu0
    %v1360 = vadd.f32 %v780, %v1359
    %v1361 = vpop.f32.mrf.mxu0
    %1362 = vmatprep.mubr.f32.mxu0 0.0
    %1363 = vmatmul.mubr.f32.gmra.mxu0 %v1056
    %v1364 = vpop.f32.mrf.mxu0
    %v1365 = vadd.f32 %v785, %v1364
    %v1366 = vpop.f32.mrf.mxu0
    %1367 = vmatprep.mubr.f32.mxu0 0.0
    %1368 = vmatmul.mubr.f32.gmra.mxu0 %v1059
    %v1369 = vpop.f32.mrf.mxu0
    %v1370 = vadd.f32 %v790, %v1369
    %v1371 = vpop.f32.mrf.mxu0
    %1372 = vmatprep.mubr.f32.mxu0 0.0
    %1373 = vmatmul.mubr.f32.gmra.mxu0 %v1062
    %v1374 = vpop.f32.mrf.mxu0
    %v1375 = vadd.f32 %v795, %v1374
    %v1376 = vpop.f32.mrf.mxu0
    %1377 = vmatprep.mubr.f32.mxu0 0.0
    %1378 = vmatmul.mubr.f32.gmra.mxu0 %v1065
    %v1379 = vpop.f32.mrf.mxu0
    %v1380 = vadd.f32 %v800, %v1379
    %v1381 = vpop.f32.mrf.mxu0
    %1382 = vmatprep.mubr.f32.mxu0 0.0
    %1383 = vmatmul.mubr.f32.gmra.mxu0 %v1068
    %v1384 = vpop.f32.mrf.mxu0
    %v1385 = vadd.f32 %v805, %v1384
    %v1386 = vpop.f32.mrf.mxu0
    %1387 = vmatprep.mubr.f32.mxu0 0.0
    %1388 = vmatmul.mubr.f32.gmra.mxu0 %v1071
    %v1389 = vpop.f32.mrf.mxu0
    %v1390 = vadd.f32 %v810, %v1389
    %v1391 = vpop.f32.mrf.mxu0
    %1392 = vmatprep.mubr.f32.mxu0 0.0
    %1393 = vmatmul.mubr.f32.gmra.mxu0 %v1074
    %v1394 = vpop.f32.mrf.mxu0
    %v1395 = vadd.f32 %v815, %v1394
    %v1396 = vpop.f32.mrf.mxu0
    %1397 = vmatprep.mubr.f32.mxu0 0.0
    %1398 = vmatmul.mubr.f32.gmra.mxu0 %v1077
    %v1399 = vpop.f32.mrf.mxu0
    %v1400 = vadd.f32 %v820, %v1399
    %v1401 = vpop.f32.mrf.mxu0
    %1402 = vmatprep.mubr.f32.mxu0 0.0
    %1403 = vmatmul.mubr.f32.gmra.mxu0 %v1080
    %v1404 = vpop.f32.mrf.mxu0
    %v1405 = vadd.f32 %v825, %v1404
    %v1406 = vpop.f32.mrf.mxu0
    %1407 = vmatprep.mubr.f32.mxu0 0.0
    %1408 = vmatmul.mubr.f32.gmra.mxu0 %v1083
    %v1409 = vpop.f32.mrf.mxu0
    %v1410 = vadd.f32 %v830, %v1409
    %v1411 = vpop.f32.mrf.mxu0
    %1412 = vmatprep.mubr.f32.mxu0 0.0
    %1413 = vmatmul.mubr.f32.gmra.mxu0 %v1086
    %v1414 = vpop.f32.mrf.mxu0
    %v1415 = vadd.f32 %v835, %v1414
    %v1416 = vpop.f32.mrf.mxu0
    %1417 = vmatprep.mubr.f32.mxu0 0.0
    %1418 = vmatmul.mubr.f32.gmra.mxu0 %v1089
    %v1419 = vpop.f32.mrf.mxu0
    %v1420 = vadd.f32 %v840, %v1419
    %v1421 = vpop.f32.mrf.mxu0
    %1422 = vmatprep.mubr.f32.mxu0 0.0
    %1423 = vmatmul.mubr.f32.gmra.mxu0 %v1092
    %v1424 = vpop.f32.mrf.mxu0
    %v1425 = vadd.f32 %v845, %v1424
    %v1426 = vpop.f32.mrf.mxu0
    %1427 = vmatprep.mubr.f32.mxu0 0.0
    %1428 = vmatmul.mubr.f32.gmra.mxu0 %v1095
    %v1429 = vpop.f32.mrf.mxu0
    %v1430 = vadd.f32 %v850, %v1429
    %v1431 = vpop.f32.mrf.mxu0
    %1432 = vmatprep.mubr.f32.mxu0 0.0
    %1433 = vmatmul.mubr.f32.gmra.mxu0 %v1098
    %v1434 = vpop.f32.mrf.mxu0
    %v1435 = vadd.f32 %v855, %v1434
    %v1436 = vpop.f32.mrf.mxu0
    %1437 = vmatprep.mubr.f32.mxu0 0.0
    %1438 = vmatmul.mubr.f32.gmra.mxu0 %v1101
    %v1439 = vpop.f32.mrf.mxu0
    %v1440 = vadd.f32 %v860, %v1439
    %v1441 = vpop.f32.mrf.mxu0
    %1442 = vmatprep.mubr.f32.mxu0 0.0
    %1443 = vmatmul.mubr.f32.gmra.mxu0 %v1104
    %v1444 = vpop.f32.mrf.mxu0
    %v1445 = vadd.f32 %v865, %v1444
    %v1446 = vpop.f32.mrf.mxu0
    %1447 = vmatprep.mubr.f32.mxu0 0.0
    %1448 = vmatmul.mubr.f32.gmra.mxu0 %v1107
    %v1449 = vpop.f32.mrf.mxu0
    %v1450 = vadd.f32 %v870, %v1449
    %v1451 = vpop.f32.mrf.mxu0
    %1452 = vmatprep.mubr.f32.mxu0 0.0
    %1453 = vmatmul.mubr.f32.gmra.mxu0 %v1110
    %v1454 = vpop.f32.mrf.mxu0
    %v1455 = vadd.f32 %v875, %v1454
    %v1456 = vpop.f32.mrf.mxu0
    %1457 = vmatprep.mubr.f32.mxu0 0.0
    %1458 = vmatmul.mubr.f32.gmra.mxu0 %v1113
    %v1459 = vpop.f32.mrf.mxu0
    %v1460 = vadd.f32 %v880, %v1459
    %v1461 = vpop.f32.mrf.mxu0
    %1462 = vmatprep.mubr.f32.mxu0 0.0
    %1463 = vmatmul.mubr.f32.gmra.mxu0 %v1116
    %v1464 = vpop.f32.mrf.mxu0
    %v1465 = vadd.f32 %v885, %v1464
    %v1466 = vpop.f32.mrf.mxu0
    %1467 = vmatprep.mubr.f32.mxu0 0.0
    %1468 = vmatmul.mubr.f32.gmra.mxu0 %v1119
    %v1469 = vpop.f32.mrf.mxu0
    %v1470 = vadd.f32 %v890, %v1469
    %v1471 = vpop.f32.mrf.mxu0
    %1472 = vmatprep.mubr.f32.mxu0 0.0
    %1473 = vmatmul.mubr.f32.gmra.mxu0 %v1122
    %v1474 = vpop.f32.mrf.mxu0
    %v1475 = vadd.f32 %v895, %v1474
    %v1476 = vpop.f32.mrf.mxu0
    %1477 = vmatprep.mubr.f32.mxu0 0.0
    %1478 = vmatmul.mubr.f32.gmra.mxu0 %v1125
    %v1479 = vpop.f32.mrf.mxu0
    %v1480 = vadd.f32 %v900, %v1479
    %v1481 = vpop.f32.mrf.mxu0
    %1482 = vmatprep.mubr.f32.mxu0 0.0
    %1483 = vmatmul.mubr.f32.gmra.mxu0 %v1128
    %v1484 = vpop.f32.mrf.mxu0
    %v1485 = vadd.f32 %v905, %v1484
    %v1486 = vpop.f32.mrf.mxu0
    %1487 = vmatprep.mubr.f32.mxu0 0.0
    %1488 = vmatmul.mubr.f32.gmra.mxu0 %v1131
    %v1489 = vpop.f32.mrf.mxu0
    %v1490 = vadd.f32 %v910, %v1489
    %v1491 = vpop.f32.mrf.mxu0
    %1492 = vmatprep.mubr.f32.mxu0 0.0
    %1493 = vmatmul.mubr.f32.gmra.mxu0 %v1134
    %v1494 = vpop.f32.mrf.mxu0
    %v1495 = vadd.f32 %v915, %v1494
    %v1496 = vpop.f32.mrf.mxu0
    %1497 = vmatprep.mubr.f32.mxu0 0.0
    %1498 = vmatmul.mubr.f32.gmra.mxu0 %v1137
    %v1499 = vpop.f32.mrf.mxu0
    %v1500 = vadd.f32 %v920, %v1499
    %v1501 = vpop.f32.mrf.mxu0
    %1502 = vmatprep.mubr.f32.mxu0 0.0
    %1503 = vmatmul.mubr.f32.gmra.mxu0 %v1140
    %v1504 = vpop.f32.mrf.mxu0
    %v1505 = vadd.f32 %v925, %v1504
    %v1506 = vpop.f32.mrf.mxu0
    %1507 = vmatprep.mubr.f32.mxu0 0.0
    %1508 = vmatmul.mubr.f32.gmra.mxu0 %v1143
    %v1509 = vpop.f32.mrf.mxu0
    %v1510 = vadd.f32 %v930, %v1509
    %v1511 = vpop.f32.mrf.mxu0
    %1512 = vmatprep.mubr.f32.mxu0 0.0
    %1513 = vmatmul.mubr.f32.gmra.mxu0 %v1146
    %v1514 = vpop.f32.mrf.mxu0
    %v1515 = vadd.f32 %v935, %v1514
    %v1516 = vpop.f32.mrf.mxu0
    %1517 = vmatprep.mubr.f32.mxu0 0.0
    %1518 = vmatmul.mubr.f32.gmra.mxu0 %v1149
    %v1519 = vpop.f32.mrf.mxu0
    %v1520 = vadd.f32 %v940, %v1519
    %v1521 = vpop.f32.mrf.mxu0
    %1522 = vmatprep.mubr.f32.mxu0 0.0
    %1523 = vmatmul.mubr.f32.gmra.mxu0 %v1152
    %v1524 = vpop.f32.mrf.mxu0
    %v1525 = vadd.f32 %v945, %v1524
    %v1526 = vpop.f32.mrf.mxu0
    %1527 = vmatprep.mubr.f32.mxu0 0.0
    %1528 = vmatmul.mubr.f32.gmra.mxu0 %v1155
    %v1529 = vpop.f32.mrf.mxu0
    %v1530 = vadd.f32 %v950, %v1529
    %v1531 = vpop.f32.mrf.mxu0
    %1532 = vmatprep.mubr.f32.mxu0 0.0
    %1533 = vmatmul.mubr.f32.gmra.mxu0 %v1158
    %v1534 = vpop.f32.mrf.mxu0
    %v1535 = vadd.f32 %v955, %v1534
    %v1536 = vpop.f32.mrf.mxu0
    %1537 = vmatprep.mubr.f32.mxu0 0.0
    %1538 = vmatmul.mubr.f32.gmra.mxu0 %v1161
    %v1539 = vpop.f32.mrf.mxu0
    %v1540 = vadd.f32 %v960, %v1539
    %v1541 = vpop.f32.mrf.mxu0
    %1542 = vmatprep.mubr.f32.mxu0 0.0
    %1543 = vmatmul.mubr.f32.gmra.mxu0 %v1164
    %v1544 = vpop.f32.mrf.mxu0
    %v1545 = vadd.f32 %v965, %v1544
    %v1546 = vpop.f32.mrf.mxu0
    %1547 = vmatprep.mubr.f32.mxu0 0.0
    %1548 = vmatmul.mubr.f32.gmra.mxu0 %v1167
    %v1549 = vpop.f32.mrf.mxu0
    %v1550 = vadd.f32 %v970, %v1549
    %v1551 = vpop.f32.mrf.mxu0
    %1552 = vmatprep.mubr.f32.mxu0 0.0
    %1553 = vmatmul.mubr.f32.gmra.mxu0 %v1170
    %v1554 = vpop.f32.mrf.mxu0
    %v1555 = vadd.f32 %v975, %v1554
    %v1556 = vpop.f32.mrf.mxu0
    %1557 = vmatprep.mubr.f32.mxu0 0.0
    %1558 = vmatmul.mubr.f32.gmra.mxu0 %v1173
    %v1559 = vpop.f32.mrf.mxu0
    %v1560 = vadd.f32 %v980, %v1559
    %v1561 = vpop.f32.mrf.mxu0
    %1562 = vdwg.mxu0
    %v1563 = vld [vmem:[#allocation2 + $0x2] sm:$0xff]
    %v1564 = vld [vmem:[#allocation2 + $0xa] sm:$0xff]
    %v1565 = vld [vmem:[#allocation2 + $0x1a] sm:$0xff]
    %v1566 = vld [vmem:[#allocation2 + $0x22] sm:$0xff]
    %v1567 = vld [vmem:[#allocation2 + $0x32] sm:$0xff]
    %v1568 = vld [vmem:[#allocation2 + $0x3a] sm:$0xff]
    %v1569 = vld [vmem:[#allocation2 + $0x4a] sm:$0xff]
    %v1570 = vld [vmem:[#allocation2 + $0x52] sm:$0xff]
    %v1571 = vld [vmem:[#allocation2 + $0x62] sm:$0xff]
    %v1572 = vld [vmem:[#allocation2 + $0x6a] sm:$0xff]
    %v1573 = vld [vmem:[#allocation2 + $0x7a] sm:$0xff]
    %v1574 = vld [vmem:[#allocation2 + $0x82] sm:$0xff]
    %v1575 = vld [vmem:[#allocation2 + $0x92] sm:$0xff]
    %v1576 = vld [vmem:[#allocation2 + $0x9a] sm:$0xff]
    %v1577 = vld [vmem:[#allocation2 + $0xaa] sm:$0xff]
    %v1578 = vld [vmem:[#allocation2 + $0xb2] sm:$0xff]
    %v1579 = vld [vmem:[#allocation2 + $0xc2] sm:$0xff]
    %v1580 = vld [vmem:[#allocation2 + $0xca] sm:$0xff]
    %v1581 = vld [vmem:[#allocation2 + $0xda] sm:$0xff]
    %v1582 = vld [vmem:[#allocation2 + $0xe2] sm:$0xff]
    %v1583 = vld [vmem:[#allocation2 + $0xf2] sm:$0xff]
    %v1584 = vld [vmem:[#allocation2 + $0xfa] sm:$0xff]
    %v1585 = vld [vmem:[#allocation2 + $0x10a] sm:$0xff]
    %v1586 = vld [vmem:[#allocation2 + $0x112] sm:$0xff]
    %v1587 = vld [vmem:[#allocation2 + $0x122] sm:$0xff]
    %v1588 = vld [vmem:[#allocation2 + $0x12a] sm:$0xff]
    %v1589 = vld [vmem:[#allocation2 + $0x13a] sm:$0xff]
    %v1590 = vld [vmem:[#allocation2 + $0x142] sm:$0xff]
    %v1591 = vld [vmem:[#allocation2 + $0x152] sm:$0xff]
    %v1592 = vld [vmem:[#allocation2 + $0x15a] sm:$0xff]
    %v1593 = vld [vmem:[#allocation2 + $0x16a] sm:$0xff]
    %v1594 = vld [vmem:[#allocation2 + $0x172] sm:$0xff]
    %v1595 = vld [vmem:[#allocation2 + $0x1b2] sm:$0xff]
    %v1596 = vld [vmem:[#allocation2 + $0x1ba] sm:$0xff]
    %v1597 = vld [vmem:[#allocation2 + $0x1ca] sm:$0xff]
    %v1598 = vld [vmem:[#allocation2 + $0x1d2] sm:$0xff]
    %v1599 = vld [vmem:[#allocation2 + $0x1e2] sm:$0xff]
    %v1600 = vld [vmem:[#allocation2 + $0x1ea] sm:$0xff]
    %v1601 = vld [vmem:[#allocation2 + $0x1fa] sm:$0xff]
    %v1602 = vld [vmem:[#allocation2 + $0x202] sm:$0xff]
    %v1603 = vld [vmem:[#allocation2 + $0x212] sm:$0xff]
    %v1604 = vld [vmem:[#allocation2 + $0x21a] sm:$0xff]
    %v1605 = vld [vmem:[#allocation2 + $0x22a] sm:$0xff]
    %v1606 = vld [vmem:[#allocation2 + $0x232] sm:$0xff]
    %v1607 = vld [vmem:[#allocation2 + $0x242] sm:$0xff]
    %v1608 = vld [vmem:[#allocation2 + $0x24a] sm:$0xff]
    %v1609 = vld [vmem:[#allocation2 + $0x25a] sm:$0xff]
    %v1610 = vld [vmem:[#allocation2 + $0x262] sm:$0xff]
    %v1611 = vld [vmem:[#allocation2 + $0x272] sm:$0xff]
    %v1612 = vld [vmem:[#allocation2 + $0x27a] sm:$0xff]
    %v1613 = vld [vmem:[#allocation2 + $0x28a] sm:$0xff]
    %v1614 = vld [vmem:[#allocation2 + $0x292] sm:$0xff]
    %v1615 = vld [vmem:[#allocation2 + $0x2a2] sm:$0xff]
    %v1616 = vld [vmem:[#allocation2 + $0x2aa] sm:$0xff]
    %v1617 = vld [vmem:[#allocation2 + $0x2ba] sm:$0xff]
    %v1618 = vld [vmem:[#allocation2 + $0x2c2] sm:$0xff]
    %v1619 = vld [vmem:[#allocation2 + $0x2d2] sm:$0xff]
    %v1620 = vld [vmem:[#allocation2 + $0x2da] sm:$0xff]
    %v1621 = vld [vmem:[#allocation2 + $0x2ea] sm:$0xff]
    %v1622 = vld [vmem:[#allocation2 + $0x2f2] sm:$0xff]
    %v1623 = vld [vmem:[#allocation2 + $0x302] sm:$0xff]
    %v1624 = vld [vmem:[#allocation2 + $0x30a] sm:$0xff]
    %v1625 = vld [vmem:[#allocation2 + $0x31a] sm:$0xff]
    %v1626 = vld [vmem:[#allocation2 + $0x322] sm:$0xff]
    %v1627 = vld [vmem:[%s1 + $0x6] sm:$0x7]
    %v1629 = vsel %vm33, %v1563, 0
    %v1632 = vsel %vm33, %v1564, 0
    %v1635 = vsel %vm33, %v1565, 0
    %v1638 = vsel %vm33, %v1566, 0
    %v1641 = vsel %vm33, %v1567, 0
    %v1644 = vsel %vm33, %v1568, 0
    %v1647 = vsel %vm33, %v1569, 0
    %v1650 = vsel %vm33, %v1570, 0
    %v1653 = vsel %vm33, %v1571, 0
    %v1656 = vsel %vm33, %v1572, 0
    %v1659 = vsel %vm33, %v1573, 0
    %v1662 = vsel %vm33, %v1574, 0
    %v1665 = vsel %vm33, %v1575, 0
    %v1668 = vsel %vm33, %v1576, 0
    %v1671 = vsel %vm33, %v1577, 0
    %v1674 = vsel %vm33, %v1578, 0
    %v1677 = vsel %vm33, %v1579, 0
    %v1680 = vsel %vm33, %v1580, 0
    %v1683 = vsel %vm33, %v1581, 0
    %v1686 = vsel %vm33, %v1582, 0
    %v1689 = vsel %vm33, %v1583, 0
    %v1692 = vsel %vm33, %v1584, 0
    %v1695 = vsel %vm33, %v1585, 0
    %v1698 = vsel %vm33, %v1586, 0
    %v1701 = vsel %vm33, %v1587, 0
    %v1704 = vsel %vm33, %v1588, 0
    %v1707 = vsel %vm33, %v1589, 0
    %v1710 = vsel %vm33, %v1590, 0
    %v1713 = vsel %vm33, %v1591, 0
    %v1716 = vsel %vm33, %v1592, 0
    %v1719 = vsel %vm33, %v1593, 0
    %v1722 = vsel %vm33, %v1594, 0
    %v1725 = vsel %vm33, %v1595, 0
    %v1728 = vsel %vm33, %v1596, 0
    %v1731 = vsel %vm33, %v1597, 0
    %v1734 = vsel %vm33, %v1598, 0
    %v1737 = vsel %vm33, %v1599, 0
    %v1740 = vsel %vm33, %v1600, 0
    %v1743 = vsel %vm33, %v1601, 0
    %v1746 = vsel %vm33, %v1602, 0
    %v1749 = vsel %vm33, %v1603, 0
    %v1752 = vsel %vm33, %v1604, 0
    %v1755 = vsel %vm33, %v1605, 0
    %v1758 = vsel %vm33, %v1606, 0
    %v1761 = vsel %vm33, %v1607, 0
    %v1764 = vsel %vm33, %v1608, 0
    %v1767 = vsel %vm33, %v1609, 0
    %v1770 = vsel %vm33, %v1610, 0
    %v1773 = vsel %vm33, %v1611, 0
    %v1776 = vsel %vm33, %v1612, 0
    %v1779 = vsel %vm33, %v1613, 0
    %v1782 = vsel %vm33, %v1614, 0
    %v1785 = vsel %vm33, %v1615, 0
    %v1788 = vsel %vm33, %v1616, 0
    %v1791 = vsel %vm33, %v1617, 0
    %v1794 = vsel %vm33, %v1618, 0
    %v1797 = vsel %vm33, %v1619, 0
    %v1800 = vsel %vm33, %v1620, 0
    %v1803 = vsel %vm33, %v1621, 0
    %v1806 = vsel %vm33, %v1622, 0
    %v1809 = vsel %vm33, %v1623, 0
    %v1812 = vsel %vm33, %v1624, 0
    %v1815 = vsel %vm33, %v1625, 0
    %v1818 = vsel %vm33, %v1626, 0
    %v1821 = vsel %vm594, %v1627, 0
    %1823 = vmatprep.subr.mxu0 0.0
    %1824 = vmatpush1.msra.mxu0 0.0
    %1825 = vmatprep.subr.mxu0 0.0
    %1826 = vmatpush1.msra.mxu0 0.0
    %1827 = vmatprep.subr.mxu0 0.0
    %1828 = vmatpush1.msra.mxu0 0.0
    %1829 = vmatprep.subr.mxu0 0.0
    %1830 = vmatpush1.msra.mxu0 0.0
    %1831 = vmatprep.subr.mxu0 0.0
    %1832 = vmatpush1.msra.mxu0 0.0
    %1833 = vmatprep.subr.mxu0 0.0
    %1834 = vmatpush1.msra.mxu0 0.0
    %1835 = vmatprep.subr.mxu0 0.0
    %1836 = vmatpush1.msra.mxu0 0.0
    %1837 = vmatprep.subr.mxu0 0.0
    %1838 = vmatpush1.msra.mxu0 0.0
    %1839 = vmatprep.subr.mxu0 0.0
    %1840 = vmatpush1.msra.mxu0 0.0
    %1841 = vmatprep.subr.mxu0 0.0
    %1842 = vmatpush1.msra.mxu0 0.0
    %1843 = vmatprep.subr.mxu0 0.0
    %1844 = vmatpush1.msra.mxu0 0.0
    %1845 = vmatprep.subr.mxu0 0.0
    %1846 = vmatpush1.msra.mxu0 0.0
    %1847 = vmatprep.subr.mxu0 0.0
    %1848 = vmatpush1.msra.mxu0 0.0
    %1849 = vmatprep.subr.mxu0 0.0
    %1850 = vmatpush1.msra.mxu0 0.0
    %1851 = vmatprep.subr.mxu0 0.0
    %1852 = vmatpush1.msra.mxu0 0.0
    %1853 = vmatprep.subr.mxu0 0.0
    %1854 = vmatpush1.msra.mxu0 %v1821
    %1855 = vmatprep.subr.mxu0 0.0
    %1856 = vmatpush2.msra.mxu0 0.0
    %1857 = vmatprep.subr.mxu0 0.0
    %1858 = vmatpush2.msra.mxu0 0.0
    %1859 = vmatprep.subr.mxu0 0.0
    %1860 = vmatpush2.msra.mxu0 0.0
    %1861 = vmatprep.subr.mxu0 0.0
    %1862 = vmatpush2.msra.mxu0 0.0
    %1863 = vmatprep.subr.mxu0 0.0
    %1864 = vmatpush2.msra.mxu0 0.0
    %1865 = vmatprep.subr.mxu0 0.0
    %1866 = vmatpush2.msra.mxu0 0.0
    %1867 = vmatprep.subr.mxu0 0.0
    %1868 = vmatpush2.msra.mxu0 0.0
    %1869 = vmatprep.subr.mxu0 0.0
    %1870 = vmatpush2.msra.mxu0 0.0
    %1871 = vmatprep.subr.mxu0 0.0
    %1872 = vmatpush2.msra.mxu0 0.0
    %1873 = vmatprep.subr.mxu0 0.0
    %1874 = vmatpush2.msra.mxu0 0.0
    %1875 = vmatprep.subr.mxu0 0.0
    %1876 = vmatpush2.msra.mxu0 0.0
    %1877 = vmatprep.subr.mxu0 0.0
    %1878 = vmatpush2.msra.mxu0 0.0
    %1879 = vmatprep.subr.mxu0 0.0
    %1880 = vmatpush2.msra.mxu0 0.0
    %1881 = vmatprep.subr.mxu0 0.0
    %1882 = vmatpush2.msra.mxu0 0.0
    %1883 = vmatprep.subr.mxu0 0.0
    %1884 = vmatpush2.msra.mxu0 0.0
    %1885 = vmatprep.subr.mxu0 0.0
    %1886 = vmatpush2.msra.mxu0 0.0
    %1887 = vmatprep.mubr.f32.mxu0 0.0
    %1888 = vmatmul.mubr.f32.gmra.mxu0 %v1629
    %v1889 = vpop.f32.mrf.mxu0
    %v1890 = vadd.f32 0.0, %v1889
    %v1891 = vpop.f32.mrf.mxu0
    %1892 = vmatprep.mubr.f32.mxu0 0.0
    %1893 = vmatmul.mubr.f32.gmra.mxu0 %v1632
    %v1894 = vpop.f32.mrf.mxu0
    %v1895 = vadd.f32 0.0, %v1894
    %v1896 = vpop.f32.mrf.mxu0
    %1897 = vmatprep.mubr.f32.mxu0 0.0
    %1898 = vmatmul.mubr.f32.gmra.mxu0 %v1635
    %v1899 = vpop.f32.mrf.mxu0
    %v1900 = vadd.f32 0.0, %v1899
    %v1901 = vpop.f32.mrf.mxu0
    %1902 = vmatprep.mubr.f32.mxu0 0.0
    %1903 = vmatmul.mubr.f32.gmra.mxu0 %v1638
    %v1904 = vpop.f32.mrf.mxu0
    %v1905 = vadd.f32 0.0, %v1904
    %v1906 = vpop.f32.mrf.mxu0
    %1907 = vmatprep.mubr.f32.mxu0 0.0
    %1908 = vmatmul.mubr.f32.gmra.mxu0 %v1641
    %v1909 = vpop.f32.mrf.mxu0
    %v1910 = vadd.f32 0.0, %v1909
    %v1911 = vpop.f32.mrf.mxu0
    %1912 = vmatprep.mubr.f32.mxu0 0.0
    %1913 = vmatmul.mubr.f32.gmra.mxu0 %v1644
    %v1914 = vpop.f32.mrf.mxu0
    %v1915 = vadd.f32 0.0, %v1914
    %v1916 = vpop.f32.mrf.mxu0
    %1917 = vmatprep.mubr.f32.mxu0 0.0
    %1918 = vmatmul.mubr.f32.gmra.mxu0 %v1647
    %v1919 = vpop.f32.mrf.mxu0
    %v1920 = vadd.f32 0.0, %v1919
    %v1921 = vpop.f32.mrf.mxu0
    %1922 = vmatprep.mubr.f32.mxu0 0.0
    %1923 = vmatmul.mubr.f32.gmra.mxu0 %v1650
    %v1924 = vpop.f32.mrf.mxu0
    %v1925 = vadd.f32 0.0, %v1924
    %v1926 = vpop.f32.mrf.mxu0
    %1927 = vmatprep.mubr.f32.mxu0 0.0
    %1928 = vmatmul.mubr.f32.gmra.mxu0 %v1653
    %v1929 = vpop.f32.mrf.mxu0
    %v1930 = vadd.f32 0.0, %v1929
    %v1931 = vpop.f32.mrf.mxu0
    %1932 = vmatprep.mubr.f32.mxu0 0.0
    %1933 = vmatmul.mubr.f32.gmra.mxu0 %v1656
    %v1934 = vpop.f32.mrf.mxu0
    %v1935 = vadd.f32 0.0, %v1934
    %v1936 = vpop.f32.mrf.mxu0
    %1937 = vmatprep.mubr.f32.mxu0 0.0
    %1938 = vmatmul.mubr.f32.gmra.mxu0 %v1659
    %v1939 = vpop.f32.mrf.mxu0
    %v1940 = vadd.f32 0.0, %v1939
    %v1941 = vpop.f32.mrf.mxu0
    %1942 = vmatprep.mubr.f32.mxu0 0.0
    %1943 = vmatmul.mubr.f32.gmra.mxu0 %v1662
    %v1944 = vpop.f32.mrf.mxu0
    %v1945 = vadd.f32 0.0, %v1944
    %v1946 = vpop.f32.mrf.mxu0
    %1947 = vmatprep.mubr.f32.mxu0 0.0
    %1948 = vmatmul.mubr.f32.gmra.mxu0 %v1665
    %v1949 = vpop.f32.mrf.mxu0
    %v1950 = vadd.f32 0.0, %v1949
    %v1951 = vpop.f32.mrf.mxu0
    %1952 = vmatprep.mubr.f32.mxu0 0.0
    %1953 = vmatmul.mubr.f32.gmra.mxu0 %v1668
    %v1954 = vpop.f32.mrf.mxu0
    %v1955 = vadd.f32 0.0, %v1954
    %v1956 = vpop.f32.mrf.mxu0
    %1957 = vmatprep.mubr.f32.mxu0 0.0
    %1958 = vmatmul.mubr.f32.gmra.mxu0 %v1671
    %v1959 = vpop.f32.mrf.mxu0
    %v1960 = vadd.f32 0.0, %v1959
    %v1961 = vpop.f32.mrf.mxu0
    %1962 = vmatprep.mubr.f32.mxu0 0.0
    %1963 = vmatmul.mubr.f32.gmra.mxu0 %v1674
    %v1964 = vpop.f32.mrf.mxu0
    %v1965 = vadd.f32 0.0, %v1964
    %v1966 = vpop.f32.mrf.mxu0
    %1967 = vmatprep.mubr.f32.mxu0 0.0
    %1968 = vmatmul.mubr.f32.gmra.mxu0 %v1677
    %v1969 = vpop.f32.mrf.mxu0
    %v1970 = vadd.f32 0.0, %v1969
    %v1971 = vpop.f32.mrf.mxu0
    %1972 = vmatprep.mubr.f32.mxu0 0.0
    %1973 = vmatmul.mubr.f32.gmra.mxu0 %v1680
    %v1974 = vpop.f32.mrf.mxu0
    %v1975 = vadd.f32 0.0, %v1974
    %v1976 = vpop.f32.mrf.mxu0
    %1977 = vmatprep.mubr.f32.mxu0 0.0
    %1978 = vmatmul.mubr.f32.gmra.mxu0 %v1683
    %v1979 = vpop.f32.mrf.mxu0
    %v1980 = vadd.f32 0.0, %v1979
    %v1981 = vpop.f32.mrf.mxu0
    %1982 = vmatprep.mubr.f32.mxu0 0.0
    %1983 = vmatmul.mubr.f32.gmra.mxu0 %v1686
    %v1984 = vpop.f32.mrf.mxu0
    %v1985 = vadd.f32 0.0, %v1984
    %v1986 = vpop.f32.mrf.mxu0
    %1987 = vmatprep.mubr.f32.mxu0 0.0
    %1988 = vmatmul.mubr.f32.gmra.mxu0 %v1689
    %v1989 = vpop.f32.mrf.mxu0
    %v1990 = vadd.f32 0.0, %v1989
    %v1991 = vpop.f32.mrf.mxu0
    %1992 = vmatprep.mubr.f32.mxu0 0.0
    %1993 = vmatmul.mubr.f32.gmra.mxu0 %v1692
    %v1994 = vpop.f32.mrf.mxu0
    %v1995 = vadd.f32 0.0, %v1994
    %v1996 = vpop.f32.mrf.mxu0
    %1997 = vmatprep.mubr.f32.mxu0 0.0
    %1998 = vmatmul.mubr.f32.gmra.mxu0 %v1695
    %v1999 = vpop.f32.mrf.mxu0
    %v2000 = vadd.f32 0.0, %v1999
    %v2001 = vpop.f32.mrf.mxu0
    %2002 = vmatprep.mubr.f32.mxu0 0.0
    %2003 = vmatmul.mubr.f32.gmra.mxu0 %v1698
    %v2004 = vpop.f32.mrf.mxu0
    %v2005 = vadd.f32 0.0, %v2004
    %v2006 = vpop.f32.mrf.mxu0
    %2007 = vmatprep.mubr.f32.mxu0 0.0
    %2008 = vmatmul.mubr.f32.gmra.mxu0 %v1701
    %v2009 = vpop.f32.mrf.mxu0
    %v2010 = vadd.f32 0.0, %v2009
    %v2011 = vpop.f32.mrf.mxu0
    %2012 = vmatprep.mubr.f32.mxu0 0.0
    %2013 = vmatmul.mubr.f32.gmra.mxu0 %v1704
    %v2014 = vpop.f32.mrf.mxu0
    %v2015 = vadd.f32 0.0, %v2014
    %v2016 = vpop.f32.mrf.mxu0
    %2017 = vmatprep.mubr.f32.mxu0 0.0
    %2018 = vmatmul.mubr.f32.gmra.mxu0 %v1707
    %v2019 = vpop.f32.mrf.mxu0
    %v2020 = vadd.f32 0.0, %v2019
    %v2021 = vpop.f32.mrf.mxu0
    %2022 = vmatprep.mubr.f32.mxu0 0.0
    %2023 = vmatmul.mubr.f32.gmra.mxu0 %v1710
    %v2024 = vpop.f32.mrf.mxu0
    %v2025 = vadd.f32 0.0, %v2024
    %v2026 = vpop.f32.mrf.mxu0
    %2027 = vmatprep.mubr.f32.mxu0 0.0
    %2028 = vmatmul.mubr.f32.gmra.mxu0 %v1713
    %v2029 = vpop.f32.mrf.mxu0
    %v2030 = vadd.f32 0.0, %v2029
    %v2031 = vpop.f32.mrf.mxu0
    %2032 = vmatprep.mubr.f32.mxu0 0.0
    %2033 = vmatmul.mubr.f32.gmra.mxu0 %v1716
    %v2034 = vpop.f32.mrf.mxu0
    %v2035 = vadd.f32 0.0, %v2034
    %v2036 = vpop.f32.mrf.mxu0
    %2037 = vmatprep.mubr.f32.mxu0 0.0
    %2038 = vmatmul.mubr.f32.gmra.mxu0 %v1719
    %v2039 = vpop.f32.mrf.mxu0
    %v2040 = vadd.f32 0.0, %v2039
    %v2041 = vpop.f32.mrf.mxu0
    %2042 = vmatprep.mubr.f32.mxu0 0.0
    %2043 = vmatmul.mubr.f32.gmra.mxu0 %v1722
    %v2044 = vpop.f32.mrf.mxu0
    %v2045 = vadd.f32 0.0, %v2044
    %v2046 = vpop.f32.mrf.mxu0
    %2047 = vmatprep.mubr.f32.mxu0 0.0
    %2048 = vmatmul.mubr.f32.gmra.mxu0 %v1725
    %v2049 = vpop.f32.mrf.mxu0
    %v2050 = vadd.f32 0.0, %v2049
    %v2051 = vpop.f32.mrf.mxu0
    %2052 = vmatprep.mubr.f32.mxu0 0.0
    %2053 = vmatmul.mubr.f32.gmra.mxu0 %v1728
    %v2054 = vpop.f32.mrf.mxu0
    %v2055 = vadd.f32 0.0, %v2054
    %v2056 = vpop.f32.mrf.mxu0
    %2057 = vmatprep.mubr.f32.mxu0 0.0
    %2058 = vmatmul.mubr.f32.gmra.mxu0 %v1731
    %v2059 = vpop.f32.mrf.mxu0
    %v2060 = vadd.f32 0.0, %v2059
    %v2061 = vpop.f32.mrf.mxu0
    %2062 = vmatprep.mubr.f32.mxu0 0.0
    %2063 = vmatmul.mubr.f32.gmra.mxu0 %v1734
    %v2064 = vpop.f32.mrf.mxu0
    %v2065 = vadd.f32 0.0, %v2064
    %v2066 = vpop.f32.mrf.mxu0
    %2067 = vmatprep.mubr.f32.mxu0 0.0
    %2068 = vmatmul.mubr.f32.gmra.mxu0 %v1737
    %v2069 = vpop.f32.mrf.mxu0
    %v2070 = vadd.f32 0.0, %v2069
    %v2071 = vpop.f32.mrf.mxu0
    %2072 = vmatprep.mubr.f32.mxu0 0.0
    %2073 = vmatmul.mubr.f32.gmra.mxu0 %v1740
    %v2074 = vpop.f32.mrf.mxu0
    %v2075 = vadd.f32 0.0, %v2074
    %v2076 = vpop.f32.mrf.mxu0
    %2077 = vmatprep.mubr.f32.mxu0 0.0
    %2078 = vmatmul.mubr.f32.gmra.mxu0 %v1743
    %v2079 = vpop.f32.mrf.mxu0
    %v2080 = vadd.f32 0.0, %v2079
    %v2081 = vpop.f32.mrf.mxu0
    %2082 = vmatprep.mubr.f32.mxu0 0.0
    %2083 = vmatmul.mubr.f32.gmra.mxu0 %v1746
    %v2084 = vpop.f32.mrf.mxu0
    %v2085 = vadd.f32 0.0, %v2084
    %v2086 = vpop.f32.mrf.mxu0
    %2087 = vmatprep.mubr.f32.mxu0 0.0
    %2088 = vmatmul.mubr.f32.gmra.mxu0 %v1749
    %v2089 = vpop.f32.mrf.mxu0
    %v2090 = vadd.f32 0.0, %v2089
    %v2091 = vpop.f32.mrf.mxu0
    %2092 = vmatprep.mubr.f32.mxu0 0.0
    %2093 = vmatmul.mubr.f32.gmra.mxu0 %v1752
    %v2094 = vpop.f32.mrf.mxu0
    %v2095 = vadd.f32 0.0, %v2094
    %v2096 = vpop.f32.mrf.mxu0
    %2097 = vmatprep.mubr.f32.mxu0 0.0
    %2098 = vmatmul.mubr.f32.gmra.mxu0 %v1755
    %v2099 = vpop.f32.mrf.mxu0
    %v2100 = vadd.f32 0.0, %v2099
    %v2101 = vpop.f32.mrf.mxu0
    %2102 = vmatprep.mubr.f32.mxu0 0.0
    %2103 = vmatmul.mubr.f32.gmra.mxu0 %v1758
    %v2104 = vpop.f32.mrf.mxu0
    %v2105 = vadd.f32 0.0, %v2104
    %v2106 = vpop.f32.mrf.mxu0
    %2107 = vmatprep.mubr.f32.mxu0 0.0
    %2108 = vmatmul.mubr.f32.gmra.mxu0 %v1761
    %v2109 = vpop.f32.mrf.mxu0
    %v2110 = vadd.f32 0.0, %v2109
    %v2111 = vpop.f32.mrf.mxu0
    %2112 = vmatprep.mubr.f32.mxu0 0.0
    %2113 = vmatmul.mubr.f32.gmra.mxu0 %v1764
    %v2114 = vpop.f32.mrf.mxu0
    %v2115 = vadd.f32 0.0, %v2114
    %v2116 = vpop.f32.mrf.mxu0
    %2117 = vmatprep.mubr.f32.mxu0 0.0
    %2118 = vmatmul.mubr.f32.gmra.mxu0 %v1767
    %v2119 = vpop.f32.mrf.mxu0
    %v2120 = vadd.f32 0.0, %v2119
    %v2121 = vpop.f32.mrf.mxu0
    %2122 = vmatprep.mubr.f32.mxu0 0.0
    %2123 = vmatmul.mubr.f32.gmra.mxu0 %v1770
    %v2124 = vpop.f32.mrf.mxu0
    %v2125 = vadd.f32 0.0, %v2124
    %v2126 = vpop.f32.mrf.mxu0
    %2127 = vmatprep.mubr.f32.mxu0 0.0
    %2128 = vmatmul.mubr.f32.gmra.mxu0 %v1773
    %v2129 = vpop.f32.mrf.mxu0
    %v2130 = vadd.f32 0.0, %v2129
    %v2131 = vpop.f32.mrf.mxu0
    %2132 = vmatprep.mubr.f32.mxu0 0.0
    %2133 = vmatmul.mubr.f32.gmra.mxu0 %v1776
    %v2134 = vpop.f32.mrf.mxu0
    %v2135 = vadd.f32 0.0, %v2134
    %v2136 = vpop.f32.mrf.mxu0
    %2137 = vmatprep.mubr.f32.mxu0 0.0
    %2138 = vmatmul.mubr.f32.gmra.mxu0 %v1779
    %v2139 = vpop.f32.mrf.mxu0
    %v2140 = vadd.f32 0.0, %v2139
    %v2141 = vpop.f32.mrf.mxu0
    %2142 = vmatprep.mubr.f32.mxu0 0.0
    %2143 = vmatmul.mubr.f32.gmra.mxu0 %v1782
    %v2144 = vpop.f32.mrf.mxu0
    %v2145 = vadd.f32 0.0, %v2144
    %v2146 = vpop.f32.mrf.mxu0
    %2147 = vmatprep.mubr.f32.mxu0 0.0
    %2148 = vmatmul.mubr.f32.gmra.mxu0 %v1785
    %v2149 = vpop.f32.mrf.mxu0
    %v2150 = vadd.f32 0.0, %v2149
    %v2151 = vpop.f32.mrf.mxu0
    %2152 = vmatprep.mubr.f32.mxu0 0.0
    %2153 = vmatmul.mubr.f32.gmra.mxu0 %v1788
    %v2154 = vpop.f32.mrf.mxu0
    %v2155 = vadd.f32 0.0, %v2154
    %v2156 = vpop.f32.mrf.mxu0
    %2157 = vmatprep.mubr.f32.mxu0 0.0
    %2158 = vmatmul.mubr.f32.gmra.mxu0 %v1791
    %v2159 = vpop.f32.mrf.mxu0
    %v2160 = vadd.f32 0.0, %v2159
    %v2161 = vpop.f32.mrf.mxu0
    %2162 = vmatprep.mubr.f32.mxu0 0.0
    %2163 = vmatmul.mubr.f32.gmra.mxu0 %v1794
    %v2164 = vpop.f32.mrf.mxu0
    %v2165 = vadd.f32 0.0, %v2164
    %v2166 = vpop.f32.mrf.mxu0
    %2167 = vmatprep.mubr.f32.mxu0 0.0
    %2168 = vmatmul.mubr.f32.gmra.mxu0 %v1797
    %v2169 = vpop.f32.mrf.mxu0
    %v2170 = vadd.f32 0.0, %v2169
    %v2171 = vpop.f32.mrf.mxu0
    %2172 = vmatprep.mubr.f32.mxu0 0.0
    %2173 = vmatmul.mubr.f32.gmra.mxu0 %v1800
    %v2174 = vpop.f32.mrf.mxu0
    %v2175 = vadd.f32 0.0, %v2174
    %v2176 = vpop.f32.mrf.mxu0
    %2177 = vmatprep.mubr.f32.mxu0 0.0
    %2178 = vmatmul.mubr.f32.gmra.mxu0 %v1803
    %v2179 = vpop.f32.mrf.mxu0
    %v2180 = vadd.f32 0.0, %v2179
    %v2181 = vpop.f32.mrf.mxu0
    %2182 = vmatprep.mubr.f32.mxu0 0.0
    %2183 = vmatmul.mubr.f32.gmra.mxu0 %v1806
    %v2184 = vpop.f32.mrf.mxu0
    %v2185 = vadd.f32 0.0, %v2184
    %v2186 = vpop.f32.mrf.mxu0
    %2187 = vmatprep.mubr.f32.mxu0 0.0
    %2188 = vmatmul.mubr.f32.gmra.mxu0 %v1809
    %v2189 = vpop.f32.mrf.mxu0
    %v2190 = vadd.f32 0.0, %v2189
    %v2191 = vpop.f32.mrf.mxu0
    %2192 = vmatprep.mubr.f32.mxu0 0.0
    %2193 = vmatmul.mubr.f32.gmra.mxu0 %v1812
    %v2194 = vpop.f32.mrf.mxu0
    %v2195 = vadd.f32 0.0, %v2194
    %v2196 = vpop.f32.mrf.mxu0
    %2197 = vmatprep.mubr.f32.mxu0 0.0
    %2198 = vmatmul.mubr.f32.gmra.mxu0 %v1815
    %v2199 = vpop.f32.mrf.mxu0
    %v2200 = vadd.f32 0.0, %v2199
    %v2201 = vpop.f32.mrf.mxu0
    %2202 = vmatprep.mubr.f32.mxu0 0.0
    %2203 = vmatmul.mubr.f32.gmra.mxu0 %v1818
    %v2204 = vpop.f32.mrf.mxu0
    %v2205 = vadd.f32 0.0, %v2204
    %v2206 = vpop.f32.mrf.mxu0
    %2207 = vdwg.mxu0
    %v2208 = vadd.f32 %v1245, %v1890
    %v2209 = vadd.f32 %v1250, %v1895
    %v2210 = vadd.f32 %v1255, %v1900
    %v2211 = vadd.f32 %v1260, %v1905
    %v2212 = vadd.f32 %v1265, %v1910
    %v2213 = vadd.f32 %v1270, %v1915
    %v2214 = vadd.f32 %v1275, %v1920
    %v2215 = vadd.f32 %v1280, %v1925
    %v2216 = vadd.f32 %v1285, %v1930
    %v2217 = vadd.f32 %v1290, %v1935
    %v2218 = vadd.f32 %v1295, %v1940
    %v2219 = vadd.f32 %v1300, %v1945
    %v2220 = vadd.f32 %v1305, %v1950
    %v2221 = vadd.f32 %v1310, %v1955
    %v2222 = vadd.f32 %v1315, %v1960
    %v2223 = vadd.f32 %v1320, %v1965
    %v2224 = vadd.f32 %v1325, %v1970
    %v2225 = vadd.f32 %v1330, %v1975
    %v2226 = vadd.f32 %v1335, %v1980
    %v2227 = vadd.f32 %v1340, %v1985
    %v2228 = vadd.f32 %v1345, %v1990
    %v2229 = vadd.f32 %v1350, %v1995
    %v2230 = vadd.f32 %v1355, %v2000
    %v2231 = vadd.f32 %v1360, %v2005
    %v2232 = vadd.f32 %v1365, %v2010
    %v2233 = vadd.f32 %v1370, %v2015
    %v2234 = vadd.f32 %v1375, %v2020
    %v2235 = vadd.f32 %v1380, %v2025
    %v2236 = vadd.f32 %v1385, %v2030
    %v2237 = vadd.f32 %v1390, %v2035
    %v2238 = vadd.f32 %v1395, %v2040
    %v2239 = vadd.f32 %v1400, %v2045
    %v2240 = vadd.f32 %v1405, %v2050
    %v2241 = vadd.f32 %v1410, %v2055
    %v2242 = vadd.f32 %v1415, %v2060
    %v2243 = vadd.f32 %v1420, %v2065
    %v2244 = vadd.f32 %v1425, %v2070
    %v2245 = vadd.f32 %v1430, %v2075
    %v2246 = vadd.f32 %v1435, %v2080
    %v2247 = vadd.f32 %v1440, %v2085
    %v2248 = vadd.f32 %v1445, %v2090
    %v2249 = vadd.f32 %v1450, %v2095
    %v2250 = vadd.f32 %v1455, %v2100
    %v2251 = vadd.f32 %v1460, %v2105
    %v2252 = vadd.f32 %v1465, %v2110
    %v2253 = vadd.f32 %v1470, %v2115
    %v2254 = vadd.f32 %v1475, %v2120
    %v2255 = vadd.f32 %v1480, %v2125
    %v2256 = vadd.f32 %v1485, %v2130
    %v2257 = vadd.f32 %v1490, %v2135
    %v2258 = vadd.f32 %v1495, %v2140
    %v2259 = vadd.f32 %v1500, %v2145
    %v2260 = vadd.f32 %v1505, %v2150
    %v2261 = vadd.f32 %v1510, %v2155
    %v2262 = vadd.f32 %v1515, %v2160
    %v2263 = vadd.f32 %v1520, %v2165
    %v2264 = vadd.f32 %v1525, %v2170
    %v2265 = vadd.f32 %v1530, %v2175
    %v2266 = vadd.f32 %v1535, %v2180
    %v2267 = vadd.f32 %v1540, %v2185
    %v2268 = vadd.f32 %v1545, %v2190
    %v2269 = vadd.f32 %v1550, %v2195
    %v2270 = vadd.f32 %v1555, %v2200
    %v2271 = vadd.f32 %v1560, %v2205
    %v2272 = vld [vmem:[%s207] sm:$0xff]
    %v2273 = vld [vmem:[%s207 + $0x8] sm:$0xff]
    %v2274 = vld [vmem:[%s207 + $0x18] sm:$0xff]
    %v2275 = vld [vmem:[%s207 + $0x20] sm:$0xff]
    %v2276 = vld [vmem:[%s207 + $0x30] sm:$0xff]
    %v2277 = vld [vmem:[%s207 + $0x38] sm:$0xff]
    %v2278 = vld [vmem:[%s207 + $0x48] sm:$0xff]
    %v2279 = vld [vmem:[%s207 + $0x50] sm:$0xff]
    %v2280 = vld [vmem:[%s207 + $0x60] sm:$0xff]
    %v2281 = vld [vmem:[%s207 + $0x68] sm:$0xff]
    %v2282 = vld [vmem:[%s207 + $0x78] sm:$0xff]
    %v2283 = vld [vmem:[%s207 + $0x80] sm:$0xff]
    %v2284 = vld [vmem:[%s207 + $0x90] sm:$0xff]
    %v2285 = vld [vmem:[%s207 + $0x98] sm:$0xff]
    %v2286 = vld [vmem:[%s207 + $0xa8] sm:$0xff]
    %v2287 = vld [vmem:[%s207 + $0xb0] sm:$0xff]
    %v2288 = vld [vmem:[%s207 + $0xc0] sm:$0xff]
    %v2289 = vld [vmem:[%s207 + $0xc8] sm:$0xff]
    %v2290 = vld [vmem:[%s207 + $0xd8] sm:$0xff]
    %v2291 = vld [vmem:[%s207 + $0xe0] sm:$0xff]
    %v2292 = vld [vmem:[%s207 + $0xf0] sm:$0xff]
    %v2293 = vld [vmem:[%s207 + $0xf8] sm:$0xff]
    %v2294 = vld [vmem:[%s207 + $0x108] sm:$0xff]
    %v2295 = vld [vmem:[%s207 + $0x110] sm:$0xff]
    %v2296 = vld [vmem:[%s207 + $0x120] sm:$0xff]
    %v2297 = vld [vmem:[%s207 + $0x128] sm:$0xff]
    %v2298 = vld [vmem:[%s207 + $0x138] sm:$0xff]
    %v2299 = vld [vmem:[%s207 + $0x140] sm:$0xff]
    %v2300 = vld [vmem:[%s207 + $0x150] sm:$0xff]
    %v2301 = vld [vmem:[%s207 + $0x158] sm:$0xff]
    %v2302 = vld [vmem:[%s207 + $0x168] sm:$0xff]
    %v2303 = vld [vmem:[%s207 + $0x170] sm:$0xff]
    %v2304 = vld [vmem:[%s207 + $0x1b0] sm:$0xff]
    %v2305 = vld [vmem:[%s207 + $0x1b8] sm:$0xff]
    %v2306 = vld [vmem:[%s207 + $0x1c8] sm:$0xff]
    %v2307 = vld [vmem:[%s207 + $0x1d0] sm:$0xff]
    %v2308 = vld [vmem:[%s207 + $0x1e0] sm:$0xff]
    %v2309 = vld [vmem:[%s207 + $0x1e8] sm:$0xff]
    %v2310 = vld [vmem:[%s207 + $0x1f8] sm:$0xff]
    %v2311 = vld [vmem:[%s207 + $0x200] sm:$0xff]
    %v2312 = vld [vmem:[%s207 + $0x210] sm:$0xff]
    %v2313 = vld [vmem:[%s207 + $0x218] sm:$0xff]
    %v2314 = vld [vmem:[%s207 + $0x228] sm:$0xff]
    %v2315 = vld [vmem:[%s207 + $0x230] sm:$0xff]
    %v2316 = vld [vmem:[%s207 + $0x240] sm:$0xff]
    %v2317 = vld [vmem:[%s207 + $0x248] sm:$0xff]
    %v2318 = vld [vmem:[%s207 + $0x258] sm:$0xff]
    %v2319 = vld [vmem:[%s207 + $0x260] sm:$0xff]
    %v2320 = vld [vmem:[%s207 + $0x270] sm:$0xff]
    %v2321 = vld [vmem:[%s207 + $0x278] sm:$0xff]
    %v2322 = vld [vmem:[%s207 + $0x288] sm:$0xff]
    %v2323 = vld [vmem:[%s207 + $0x290] sm:$0xff]
    %v2324 = vld [vmem:[%s207 + $0x2a0] sm:$0xff]
    %v2325 = vld [vmem:[%s207 + $0x2a8] sm:$0xff]
    %v2326 = vld [vmem:[%s207 + $0x2b8] sm:$0xff]
    %v2327 = vld [vmem:[%s207 + $0x2c0] sm:$0xff]
    %v2328 = vld [vmem:[%s207 + $0x2d0] sm:$0xff]
    %v2329 = vld [vmem:[%s207 + $0x2d8] sm:$0xff]
    %v2330 = vld [vmem:[%s207 + $0x2e8] sm:$0xff]
    %v2331 = vld [vmem:[%s207 + $0x2f0] sm:$0xff]
    %v2332 = vld [vmem:[%s207 + $0x300] sm:$0xff]
    %v2333 = vld [vmem:[%s207 + $0x308] sm:$0xff]
    %v2334 = vld [vmem:[%s207 + $0x318] sm:$0xff]
    %v2335 = vld [vmem:[%s207 + $0x320] sm:$0xff]
    %v2336 = vld [vmem:[%s1 + $0x9] sm:$0x7]
    %v2338 = vsel %vm33, %v2272, 0
    %v2341 = vsel %vm33, %v2273, 0
    %v2344 = vsel %vm33, %v2274, 0
    %v2347 = vsel %vm33, %v2275, 0
    %v2350 = vsel %vm33, %v2276, 0
    %v2353 = vsel %vm33, %v2277, 0
    %v2356 = vsel %vm33, %v2278, 0
    %v2359 = vsel %vm33, %v2279, 0
    %v2362 = vsel %vm33, %v2280, 0
    %v2365 = vsel %vm33, %v2281, 0
    %v2368 = vsel %vm33, %v2282, 0
    %v2371 = vsel %vm33, %v2283, 0
    %v2374 = vsel %vm33, %v2284, 0
    %v2377 = vsel %vm33, %v2285, 0
    %v2380 = vsel %vm33, %v2286, 0
    %v2383 = vsel %vm33, %v2287, 0
    %v2386 = vsel %vm33, %v2288, 0
    %v2389 = vsel %vm33, %v2289, 0
    %v2392 = vsel %vm33, %v2290, 0
    %v2395 = vsel %vm33, %v2291, 0
    %v2398 = vsel %vm33, %v2292, 0
    %v2401 = vsel %vm33, %v2293, 0
    %v2404 = vsel %vm33, %v2294, 0
    %v2407 = vsel %vm33, %v2295, 0
    %v2410 = vsel %vm33, %v2296, 0
    %v2413 = vsel %vm33, %v2297, 0
    %v2416 = vsel %vm33, %v2298, 0
    %v2419 = vsel %vm33, %v2299, 0
    %v2422 = vsel %vm33, %v2300, 0
    %v2425 = vsel %vm33, %v2301, 0
    %v2428 = vsel %vm33, %v2302, 0
    %v2431 = vsel %vm33, %v2303, 0
    %v2434 = vsel %vm33, %v2304, 0
    %v2437 = vsel %vm33, %v2305, 0
    %v2440 = vsel %vm33, %v2306, 0
    %v2443 = vsel %vm33, %v2307, 0
    %v2446 = vsel %vm33, %v2308, 0
    %v2449 = vsel %vm33, %v2309, 0
    %v2452 = vsel %vm33, %v2310, 0
    %v2455 = vsel %vm33, %v2311, 0
    %v2458 = vsel %vm33, %v2312, 0
    %v2461 = vsel %vm33, %v2313, 0
    %v2464 = vsel %vm33, %v2314, 0
    %v2467 = vsel %vm33, %v2315, 0
    %v2470 = vsel %vm33, %v2316, 0
    %v2473 = vsel %vm33, %v2317, 0
    %v2476 = vsel %vm33, %v2318, 0
    %v2479 = vsel %vm33, %v2319, 0
    %v2482 = vsel %vm33, %v2320, 0
    %v2485 = vsel %vm33, %v2321, 0
    %v2488 = vsel %vm33, %v2322, 0
    %v2491 = vsel %vm33, %v2323, 0
    %v2494 = vsel %vm33, %v2324, 0
    %v2497 = vsel %vm33, %v2325, 0
    %v2500 = vsel %vm33, %v2326, 0
    %v2503 = vsel %vm33, %v2327, 0
    %v2506 = vsel %vm33, %v2328, 0
    %v2509 = vsel %vm33, %v2329, 0
    %v2512 = vsel %vm33, %v2330, 0
    %v2515 = vsel %vm33, %v2331, 0
    %v2518 = vsel %vm33, %v2332, 0
    %v2521 = vsel %vm33, %v2333, 0
    %v2524 = vsel %vm33, %v2334, 0
    %v2527 = vsel %vm33, %v2335, 0
    %v2530 = vsel %vm594, %v2336, 0
    %2532 = vmatprep.subr.mxu0 0.0
    %2533 = vmatpush1.msra.mxu0 0.0
    %2534 = vmatprep.subr.mxu0 0.0
    %2535 = vmatpush1.msra.mxu0 0.0
    %2536 = vmatprep.subr.mxu0 0.0
    %2537 = vmatpush1.msra.mxu0 0.0
    %2538 = vmatprep.subr.mxu0 0.0
    %2539 = vmatpush1.msra.mxu0 0.0
    %2540 = vmatprep.subr.mxu0 0.0
    %2541 = vmatpush1.msra.mxu0 0.0
    %2542 = vmatprep.subr.mxu0 0.0
    %2543 = vmatpush1.msra.mxu0 0.0
    %2544 = vmatprep.subr.mxu0 0.0
    %2545 = vmatpush1.msra.mxu0 0.0
    %2546 = vmatprep.subr.mxu0 0.0
    %2547 = vmatpush1.msra.mxu0 0.0
    %2548 = vmatprep.subr.mxu0 0.0
    %2549 = vmatpush1.msra.mxu0 0.0
    %2550 = vmatprep.subr.mxu0 0.0
    %2551 = vmatpush1.msra.mxu0 0.0
    %2552 = vmatprep.subr.mxu0 0.0
    %2553 = vmatpush1.msra.mxu0 0.0
    %2554 = vmatprep.subr.mxu0 0.0
    %2555 = vmatpush1.msra.mxu0 0.0
    %2556 = vmatprep.subr.mxu0 0.0
    %2557 = vmatpush1.msra.mxu0 0.0
    %2558 = vmatprep.subr.mxu0 0.0
    %2559 = vmatpush1.msra.mxu0 0.0
    %2560 = vmatprep.subr.mxu0 0.0
    %2561 = vmatpush1.msra.mxu0 0.0
    %2562 = vmatprep.subr.mxu0 0.0
    %2563 = vmatpush1.msra.mxu0 %v2530
    %2564 = vmatprep.subr.mxu0 0.0
    %2565 = vmatpush2.msra.mxu0 0.0
    %2566 = vmatprep.subr.mxu0 0.0
    %2567 = vmatpush2.msra.mxu0 0.0
    %2568 = vmatprep.subr.mxu0 0.0
    %2569 = vmatpush2.msra.mxu0 0.0
    %2570 = vmatprep.subr.mxu0 0.0
    %2571 = vmatpush2.msra.mxu0 0.0
    %2572 = vmatprep.subr.mxu0 0.0
    %2573 = vmatpush2.msra.mxu0 0.0
    %2574 = vmatprep.subr.mxu0 0.0
    %2575 = vmatpush2.msra.mxu0 0.0
    %2576 = vmatprep.subr.mxu0 0.0
    %2577 = vmatpush2.msra.mxu0 0.0
    %2578 = vmatprep.subr.mxu0 0.0
    %2579 = vmatpush2.msra.mxu0 0.0
    %2580 = vmatprep.subr.mxu0 0.0
    %2581 = vmatpush2.msra.mxu0 0.0
    %2582 = vmatprep.subr.mxu0 0.0
    %2583 = vmatpush2.msra.mxu0 0.0
    %2584 = vmatprep.subr.mxu0 0.0
    %2585 = vmatpush2.msra.mxu0 0.0
    %2586 = vmatprep.subr.mxu0 0.0
    %2587 = vmatpush2.msra.mxu0 0.0
    %2588 = vmatprep.subr.mxu0 0.0
    %2589 = vmatpush2.msra.mxu0 0.0
    %2590 = vmatprep.subr.mxu0 0.0
    %2591 = vmatpush2.msra.mxu0 0.0
    %2592 = vmatprep.subr.mxu0 0.0
    %2593 = vmatpush2.msra.mxu0 0.0
    %2594 = vmatprep.subr.mxu0 0.0
    %2595 = vmatpush2.msra.mxu0 0.0
    %2596 = vmatprep.mubr.f32.mxu0 0.0
    %2597 = vmatmul.mubr.f32.gmra.mxu0 %v2338
    %v2598 = vpop.f32.mrf.mxu0
    %v2599 = vadd.f32 0.0, %v2598
    %v2600 = vpop.f32.mrf.mxu0
    %2601 = vmatprep.mubr.f32.mxu0 0.0
    %2602 = vmatmul.mubr.f32.gmra.mxu0 %v2341
    %v2603 = vpop.f32.mrf.mxu0
    %v2604 = vadd.f32 0.0, %v2603
    %v2605 = vpop.f32.mrf.mxu0
    %2606 = vmatprep.mubr.f32.mxu0 0.0
    %2607 = vmatmul.mubr.f32.gmra.mxu0 %v2344
    %v2608 = vpop.f32.mrf.mxu0
    %v2609 = vadd.f32 0.0, %v2608
    %v2610 = vpop.f32.mrf.mxu0
    %2611 = vmatprep.mubr.f32.mxu0 0.0
    %2612 = vmatmul.mubr.f32.gmra.mxu0 %v2347
    %v2613 = vpop.f32.mrf.mxu0
    %v2614 = vadd.f32 0.0, %v2613
    %v2615 = vpop.f32.mrf.mxu0
    %2616 = vmatprep.mubr.f32.mxu0 0.0
    %2617 = vmatmul.mubr.f32.gmra.mxu0 %v2350
    %v2618 = vpop.f32.mrf.mxu0
    %v2619 = vadd.f32 0.0, %v2618
    %v2620 = vpop.f32.mrf.mxu0
    %2621 = vmatprep.mubr.f32.mxu0 0.0
    %2622 = vmatmul.mubr.f32.gmra.mxu0 %v2353
    %v2623 = vpop.f32.mrf.mxu0
    %v2624 = vadd.f32 0.0, %v2623
    %v2625 = vpop.f32.mrf.mxu0
    %2626 = vmatprep.mubr.f32.mxu0 0.0
    %2627 = vmatmul.mubr.f32.gmra.mxu0 %v2356
    %v2628 = vpop.f32.mrf.mxu0
    %v2629 = vadd.f32 0.0, %v2628
    %v2630 = vpop.f32.mrf.mxu0
    %2631 = vmatprep.mubr.f32.mxu0 0.0
    %2632 = vmatmul.mubr.f32.gmra.mxu0 %v2359
    %v2633 = vpop.f32.mrf.mxu0
    %v2634 = vadd.f32 0.0, %v2633
    %v2635 = vpop.f32.mrf.mxu0
    %2636 = vmatprep.mubr.f32.mxu0 0.0
    %2637 = vmatmul.mubr.f32.gmra.mxu0 %v2362
    %v2638 = vpop.f32.mrf.mxu0
    %v2639 = vadd.f32 0.0, %v2638
    %v2640 = vpop.f32.mrf.mxu0
    %2641 = vmatprep.mubr.f32.mxu0 0.0
    %2642 = vmatmul.mubr.f32.gmra.mxu0 %v2365
    %v2643 = vpop.f32.mrf.mxu0
    %v2644 = vadd.f32 0.0, %v2643
    %v2645 = vpop.f32.mrf.mxu0
    %2646 = vmatprep.mubr.f32.mxu0 0.0
    %2647 = vmatmul.mubr.f32.gmra.mxu0 %v2368
    %v2648 = vpop.f32.mrf.mxu0
    %v2649 = vadd.f32 0.0, %v2648
    %v2650 = vpop.f32.mrf.mxu0
    %2651 = vmatprep.mubr.f32.mxu0 0.0
    %2652 = vmatmul.mubr.f32.gmra.mxu0 %v2371
    %v2653 = vpop.f32.mrf.mxu0
    %v2654 = vadd.f32 0.0, %v2653
    %v2655 = vpop.f32.mrf.mxu0
    %2656 = vmatprep.mubr.f32.mxu0 0.0
    %2657 = vmatmul.mubr.f32.gmra.mxu0 %v2374
    %v2658 = vpop.f32.mrf.mxu0
    %v2659 = vadd.f32 0.0, %v2658
    %v2660 = vpop.f32.mrf.mxu0
    %2661 = vmatprep.mubr.f32.mxu0 0.0
    %2662 = vmatmul.mubr.f32.gmra.mxu0 %v2377
    %v2663 = vpop.f32.mrf.mxu0
    %v2664 = vadd.f32 0.0, %v2663
    %v2665 = vpop.f32.mrf.mxu0
    %2666 = vmatprep.mubr.f32.mxu0 0.0
    %2667 = vmatmul.mubr.f32.gmra.mxu0 %v2380
    %v2668 = vpop.f32.mrf.mxu0
    %v2669 = vadd.f32 0.0, %v2668
    %v2670 = vpop.f32.mrf.mxu0
    %2671 = vmatprep.mubr.f32.mxu0 0.0
    %2672 = vmatmul.mubr.f32.gmra.mxu0 %v2383
    %v2673 = vpop.f32.mrf.mxu0
    %v2674 = vadd.f32 0.0, %v2673
    %v2675 = vpop.f32.mrf.mxu0
    %2676 = vmatprep.mubr.f32.mxu0 0.0
    %2677 = vmatmul.mubr.f32.gmra.mxu0 %v2386
    %v2678 = vpop.f32.mrf.mxu0
    %v2679 = vadd.f32 0.0, %v2678
    %v2680 = vpop.f32.mrf.mxu0
    %2681 = vmatprep.mubr.f32.mxu0 0.0
    %2682 = vmatmul.mubr.f32.gmra.mxu0 %v2389
    %v2683 = vpop.f32.mrf.mxu0
    %v2684 = vadd.f32 0.0, %v2683
    %v2685 = vpop.f32.mrf.mxu0
    %2686 = vmatprep.mubr.f32.mxu0 0.0
    %2687 = vmatmul.mubr.f32.gmra.mxu0 %v2392
    %v2688 = vpop.f32.mrf.mxu0
    %v2689 = vadd.f32 0.0, %v2688
    %v2690 = vpop.f32.mrf.mxu0
    %2691 = vmatprep.mubr.f32.mxu0 0.0
    %2692 = vmatmul.mubr.f32.gmra.mxu0 %v2395
    %v2693 = vpop.f32.mrf.mxu0
    %v2694 = vadd.f32 0.0, %v2693
    %v2695 = vpop.f32.mrf.mxu0
    %2696 = vmatprep.mubr.f32.mxu0 0.0
    %2697 = vmatmul.mubr.f32.gmra.mxu0 %v2398
    %v2698 = vpop.f32.mrf.mxu0
    %v2699 = vadd.f32 0.0, %v2698
    %v2700 = vpop.f32.mrf.mxu0
    %2701 = vmatprep.mubr.f32.mxu0 0.0
    %2702 = vmatmul.mubr.f32.gmra.mxu0 %v2401
    %v2703 = vpop.f32.mrf.mxu0
    %v2704 = vadd.f32 0.0, %v2703
    %v2705 = vpop.f32.mrf.mxu0
    %2706 = vmatprep.mubr.f32.mxu0 0.0
    %2707 = vmatmul.mubr.f32.gmra.mxu0 %v2404
    %v2708 = vpop.f32.mrf.mxu0
    %v2709 = vadd.f32 0.0, %v2708
    %v2710 = vpop.f32.mrf.mxu0
    %2711 = vmatprep.mubr.f32.mxu0 0.0
    %2712 = vmatmul.mubr.f32.gmra.mxu0 %v2407
    %v2713 = vpop.f32.mrf.mxu0
    %v2714 = vadd.f32 0.0, %v2713
    %v2715 = vpop.f32.mrf.mxu0
    %2716 = vmatprep.mubr.f32.mxu0 0.0
    %2717 = vmatmul.mubr.f32.gmra.mxu0 %v2410
    %v2718 = vpop.f32.mrf.mxu0
    %v2719 = vadd.f32 0.0, %v2718
    %v2720 = vpop.f32.mrf.mxu0
    %2721 = vmatprep.mubr.f32.mxu0 0.0
    %2722 = vmatmul.mubr.f32.gmra.mxu0 %v2413
    %v2723 = vpop.f32.mrf.mxu0
    %v2724 = vadd.f32 0.0, %v2723
    %v2725 = vpop.f32.mrf.mxu0
    %2726 = vmatprep.mubr.f32.mxu0 0.0
    %2727 = vmatmul.mubr.f32.gmra.mxu0 %v2416
    %v2728 = vpop.f32.mrf.mxu0
    %v2729 = vadd.f32 0.0, %v2728
    %v2730 = vpop.f32.mrf.mxu0
    %2731 = vmatprep.mubr.f32.mxu0 0.0
    %2732 = vmatmul.mubr.f32.gmra.mxu0 %v2419
    %v2733 = vpop.f32.mrf.mxu0
    %v2734 = vadd.f32 0.0, %v2733
    %v2735 = vpop.f32.mrf.mxu0
    %2736 = vmatprep.mubr.f32.mxu0 0.0
    %2737 = vmatmul.mubr.f32.gmra.mxu0 %v2422
    %v2738 = vpop.f32.mrf.mxu0
    %v2739 = vadd.f32 0.0, %v2738
    %v2740 = vpop.f32.mrf.mxu0
    %2741 = vmatprep.mubr.f32.mxu0 0.0
    %2742 = vmatmul.mubr.f32.gmra.mxu0 %v2425
    %v2743 = vpop.f32.mrf.mxu0
    %v2744 = vadd.f32 0.0, %v2743
    %v2745 = vpop.f32.mrf.mxu0
    %2746 = vmatprep.mubr.f32.mxu0 0.0
    %2747 = vmatmul.mubr.f32.gmra.mxu0 %v2428
    %v2748 = vpop.f32.mrf.mxu0
    %v2749 = vadd.f32 0.0, %v2748
    %v2750 = vpop.f32.mrf.mxu0
    %2751 = vmatprep.mubr.f32.mxu0 0.0
    %2752 = vmatmul.mubr.f32.gmra.mxu0 %v2431
    %v2753 = vpop.f32.mrf.mxu0
    %v2754 = vadd.f32 0.0, %v2753
    %v2755 = vpop.f32.mrf.mxu0
    %2756 = vmatprep.mubr.f32.mxu0 0.0
    %2757 = vmatmul.mubr.f32.gmra.mxu0 %v2434
    %v2758 = vpop.f32.mrf.mxu0
    %v2759 = vadd.f32 0.0, %v2758
    %v2760 = vpop.f32.mrf.mxu0
    %2761 = vmatprep.mubr.f32.mxu0 0.0
    %2762 = vmatmul.mubr.f32.gmra.mxu0 %v2437
    %v2763 = vpop.f32.mrf.mxu0
    %v2764 = vadd.f32 0.0, %v2763
    %v2765 = vpop.f32.mrf.mxu0
    %2766 = vmatprep.mubr.f32.mxu0 0.0
    %2767 = vmatmul.mubr.f32.gmra.mxu0 %v2440
    %v2768 = vpop.f32.mrf.mxu0
    %v2769 = vadd.f32 0.0, %v2768
    %v2770 = vpop.f32.mrf.mxu0
    %2771 = vmatprep.mubr.f32.mxu0 0.0
    %2772 = vmatmul.mubr.f32.gmra.mxu0 %v2443
    %v2773 = vpop.f32.mrf.mxu0
    %v2774 = vadd.f32 0.0, %v2773
    %v2775 = vpop.f32.mrf.mxu0
    %2776 = vmatprep.mubr.f32.mxu0 0.0
    %2777 = vmatmul.mubr.f32.gmra.mxu0 %v2446
    %v2778 = vpop.f32.mrf.mxu0
    %v2779 = vadd.f32 0.0, %v2778
    %v2780 = vpop.f32.mrf.mxu0
    %2781 = vmatprep.mubr.f32.mxu0 0.0
    %2782 = vmatmul.mubr.f32.gmra.mxu0 %v2449
    %v2783 = vpop.f32.mrf.mxu0
    %v2784 = vadd.f32 0.0, %v2783
    %v2785 = vpop.f32.mrf.mxu0
    %2786 = vmatprep.mubr.f32.mxu0 0.0
    %2787 = vmatmul.mubr.f32.gmra.mxu0 %v2452
    %v2788 = vpop.f32.mrf.mxu0
    %v2789 = vadd.f32 0.0, %v2788
    %v2790 = vpop.f32.mrf.mxu0
    %2791 = vmatprep.mubr.f32.mxu0 0.0
    %2792 = vmatmul.mubr.f32.gmra.mxu0 %v2455
    %v2793 = vpop.f32.mrf.mxu0
    %v2794 = vadd.f32 0.0, %v2793
    %v2795 = vpop.f32.mrf.mxu0
    %2796 = vmatprep.mubr.f32.mxu0 0.0
    %2797 = vmatmul.mubr.f32.gmra.mxu0 %v2458
    %v2798 = vpop.f32.mrf.mxu0
    %v2799 = vadd.f32 0.0, %v2798
    %v2800 = vpop.f32.mrf.mxu0
    %2801 = vmatprep.mubr.f32.mxu0 0.0
    %2802 = vmatmul.mubr.f32.gmra.mxu0 %v2461
    %v2803 = vpop.f32.mrf.mxu0
    %v2804 = vadd.f32 0.0, %v2803
    %v2805 = vpop.f32.mrf.mxu0
    %2806 = vmatprep.mubr.f32.mxu0 0.0
    %2807 = vmatmul.mubr.f32.gmra.mxu0 %v2464
    %v2808 = vpop.f32.mrf.mxu0
    %v2809 = vadd.f32 0.0, %v2808
    %v2810 = vpop.f32.mrf.mxu0
    %2811 = vmatprep.mubr.f32.mxu0 0.0
    %2812 = vmatmul.mubr.f32.gmra.mxu0 %v2467
    %v2813 = vpop.f32.mrf.mxu0
    %v2814 = vadd.f32 0.0, %v2813
    %v2815 = vpop.f32.mrf.mxu0
    %2816 = vmatprep.mubr.f32.mxu0 0.0
    %2817 = vmatmul.mubr.f32.gmra.mxu0 %v2470
    %v2818 = vpop.f32.mrf.mxu0
    %v2819 = vadd.f32 0.0, %v2818
    %v2820 = vpop.f32.mrf.mxu0
    %2821 = vmatprep.mubr.f32.mxu0 0.0
    %2822 = vmatmul.mubr.f32.gmra.mxu0 %v2473
    %v2823 = vpop.f32.mrf.mxu0
    %v2824 = vadd.f32 0.0, %v2823
    %v2825 = vpop.f32.mrf.mxu0
    %2826 = vmatprep.mubr.f32.mxu0 0.0
    %2827 = vmatmul.mubr.f32.gmra.mxu0 %v2476
    %v2828 = vpop.f32.mrf.mxu0
    %v2829 = vadd.f32 0.0, %v2828
    %v2830 = vpop.f32.mrf.mxu0
    %2831 = vmatprep.mubr.f32.mxu0 0.0
    %2832 = vmatmul.mubr.f32.gmra.mxu0 %v2479
    %v2833 = vpop.f32.mrf.mxu0
    %v2834 = vadd.f32 0.0, %v2833
    %v2835 = vpop.f32.mrf.mxu0
    %2836 = vmatprep.mubr.f32.mxu0 0.0
    %2837 = vmatmul.mubr.f32.gmra.mxu0 %v2482
    %v2838 = vpop.f32.mrf.mxu0
    %v2839 = vadd.f32 0.0, %v2838
    %v2840 = vpop.f32.mrf.mxu0
    %2841 = vmatprep.mubr.f32.mxu0 0.0
    %2842 = vmatmul.mubr.f32.gmra.mxu0 %v2485
    %v2843 = vpop.f32.mrf.mxu0
    %v2844 = vadd.f32 0.0, %v2843
    %v2845 = vpop.f32.mrf.mxu0
    %2846 = vmatprep.mubr.f32.mxu0 0.0
    %2847 = vmatmul.mubr.f32.gmra.mxu0 %v2488
    %v2848 = vpop.f32.mrf.mxu0
    %v2849 = vadd.f32 0.0, %v2848
    %v2850 = vpop.f32.mrf.mxu0
    %2851 = vmatprep.mubr.f32.mxu0 0.0
    %2852 = vmatmul.mubr.f32.gmra.mxu0 %v2491
    %v2853 = vpop.f32.mrf.mxu0
    %v2854 = vadd.f32 0.0, %v2853
    %v2855 = vpop.f32.mrf.mxu0
    %2856 = vmatprep.mubr.f32.mxu0 0.0
    %2857 = vmatmul.mubr.f32.gmra.mxu0 %v2494
    %v2858 = vpop.f32.mrf.mxu0
    %v2859 = vadd.f32 0.0, %v2858
    %v2860 = vpop.f32.mrf.mxu0
    %2861 = vmatprep.mubr.f32.mxu0 0.0
    %2862 = vmatmul.mubr.f32.gmra.mxu0 %v2497
    %v2863 = vpop.f32.mrf.mxu0
    %v2864 = vadd.f32 0.0, %v2863
    %v2865 = vpop.f32.mrf.mxu0
    %2866 = vmatprep.mubr.f32.mxu0 0.0
    %2867 = vmatmul.mubr.f32.gmra.mxu0 %v2500
    %v2868 = vpop.f32.mrf.mxu0
    %v2869 = vadd.f32 0.0, %v2868
    %v2870 = vpop.f32.mrf.mxu0
    %2871 = vmatprep.mubr.f32.mxu0 0.0
    %2872 = vmatmul.mubr.f32.gmra.mxu0 %v2503
    %v2873 = vpop.f32.mrf.mxu0
    %v2874 = vadd.f32 0.0, %v2873
    %v2875 = vpop.f32.mrf.mxu0
    %2876 = vmatprep.mubr.f32.mxu0 0.0
    %2877 = vmatmul.mubr.f32.gmra.mxu0 %v2506
    %v2878 = vpop.f32.mrf.mxu0
    %v2879 = vadd.f32 0.0, %v2878
    %v2880 = vpop.f32.mrf.mxu0
    %2881 = vmatprep.mubr.f32.mxu0 0.0
    %2882 = vmatmul.mubr.f32.gmra.mxu0 %v2509
    %v2883 = vpop.f32.mrf.mxu0
    %v2884 = vadd.f32 0.0, %v2883
    %v2885 = vpop.f32.mrf.mxu0
    %2886 = vmatprep.mubr.f32.mxu0 0.0
    %2887 = vmatmul.mubr.f32.gmra.mxu0 %v2512
    %v2888 = vpop.f32.mrf.mxu0
    %v2889 = vadd.f32 0.0, %v2888
    %v2890 = vpop.f32.mrf.mxu0
    %2891 = vmatprep.mubr.f32.mxu0 0.0
    %2892 = vmatmul.mubr.f32.gmra.mxu0 %v2515
    %v2893 = vpop.f32.mrf.mxu0
    %v2894 = vadd.f32 0.0, %v2893
    %v2895 = vpop.f32.mrf.mxu0
    %2896 = vmatprep.mubr.f32.mxu0 0.0
    %2897 = vmatmul.mubr.f32.gmra.mxu0 %v2518
    %v2898 = vpop.f32.mrf.mxu0
    %v2899 = vadd.f32 0.0, %v2898
    %v2900 = vpop.f32.mrf.mxu0
    %2901 = vmatprep.mubr.f32.mxu0 0.0
    %2902 = vmatmul.mubr.f32.gmra.mxu0 %v2521
    %v2903 = vpop.f32.mrf.mxu0
    %v2904 = vadd.f32 0.0, %v2903
    %v2905 = vpop.f32.mrf.mxu0
    %2906 = vmatprep.mubr.f32.mxu0 0.0
    %2907 = vmatmul.mubr.f32.gmra.mxu0 %v2524
    %v2908 = vpop.f32.mrf.mxu0
    %v2909 = vadd.f32 0.0, %v2908
    %v2910 = vpop.f32.mrf.mxu0
    %2911 = vmatprep.mubr.f32.mxu0 0.0
    %2912 = vmatmul.mubr.f32.gmra.mxu0 %v2527
    %v2913 = vpop.f32.mrf.mxu0
    %v2914 = vadd.f32 0.0, %v2913
    %v2915 = vpop.f32.mrf.mxu0
    %2916 = vdwg.mxu0
    %v2917 = vadd.f32 %v2208, %v2599
    %v2918 = vadd.f32 %v2209, %v2604
    %v2919 = vadd.f32 %v2210, %v2609
    %v2920 = vadd.f32 %v2211, %v2614
    %v2921 = vadd.f32 %v2212, %v2619
    %v2922 = vadd.f32 %v2213, %v2624
    %v2923 = vadd.f32 %v2214, %v2629
    %v2924 = vadd.f32 %v2215, %v2634
    %v2925 = vadd.f32 %v2216, %v2639
    %v2926 = vadd.f32 %v2217, %v2644
    %v2927 = vadd.f32 %v2218, %v2649
    %v2928 = vadd.f32 %v2219, %v2654
    %v2929 = vadd.f32 %v2220, %v2659
    %v2930 = vadd.f32 %v2221, %v2664
    %v2931 = vadd.f32 %v2222, %v2669
    %v2932 = vadd.f32 %v2223, %v2674
    %v2933 = vadd.f32 %v2224, %v2679
    %v2934 = vadd.f32 %v2225, %v2684
    %v2935 = vadd.f32 %v2226, %v2689
    %v2936 = vadd.f32 %v2227, %v2694
    %v2937 = vadd.f32 %v2228, %v2699
    %v2938 = vadd.f32 %v2229, %v2704
    %v2939 = vadd.f32 %v2230, %v2709
    %v2940 = vadd.f32 %v2231, %v2714
    %v2941 = vadd.f32 %v2232, %v2719
    %v2942 = vadd.f32 %v2233, %v2724
    %v2943 = vadd.f32 %v2234, %v2729
    %v2944 = vadd.f32 %v2235, %v2734
    %v2945 = vadd.f32 %v2236, %v2739
    %v2946 = vadd.f32 %v2237, %v2744
    %v2947 = vadd.f32 %v2238, %v2749
    %v2948 = vadd.f32 %v2239, %v2754
    %v2949 = vadd.f32 %v2240, %v2759
    %v2950 = vadd.f32 %v2241, %v2764
    %v2951 = vadd.f32 %v2242, %v2769
    %v2952 = vadd.f32 %v2243, %v2774
    %v2953 = vadd.f32 %v2244, %v2779
    %v2954 = vadd.f32 %v2245, %v2784
    %v2955 = vadd.f32 %v2246, %v2789
    %v2956 = vadd.f32 %v2247, %v2794
    %v2957 = vadd.f32 %v2248, %v2799
    %v2958 = vadd.f32 %v2249, %v2804
    %v2959 = vadd.f32 %v2250, %v2809
    %v2960 = vadd.f32 %v2251, %v2814
    %v2961 = vadd.f32 %v2252, %v2819
    %v2962 = vadd.f32 %v2253, %v2824
    %v2963 = vadd.f32 %v2254, %v2829
    %v2964 = vadd.f32 %v2255, %v2834
    %v2965 = vadd.f32 %v2256, %v2839
    %v2966 = vadd.f32 %v2257, %v2844
    %v2967 = vadd.f32 %v2258, %v2849
    %v2968 = vadd.f32 %v2259, %v2854
    %v2969 = vadd.f32 %v2260, %v2859
    %v2970 = vadd.f32 %v2261, %v2864
    %v2971 = vadd.f32 %v2262, %v2869
    %v2972 = vadd.f32 %v2263, %v2874
    %v2973 = vadd.f32 %v2264, %v2879
    %v2974 = vadd.f32 %v2265, %v2884
    %v2975 = vadd.f32 %v2266, %v2889
    %v2976 = vadd.f32 %v2267, %v2894
    %v2977 = vadd.f32 %v2268, %v2899
    %v2978 = vadd.f32 %v2269, %v2904
    %v2979 = vadd.f32 %v2270, %v2909
    %v2980 = vadd.f32 %v2271, %v2914
    %v2981 = vld [vmem:[%s207 + $0x1] sm:$0xff]
    %v2982 = vld [vmem:[%s207 + $0x9] sm:$0xff]
    %v2983 = vld [vmem:[%s207 + $0x19] sm:$0xff]
    %v2984 = vld [vmem:[%s207 + $0x21] sm:$0xff]
    %v2985 = vld [vmem:[%s207 + $0x31] sm:$0xff]
    %v2986 = vld [vmem:[%s207 + $0x39] sm:$0xff]
    %v2987 = vld [vmem:[%s207 + $0x49] sm:$0xff]
    %v2988 = vld [vmem:[%s207 + $0x51] sm:$0xff]
    %v2989 = vld [vmem:[%s207 + $0x61] sm:$0xff]
    %v2990 = vld [vmem:[%s207 + $0x69] sm:$0xff]
    %v2991 = vld [vmem:[%s207 + $0x79] sm:$0xff]
    %v2992 = vld [vmem:[%s207 + $0x81] sm:$0xff]
    %v2993 = vld [vmem:[%s207 + $0x91] sm:$0xff]
    %v2994 = vld [vmem:[%s207 + $0x99] sm:$0xff]
    %v2995 = vld [vmem:[%s207 + $0xa9] sm:$0xff]
    %v2996 = vld [vmem:[%s207 + $0xb1] sm:$0xff]
    %v2997 = vld [vmem:[%s207 + $0xc1] sm:$0xff]
    %v2998 = vld [vmem:[%s207 + $0xc9] sm:$0xff]
    %v2999 = vld [vmem:[%s207 + $0xd9] sm:$0xff]
    %v3000 = vld [vmem:[%s207 + $0xe1] sm:$0xff]
    %v3001 = vld [vmem:[%s207 + $0xf1] sm:$0xff]
    %v3002 = vld [vmem:[%s207 + $0xf9] sm:$0xff]
    %v3003 = vld [vmem:[%s207 + $0x109] sm:$0xff]
    %v3004 = vld [vmem:[%s207 + $0x111] sm:$0xff]
    %v3005 = vld [vmem:[%s207 + $0x121] sm:$0xff]
    %v3006 = vld [vmem:[%s207 + $0x129] sm:$0xff]
    %v3007 = vld [vmem:[%s207 + $0x139] sm:$0xff]
    %v3008 = vld [vmem:[%s207 + $0x141] sm:$0xff]
    %v3009 = vld [vmem:[%s207 + $0x151] sm:$0xff]
    %v3010 = vld [vmem:[%s207 + $0x159] sm:$0xff]
    %v3011 = vld [vmem:[%s207 + $0x169] sm:$0xff]
    %v3012 = vld [vmem:[%s207 + $0x171] sm:$0xff]
    %v3013 = vld [vmem:[%s207 + $0x1b1] sm:$0xff]
    %v3014 = vld [vmem:[%s207 + $0x1b9] sm:$0xff]
    %v3015 = vld [vmem:[%s207 + $0x1c9] sm:$0xff]
    %v3016 = vld [vmem:[%s207 + $0x1d1] sm:$0xff]
    %v3017 = vld [vmem:[%s207 + $0x1e1] sm:$0xff]
    %v3018 = vld [vmem:[%s207 + $0x1e9] sm:$0xff]
    %v3019 = vld [vmem:[%s207 + $0x1f9] sm:$0xff]
    %v3020 = vld [vmem:[%s207 + $0x201] sm:$0xff]
    %v3021 = vld [vmem:[%s207 + $0x211] sm:$0xff]
    %v3022 = vld [vmem:[%s207 + $0x219] sm:$0xff]
    %v3023 = vld [vmem:[%s207 + $0x229] sm:$0xff]
    %v3024 = vld [vmem:[%s207 + $0x231] sm:$0xff]
    %v3025 = vld [vmem:[%s207 + $0x241] sm:$0xff]
    %v3026 = vld [vmem:[%s207 + $0x249] sm:$0xff]
    %v3027 = vld [vmem:[%s207 + $0x259] sm:$0xff]
    %v3028 = vld [vmem:[%s207 + $0x261] sm:$0xff]
    %v3029 = vld [vmem:[%s207 + $0x271] sm:$0xff]
    %v3030 = vld [vmem:[%s207 + $0x279] sm:$0xff]
    %v3031 = vld [vmem:[%s207 + $0x289] sm:$0xff]
    %v3032 = vld [vmem:[%s207 + $0x291] sm:$0xff]
    %v3033 = vld [vmem:[%s207 + $0x2a1] sm:$0xff]
    %v3034 = vld [vmem:[%s207 + $0x2a9] sm:$0xff]
    %v3035 = vld [vmem:[%s207 + $0x2b9] sm:$0xff]
    %v3036 = vld [vmem:[%s207 + $0x2c1] sm:$0xff]
    %v3037 = vld [vmem:[%s207 + $0x2d1] sm:$0xff]
    %v3038 = vld [vmem:[%s207 + $0x2d9] sm:$0xff]
    %v3039 = vld [vmem:[%s207 + $0x2e9] sm:$0xff]
    %v3040 = vld [vmem:[%s207 + $0x2f1] sm:$0xff]
    %v3041 = vld [vmem:[%s207 + $0x301] sm:$0xff]
    %v3042 = vld [vmem:[%s207 + $0x309] sm:$0xff]
    %v3043 = vld [vmem:[%s207 + $0x319] sm:$0xff]
    %v3044 = vld [vmem:[%s207 + $0x321] sm:$0xff]
    %v3045 = vld [vmem:[%s1 + $0xc] sm:$0x7]
    %v3047 = vsel %vm33, %v2981, 0
    %v3050 = vsel %vm33, %v2982, 0
    %v3053 = vsel %vm33, %v2983, 0
    %v3056 = vsel %vm33, %v2984, 0
    %v3059 = vsel %vm33, %v2985, 0
    %v3062 = vsel %vm33, %v2986, 0
    %v3065 = vsel %vm33, %v2987, 0
    %v3068 = vsel %vm33, %v2988, 0
    %v3071 = vsel %vm33, %v2989, 0
    %v3074 = vsel %vm33, %v2990, 0
    %v3077 = vsel %vm33, %v2991, 0
    %v3080 = vsel %vm33, %v2992, 0
    %v3083 = vsel %vm33, %v2993, 0
    %v3086 = vsel %vm33, %v2994, 0
    %v3089 = vsel %vm33, %v2995, 0
    %v3092 = vsel %vm33, %v2996, 0
    %v3095 = vsel %vm33, %v2997, 0
    %v3098 = vsel %vm33, %v2998, 0
    %v3101 = vsel %vm33, %v2999, 0
    %v3104 = vsel %vm33, %v3000, 0
    %v3107 = vsel %vm33, %v3001, 0
    %v3110 = vsel %vm33, %v3002, 0
    %v3113 = vsel %vm33, %v3003, 0
    %v3116 = vsel %vm33, %v3004, 0
    %v3119 = vsel %vm33, %v3005, 0
    %v3122 = vsel %vm33, %v3006, 0
    %v3125 = vsel %vm33, %v3007, 0
    %v3128 = vsel %vm33, %v3008, 0
    %v3131 = vsel %vm33, %v3009, 0
    %v3134 = vsel %vm33, %v3010, 0
    %v3137 = vsel %vm33, %v3011, 0
    %v3140 = vsel %vm33, %v3012, 0
    %v3143 = vsel %vm33, %v3013, 0
    %v3146 = vsel %vm33, %v3014, 0
    %v3149 = vsel %vm33, %v3015, 0
    %v3152 = vsel %vm33, %v3016, 0
    %v3155 = vsel %vm33, %v3017, 0
    %v3158 = vsel %vm33, %v3018, 0
    %v3161 = vsel %vm33, %v3019, 0
    %v3164 = vsel %vm33, %v3020, 0
    %v3167 = vsel %vm33, %v3021, 0
    %v3170 = vsel %vm33, %v3022, 0
    %v3173 = vsel %vm33, %v3023, 0
    %v3176 = vsel %vm33, %v3024, 0
    %v3179 = vsel %vm33, %v3025, 0
    %v3182 = vsel %vm33, %v3026, 0
    %v3185 = vsel %vm33, %v3027, 0
    %v3188 = vsel %vm33, %v3028, 0
    %v3191 = vsel %vm33, %v3029, 0
    %v3194 = vsel %vm33, %v3030, 0
    %v3197 = vsel %vm33, %v3031, 0
    %v3200 = vsel %vm33, %v3032, 0
    %v3203 = vsel %vm33, %v3033, 0
    %v3206 = vsel %vm33, %v3034, 0
    %v3209 = vsel %vm33, %v3035, 0
    %v3212 = vsel %vm33, %v3036, 0
    %v3215 = vsel %vm33, %v3037, 0
    %v3218 = vsel %vm33, %v3038, 0
    %v3221 = vsel %vm33, %v3039, 0
    %v3224 = vsel %vm33, %v3040, 0
    %v3227 = vsel %vm33, %v3041, 0
    %v3230 = vsel %vm33, %v3042, 0
    %v3233 = vsel %vm33, %v3043, 0
    %v3236 = vsel %vm33, %v3044, 0
    %v3239 = vsel %vm594, %v3045, 0
    %3241 = vmatprep.subr.mxu0 0.0
    %3242 = vmatpush1.msra.mxu0 0.0
    %3243 = vmatprep.subr.mxu0 0.0
    %3244 = vmatpush1.msra.mxu0 0.0
    %3245 = vmatprep.subr.mxu0 0.0
    %3246 = vmatpush1.msra.mxu0 0.0
    %3247 = vmatprep.subr.mxu0 0.0
    %3248 = vmatpush1.msra.mxu0 0.0
    %3249 = vmatprep.subr.mxu0 0.0
    %3250 = vmatpush1.msra.mxu0 0.0
    %3251 = vmatprep.subr.mxu0 0.0
    %3252 = vmatpush1.msra.mxu0 0.0
    %3253 = vmatprep.subr.mxu0 0.0
    %3254 = vmatpush1.msra.mxu0 0.0
    %3255 = vmatprep.subr.mxu0 0.0
    %3256 = vmatpush1.msra.mxu0 0.0
    %3257 = vmatprep.subr.mxu0 0.0
    %3258 = vmatpush1.msra.mxu0 0.0
    %3259 = vmatprep.subr.mxu0 0.0
    %3260 = vmatpush1.msra.mxu0 0.0
    %3261 = vmatprep.subr.mxu0 0.0
    %3262 = vmatpush1.msra.mxu0 0.0
    %3263 = vmatprep.subr.mxu0 0.0
    %3264 = vmatpush1.msra.mxu0 0.0
    %3265 = vmatprep.subr.mxu0 0.0
    %3266 = vmatpush1.msra.mxu0 0.0
    %3267 = vmatprep.subr.mxu0 0.0
    %3268 = vmatpush1.msra.mxu0 0.0
    %3269 = vmatprep.subr.mxu0 0.0
    %3270 = vmatpush1.msra.mxu0 0.0
    %3271 = vmatprep.subr.mxu0 0.0
    %3272 = vmatpush1.msra.mxu0 %v3239
    %3273 = vmatprep.subr.mxu0 0.0
    %3274 = vmatpush2.msra.mxu0 0.0
    %3275 = vmatprep.subr.mxu0 0.0
    %3276 = vmatpush2.msra.mxu0 0.0
    %3277 = vmatprep.subr.mxu0 0.0
    %3278 = vmatpush2.msra.mxu0 0.0
    %3279 = vmatprep.subr.mxu0 0.0
    %3280 = vmatpush2.msra.mxu0 0.0
    %3281 = vmatprep.subr.mxu0 0.0
    %3282 = vmatpush2.msra.mxu0 0.0
    %3283 = vmatprep.subr.mxu0 0.0
    %3284 = vmatpush2.msra.mxu0 0.0
    %3285 = vmatprep.subr.mxu0 0.0
    %3286 = vmatpush2.msra.mxu0 0.0
    %3287 = vmatprep.subr.mxu0 0.0
    %3288 = vmatpush2.msra.mxu0 0.0
    %3289 = vmatprep.subr.mxu0 0.0
    %3290 = vmatpush2.msra.mxu0 0.0
    %3291 = vmatprep.subr.mxu0 0.0
    %3292 = vmatpush2.msra.mxu0 0.0
    %3293 = vmatprep.subr.mxu0 0.0
    %3294 = vmatpush2.msra.mxu0 0.0
    %3295 = vmatprep.subr.mxu0 0.0
    %3296 = vmatpush2.msra.mxu0 0.0
    %3297 = vmatprep.subr.mxu0 0.0
    %3298 = vmatpush2.msra.mxu0 0.0
    %3299 = vmatprep.subr.mxu0 0.0
    %3300 = vmatpush2.msra.mxu0 0.0
    %3301 = vmatprep.subr.mxu0 0.0
    %3302 = vmatpush2.msra.mxu0 0.0
    %3303 = vmatprep.subr.mxu0 0.0
    %3304 = vmatpush2.msra.mxu0 0.0
    %3305 = vmatprep.mubr.f32.mxu0 0.0
    %3306 = vmatmul.mubr.f32.gmra.mxu0 %v3047
    %v3307 = vpop.f32.mrf.mxu0
    %v3308 = vadd.f32 0.0, %v3307
    %v3309 = vpop.f32.mrf.mxu0
    %3310 = vmatprep.mubr.f32.mxu0 0.0
    %3311 = vmatmul.mubr.f32.gmra.mxu0 %v3050
    %v3312 = vpop.f32.mrf.mxu0
    %v3313 = vadd.f32 0.0, %v3312
    %v3314 = vpop.f32.mrf.mxu0
    %3315 = vmatprep.mubr.f32.mxu0 0.0
    %3316 = vmatmul.mubr.f32.gmra.mxu0 %v3053
    %v3317 = vpop.f32.mrf.mxu0
    %v3318 = vadd.f32 0.0, %v3317
    %v3319 = vpop.f32.mrf.mxu0
    %3320 = vmatprep.mubr.f32.mxu0 0.0
    %3321 = vmatmul.mubr.f32.gmra.mxu0 %v3056
    %v3322 = vpop.f32.mrf.mxu0
    %v3323 = vadd.f32 0.0, %v3322
    %v3324 = vpop.f32.mrf.mxu0
    %3325 = vmatprep.mubr.f32.mxu0 0.0
    %3326 = vmatmul.mubr.f32.gmra.mxu0 %v3059
    %v3327 = vpop.f32.mrf.mxu0
    %v3328 = vadd.f32 0.0, %v3327
    %v3329 = vpop.f32.mrf.mxu0
    %3330 = vmatprep.mubr.f32.mxu0 0.0
    %3331 = vmatmul.mubr.f32.gmra.mxu0 %v3062
    %v3332 = vpop.f32.mrf.mxu0
    %v3333 = vadd.f32 0.0, %v3332
    %v3334 = vpop.f32.mrf.mxu0
    %3335 = vmatprep.mubr.f32.mxu0 0.0
    %3336 = vmatmul.mubr.f32.gmra.mxu0 %v3065
    %v3337 = vpop.f32.mrf.mxu0
    %v3338 = vadd.f32 0.0, %v3337
    %v3339 = vpop.f32.mrf.mxu0
    %3340 = vmatprep.mubr.f32.mxu0 0.0
    %3341 = vmatmul.mubr.f32.gmra.mxu0 %v3068
    %v3342 = vpop.f32.mrf.mxu0
    %v3343 = vadd.f32 0.0, %v3342
    %v3344 = vpop.f32.mrf.mxu0
    %3345 = vmatprep.mubr.f32.mxu0 0.0
    %3346 = vmatmul.mubr.f32.gmra.mxu0 %v3071
    %v3347 = vpop.f32.mrf.mxu0
    %v3348 = vadd.f32 0.0, %v3347
    %v3349 = vpop.f32.mrf.mxu0
    %3350 = vmatprep.mubr.f32.mxu0 0.0
    %3351 = vmatmul.mubr.f32.gmra.mxu0 %v3074
    %v3352 = vpop.f32.mrf.mxu0
    %v3353 = vadd.f32 0.0, %v3352
    %v3354 = vpop.f32.mrf.mxu0
    %3355 = vmatprep.mubr.f32.mxu0 0.0
    %3356 = vmatmul.mubr.f32.gmra.mxu0 %v3077
    %v3357 = vpop.f32.mrf.mxu0
    %v3358 = vadd.f32 0.0, %v3357
    %v3359 = vpop.f32.mrf.mxu0
    %3360 = vmatprep.mubr.f32.mxu0 0.0
    %3361 = vmatmul.mubr.f32.gmra.mxu0 %v3080
    %v3362 = vpop.f32.mrf.mxu0
    %v3363 = vadd.f32 0.0, %v3362
    %v3364 = vpop.f32.mrf.mxu0
    %3365 = vmatprep.mubr.f32.mxu0 0.0
    %3366 = vmatmul.mubr.f32.gmra.mxu0 %v3083
    %v3367 = vpop.f32.mrf.mxu0
    %v3368 = vadd.f32 0.0, %v3367
    %v3369 = vpop.f32.mrf.mxu0
    %3370 = vmatprep.mubr.f32.mxu0 0.0
    %3371 = vmatmul.mubr.f32.gmra.mxu0 %v3086
    %v3372 = vpop.f32.mrf.mxu0
    %v3373 = vadd.f32 0.0, %v3372
    %v3374 = vpop.f32.mrf.mxu0
    %3375 = vmatprep.mubr.f32.mxu0 0.0
    %3376 = vmatmul.mubr.f32.gmra.mxu0 %v3089
    %v3377 = vpop.f32.mrf.mxu0
    %v3378 = vadd.f32 0.0, %v3377
    %v3379 = vpop.f32.mrf.mxu0
    %3380 = vmatprep.mubr.f32.mxu0 0.0
    %3381 = vmatmul.mubr.f32.gmra.mxu0 %v3092
    %v3382 = vpop.f32.mrf.mxu0
    %v3383 = vadd.f32 0.0, %v3382
    %v3384 = vpop.f32.mrf.mxu0
    %3385 = vmatprep.mubr.f32.mxu0 0.0
    %3386 = vmatmul.mubr.f32.gmra.mxu0 %v3095
    %v3387 = vpop.f32.mrf.mxu0
    %v3388 = vadd.f32 0.0, %v3387
    %v3389 = vpop.f32.mrf.mxu0
    %3390 = vmatprep.mubr.f32.mxu0 0.0
    %3391 = vmatmul.mubr.f32.gmra.mxu0 %v3098
    %v3392 = vpop.f32.mrf.mxu0
    %v3393 = vadd.f32 0.0, %v3392
    %v3394 = vpop.f32.mrf.mxu0
    %3395 = vmatprep.mubr.f32.mxu0 0.0
    %3396 = vmatmul.mubr.f32.gmra.mxu0 %v3101
    %v3397 = vpop.f32.mrf.mxu0
    %v3398 = vadd.f32 0.0, %v3397
    %v3399 = vpop.f32.mrf.mxu0
    %3400 = vmatprep.mubr.f32.mxu0 0.0
    %3401 = vmatmul.mubr.f32.gmra.mxu0 %v3104
    %v3402 = vpop.f32.mrf.mxu0
    %v3403 = vadd.f32 0.0, %v3402
    %v3404 = vpop.f32.mrf.mxu0
    %3405 = vmatprep.mubr.f32.mxu0 0.0
    %3406 = vmatmul.mubr.f32.gmra.mxu0 %v3107
    %v3407 = vpop.f32.mrf.mxu0
    %v3408 = vadd.f32 0.0, %v3407
    %v3409 = vpop.f32.mrf.mxu0
    %3410 = vmatprep.mubr.f32.mxu0 0.0
    %3411 = vmatmul.mubr.f32.gmra.mxu0 %v3110
    %v3412 = vpop.f32.mrf.mxu0
    %v3413 = vadd.f32 0.0, %v3412
    %v3414 = vpop.f32.mrf.mxu0
    %3415 = vmatprep.mubr.f32.mxu0 0.0
    %3416 = vmatmul.mubr.f32.gmra.mxu0 %v3113
    %v3417 = vpop.f32.mrf.mxu0
    %v3418 = vadd.f32 0.0, %v3417
    %v3419 = vpop.f32.mrf.mxu0
    %3420 = vmatprep.mubr.f32.mxu0 0.0
    %3421 = vmatmul.mubr.f32.gmra.mxu0 %v3116
    %v3422 = vpop.f32.mrf.mxu0
    %v3423 = vadd.f32 0.0, %v3422
    %v3424 = vpop.f32.mrf.mxu0
    %3425 = vmatprep.mubr.f32.mxu0 0.0
    %3426 = vmatmul.mubr.f32.gmra.mxu0 %v3119
    %v3427 = vpop.f32.mrf.mxu0
    %v3428 = vadd.f32 0.0, %v3427
    %v3429 = vpop.f32.mrf.mxu0
    %3430 = vmatprep.mubr.f32.mxu0 0.0
    %3431 = vmatmul.mubr.f32.gmra.mxu0 %v3122
    %v3432 = vpop.f32.mrf.mxu0
    %v3433 = vadd.f32 0.0, %v3432
    %v3434 = vpop.f32.mrf.mxu0
    %3435 = vmatprep.mubr.f32.mxu0 0.0
    %3436 = vmatmul.mubr.f32.gmra.mxu0 %v3125
    %v3437 = vpop.f32.mrf.mxu0
    %v3438 = vadd.f32 0.0, %v3437
    %v3439 = vpop.f32.mrf.mxu0
    %3440 = vmatprep.mubr.f32.mxu0 0.0
    %3441 = vmatmul.mubr.f32.gmra.mxu0 %v3128
    %v3442 = vpop.f32.mrf.mxu0
    %v3443 = vadd.f32 0.0, %v3442
    %v3444 = vpop.f32.mrf.mxu0
    %3445 = vmatprep.mubr.f32.mxu0 0.0
    %3446 = vmatmul.mubr.f32.gmra.mxu0 %v3131
    %v3447 = vpop.f32.mrf.mxu0
    %v3448 = vadd.f32 0.0, %v3447
    %v3449 = vpop.f32.mrf.mxu0
    %3450 = vmatprep.mubr.f32.mxu0 0.0
    %3451 = vmatmul.mubr.f32.gmra.mxu0 %v3134
    %v3452 = vpop.f32.mrf.mxu0
    %v3453 = vadd.f32 0.0, %v3452
    %v3454 = vpop.f32.mrf.mxu0
    %3455 = vmatprep.mubr.f32.mxu0 0.0
    %3456 = vmatmul.mubr.f32.gmra.mxu0 %v3137
    %v3457 = vpop.f32.mrf.mxu0
    %v3458 = vadd.f32 0.0, %v3457
    %v3459 = vpop.f32.mrf.mxu0
    %3460 = vmatprep.mubr.f32.mxu0 0.0
    %3461 = vmatmul.mubr.f32.gmra.mxu0 %v3140
    %v3462 = vpop.f32.mrf.mxu0
    %v3463 = vadd.f32 0.0, %v3462
    %v3464 = vpop.f32.mrf.mxu0
    %3465 = vmatprep.mubr.f32.mxu0 0.0
    %3466 = vmatmul.mubr.f32.gmra.mxu0 %v3143
    %v3467 = vpop.f32.mrf.mxu0
    %v3468 = vadd.f32 0.0, %v3467
    %v3469 = vpop.f32.mrf.mxu0
    %3470 = vmatprep.mubr.f32.mxu0 0.0
    %3471 = vmatmul.mubr.f32.gmra.mxu0 %v3146
    %v3472 = vpop.f32.mrf.mxu0
    %v3473 = vadd.f32 0.0, %v3472
    %v3474 = vpop.f32.mrf.mxu0
    %3475 = vmatprep.mubr.f32.mxu0 0.0
    %3476 = vmatmul.mubr.f32.gmra.mxu0 %v3149
    %v3477 = vpop.f32.mrf.mxu0
    %v3478 = vadd.f32 0.0, %v3477
    %v3479 = vpop.f32.mrf.mxu0
    %3480 = vmatprep.mubr.f32.mxu0 0.0
    %3481 = vmatmul.mubr.f32.gmra.mxu0 %v3152
    %v3482 = vpop.f32.mrf.mxu0
    %v3483 = vadd.f32 0.0, %v3482
    %v3484 = vpop.f32.mrf.mxu0
    %3485 = vmatprep.mubr.f32.mxu0 0.0
    %3486 = vmatmul.mubr.f32.gmra.mxu0 %v3155
    %v3487 = vpop.f32.mrf.mxu0
    %v3488 = vadd.f32 0.0, %v3487
    %v3489 = vpop.f32.mrf.mxu0
    %3490 = vmatprep.mubr.f32.mxu0 0.0
    %3491 = vmatmul.mubr.f32.gmra.mxu0 %v3158
    %v3492 = vpop.f32.mrf.mxu0
    %v3493 = vadd.f32 0.0, %v3492
    %v3494 = vpop.f32.mrf.mxu0
    %3495 = vmatprep.mubr.f32.mxu0 0.0
    %3496 = vmatmul.mubr.f32.gmra.mxu0 %v3161
    %v3497 = vpop.f32.mrf.mxu0
    %v3498 = vadd.f32 0.0, %v3497
    %v3499 = vpop.f32.mrf.mxu0
    %3500 = vmatprep.mubr.f32.mxu0 0.0
    %3501 = vmatmul.mubr.f32.gmra.mxu0 %v3164
    %v3502 = vpop.f32.mrf.mxu0
    %v3503 = vadd.f32 0.0, %v3502
    %v3504 = vpop.f32.mrf.mxu0
    %3505 = vmatprep.mubr.f32.mxu0 0.0
    %3506 = vmatmul.mubr.f32.gmra.mxu0 %v3167
    %v3507 = vpop.f32.mrf.mxu0
    %v3508 = vadd.f32 0.0, %v3507
    %v3509 = vpop.f32.mrf.mxu0
    %3510 = vmatprep.mubr.f32.mxu0 0.0
    %3511 = vmatmul.mubr.f32.gmra.mxu0 %v3170
    %v3512 = vpop.f32.mrf.mxu0
    %v3513 = vadd.f32 0.0, %v3512
    %v3514 = vpop.f32.mrf.mxu0
    %3515 = vmatprep.mubr.f32.mxu0 0.0
    %3516 = vmatmul.mubr.f32.gmra.mxu0 %v3173
    %v3517 = vpop.f32.mrf.mxu0
    %v3518 = vadd.f32 0.0, %v3517
    %v3519 = vpop.f32.mrf.mxu0
    %3520 = vmatprep.mubr.f32.mxu0 0.0
    %3521 = vmatmul.mubr.f32.gmra.mxu0 %v3176
    %v3522 = vpop.f32.mrf.mxu0
    %v3523 = vadd.f32 0.0, %v3522
    %v3524 = vpop.f32.mrf.mxu0
    %3525 = vmatprep.mubr.f32.mxu0 0.0
    %3526 = vmatmul.mubr.f32.gmra.mxu0 %v3179
    %v3527 = vpop.f32.mrf.mxu0
    %v3528 = vadd.f32 0.0, %v3527
    %v3529 = vpop.f32.mrf.mxu0
    %3530 = vmatprep.mubr.f32.mxu0 0.0
    %3531 = vmatmul.mubr.f32.gmra.mxu0 %v3182
    %v3532 = vpop.f32.mrf.mxu0
    %v3533 = vadd.f32 0.0, %v3532
    %v3534 = vpop.f32.mrf.mxu0
    %3535 = vmatprep.mubr.f32.mxu0 0.0
    %3536 = vmatmul.mubr.f32.gmra.mxu0 %v3185
    %v3537 = vpop.f32.mrf.mxu0
    %v3538 = vadd.f32 0.0, %v3537
    %v3539 = vpop.f32.mrf.mxu0
    %3540 = vmatprep.mubr.f32.mxu0 0.0
    %3541 = vmatmul.mubr.f32.gmra.mxu0 %v3188
    %v3542 = vpop.f32.mrf.mxu0
    %v3543 = vadd.f32 0.0, %v3542
    %v3544 = vpop.f32.mrf.mxu0
    %3545 = vmatprep.mubr.f32.mxu0 0.0
    %3546 = vmatmul.mubr.f32.gmra.mxu0 %v3191
    %v3547 = vpop.f32.mrf.mxu0
    %v3548 = vadd.f32 0.0, %v3547
    %v3549 = vpop.f32.mrf.mxu0
    %3550 = vmatprep.mubr.f32.mxu0 0.0
    %3551 = vmatmul.mubr.f32.gmra.mxu0 %v3194
    %v3552 = vpop.f32.mrf.mxu0
    %v3553 = vadd.f32 0.0, %v3552
    %v3554 = vpop.f32.mrf.mxu0
    %3555 = vmatprep.mubr.f32.mxu0 0.0
    %3556 = vmatmul.mubr.f32.gmra.mxu0 %v3197
    %v3557 = vpop.f32.mrf.mxu0
    %v3558 = vadd.f32 0.0, %v3557
    %v3559 = vpop.f32.mrf.mxu0
    %3560 = vmatprep.mubr.f32.mxu0 0.0
    %3561 = vmatmul.mubr.f32.gmra.mxu0 %v3200
    %v3562 = vpop.f32.mrf.mxu0
    %v3563 = vadd.f32 0.0, %v3562
    %v3564 = vpop.f32.mrf.mxu0
    %3565 = vmatprep.mubr.f32.mxu0 0.0
    %3566 = vmatmul.mubr.f32.gmra.mxu0 %v3203
    %v3567 = vpop.f32.mrf.mxu0
    %v3568 = vadd.f32 0.0, %v3567
    %v3569 = vpop.f32.mrf.mxu0
    %3570 = vmatprep.mubr.f32.mxu0 0.0
    %3571 = vmatmul.mubr.f32.gmra.mxu0 %v3206
    %v3572 = vpop.f32.mrf.mxu0
    %v3573 = vadd.f32 0.0, %v3572
    %v3574 = vpop.f32.mrf.mxu0
    %3575 = vmatprep.mubr.f32.mxu0 0.0
    %3576 = vmatmul.mubr.f32.gmra.mxu0 %v3209
    %v3577 = vpop.f32.mrf.mxu0
    %v3578 = vadd.f32 0.0, %v3577
    %v3579 = vpop.f32.mrf.mxu0
    %3580 = vmatprep.mubr.f32.mxu0 0.0
    %3581 = vmatmul.mubr.f32.gmra.mxu0 %v3212
    %v3582 = vpop.f32.mrf.mxu0
    %v3583 = vadd.f32 0.0, %v3582
    %v3584 = vpop.f32.mrf.mxu0
    %3585 = vmatprep.mubr.f32.mxu0 0.0
    %3586 = vmatmul.mubr.f32.gmra.mxu0 %v3215
    %v3587 = vpop.f32.mrf.mxu0
    %v3588 = vadd.f32 0.0, %v3587
    %v3589 = vpop.f32.mrf.mxu0
    %3590 = vmatprep.mubr.f32.mxu0 0.0
    %3591 = vmatmul.mubr.f32.gmra.mxu0 %v3218
    %v3592 = vpop.f32.mrf.mxu0
    %v3593 = vadd.f32 0.0, %v3592
    %v3594 = vpop.f32.mrf.mxu0
    %3595 = vmatprep.mubr.f32.mxu0 0.0
    %3596 = vmatmul.mubr.f32.gmra.mxu0 %v3221
    %v3597 = vpop.f32.mrf.mxu0
    %v3598 = vadd.f32 0.0, %v3597
    %v3599 = vpop.f32.mrf.mxu0
    %3600 = vmatprep.mubr.f32.mxu0 0.0
    %3601 = vmatmul.mubr.f32.gmra.mxu0 %v3224
    %v3602 = vpop.f32.mrf.mxu0
    %v3603 = vadd.f32 0.0, %v3602
    %v3604 = vpop.f32.mrf.mxu0
    %3605 = vmatprep.mubr.f32.mxu0 0.0
    %3606 = vmatmul.mubr.f32.gmra.mxu0 %v3227
    %v3607 = vpop.f32.mrf.mxu0
    %v3608 = vadd.f32 0.0, %v3607
    %v3609 = vpop.f32.mrf.mxu0
    %3610 = vmatprep.mubr.f32.mxu0 0.0
    %3611 = vmatmul.mubr.f32.gmra.mxu0 %v3230
    %v3612 = vpop.f32.mrf.mxu0
    %v3613 = vadd.f32 0.0, %v3612
    %v3614 = vpop.f32.mrf.mxu0
    %3615 = vmatprep.mubr.f32.mxu0 0.0
    %3616 = vmatmul.mubr.f32.gmra.mxu0 %v3233
    %v3617 = vpop.f32.mrf.mxu0
    %v3618 = vadd.f32 0.0, %v3617
    %v3619 = vpop.f32.mrf.mxu0
    %3620 = vmatprep.mubr.f32.mxu0 0.0
    %3621 = vmatmul.mubr.f32.gmra.mxu0 %v3236
    %v3622 = vpop.f32.mrf.mxu0
    %v3623 = vadd.f32 0.0, %v3622
    %v3624 = vpop.f32.mrf.mxu0
    %3625 = vdwg.mxu0
    %v3626 = vadd.f32 %v2917, %v3308
    %v3627 = vadd.f32 %v2918, %v3313
    %v3628 = vadd.f32 %v2919, %v3318
    %v3629 = vadd.f32 %v2920, %v3323
    %v3630 = vadd.f32 %v2921, %v3328
    %v3631 = vadd.f32 %v2922, %v3333
    %v3632 = vadd.f32 %v2923, %v3338
    %v3633 = vadd.f32 %v2924, %v3343
    %v3634 = vadd.f32 %v2925, %v3348
    %v3635 = vadd.f32 %v2926, %v3353
    %v3636 = vadd.f32 %v2927, %v3358
    %v3637 = vadd.f32 %v2928, %v3363
    %v3638 = vadd.f32 %v2929, %v3368
    %v3639 = vadd.f32 %v2930, %v3373
    %v3640 = vadd.f32 %v2931, %v3378
    %v3641 = vadd.f32 %v2932, %v3383
    %v3642 = vadd.f32 %v2933, %v3388
    %v3643 = vadd.f32 %v2934, %v3393
    %v3644 = vadd.f32 %v2935, %v3398
    %v3645 = vadd.f32 %v2936, %v3403
    %v3646 = vadd.f32 %v2937, %v3408
    %v3647 = vadd.f32 %v2938, %v3413
    %v3648 = vadd.f32 %v2939, %v3418
    %v3649 = vadd.f32 %v2940, %v3423
    %v3650 = vadd.f32 %v2941, %v3428
    %v3651 = vadd.f32 %v2942, %v3433
    %v3652 = vadd.f32 %v2943, %v3438
    %v3653 = vadd.f32 %v2944, %v3443
    %v3654 = vadd.f32 %v2945, %v3448
    %v3655 = vadd.f32 %v2946, %v3453
    %v3656 = vadd.f32 %v2947, %v3458
    %v3657 = vadd.f32 %v2948, %v3463
    %v3658 = vadd.f32 %v2949, %v3468
    %v3659 = vadd.f32 %v2950, %v3473
    %v3660 = vadd.f32 %v2951, %v3478
    %v3661 = vadd.f32 %v2952, %v3483
    %v3662 = vadd.f32 %v2953, %v3488
    %v3663 = vadd.f32 %v2954, %v3493
    %v3664 = vadd.f32 %v2955, %v3498
    %v3665 = vadd.f32 %v2956, %v3503
    %v3666 = vadd.f32 %v2957, %v3508
    %v3667 = vadd.f32 %v2958, %v3513
    %v3668 = vadd.f32 %v2959, %v3518
    %v3669 = vadd.f32 %v2960, %v3523
    %v3670 = vadd.f32 %v2961, %v3528
    %v3671 = vadd.f32 %v2962, %v3533
    %v3672 = vadd.f32 %v2963, %v3538
    %v3673 = vadd.f32 %v2964, %v3543
    %v3674 = vadd.f32 %v2965, %v3548
    %v3675 = vadd.f32 %v2966, %v3553
    %v3676 = vadd.f32 %v2967, %v3558
    %v3677 = vadd.f32 %v2968, %v3563
    %v3678 = vadd.f32 %v2969, %v3568
    %v3679 = vadd.f32 %v2970, %v3573
    %v3680 = vadd.f32 %v2971, %v3578
    %v3681 = vadd.f32 %v2972, %v3583
    %v3682 = vadd.f32 %v2973, %v3588
    %v3683 = vadd.f32 %v2974, %v3593
    %v3684 = vadd.f32 %v2975, %v3598
    %v3685 = vadd.f32 %v2976, %v3603
    %v3686 = vadd.f32 %v2977, %v3608
    %v3687 = vadd.f32 %v2978, %v3613
    %v3688 = vadd.f32 %v2979, %v3618
    %v3689 = vadd.f32 %v2980, %v3623
    %v3690 = vld [vmem:[%s207 + $0x2] sm:$0xff]
    %v3691 = vld [vmem:[%s207 + $0xa] sm:$0xff]
    %v3692 = vld [vmem:[%s207 + $0x1a] sm:$0xff]
    %v3693 = vld [vmem:[%s207 + $0x22] sm:$0xff]
    %v3694 = vld [vmem:[%s207 + $0x32] sm:$0xff]
    %v3695 = vld [vmem:[%s207 + $0x3a] sm:$0xff]
    %v3696 = vld [vmem:[%s207 + $0x4a] sm:$0xff]
    %v3697 = vld [vmem:[%s207 + $0x52] sm:$0xff]
    %v3698 = vld [vmem:[%s207 + $0x62] sm:$0xff]
    %v3699 = vld [vmem:[%s207 + $0x6a] sm:$0xff]
    %v3700 = vld [vmem:[%s207 + $0x7a] sm:$0xff]
    %v3701 = vld [vmem:[%s207 + $0x82] sm:$0xff]
    %v3702 = vld [vmem:[%s207 + $0x92] sm:$0xff]
    %v3703 = vld [vmem:[%s207 + $0x9a] sm:$0xff]
    %v3704 = vld [vmem:[%s207 + $0xaa] sm:$0xff]
    %v3705 = vld [vmem:[%s207 + $0xb2] sm:$0xff]
    %v3706 = vld [vmem:[%s207 + $0xc2] sm:$0xff]
    %v3707 = vld [vmem:[%s207 + $0xca] sm:$0xff]
    %v3708 = vld [vmem:[%s207 + $0xda] sm:$0xff]
    %v3709 = vld [vmem:[%s207 + $0xe2] sm:$0xff]
    %v3710 = vld [vmem:[%s207 + $0xf2] sm:$0xff]
    %v3711 = vld [vmem:[%s207 + $0xfa] sm:$0xff]
    %v3712 = vld [vmem:[%s207 + $0x10a] sm:$0xff]
    %v3713 = vld [vmem:[%s207 + $0x112] sm:$0xff]
    %v3714 = vld [vmem:[%s207 + $0x122] sm:$0xff]
    %v3715 = vld [vmem:[%s207 + $0x12a] sm:$0xff]
    %v3716 = vld [vmem:[%s207 + $0x13a] sm:$0xff]
    %v3717 = vld [vmem:[%s207 + $0x142] sm:$0xff]
    %v3718 = vld [vmem:[%s207 + $0x152] sm:$0xff]
    %v3719 = vld [vmem:[%s207 + $0x15a] sm:$0xff]
    %v3720 = vld [vmem:[%s207 + $0x16a] sm:$0xff]
    %v3721 = vld [vmem:[%s207 + $0x172] sm:$0xff]
    %v3722 = vld [vmem:[%s207 + $0x1b2] sm:$0xff]
    %v3723 = vld [vmem:[%s207 + $0x1ba] sm:$0xff]
    %v3724 = vld [vmem:[%s207 + $0x1ca] sm:$0xff]
    %v3725 = vld [vmem:[%s207 + $0x1d2] sm:$0xff]
    %v3726 = vld [vmem:[%s207 + $0x1e2] sm:$0xff]
    %v3727 = vld [vmem:[%s207 + $0x1ea] sm:$0xff]
    %v3728 = vld [vmem:[%s207 + $0x1fa] sm:$0xff]
    %v3729 = vld [vmem:[%s207 + $0x202] sm:$0xff]
    %v3730 = vld [vmem:[%s207 + $0x212] sm:$0xff]
    %v3731 = vld [vmem:[%s207 + $0x21a] sm:$0xff]
    %v3732 = vld [vmem:[%s207 + $0x22a] sm:$0xff]
    %v3733 = vld [vmem:[%s207 + $0x232] sm:$0xff]
    %v3734 = vld [vmem:[%s207 + $0x242] sm:$0xff]
    %v3735 = vld [vmem:[%s207 + $0x24a] sm:$0xff]
    %v3736 = vld [vmem:[%s207 + $0x25a] sm:$0xff]
    %v3737 = vld [vmem:[%s207 + $0x262] sm:$0xff]
    %v3738 = vld [vmem:[%s207 + $0x272] sm:$0xff]
    %v3739 = vld [vmem:[%s207 + $0x27a] sm:$0xff]
    %v3740 = vld [vmem:[%s207 + $0x28a] sm:$0xff]
    %v3741 = vld [vmem:[%s207 + $0x292] sm:$0xff]
    %v3742 = vld [vmem:[%s207 + $0x2a2] sm:$0xff]
    %v3743 = vld [vmem:[%s207 + $0x2aa] sm:$0xff]
    %v3744 = vld [vmem:[%s207 + $0x2ba] sm:$0xff]
    %v3745 = vld [vmem:[%s207 + $0x2c2] sm:$0xff]
    %v3746 = vld [vmem:[%s207 + $0x2d2] sm:$0xff]
    %v3747 = vld [vmem:[%s207 + $0x2da] sm:$0xff]
    %v3748 = vld [vmem:[%s207 + $0x2ea] sm:$0xff]
    %v3749 = vld [vmem:[%s207 + $0x2f2] sm:$0xff]
    %v3750 = vld [vmem:[%s207 + $0x302] sm:$0xff]
    %v3751 = vld [vmem:[%s207 + $0x30a] sm:$0xff]
    %v3752 = vld [vmem:[%s207 + $0x31a] sm:$0xff]
    %v3753 = vld [vmem:[%s207 + $0x322] sm:$0xff]
    %v3754 = vld [vmem:[%s1 + $0xf] sm:$0x7]
    %v3756 = vsel %vm33, %v3690, 0
    %v3759 = vsel %vm33, %v3691, 0
    %v3762 = vsel %vm33, %v3692, 0
    %v3765 = vsel %vm33, %v3693, 0
    %v3768 = vsel %vm33, %v3694, 0
    %v3771 = vsel %vm33, %v3695, 0
    %v3774 = vsel %vm33, %v3696, 0
    %v3777 = vsel %vm33, %v3697, 0
    %v3780 = vsel %vm33, %v3698, 0
    %v3783 = vsel %vm33, %v3699, 0
    %v3786 = vsel %vm33, %v3700, 0
    %v3789 = vsel %vm33, %v3701, 0
    %v3792 = vsel %vm33, %v3702, 0
    %v3795 = vsel %vm33, %v3703, 0
    %v3798 = vsel %vm33, %v3704, 0
    %v3801 = vsel %vm33, %v3705, 0
    %v3804 = vsel %vm33, %v3706, 0
    %v3807 = vsel %vm33, %v3707, 0
    %v3810 = vsel %vm33, %v3708, 0
    %v3813 = vsel %vm33, %v3709, 0
    %v3816 = vsel %vm33, %v3710, 0
    %v3819 = vsel %vm33, %v3711, 0
    %v3822 = vsel %vm33, %v3712, 0
    %v3825 = vsel %vm33, %v3713, 0
    %v3828 = vsel %vm33, %v3714, 0
    %v3831 = vsel %vm33, %v3715, 0
    %v3834 = vsel %vm33, %v3716, 0
    %v3837 = vsel %vm33, %v3717, 0
    %v3840 = vsel %vm33, %v3718, 0
    %v3843 = vsel %vm33, %v3719, 0
    %v3846 = vsel %vm33, %v3720, 0
    %v3849 = vsel %vm33, %v3721, 0
    %v3852 = vsel %vm33, %v3722, 0
    %v3855 = vsel %vm33, %v3723, 0
    %v3858 = vsel %vm33, %v3724, 0
    %v3861 = vsel %vm33, %v3725, 0
    %v3864 = vsel %vm33, %v3726, 0
    %v3867 = vsel %vm33, %v3727, 0
    %v3870 = vsel %vm33, %v3728, 0
    %v3873 = vsel %vm33, %v3729, 0
    %v3876 = vsel %vm33, %v3730, 0
    %v3879 = vsel %vm33, %v3731, 0
    %v3882 = vsel %vm33, %v3732, 0
    %v3885 = vsel %vm33, %v3733, 0
    %v3888 = vsel %vm33, %v3734, 0
    %v3891 = vsel %vm33, %v3735, 0
    %v3894 = vsel %vm33, %v3736, 0
    %v3897 = vsel %vm33, %v3737, 0
    %v3900 = vsel %vm33, %v3738, 0
    %v3903 = vsel %vm33, %v3739, 0
    %v3906 = vsel %vm33, %v3740, 0
    %v3909 = vsel %vm33, %v3741, 0
    %v3912 = vsel %vm33, %v3742, 0
    %v3915 = vsel %vm33, %v3743, 0
    %v3918 = vsel %vm33, %v3744, 0
    %v3921 = vsel %vm33, %v3745, 0
    %v3924 = vsel %vm33, %v3746, 0
    %v3927 = vsel %vm33, %v3747, 0
    %v3930 = vsel %vm33, %v3748, 0
    %v3933 = vsel %vm33, %v3749, 0
    %v3936 = vsel %vm33, %v3750, 0
    %v3939 = vsel %vm33, %v3751, 0
    %v3942 = vsel %vm33, %v3752, 0
    %v3945 = vsel %vm33, %v3753, 0
    %v3948 = vsel %vm594, %v3754, 0
    %3950 = vmatprep.subr.mxu0 0.0
    %3951 = vmatpush1.msra.mxu0 0.0
    %3952 = vmatprep.subr.mxu0 0.0
    %3953 = vmatpush1.msra.mxu0 0.0
    %3954 = vmatprep.subr.mxu0 0.0
    %3955 = vmatpush1.msra.mxu0 0.0
    %3956 = vmatprep.subr.mxu0 0.0
    %3957 = vmatpush1.msra.mxu0 0.0
    %3958 = vmatprep.subr.mxu0 0.0
    %3959 = vmatpush1.msra.mxu0 0.0
    %3960 = vmatprep.subr.mxu0 0.0
    %3961 = vmatpush1.msra.mxu0 0.0
    %3962 = vmatprep.subr.mxu0 0.0
    %3963 = vmatpush1.msra.mxu0 0.0
    %3964 = vmatprep.subr.mxu0 0.0
    %3965 = vmatpush1.msra.mxu0 0.0
    %3966 = vmatprep.subr.mxu0 0.0
    %3967 = vmatpush1.msra.mxu0 0.0
    %3968 = vmatprep.subr.mxu0 0.0
    %3969 = vmatpush1.msra.mxu0 0.0
    %3970 = vmatprep.subr.mxu0 0.0
    %3971 = vmatpush1.msra.mxu0 0.0
    %3972 = vmatprep.subr.mxu0 0.0
    %3973 = vmatpush1.msra.mxu0 0.0
    %3974 = vmatprep.subr.mxu0 0.0
    %3975 = vmatpush1.msra.mxu0 0.0
    %3976 = vmatprep.subr.mxu0 0.0
    %3977 = vmatpush1.msra.mxu0 0.0
    %3978 = vmatprep.subr.mxu0 0.0
    %3979 = vmatpush1.msra.mxu0 0.0
    %3980 = vmatprep.subr.mxu0 0.0
    %3981 = vmatpush1.msra.mxu0 %v3948
    %3982 = vmatprep.subr.mxu0 0.0
    %3983 = vmatpush2.msra.mxu0 0.0
    %3984 = vmatprep.subr.mxu0 0.0
    %3985 = vmatpush2.msra.mxu0 0.0
    %3986 = vmatprep.subr.mxu0 0.0
    %3987 = vmatpush2.msra.mxu0 0.0
    %3988 = vmatprep.subr.mxu0 0.0
    %3989 = vmatpush2.msra.mxu0 0.0
    %3990 = vmatprep.subr.mxu0 0.0
    %3991 = vmatpush2.msra.mxu0 0.0
    %3992 = vmatprep.subr.mxu0 0.0
    %3993 = vmatpush2.msra.mxu0 0.0
    %3994 = vmatprep.subr.mxu0 0.0
    %3995 = vmatpush2.msra.mxu0 0.0
    %3996 = vmatprep.subr.mxu0 0.0
    %3997 = vmatpush2.msra.mxu0 0.0
    %3998 = vmatprep.subr.mxu0 0.0
    %3999 = vmatpush2.msra.mxu0 0.0
    %4000 = vmatprep.subr.mxu0 0.0
    %4001 = vmatpush2.msra.mxu0 0.0
    %4002 = vmatprep.subr.mxu0 0.0
    %4003 = vmatpush2.msra.mxu0 0.0
    %4004 = vmatprep.subr.mxu0 0.0
    %4005 = vmatpush2.msra.mxu0 0.0
    %4006 = vmatprep.subr.mxu0 0.0
    %4007 = vmatpush2.msra.mxu0 0.0
    %4008 = vmatprep.subr.mxu0 0.0
    %4009 = vmatpush2.msra.mxu0 0.0
    %4010 = vmatprep.subr.mxu0 0.0
    %4011 = vmatpush2.msra.mxu0 0.0
    %4012 = vmatprep.subr.mxu0 0.0
    %4013 = vmatpush2.msra.mxu0 0.0
    %4014 = vmatprep.mubr.f32.mxu0 0.0
    %4015 = vmatmul.mubr.f32.gmra.mxu0 %v3756
    %v4016 = vpop.f32.mrf.mxu0
    %v4017 = vadd.f32 0.0, %v4016
    %v4018 = vpop.f32.mrf.mxu0
    %4019 = vmatprep.mubr.f32.mxu0 0.0
    %4020 = vmatmul.mubr.f32.gmra.mxu0 %v3759
    %v4021 = vpop.f32.mrf.mxu0
    %v4022 = vadd.f32 0.0, %v4021
    %v4023 = vpop.f32.mrf.mxu0
    %4024 = vmatprep.mubr.f32.mxu0 0.0
    %4025 = vmatmul.mubr.f32.gmra.mxu0 %v3762
    %v4026 = vpop.f32.mrf.mxu0
    %v4027 = vadd.f32 0.0, %v4026
    %v4028 = vpop.f32.mrf.mxu0
    %4029 = vmatprep.mubr.f32.mxu0 0.0
    %4030 = vmatmul.mubr.f32.gmra.mxu0 %v3765
    %v4031 = vpop.f32.mrf.mxu0
    %v4032 = vadd.f32 0.0, %v4031
    %v4033 = vpop.f32.mrf.mxu0
    %4034 = vmatprep.mubr.f32.mxu0 0.0
    %4035 = vmatmul.mubr.f32.gmra.mxu0 %v3768
    %v4036 = vpop.f32.mrf.mxu0
    %v4037 = vadd.f32 0.0, %v4036
    %v4038 = vpop.f32.mrf.mxu0
    %4039 = vmatprep.mubr.f32.mxu0 0.0
    %4040 = vmatmul.mubr.f32.gmra.mxu0 %v3771
    %v4041 = vpop.f32.mrf.mxu0
    %v4042 = vadd.f32 0.0, %v4041
    %v4043 = vpop.f32.mrf.mxu0
    %4044 = vmatprep.mubr.f32.mxu0 0.0
    %4045 = vmatmul.mubr.f32.gmra.mxu0 %v3774
    %v4046 = vpop.f32.mrf.mxu0
    %v4047 = vadd.f32 0.0, %v4046
    %v4048 = vpop.f32.mrf.mxu0
    %4049 = vmatprep.mubr.f32.mxu0 0.0
    %4050 = vmatmul.mubr.f32.gmra.mxu0 %v3777
    %v4051 = vpop.f32.mrf.mxu0
    %v4052 = vadd.f32 0.0, %v4051
    %v4053 = vpop.f32.mrf.mxu0
    %4054 = vmatprep.mubr.f32.mxu0 0.0
    %4055 = vmatmul.mubr.f32.gmra.mxu0 %v3780
    %v4056 = vpop.f32.mrf.mxu0
    %v4057 = vadd.f32 0.0, %v4056
    %v4058 = vpop.f32.mrf.mxu0
    %4059 = vmatprep.mubr.f32.mxu0 0.0
    %4060 = vmatmul.mubr.f32.gmra.mxu0 %v3783
    %v4061 = vpop.f32.mrf.mxu0
    %v4062 = vadd.f32 0.0, %v4061
    %v4063 = vpop.f32.mrf.mxu0
    %4064 = vmatprep.mubr.f32.mxu0 0.0
    %4065 = vmatmul.mubr.f32.gmra.mxu0 %v3786
    %v4066 = vpop.f32.mrf.mxu0
    %v4067 = vadd.f32 0.0, %v4066
    %v4068 = vpop.f32.mrf.mxu0
    %4069 = vmatprep.mubr.f32.mxu0 0.0
    %4070 = vmatmul.mubr.f32.gmra.mxu0 %v3789
    %v4071 = vpop.f32.mrf.mxu0
    %v4072 = vadd.f32 0.0, %v4071
    %v4073 = vpop.f32.mrf.mxu0
    %4074 = vmatprep.mubr.f32.mxu0 0.0
    %4075 = vmatmul.mubr.f32.gmra.mxu0 %v3792
    %v4076 = vpop.f32.mrf.mxu0
    %v4077 = vadd.f32 0.0, %v4076
    %v4078 = vpop.f32.mrf.mxu0
    %4079 = vmatprep.mubr.f32.mxu0 0.0
    %4080 = vmatmul.mubr.f32.gmra.mxu0 %v3795
    %v4081 = vpop.f32.mrf.mxu0
    %v4082 = vadd.f32 0.0, %v4081
    %v4083 = vpop.f32.mrf.mxu0
    %4084 = vmatprep.mubr.f32.mxu0 0.0
    %4085 = vmatmul.mubr.f32.gmra.mxu0 %v3798
    %v4086 = vpop.f32.mrf.mxu0
    %v4087 = vadd.f32 0.0, %v4086
    %v4088 = vpop.f32.mrf.mxu0
    %4089 = vmatprep.mubr.f32.mxu0 0.0
    %4090 = vmatmul.mubr.f32.gmra.mxu0 %v3801
    %v4091 = vpop.f32.mrf.mxu0
    %v4092 = vadd.f32 0.0, %v4091
    %v4093 = vpop.f32.mrf.mxu0
    %4094 = vmatprep.mubr.f32.mxu0 0.0
    %4095 = vmatmul.mubr.f32.gmra.mxu0 %v3804
    %v4096 = vpop.f32.mrf.mxu0
    %v4097 = vadd.f32 0.0, %v4096
    %v4098 = vpop.f32.mrf.mxu0
    %4099 = vmatprep.mubr.f32.mxu0 0.0
    %4100 = vmatmul.mubr.f32.gmra.mxu0 %v3807
    %v4101 = vpop.f32.mrf.mxu0
    %v4102 = vadd.f32 0.0, %v4101
    %v4103 = vpop.f32.mrf.mxu0
    %4104 = vmatprep.mubr.f32.mxu0 0.0
    %4105 = vmatmul.mubr.f32.gmra.mxu0 %v3810
    %v4106 = vpop.f32.mrf.mxu0
    %v4107 = vadd.f32 0.0, %v4106
    %v4108 = vpop.f32.mrf.mxu0
    %4109 = vmatprep.mubr.f32.mxu0 0.0
    %4110 = vmatmul.mubr.f32.gmra.mxu0 %v3813
    %v4111 = vpop.f32.mrf.mxu0
    %v4112 = vadd.f32 0.0, %v4111
    %v4113 = vpop.f32.mrf.mxu0
    %4114 = vmatprep.mubr.f32.mxu0 0.0
    %4115 = vmatmul.mubr.f32.gmra.mxu0 %v3816
    %v4116 = vpop.f32.mrf.mxu0
    %v4117 = vadd.f32 0.0, %v4116
    %v4118 = vpop.f32.mrf.mxu0
    %4119 = vmatprep.mubr.f32.mxu0 0.0
    %4120 = vmatmul.mubr.f32.gmra.mxu0 %v3819
    %v4121 = vpop.f32.mrf.mxu0
    %v4122 = vadd.f32 0.0, %v4121
    %v4123 = vpop.f32.mrf.mxu0
    %4124 = vmatprep.mubr.f32.mxu0 0.0
    %4125 = vmatmul.mubr.f32.gmra.mxu0 %v3822
    %v4126 = vpop.f32.mrf.mxu0
    %v4127 = vadd.f32 0.0, %v4126
    %v4128 = vpop.f32.mrf.mxu0
    %4129 = vmatprep.mubr.f32.mxu0 0.0
    %4130 = vmatmul.mubr.f32.gmra.mxu0 %v3825
    %v4131 = vpop.f32.mrf.mxu0
    %v4132 = vadd.f32 0.0, %v4131
    %v4133 = vpop.f32.mrf.mxu0
    %4134 = vmatprep.mubr.f32.mxu0 0.0
    %4135 = vmatmul.mubr.f32.gmra.mxu0 %v3828
    %v4136 = vpop.f32.mrf.mxu0
    %v4137 = vadd.f32 0.0, %v4136
    %v4138 = vpop.f32.mrf.mxu0
    %4139 = vmatprep.mubr.f32.mxu0 0.0
    %4140 = vmatmul.mubr.f32.gmra.mxu0 %v3831
    %v4141 = vpop.f32.mrf.mxu0
    %v4142 = vadd.f32 0.0, %v4141
    %v4143 = vpop.f32.mrf.mxu0
    %4144 = vmatprep.mubr.f32.mxu0 0.0
    %4145 = vmatmul.mubr.f32.gmra.mxu0 %v3834
    %v4146 = vpop.f32.mrf.mxu0
    %v4147 = vadd.f32 0.0, %v4146
    %v4148 = vpop.f32.mrf.mxu0
    %4149 = vmatprep.mubr.f32.mxu0 0.0
    %4150 = vmatmul.mubr.f32.gmra.mxu0 %v3837
    %v4151 = vpop.f32.mrf.mxu0
    %v4152 = vadd.f32 0.0, %v4151
    %v4153 = vpop.f32.mrf.mxu0
    %4154 = vmatprep.mubr.f32.mxu0 0.0
    %4155 = vmatmul.mubr.f32.gmra.mxu0 %v3840
    %v4156 = vpop.f32.mrf.mxu0
    %v4157 = vadd.f32 0.0, %v4156
    %v4158 = vpop.f32.mrf.mxu0
    %4159 = vmatprep.mubr.f32.mxu0 0.0
    %4160 = vmatmul.mubr.f32.gmra.mxu0 %v3843
    %v4161 = vpop.f32.mrf.mxu0
    %v4162 = vadd.f32 0.0, %v4161
    %v4163 = vpop.f32.mrf.mxu0
    %4164 = vmatprep.mubr.f32.mxu0 0.0
    %4165 = vmatmul.mubr.f32.gmra.mxu0 %v3846
    %v4166 = vpop.f32.mrf.mxu0
    %v4167 = vadd.f32 0.0, %v4166
    %v4168 = vpop.f32.mrf.mxu0
    %4169 = vmatprep.mubr.f32.mxu0 0.0
    %4170 = vmatmul.mubr.f32.gmra.mxu0 %v3849
    %v4171 = vpop.f32.mrf.mxu0
    %v4172 = vadd.f32 0.0, %v4171
    %v4173 = vpop.f32.mrf.mxu0
    %4174 = vmatprep.mubr.f32.mxu0 0.0
    %4175 = vmatmul.mubr.f32.gmra.mxu0 %v3852
    %v4176 = vpop.f32.mrf.mxu0
    %v4177 = vadd.f32 0.0, %v4176
    %v4178 = vpop.f32.mrf.mxu0
    %4179 = vmatprep.mubr.f32.mxu0 0.0
    %4180 = vmatmul.mubr.f32.gmra.mxu0 %v3855
    %v4181 = vpop.f32.mrf.mxu0
    %v4182 = vadd.f32 0.0, %v4181
    %v4183 = vpop.f32.mrf.mxu0
    %4184 = vmatprep.mubr.f32.mxu0 0.0
    %4185 = vmatmul.mubr.f32.gmra.mxu0 %v3858
    %v4186 = vpop.f32.mrf.mxu0
    %v4187 = vadd.f32 0.0, %v4186
    %v4188 = vpop.f32.mrf.mxu0
    %4189 = vmatprep.mubr.f32.mxu0 0.0
    %4190 = vmatmul.mubr.f32.gmra.mxu0 %v3861
    %v4191 = vpop.f32.mrf.mxu0
    %v4192 = vadd.f32 0.0, %v4191
    %v4193 = vpop.f32.mrf.mxu0
    %4194 = vmatprep.mubr.f32.mxu0 0.0
    %4195 = vmatmul.mubr.f32.gmra.mxu0 %v3864
    %v4196 = vpop.f32.mrf.mxu0
    %v4197 = vadd.f32 0.0, %v4196
    %v4198 = vpop.f32.mrf.mxu0
    %4199 = vmatprep.mubr.f32.mxu0 0.0
    %4200 = vmatmul.mubr.f32.gmra.mxu0 %v3867
    %v4201 = vpop.f32.mrf.mxu0
    %v4202 = vadd.f32 0.0, %v4201
    %v4203 = vpop.f32.mrf.mxu0
    %4204 = vmatprep.mubr.f32.mxu0 0.0
    %4205 = vmatmul.mubr.f32.gmra.mxu0 %v3870
    %v4206 = vpop.f32.mrf.mxu0
    %v4207 = vadd.f32 0.0, %v4206
    %v4208 = vpop.f32.mrf.mxu0
    %4209 = vmatprep.mubr.f32.mxu0 0.0
    %4210 = vmatmul.mubr.f32.gmra.mxu0 %v3873
    %v4211 = vpop.f32.mrf.mxu0
    %v4212 = vadd.f32 0.0, %v4211
    %v4213 = vpop.f32.mrf.mxu0
    %4214 = vmatprep.mubr.f32.mxu0 0.0
    %4215 = vmatmul.mubr.f32.gmra.mxu0 %v3876
    %v4216 = vpop.f32.mrf.mxu0
    %v4217 = vadd.f32 0.0, %v4216
    %v4218 = vpop.f32.mrf.mxu0
    %4219 = vmatprep.mubr.f32.mxu0 0.0
    %4220 = vmatmul.mubr.f32.gmra.mxu0 %v3879
    %v4221 = vpop.f32.mrf.mxu0
    %v4222 = vadd.f32 0.0, %v4221
    %v4223 = vpop.f32.mrf.mxu0
    %4224 = vmatprep.mubr.f32.mxu0 0.0
    %4225 = vmatmul.mubr.f32.gmra.mxu0 %v3882
    %v4226 = vpop.f32.mrf.mxu0
    %v4227 = vadd.f32 0.0, %v4226
    %v4228 = vpop.f32.mrf.mxu0
    %4229 = vmatprep.mubr.f32.mxu0 0.0
    %4230 = vmatmul.mubr.f32.gmra.mxu0 %v3885
    %v4231 = vpop.f32.mrf.mxu0
    %v4232 = vadd.f32 0.0, %v4231
    %v4233 = vpop.f32.mrf.mxu0
    %4234 = vmatprep.mubr.f32.mxu0 0.0
    %4235 = vmatmul.mubr.f32.gmra.mxu0 %v3888
    %v4236 = vpop.f32.mrf.mxu0
    %v4237 = vadd.f32 0.0, %v4236
    %v4238 = vpop.f32.mrf.mxu0
    %4239 = vmatprep.mubr.f32.mxu0 0.0
    %4240 = vmatmul.mubr.f32.gmra.mxu0 %v3891
    %v4241 = vpop.f32.mrf.mxu0
    %v4242 = vadd.f32 0.0, %v4241
    %v4243 = vpop.f32.mrf.mxu0
    %4244 = vmatprep.mubr.f32.mxu0 0.0
    %4245 = vmatmul.mubr.f32.gmra.mxu0 %v3894
    %v4246 = vpop.f32.mrf.mxu0
    %v4247 = vadd.f32 0.0, %v4246
    %v4248 = vpop.f32.mrf.mxu0
    %4249 = vmatprep.mubr.f32.mxu0 0.0
    %4250 = vmatmul.mubr.f32.gmra.mxu0 %v3897
    %v4251 = vpop.f32.mrf.mxu0
    %v4252 = vadd.f32 0.0, %v4251
    %v4253 = vpop.f32.mrf.mxu0
    %4254 = vmatprep.mubr.f32.mxu0 0.0
    %4255 = vmatmul.mubr.f32.gmra.mxu0 %v3900
    %v4256 = vpop.f32.mrf.mxu0
    %v4257 = vadd.f32 0.0, %v4256
    %v4258 = vpop.f32.mrf.mxu0
    %4259 = vmatprep.mubr.f32.mxu0 0.0
    %4260 = vmatmul.mubr.f32.gmra.mxu0 %v3903
    %v4261 = vpop.f32.mrf.mxu0
    %v4262 = vadd.f32 0.0, %v4261
    %v4263 = vpop.f32.mrf.mxu0
    %4264 = vmatprep.mubr.f32.mxu0 0.0
    %4265 = vmatmul.mubr.f32.gmra.mxu0 %v3906
    %v4266 = vpop.f32.mrf.mxu0
    %v4267 = vadd.f32 0.0, %v4266
    %v4268 = vpop.f32.mrf.mxu0
    %4269 = vmatprep.mubr.f32.mxu0 0.0
    %4270 = vmatmul.mubr.f32.gmra.mxu0 %v3909
    %v4271 = vpop.f32.mrf.mxu0
    %v4272 = vadd.f32 0.0, %v4271
    %v4273 = vpop.f32.mrf.mxu0
    %4274 = vmatprep.mubr.f32.mxu0 0.0
    %4275 = vmatmul.mubr.f32.gmra.mxu0 %v3912
    %v4276 = vpop.f32.mrf.mxu0
    %v4277 = vadd.f32 0.0, %v4276
    %v4278 = vpop.f32.mrf.mxu0
    %4279 = vmatprep.mubr.f32.mxu0 0.0
    %4280 = vmatmul.mubr.f32.gmra.mxu0 %v3915
    %v4281 = vpop.f32.mrf.mxu0
    %v4282 = vadd.f32 0.0, %v4281
    %v4283 = vpop.f32.mrf.mxu0
    %4284 = vmatprep.mubr.f32.mxu0 0.0
    %4285 = vmatmul.mubr.f32.gmra.mxu0 %v3918
    %v4286 = vpop.f32.mrf.mxu0
    %v4287 = vadd.f32 0.0, %v4286
    %v4288 = vpop.f32.mrf.mxu0
    %4289 = vmatprep.mubr.f32.mxu0 0.0
    %4290 = vmatmul.mubr.f32.gmra.mxu0 %v3921
    %v4291 = vpop.f32.mrf.mxu0
    %v4292 = vadd.f32 0.0, %v4291
    %v4293 = vpop.f32.mrf.mxu0
    %4294 = vmatprep.mubr.f32.mxu0 0.0
    %4295 = vmatmul.mubr.f32.gmra.mxu0 %v3924
    %v4296 = vpop.f32.mrf.mxu0
    %v4297 = vadd.f32 0.0, %v4296
    %v4298 = vpop.f32.mrf.mxu0
    %4299 = vmatprep.mubr.f32.mxu0 0.0
    %4300 = vmatmul.mubr.f32.gmra.mxu0 %v3927
    %v4301 = vpop.f32.mrf.mxu0
    %v4302 = vadd.f32 0.0, %v4301
    %v4303 = vpop.f32.mrf.mxu0
    %4304 = vmatprep.mubr.f32.mxu0 0.0
    %4305 = vmatmul.mubr.f32.gmra.mxu0 %v3930
    %v4306 = vpop.f32.mrf.mxu0
    %v4307 = vadd.f32 0.0, %v4306
    %v4308 = vpop.f32.mrf.mxu0
    %4309 = vmatprep.mubr.f32.mxu0 0.0
    %4310 = vmatmul.mubr.f32.gmra.mxu0 %v3933
    %v4311 = vpop.f32.mrf.mxu0
    %v4312 = vadd.f32 0.0, %v4311
    %v4313 = vpop.f32.mrf.mxu0
    %4314 = vmatprep.mubr.f32.mxu0 0.0
    %4315 = vmatmul.mubr.f32.gmra.mxu0 %v3936
    %v4316 = vpop.f32.mrf.mxu0
    %v4317 = vadd.f32 0.0, %v4316
    %v4318 = vpop.f32.mrf.mxu0
    %4319 = vmatprep.mubr.f32.mxu0 0.0
    %4320 = vmatmul.mubr.f32.gmra.mxu0 %v3939
    %v4321 = vpop.f32.mrf.mxu0
    %v4322 = vadd.f32 0.0, %v4321
    %v4323 = vpop.f32.mrf.mxu0
    %4324 = vmatprep.mubr.f32.mxu0 0.0
    %4325 = vmatmul.mubr.f32.gmra.mxu0 %v3942
    %v4326 = vpop.f32.mrf.mxu0
    %v4327 = vadd.f32 0.0, %v4326
    %v4328 = vpop.f32.mrf.mxu0
    %4329 = vmatprep.mubr.f32.mxu0 0.0
    %4330 = vmatmul.mubr.f32.gmra.mxu0 %v3945
    %v4331 = vpop.f32.mrf.mxu0
    %v4332 = vadd.f32 0.0, %v4331
    %v4333 = vpop.f32.mrf.mxu0
    %4334 = vdwg.mxu0
    %v4335 = vadd.f32 %v3626, %v4017
    %v4336 = vadd.f32 %v3627, %v4022
    %v4337 = vadd.f32 %v3628, %v4027
    %v4338 = vadd.f32 %v3629, %v4032
    %v4339 = vadd.f32 %v3630, %v4037
    %v4340 = vadd.f32 %v3631, %v4042
    %v4341 = vadd.f32 %v3632, %v4047
    %v4342 = vadd.f32 %v3633, %v4052
    %v4343 = vadd.f32 %v3634, %v4057
    %v4344 = vadd.f32 %v3635, %v4062
    %v4345 = vadd.f32 %v3636, %v4067
    %v4346 = vadd.f32 %v3637, %v4072
    %v4347 = vadd.f32 %v3638, %v4077
    %v4348 = vadd.f32 %v3639, %v4082
    %v4349 = vadd.f32 %v3640, %v4087
    %v4350 = vadd.f32 %v3641, %v4092
    %v4351 = vadd.f32 %v3642, %v4097
    %v4352 = vadd.f32 %v3643, %v4102
    %v4353 = vadd.f32 %v3644, %v4107
    %v4354 = vadd.f32 %v3645, %v4112
    %v4355 = vadd.f32 %v3646, %v4117
    %v4356 = vadd.f32 %v3647, %v4122
    %v4357 = vadd.f32 %v3648, %v4127
    %v4358 = vadd.f32 %v3649, %v4132
    %v4359 = vadd.f32 %v3650, %v4137
    %v4360 = vadd.f32 %v3651, %v4142
    %v4361 = vadd.f32 %v3652, %v4147
    %v4362 = vadd.f32 %v3653, %v4152
    %v4363 = vadd.f32 %v3654, %v4157
    %v4364 = vadd.f32 %v3655, %v4162
    %v4365 = vadd.f32 %v3656, %v4167
    %v4366 = vadd.f32 %v3657, %v4172
    %v4367 = vadd.f32 %v3658, %v4177
    %v4368 = vadd.f32 %v3659, %v4182
    %v4369 = vadd.f32 %v3660, %v4187
    %v4370 = vadd.f32 %v3661, %v4192
    %v4371 = vadd.f32 %v3662, %v4197
    %v4372 = vadd.f32 %v3663, %v4202
    %v4373 = vadd.f32 %v3664, %v4207
    %v4374 = vadd.f32 %v3665, %v4212
    %v4375 = vadd.f32 %v3666, %v4217
    %v4376 = vadd.f32 %v3667, %v4222
    %v4377 = vadd.f32 %v3668, %v4227
    %v4378 = vadd.f32 %v3669, %v4232
    %v4379 = vadd.f32 %v3670, %v4237
    %v4380 = vadd.f32 %v3671, %v4242
    %v4381 = vadd.f32 %v3672, %v4247
    %v4382 = vadd.f32 %v3673, %v4252
    %v4383 = vadd.f32 %v3674, %v4257
    %v4384 = vadd.f32 %v3675, %v4262
    %v4385 = vadd.f32 %v3676, %v4267
    %v4386 = vadd.f32 %v3677, %v4272
    %v4387 = vadd.f32 %v3678, %v4277
    %v4388 = vadd.f32 %v3679, %v4282
    %v4389 = vadd.f32 %v3680, %v4287
    %v4390 = vadd.f32 %v3681, %v4292
    %v4391 = vadd.f32 %v3682, %v4297
    %v4392 = vadd.f32 %v3683, %v4302
    %v4393 = vadd.f32 %v3684, %v4307
    %v4394 = vadd.f32 %v3685, %v4312
    %v4395 = vadd.f32 %v3686, %v4317
    %v4396 = vadd.f32 %v3687, %v4322
    %v4397 = vadd.f32 %v3688, %v4327
    %v4398 = vadd.f32 %v3689, %v4332
    %s4399 = scalar_lea.vmem [#allocation2], 48
    %v4400 = vld [vmem:[%s4399] sm:$0xff]
    %v4401 = vld [vmem:[%s4399 + $0x8] sm:$0xff]
    %v4402 = vld [vmem:[%s4399 + $0x18] sm:$0xff]
    %v4403 = vld [vmem:[%s4399 + $0x20] sm:$0xff]
    %v4404 = vld [vmem:[%s4399 + $0x30] sm:$0xff]
    %v4405 = vld [vmem:[%s4399 + $0x38] sm:$0xff]
    %v4406 = vld [vmem:[%s4399 + $0x48] sm:$0xff]
    %v4407 = vld [vmem:[%s4399 + $0x50] sm:$0xff]
    %v4408 = vld [vmem:[%s4399 + $0x60] sm:$0xff]
    %v4409 = vld [vmem:[%s4399 + $0x68] sm:$0xff]
    %v4410 = vld [vmem:[%s4399 + $0x78] sm:$0xff]
    %v4411 = vld [vmem:[%s4399 + $0x80] sm:$0xff]
    %v4412 = vld [vmem:[%s4399 + $0x90] sm:$0xff]
    %v4413 = vld [vmem:[%s4399 + $0x98] sm:$0xff]
    %v4414 = vld [vmem:[%s4399 + $0xa8] sm:$0xff]
    %v4415 = vld [vmem:[%s4399 + $0xb0] sm:$0xff]
    %v4416 = vld [vmem:[%s4399 + $0xc0] sm:$0xff]
    %v4417 = vld [vmem:[%s4399 + $0xc8] sm:$0xff]
    %v4418 = vld [vmem:[%s4399 + $0xd8] sm:$0xff]
    %v4419 = vld [vmem:[%s4399 + $0xe0] sm:$0xff]
    %v4420 = vld [vmem:[%s4399 + $0xf0] sm:$0xff]
    %v4421 = vld [vmem:[%s4399 + $0xf8] sm:$0xff]
    %v4422 = vld [vmem:[%s4399 + $0x108] sm:$0xff]
    %v4423 = vld [vmem:[%s4399 + $0x110] sm:$0xff]
    %v4424 = vld [vmem:[%s4399 + $0x120] sm:$0xff]
    %v4425 = vld [vmem:[%s4399 + $0x128] sm:$0xff]
    %v4426 = vld [vmem:[%s4399 + $0x138] sm:$0xff]
    %v4427 = vld [vmem:[%s4399 + $0x140] sm:$0xff]
    %v4428 = vld [vmem:[%s4399 + $0x150] sm:$0xff]
    %v4429 = vld [vmem:[%s4399 + $0x158] sm:$0xff]
    %v4430 = vld [vmem:[%s4399 + $0x168] sm:$0xff]
    %v4431 = vld [vmem:[%s4399 + $0x170] sm:$0xff]
    %v4432 = vld [vmem:[%s4399 + $0x1b0] sm:$0xff]
    %v4433 = vld [vmem:[%s4399 + $0x1b8] sm:$0xff]
    %v4434 = vld [vmem:[%s4399 + $0x1c8] sm:$0xff]
    %v4435 = vld [vmem:[%s4399 + $0x1d0] sm:$0xff]
    %v4436 = vld [vmem:[%s4399 + $0x1e0] sm:$0xff]
    %v4437 = vld [vmem:[%s4399 + $0x1e8] sm:$0xff]
    %v4438 = vld [vmem:[%s4399 + $0x1f8] sm:$0xff]
    %v4439 = vld [vmem:[%s4399 + $0x200] sm:$0xff]
    %v4440 = vld [vmem:[%s4399 + $0x210] sm:$0xff]
    %v4441 = vld [vmem:[%s4399 + $0x218] sm:$0xff]
    %v4442 = vld [vmem:[%s4399 + $0x228] sm:$0xff]
    %v4443 = vld [vmem:[%s4399 + $0x230] sm:$0xff]
    %v4444 = vld [vmem:[%s4399 + $0x240] sm:$0xff]
    %v4445 = vld [vmem:[%s4399 + $0x248] sm:$0xff]
    %v4446 = vld [vmem:[%s4399 + $0x258] sm:$0xff]
    %v4447 = vld [vmem:[%s4399 + $0x260] sm:$0xff]
    %v4448 = vld [vmem:[%s4399 + $0x270] sm:$0xff]
    %v4449 = vld [vmem:[%s4399 + $0x278] sm:$0xff]
    %v4450 = vld [vmem:[%s4399 + $0x288] sm:$0xff]
    %v4451 = vld [vmem:[%s4399 + $0x290] sm:$0xff]
    %v4452 = vld [vmem:[%s4399 + $0x2a0] sm:$0xff]
    %v4453 = vld [vmem:[%s4399 + $0x2a8] sm:$0xff]
    %v4454 = vld [vmem:[%s4399 + $0x2b8] sm:$0xff]
    %v4455 = vld [vmem:[%s4399 + $0x2c0] sm:$0xff]
    %v4456 = vld [vmem:[%s4399 + $0x2d0] sm:$0xff]
    %v4457 = vld [vmem:[%s4399 + $0x2d8] sm:$0xff]
    %v4458 = vld [vmem:[%s4399 + $0x2e8] sm:$0xff]
    %v4459 = vld [vmem:[%s4399 + $0x2f0] sm:$0xff]
    %v4460 = vld [vmem:[%s4399 + $0x300] sm:$0xff]
    %v4461 = vld [vmem:[%s4399 + $0x308] sm:$0xff]
    %v4462 = vld [vmem:[%s4399 + $0x318] sm:$0xff]
    %v4463 = vld [vmem:[%s4399 + $0x320] sm:$0xff]
    %v4464 = vld [vmem:[%s1 + $0x12] sm:$0x7]
    %v4466 = vsel %vm33, %v4400, 0
    %v4469 = vsel %vm33, %v4401, 0
    %v4472 = vsel %vm33, %v4402, 0
    %v4475 = vsel %vm33, %v4403, 0
    %v4478 = vsel %vm33, %v4404, 0
    %v4481 = vsel %vm33, %v4405, 0
    %v4484 = vsel %vm33, %v4406, 0
    %v4487 = vsel %vm33, %v4407, 0
    %v4490 = vsel %vm33, %v4408, 0
    %v4493 = vsel %vm33, %v4409, 0
    %v4496 = vsel %vm33, %v4410, 0
    %v4499 = vsel %vm33, %v4411, 0
    %v4502 = vsel %vm33, %v4412, 0
    %v4505 = vsel %vm33, %v4413, 0
    %v4508 = vsel %vm33, %v4414, 0
    %v4511 = vsel %vm33, %v4415, 0
    %v4514 = vsel %vm33, %v4416, 0
    %v4517 = vsel %vm33, %v4417, 0
    %v4520 = vsel %vm33, %v4418, 0
    %v4523 = vsel %vm33, %v4419, 0
    %v4526 = vsel %vm33, %v4420, 0
    %v4529 = vsel %vm33, %v4421, 0
    %v4532 = vsel %vm33, %v4422, 0
    %v4535 = vsel %vm33, %v4423, 0
    %v4538 = vsel %vm33, %v4424, 0
    %v4541 = vsel %vm33, %v4425, 0
    %v4544 = vsel %vm33, %v4426, 0
    %v4547 = vsel %vm33, %v4427, 0
    %v4550 = vsel %vm33, %v4428, 0
    %v4553 = vsel %vm33, %v4429, 0
    %v4556 = vsel %vm33, %v4430, 0
    %v4559 = vsel %vm33, %v4431, 0
    %v4562 = vsel %vm33, %v4432, 0
    %v4565 = vsel %vm33, %v4433, 0
    %v4568 = vsel %vm33, %v4434, 0
    %v4571 = vsel %vm33, %v4435, 0
    %v4574 = vsel %vm33, %v4436, 0
    %v4577 = vsel %vm33, %v4437, 0
    %v4580 = vsel %vm33, %v4438, 0
    %v4583 = vsel %vm33, %v4439, 0
    %v4586 = vsel %vm33, %v4440, 0
    %v4589 = vsel %vm33, %v4441, 0
    %v4592 = vsel %vm33, %v4442, 0
    %v4595 = vsel %vm33, %v4443, 0
    %v4598 = vsel %vm33, %v4444, 0
    %v4601 = vsel %vm33, %v4445, 0
    %v4604 = vsel %vm33, %v4446, 0
    %v4607 = vsel %vm33, %v4447, 0
    %v4610 = vsel %vm33, %v4448, 0
    %v4613 = vsel %vm33, %v4449, 0
    %v4616 = vsel %vm33, %v4450, 0
    %v4619 = vsel %vm33, %v4451, 0
    %v4622 = vsel %vm33, %v4452, 0
    %v4625 = vsel %vm33, %v4453, 0
    %v4628 = vsel %vm33, %v4454, 0
    %v4631 = vsel %vm33, %v4455, 0
    %v4634 = vsel %vm33, %v4456, 0
    %v4637 = vsel %vm33, %v4457, 0
    %v4640 = vsel %vm33, %v4458, 0
    %v4643 = vsel %vm33, %v4459, 0
    %v4646 = vsel %vm33, %v4460, 0
    %v4649 = vsel %vm33, %v4461, 0
    %v4652 = vsel %vm33, %v4462, 0
    %v4655 = vsel %vm33, %v4463, 0
    %v4658 = vsel %vm594, %v4464, 0
    %4660 = vmatprep.subr.mxu0 0.0
    %4661 = vmatpush1.msra.mxu0 0.0
    %4662 = vmatprep.subr.mxu0 0.0
    %4663 = vmatpush1.msra.mxu0 0.0
    %4664 = vmatprep.subr.mxu0 0.0
    %4665 = vmatpush1.msra.mxu0 0.0
    %4666 = vmatprep.subr.mxu0 0.0
    %4667 = vmatpush1.msra.mxu0 0.0
    %4668 = vmatprep.subr.mxu0 0.0
    %4669 = vmatpush1.msra.mxu0 0.0
    %4670 = vmatprep.subr.mxu0 0.0
    %4671 = vmatpush1.msra.mxu0 0.0
    %4672 = vmatprep.subr.mxu0 0.0
    %4673 = vmatpush1.msra.mxu0 0.0
    %4674 = vmatprep.subr.mxu0 0.0
    %4675 = vmatpush1.msra.mxu0 0.0
    %4676 = vmatprep.subr.mxu0 0.0
    %4677 = vmatpush1.msra.mxu0 0.0
    %4678 = vmatprep.subr.mxu0 0.0
    %4679 = vmatpush1.msra.mxu0 0.0
    %4680 = vmatprep.subr.mxu0 0.0
    %4681 = vmatpush1.msra.mxu0 0.0
    %4682 = vmatprep.subr.mxu0 0.0
    %4683 = vmatpush1.msra.mxu0 0.0
    %4684 = vmatprep.subr.mxu0 0.0
    %4685 = vmatpush1.msra.mxu0 0.0
    %4686 = vmatprep.subr.mxu0 0.0
    %4687 = vmatpush1.msra.mxu0 0.0
    %4688 = vmatprep.subr.mxu0 0.0
    %4689 = vmatpush1.msra.mxu0 0.0
    %4690 = vmatprep.subr.mxu0 0.0
    %4691 = vmatpush1.msra.mxu0 %v4658
    %4692 = vmatprep.subr.mxu0 0.0
    %4693 = vmatpush2.msra.mxu0 0.0
    %4694 = vmatprep.subr.mxu0 0.0
    %4695 = vmatpush2.msra.mxu0 0.0
    %4696 = vmatprep.subr.mxu0 0.0
    %4697 = vmatpush2.msra.mxu0 0.0
    %4698 = vmatprep.subr.mxu0 0.0
    %4699 = vmatpush2.msra.mxu0 0.0
    %4700 = vmatprep.subr.mxu0 0.0
    %4701 = vmatpush2.msra.mxu0 0.0
    %4702 = vmatprep.subr.mxu0 0.0
    %4703 = vmatpush2.msra.mxu0 0.0
    %4704 = vmatprep.subr.mxu0 0.0
    %4705 = vmatpush2.msra.mxu0 0.0
    %4706 = vmatprep.subr.mxu0 0.0
    %4707 = vmatpush2.msra.mxu0 0.0
    %4708 = vmatprep.subr.mxu0 0.0
    %4709 = vmatpush2.msra.mxu0 0.0
    %4710 = vmatprep.subr.mxu0 0.0
    %4711 = vmatpush2.msra.mxu0 0.0
    %4712 = vmatprep.subr.mxu0 0.0
    %4713 = vmatpush2.msra.mxu0 0.0
    %4714 = vmatprep.subr.mxu0 0.0
    %4715 = vmatpush2.msra.mxu0 0.0
    %4716 = vmatprep.subr.mxu0 0.0
    %4717 = vmatpush2.msra.mxu0 0.0
    %4718 = vmatprep.subr.mxu0 0.0
    %4719 = vmatpush2.msra.mxu0 0.0
    %4720 = vmatprep.subr.mxu0 0.0
    %4721 = vmatpush2.msra.mxu0 0.0
    %4722 = vmatprep.subr.mxu0 0.0
    %4723 = vmatpush2.msra.mxu0 0.0
    %4724 = vmatprep.mubr.f32.mxu0 0.0
    %4725 = vmatmul.mubr.f32.gmra.mxu0 %v4466
    %v4726 = vpop.f32.mrf.mxu0
    %v4727 = vadd.f32 0.0, %v4726
    %v4728 = vpop.f32.mrf.mxu0
    %4729 = vmatprep.mubr.f32.mxu0 0.0
    %4730 = vmatmul.mubr.f32.gmra.mxu0 %v4469
    %v4731 = vpop.f32.mrf.mxu0
    %v4732 = vadd.f32 0.0, %v4731
    %v4733 = vpop.f32.mrf.mxu0
    %4734 = vmatprep.mubr.f32.mxu0 0.0
    %4735 = vmatmul.mubr.f32.gmra.mxu0 %v4472
    %v4736 = vpop.f32.mrf.mxu0
    %v4737 = vadd.f32 0.0, %v4736
    %v4738 = vpop.f32.mrf.mxu0
    %4739 = vmatprep.mubr.f32.mxu0 0.0
    %4740 = vmatmul.mubr.f32.gmra.mxu0 %v4475
    %v4741 = vpop.f32.mrf.mxu0
    %v4742 = vadd.f32 0.0, %v4741
    %v4743 = vpop.f32.mrf.mxu0
    %4744 = vmatprep.mubr.f32.mxu0 0.0
    %4745 = vmatmul.mubr.f32.gmra.mxu0 %v4478
    %v4746 = vpop.f32.mrf.mxu0
    %v4747 = vadd.f32 0.0, %v4746
    %v4748 = vpop.f32.mrf.mxu0
    %4749 = vmatprep.mubr.f32.mxu0 0.0
    %4750 = vmatmul.mubr.f32.gmra.mxu0 %v4481
    %v4751 = vpop.f32.mrf.mxu0
    %v4752 = vadd.f32 0.0, %v4751
    %v4753 = vpop.f32.mrf.mxu0
    %4754 = vmatprep.mubr.f32.mxu0 0.0
    %4755 = vmatmul.mubr.f32.gmra.mxu0 %v4484
    %v4756 = vpop.f32.mrf.mxu0
    %v4757 = vadd.f32 0.0, %v4756
    %v4758 = vpop.f32.mrf.mxu0
    %4759 = vmatprep.mubr.f32.mxu0 0.0
    %4760 = vmatmul.mubr.f32.gmra.mxu0 %v4487
    %v4761 = vpop.f32.mrf.mxu0
    %v4762 = vadd.f32 0.0, %v4761
    %v4763 = vpop.f32.mrf.mxu0
    %4764 = vmatprep.mubr.f32.mxu0 0.0
    %4765 = vmatmul.mubr.f32.gmra.mxu0 %v4490
    %v4766 = vpop.f32.mrf.mxu0
    %v4767 = vadd.f32 0.0, %v4766
    %v4768 = vpop.f32.mrf.mxu0
    %4769 = vmatprep.mubr.f32.mxu0 0.0
    %4770 = vmatmul.mubr.f32.gmra.mxu0 %v4493
    %v4771 = vpop.f32.mrf.mxu0
    %v4772 = vadd.f32 0.0, %v4771
    %v4773 = vpop.f32.mrf.mxu0
    %4774 = vmatprep.mubr.f32.mxu0 0.0
    %4775 = vmatmul.mubr.f32.gmra.mxu0 %v4496
    %v4776 = vpop.f32.mrf.mxu0
    %v4777 = vadd.f32 0.0, %v4776
    %v4778 = vpop.f32.mrf.mxu0
    %4779 = vmatprep.mubr.f32.mxu0 0.0
    %4780 = vmatmul.mubr.f32.gmra.mxu0 %v4499
    %v4781 = vpop.f32.mrf.mxu0
    %v4782 = vadd.f32 0.0, %v4781
    %v4783 = vpop.f32.mrf.mxu0
    %4784 = vmatprep.mubr.f32.mxu0 0.0
    %4785 = vmatmul.mubr.f32.gmra.mxu0 %v4502
    %v4786 = vpop.f32.mrf.mxu0
    %v4787 = vadd.f32 0.0, %v4786
    %v4788 = vpop.f32.mrf.mxu0
    %4789 = vmatprep.mubr.f32.mxu0 0.0
    %4790 = vmatmul.mubr.f32.gmra.mxu0 %v4505
    %v4791 = vpop.f32.mrf.mxu0
    %v4792 = vadd.f32 0.0, %v4791
    %v4793 = vpop.f32.mrf.mxu0
    %4794 = vmatprep.mubr.f32.mxu0 0.0
    %4795 = vmatmul.mubr.f32.gmra.mxu0 %v4508
    %v4796 = vpop.f32.mrf.mxu0
    %v4797 = vadd.f32 0.0, %v4796
    %v4798 = vpop.f32.mrf.mxu0
    %4799 = vmatprep.mubr.f32.mxu0 0.0
    %4800 = vmatmul.mubr.f32.gmra.mxu0 %v4511
    %v4801 = vpop.f32.mrf.mxu0
    %v4802 = vadd.f32 0.0, %v4801
    %v4803 = vpop.f32.mrf.mxu0
    %4804 = vmatprep.mubr.f32.mxu0 0.0
    %4805 = vmatmul.mubr.f32.gmra.mxu0 %v4514
    %v4806 = vpop.f32.mrf.mxu0
    %v4807 = vadd.f32 0.0, %v4806
    %v4808 = vpop.f32.mrf.mxu0
    %4809 = vmatprep.mubr.f32.mxu0 0.0
    %4810 = vmatmul.mubr.f32.gmra.mxu0 %v4517
    %v4811 = vpop.f32.mrf.mxu0
    %v4812 = vadd.f32 0.0, %v4811
    %v4813 = vpop.f32.mrf.mxu0
    %4814 = vmatprep.mubr.f32.mxu0 0.0
    %4815 = vmatmul.mubr.f32.gmra.mxu0 %v4520
    %v4816 = vpop.f32.mrf.mxu0
    %v4817 = vadd.f32 0.0, %v4816
    %v4818 = vpop.f32.mrf.mxu0
    %4819 = vmatprep.mubr.f32.mxu0 0.0
    %4820 = vmatmul.mubr.f32.gmra.mxu0 %v4523
    %v4821 = vpop.f32.mrf.mxu0
    %v4822 = vadd.f32 0.0, %v4821
    %v4823 = vpop.f32.mrf.mxu0
    %4824 = vmatprep.mubr.f32.mxu0 0.0
    %4825 = vmatmul.mubr.f32.gmra.mxu0 %v4526
    %v4826 = vpop.f32.mrf.mxu0
    %v4827 = vadd.f32 0.0, %v4826
    %v4828 = vpop.f32.mrf.mxu0
    %4829 = vmatprep.mubr.f32.mxu0 0.0
    %4830 = vmatmul.mubr.f32.gmra.mxu0 %v4529
    %v4831 = vpop.f32.mrf.mxu0
    %v4832 = vadd.f32 0.0, %v4831
    %v4833 = vpop.f32.mrf.mxu0
    %4834 = vmatprep.mubr.f32.mxu0 0.0
    %4835 = vmatmul.mubr.f32.gmra.mxu0 %v4532
    %v4836 = vpop.f32.mrf.mxu0
    %v4837 = vadd.f32 0.0, %v4836
    %v4838 = vpop.f32.mrf.mxu0
    %4839 = vmatprep.mubr.f32.mxu0 0.0
    %4840 = vmatmul.mubr.f32.gmra.mxu0 %v4535
    %v4841 = vpop.f32.mrf.mxu0
    %v4842 = vadd.f32 0.0, %v4841
    %v4843 = vpop.f32.mrf.mxu0
    %4844 = vmatprep.mubr.f32.mxu0 0.0
    %4845 = vmatmul.mubr.f32.gmra.mxu0 %v4538
    %v4846 = vpop.f32.mrf.mxu0
    %v4847 = vadd.f32 0.0, %v4846
    %v4848 = vpop.f32.mrf.mxu0
    %4849 = vmatprep.mubr.f32.mxu0 0.0
    %4850 = vmatmul.mubr.f32.gmra.mxu0 %v4541
    %v4851 = vpop.f32.mrf.mxu0
    %v4852 = vadd.f32 0.0, %v4851
    %v4853 = vpop.f32.mrf.mxu0
    %4854 = vmatprep.mubr.f32.mxu0 0.0
    %4855 = vmatmul.mubr.f32.gmra.mxu0 %v4544
    %v4856 = vpop.f32.mrf.mxu0
    %v4857 = vadd.f32 0.0, %v4856
    %v4858 = vpop.f32.mrf.mxu0
    %4859 = vmatprep.mubr.f32.mxu0 0.0
    %4860 = vmatmul.mubr.f32.gmra.mxu0 %v4547
    %v4861 = vpop.f32.mrf.mxu0
    %v4862 = vadd.f32 0.0, %v4861
    %v4863 = vpop.f32.mrf.mxu0
    %4864 = vmatprep.mubr.f32.mxu0 0.0
    %4865 = vmatmul.mubr.f32.gmra.mxu0 %v4550
    %v4866 = vpop.f32.mrf.mxu0
    %v4867 = vadd.f32 0.0, %v4866
    %v4868 = vpop.f32.mrf.mxu0
    %4869 = vmatprep.mubr.f32.mxu0 0.0
    %4870 = vmatmul.mubr.f32.gmra.mxu0 %v4553
    %v4871 = vpop.f32.mrf.mxu0
    %v4872 = vadd.f32 0.0, %v4871
    %v4873 = vpop.f32.mrf.mxu0
    %4874 = vmatprep.mubr.f32.mxu0 0.0
    %4875 = vmatmul.mubr.f32.gmra.mxu0 %v4556
    %v4876 = vpop.f32.mrf.mxu0
    %v4877 = vadd.f32 0.0, %v4876
    %v4878 = vpop.f32.mrf.mxu0
    %4879 = vmatprep.mubr.f32.mxu0 0.0
    %4880 = vmatmul.mubr.f32.gmra.mxu0 %v4559
    %v4881 = vpop.f32.mrf.mxu0
    %v4882 = vadd.f32 0.0, %v4881
    %v4883 = vpop.f32.mrf.mxu0
    %4884 = vmatprep.mubr.f32.mxu0 0.0
    %4885 = vmatmul.mubr.f32.gmra.mxu0 %v4562
    %v4886 = vpop.f32.mrf.mxu0
    %v4887 = vadd.f32 0.0, %v4886
    %v4888 = vpop.f32.mrf.mxu0
    %4889 = vmatprep.mubr.f32.mxu0 0.0
    %4890 = vmatmul.mubr.f32.gmra.mxu0 %v4565
    %v4891 = vpop.f32.mrf.mxu0
    %v4892 = vadd.f32 0.0, %v4891
    %v4893 = vpop.f32.mrf.mxu0
    %4894 = vmatprep.mubr.f32.mxu0 0.0
    %4895 = vmatmul.mubr.f32.gmra.mxu0 %v4568
    %v4896 = vpop.f32.mrf.mxu0
    %v4897 = vadd.f32 0.0, %v4896
    %v4898 = vpop.f32.mrf.mxu0
    %4899 = vmatprep.mubr.f32.mxu0 0.0
    %4900 = vmatmul.mubr.f32.gmra.mxu0 %v4571
    %v4901 = vpop.f32.mrf.mxu0
    %v4902 = vadd.f32 0.0, %v4901
    %v4903 = vpop.f32.mrf.mxu0
    %4904 = vmatprep.mubr.f32.mxu0 0.0
    %4905 = vmatmul.mubr.f32.gmra.mxu0 %v4574
    %v4906 = vpop.f32.mrf.mxu0
    %v4907 = vadd.f32 0.0, %v4906
    %v4908 = vpop.f32.mrf.mxu0
    %4909 = vmatprep.mubr.f32.mxu0 0.0
    %4910 = vmatmul.mubr.f32.gmra.mxu0 %v4577
    %v4911 = vpop.f32.mrf.mxu0
    %v4912 = vadd.f32 0.0, %v4911
    %v4913 = vpop.f32.mrf.mxu0
    %4914 = vmatprep.mubr.f32.mxu0 0.0
    %4915 = vmatmul.mubr.f32.gmra.mxu0 %v4580
    %v4916 = vpop.f32.mrf.mxu0
    %v4917 = vadd.f32 0.0, %v4916
    %v4918 = vpop.f32.mrf.mxu0
    %4919 = vmatprep.mubr.f32.mxu0 0.0
    %4920 = vmatmul.mubr.f32.gmra.mxu0 %v4583
    %v4921 = vpop.f32.mrf.mxu0
    %v4922 = vadd.f32 0.0, %v4921
    %v4923 = vpop.f32.mrf.mxu0
    %4924 = vmatprep.mubr.f32.mxu0 0.0
    %4925 = vmatmul.mubr.f32.gmra.mxu0 %v4586
    %v4926 = vpop.f32.mrf.mxu0
    %v4927 = vadd.f32 0.0, %v4926
    %v4928 = vpop.f32.mrf.mxu0
    %4929 = vmatprep.mubr.f32.mxu0 0.0
    %4930 = vmatmul.mubr.f32.gmra.mxu0 %v4589
    %v4931 = vpop.f32.mrf.mxu0
    %v4932 = vadd.f32 0.0, %v4931
    %v4933 = vpop.f32.mrf.mxu0
    %4934 = vmatprep.mubr.f32.mxu0 0.0
    %4935 = vmatmul.mubr.f32.gmra.mxu0 %v4592
    %v4936 = vpop.f32.mrf.mxu0
    %v4937 = vadd.f32 0.0, %v4936
    %v4938 = vpop.f32.mrf.mxu0
    %4939 = vmatprep.mubr.f32.mxu0 0.0
    %4940 = vmatmul.mubr.f32.gmra.mxu0 %v4595
    %v4941 = vpop.f32.mrf.mxu0
    %v4942 = vadd.f32 0.0, %v4941
    %v4943 = vpop.f32.mrf.mxu0
    %4944 = vmatprep.mubr.f32.mxu0 0.0
    %4945 = vmatmul.mubr.f32.gmra.mxu0 %v4598
    %v4946 = vpop.f32.mrf.mxu0
    %v4947 = vadd.f32 0.0, %v4946
    %v4948 = vpop.f32.mrf.mxu0
    %4949 = vmatprep.mubr.f32.mxu0 0.0
    %4950 = vmatmul.mubr.f32.gmra.mxu0 %v4601
    %v4951 = vpop.f32.mrf.mxu0
    %v4952 = vadd.f32 0.0, %v4951
    %v4953 = vpop.f32.mrf.mxu0
    %4954 = vmatprep.mubr.f32.mxu0 0.0
    %4955 = vmatmul.mubr.f32.gmra.mxu0 %v4604
    %v4956 = vpop.f32.mrf.mxu0
    %v4957 = vadd.f32 0.0, %v4956
    %v4958 = vpop.f32.mrf.mxu0
    %4959 = vmatprep.mubr.f32.mxu0 0.0
    %4960 = vmatmul.mubr.f32.gmra.mxu0 %v4607
    %v4961 = vpop.f32.mrf.mxu0
    %v4962 = vadd.f32 0.0, %v4961
    %v4963 = vpop.f32.mrf.mxu0
    %4964 = vmatprep.mubr.f32.mxu0 0.0
    %4965 = vmatmul.mubr.f32.gmra.mxu0 %v4610
    %v4966 = vpop.f32.mrf.mxu0
    %v4967 = vadd.f32 0.0, %v4966
    %v4968 = vpop.f32.mrf.mxu0
    %4969 = vmatprep.mubr.f32.mxu0 0.0
    %4970 = vmatmul.mubr.f32.gmra.mxu0 %v4613
    %v4971 = vpop.f32.mrf.mxu0
    %v4972 = vadd.f32 0.0, %v4971
    %v4973 = vpop.f32.mrf.mxu0
    %4974 = vmatprep.mubr.f32.mxu0 0.0
    %4975 = vmatmul.mubr.f32.gmra.mxu0 %v4616
    %v4976 = vpop.f32.mrf.mxu0
    %v4977 = vadd.f32 0.0, %v4976
    %v4978 = vpop.f32.mrf.mxu0
    %4979 = vmatprep.mubr.f32.mxu0 0.0
    %4980 = vmatmul.mubr.f32.gmra.mxu0 %v4619
    %v4981 = vpop.f32.mrf.mxu0
    %v4982 = vadd.f32 0.0, %v4981
    %v4983 = vpop.f32.mrf.mxu0
    %4984 = vmatprep.mubr.f32.mxu0 0.0
    %4985 = vmatmul.mubr.f32.gmra.mxu0 %v4622
    %v4986 = vpop.f32.mrf.mxu0
    %v4987 = vadd.f32 0.0, %v4986
    %v4988 = vpop.f32.mrf.mxu0
    %4989 = vmatprep.mubr.f32.mxu0 0.0
    %4990 = vmatmul.mubr.f32.gmra.mxu0 %v4625
    %v4991 = vpop.f32.mrf.mxu0
    %v4992 = vadd.f32 0.0, %v4991
    %v4993 = vpop.f32.mrf.mxu0
    %4994 = vmatprep.mubr.f32.mxu0 0.0
    %4995 = vmatmul.mubr.f32.gmra.mxu0 %v4628
    %v4996 = vpop.f32.mrf.mxu0
    %v4997 = vadd.f32 0.0, %v4996
    %v4998 = vpop.f32.mrf.mxu0
    %4999 = vmatprep.mubr.f32.mxu0 0.0
    %5000 = vmatmul.mubr.f32.gmra.mxu0 %v4631
    %v5001 = vpop.f32.mrf.mxu0
    %v5002 = vadd.f32 0.0, %v5001
    %v5003 = vpop.f32.mrf.mxu0
    %5004 = vmatprep.mubr.f32.mxu0 0.0
    %5005 = vmatmul.mubr.f32.gmra.mxu0 %v4634
    %v5006 = vpop.f32.mrf.mxu0
    %v5007 = vadd.f32 0.0, %v5006
    %v5008 = vpop.f32.mrf.mxu0
    %5009 = vmatprep.mubr.f32.mxu0 0.0
    %5010 = vmatmul.mubr.f32.gmra.mxu0 %v4637
    %v5011 = vpop.f32.mrf.mxu0
    %v5012 = vadd.f32 0.0, %v5011
    %v5013 = vpop.f32.mrf.mxu0
    %5014 = vmatprep.mubr.f32.mxu0 0.0
    %5015 = vmatmul.mubr.f32.gmra.mxu0 %v4640
    %v5016 = vpop.f32.mrf.mxu0
    %v5017 = vadd.f32 0.0, %v5016
    %v5018 = vpop.f32.mrf.mxu0
    %5019 = vmatprep.mubr.f32.mxu0 0.0
    %5020 = vmatmul.mubr.f32.gmra.mxu0 %v4643
    %v5021 = vpop.f32.mrf.mxu0
    %v5022 = vadd.f32 0.0, %v5021
    %v5023 = vpop.f32.mrf.mxu0
    %5024 = vmatprep.mubr.f32.mxu0 0.0
    %5025 = vmatmul.mubr.f32.gmra.mxu0 %v4646
    %v5026 = vpop.f32.mrf.mxu0
    %v5027 = vadd.f32 0.0, %v5026
    %v5028 = vpop.f32.mrf.mxu0
    %5029 = vmatprep.mubr.f32.mxu0 0.0
    %5030 = vmatmul.mubr.f32.gmra.mxu0 %v4649
    %v5031 = vpop.f32.mrf.mxu0
    %v5032 = vadd.f32 0.0, %v5031
    %v5033 = vpop.f32.mrf.mxu0
    %5034 = vmatprep.mubr.f32.mxu0 0.0
    %5035 = vmatmul.mubr.f32.gmra.mxu0 %v4652
    %v5036 = vpop.f32.mrf.mxu0
    %v5037 = vadd.f32 0.0, %v5036
    %v5038 = vpop.f32.mrf.mxu0
    %5039 = vmatprep.mubr.f32.mxu0 0.0
    %5040 = vmatmul.mubr.f32.gmra.mxu0 %v4655
    %v5041 = vpop.f32.mrf.mxu0
    %v5042 = vadd.f32 0.0, %v5041
    %v5043 = vpop.f32.mrf.mxu0
    %5044 = vdwg.mxu0
    %v5045 = vadd.f32 %v4335, %v4727
    %v5046 = vadd.f32 %v4336, %v4732
    %v5047 = vadd.f32 %v4337, %v4737
    %v5048 = vadd.f32 %v4338, %v4742
    %v5049 = vadd.f32 %v4339, %v4747
    %v5050 = vadd.f32 %v4340, %v4752
    %v5051 = vadd.f32 %v4341, %v4757
    %v5052 = vadd.f32 %v4342, %v4762
    %v5053 = vadd.f32 %v4343, %v4767
    %v5054 = vadd.f32 %v4344, %v4772
    %v5055 = vadd.f32 %v4345, %v4777
    %v5056 = vadd.f32 %v4346, %v4782
    %v5057 = vadd.f32 %v4347, %v4787
    %v5058 = vadd.f32 %v4348, %v4792
    %v5059 = vadd.f32 %v4349, %v4797
    %v5060 = vadd.f32 %v4350, %v4802
    %v5061 = vadd.f32 %v4351, %v4807
    %v5062 = vadd.f32 %v4352, %v4812
    %v5063 = vadd.f32 %v4353, %v4817
    %v5064 = vadd.f32 %v4354, %v4822
    %v5065 = vadd.f32 %v4355, %v4827
    %v5066 = vadd.f32 %v4356, %v4832
    %v5067 = vadd.f32 %v4357, %v4837
    %v5068 = vadd.f32 %v4358, %v4842
    %v5069 = vadd.f32 %v4359, %v4847
    %v5070 = vadd.f32 %v4360, %v4852
    %v5071 = vadd.f32 %v4361, %v4857
    %v5072 = vadd.f32 %v4362, %v4862
    %v5073 = vadd.f32 %v4363, %v4867
    %v5074 = vadd.f32 %v4364, %v4872
    %v5075 = vadd.f32 %v4365, %v4877
    %v5076 = vadd.f32 %v4366, %v4882
    %v5077 = vadd.f32 %v4367, %v4887
    %v5078 = vadd.f32 %v4368, %v4892
    %v5079 = vadd.f32 %v4369, %v4897
    %v5080 = vadd.f32 %v4370, %v4902
    %v5081 = vadd.f32 %v4371, %v4907
    %v5082 = vadd.f32 %v4372, %v4912
    %v5083 = vadd.f32 %v4373, %v4917
    %v5084 = vadd.f32 %v4374, %v4922
    %v5085 = vadd.f32 %v4375, %v4927
    %v5086 = vadd.f32 %v4376, %v4932
    %v5087 = vadd.f32 %v4377, %v4937
    %v5088 = vadd.f32 %v4378, %v4942
    %v5089 = vadd.f32 %v4379, %v4947
    %v5090 = vadd.f32 %v4380, %v4952
    %v5091 = vadd.f32 %v4381, %v4957
    %v5092 = vadd.f32 %v4382, %v4962
    %v5093 = vadd.f32 %v4383, %v4967
    %v5094 = vadd.f32 %v4384, %v4972
    %v5095 = vadd.f32 %v4385, %v4977
    %v5096 = vadd.f32 %v4386, %v4982
    %v5097 = vadd.f32 %v4387, %v4987
    %v5098 = vadd.f32 %v4388, %v4992
    %v5099 = vadd.f32 %v4389, %v4997
    %v5100 = vadd.f32 %v4390, %v5002
    %v5101 = vadd.f32 %v4391, %v5007
    %v5102 = vadd.f32 %v4392, %v5012
    %v5103 = vadd.f32 %v4393, %v5017
    %v5104 = vadd.f32 %v4394, %v5022
    %v5105 = vadd.f32 %v4395, %v5027
    %v5106 = vadd.f32 %v4396, %v5032
    %v5107 = vadd.f32 %v4397, %v5037
    %v5108 = vadd.f32 %v4398, %v5042
    %v5109 = vld [vmem:[%s4399 + $0x1] sm:$0xff]
    %v5110 = vld [vmem:[%s4399 + $0x9] sm:$0xff]
    %v5111 = vld [vmem:[%s4399 + $0x19] sm:$0xff]
    %v5112 = vld [vmem:[%s4399 + $0x21] sm:$0xff]
    %v5113 = vld [vmem:[%s4399 + $0x31] sm:$0xff]
    %v5114 = vld [vmem:[%s4399 + $0x39] sm:$0xff]
    %v5115 = vld [vmem:[%s4399 + $0x49] sm:$0xff]
    %v5116 = vld [vmem:[%s4399 + $0x51] sm:$0xff]
    %v5117 = vld [vmem:[%s4399 + $0x61] sm:$0xff]
    %v5118 = vld [vmem:[%s4399 + $0x69] sm:$0xff]
    %v5119 = vld [vmem:[%s4399 + $0x79] sm:$0xff]
    %v5120 = vld [vmem:[%s4399 + $0x81] sm:$0xff]
    %v5121 = vld [vmem:[%s4399 + $0x91] sm:$0xff]
    %v5122 = vld [vmem:[%s4399 + $0x99] sm:$0xff]
    %v5123 = vld [vmem:[%s4399 + $0xa9] sm:$0xff]
    %v5124 = vld [vmem:[%s4399 + $0xb1] sm:$0xff]
    %v5125 = vld [vmem:[%s4399 + $0xc1] sm:$0xff]
    %v5126 = vld [vmem:[%s4399 + $0xc9] sm:$0xff]
    %v5127 = vld [vmem:[%s4399 + $0xd9] sm:$0xff]
    %v5128 = vld [vmem:[%s4399 + $0xe1] sm:$0xff]
    %v5129 = vld [vmem:[%s4399 + $0xf1] sm:$0xff]
    %v5130 = vld [vmem:[%s4399 + $0xf9] sm:$0xff]
    %v5131 = vld [vmem:[%s4399 + $0x109] sm:$0xff]
    %v5132 = vld [vmem:[%s4399 + $0x111] sm:$0xff]
    %v5133 = vld [vmem:[%s4399 + $0x121] sm:$0xff]
    %v5134 = vld [vmem:[%s4399 + $0x129] sm:$0xff]
    %v5135 = vld [vmem:[%s4399 + $0x139] sm:$0xff]
    %v5136 = vld [vmem:[%s4399 + $0x141] sm:$0xff]
    %v5137 = vld [vmem:[%s4399 + $0x151] sm:$0xff]
    %v5138 = vld [vmem:[%s4399 + $0x159] sm:$0xff]
    %v5139 = vld [vmem:[%s4399 + $0x169] sm:$0xff]
    %v5140 = vld [vmem:[%s4399 + $0x171] sm:$0xff]
    %v5141 = vld [vmem:[%s4399 + $0x1b1] sm:$0xff]
    %v5142 = vld [vmem:[%s4399 + $0x1b9] sm:$0xff]
    %v5143 = vld [vmem:[%s4399 + $0x1c9] sm:$0xff]
    %v5144 = vld [vmem:[%s4399 + $0x1d1] sm:$0xff]
    %v5145 = vld [vmem:[%s4399 + $0x1e1] sm:$0xff]
    %v5146 = vld [vmem:[%s4399 + $0x1e9] sm:$0xff]
    %v5147 = vld [vmem:[%s4399 + $0x1f9] sm:$0xff]
    %v5148 = vld [vmem:[%s4399 + $0x201] sm:$0xff]
    %v5149 = vld [vmem:[%s4399 + $0x211] sm:$0xff]
    %v5150 = vld [vmem:[%s4399 + $0x219] sm:$0xff]
    %v5151 = vld [vmem:[%s4399 + $0x229] sm:$0xff]
    %v5152 = vld [vmem:[%s4399 + $0x231] sm:$0xff]
    %v5153 = vld [vmem:[%s4399 + $0x241] sm:$0xff]
    %v5154 = vld [vmem:[%s4399 + $0x249] sm:$0xff]
    %v5155 = vld [vmem:[%s4399 + $0x259] sm:$0xff]
    %v5156 = vld [vmem:[%s4399 + $0x261] sm:$0xff]
    %v5157 = vld [vmem:[%s4399 + $0x271] sm:$0xff]
    %v5158 = vld [vmem:[%s4399 + $0x279] sm:$0xff]
    %v5159 = vld [vmem:[%s4399 + $0x289] sm:$0xff]
    %v5160 = vld [vmem:[%s4399 + $0x291] sm:$0xff]
    %v5161 = vld [vmem:[%s4399 + $0x2a1] sm:$0xff]
    %v5162 = vld [vmem:[%s4399 + $0x2a9] sm:$0xff]
    %v5163 = vld [vmem:[%s4399 + $0x2b9] sm:$0xff]
    %v5164 = vld [vmem:[%s4399 + $0x2c1] sm:$0xff]
    %v5165 = vld [vmem:[%s4399 + $0x2d1] sm:$0xff]
    %v5166 = vld [vmem:[%s4399 + $0x2d9] sm:$0xff]
    %v5167 = vld [vmem:[%s4399 + $0x2e9] sm:$0xff]
    %v5168 = vld [vmem:[%s4399 + $0x2f1] sm:$0xff]
    %v5169 = vld [vmem:[%s4399 + $0x301] sm:$0xff]
    %v5170 = vld [vmem:[%s4399 + $0x309] sm:$0xff]
    %v5171 = vld [vmem:[%s4399 + $0x319] sm:$0xff]
    %v5172 = vld [vmem:[%s4399 + $0x321] sm:$0xff]
    %v5173 = vld [vmem:[%s1 + $0x15] sm:$0x7]
    %v5175 = vsel %vm33, %v5109, 0
    %v5178 = vsel %vm33, %v5110, 0
    %v5181 = vsel %vm33, %v5111, 0
    %v5184 = vsel %vm33, %v5112, 0
    %v5187 = vsel %vm33, %v5113, 0
    %v5190 = vsel %vm33, %v5114, 0
    %v5193 = vsel %vm33, %v5115, 0
    %v5196 = vsel %vm33, %v5116, 0
    %v5199 = vsel %vm33, %v5117, 0
    %v5202 = vsel %vm33, %v5118, 0
    %v5205 = vsel %vm33, %v5119, 0
    %v5208 = vsel %vm33, %v5120, 0
    %v5211 = vsel %vm33, %v5121, 0
    %v5214 = vsel %vm33, %v5122, 0
    %v5217 = vsel %vm33, %v5123, 0
    %v5220 = vsel %vm33, %v5124, 0
    %v5223 = vsel %vm33, %v5125, 0
    %v5226 = vsel %vm33, %v5126, 0
    %v5229 = vsel %vm33, %v5127, 0
    %v5232 = vsel %vm33, %v5128, 0
    %v5235 = vsel %vm33, %v5129, 0
    %v5238 = vsel %vm33, %v5130, 0
    %v5241 = vsel %vm33, %v5131, 0
    %v5244 = vsel %vm33, %v5132, 0
    %v5247 = vsel %vm33, %v5133, 0
    %v5250 = vsel %vm33, %v5134, 0
    %v5253 = vsel %vm33, %v5135, 0
    %v5256 = vsel %vm33, %v5136, 0
    %v5259 = vsel %vm33, %v5137, 0
    %v5262 = vsel %vm33, %v5138, 0
    %v5265 = vsel %vm33, %v5139, 0
    %v5268 = vsel %vm33, %v5140, 0
    %v5271 = vsel %vm33, %v5141, 0
    %v5274 = vsel %vm33, %v5142, 0
    %v5277 = vsel %vm33, %v5143, 0
    %v5280 = vsel %vm33, %v5144, 0
    %v5283 = vsel %vm33, %v5145, 0
    %v5286 = vsel %vm33, %v5146, 0
    %v5289 = vsel %vm33, %v5147, 0
    %v5292 = vsel %vm33, %v5148, 0
    %v5295 = vsel %vm33, %v5149, 0
    %v5298 = vsel %vm33, %v5150, 0
    %v5301 = vsel %vm33, %v5151, 0
    %v5304 = vsel %vm33, %v5152, 0
    %v5307 = vsel %vm33, %v5153, 0
    %v5310 = vsel %vm33, %v5154, 0
    %v5313 = vsel %vm33, %v5155, 0
    %v5316 = vsel %vm33, %v5156, 0
    %v5319 = vsel %vm33, %v5157, 0
    %v5322 = vsel %vm33, %v5158, 0
    %v5325 = vsel %vm33, %v5159, 0
    %v5328 = vsel %vm33, %v5160, 0
    %v5331 = vsel %vm33, %v5161, 0
    %v5334 = vsel %vm33, %v5162, 0
    %v5337 = vsel %vm33, %v5163, 0
    %v5340 = vsel %vm33, %v5164, 0
    %v5343 = vsel %vm33, %v5165, 0
    %v5346 = vsel %vm33, %v5166, 0
    %v5349 = vsel %vm33, %v5167, 0
    %v5352 = vsel %vm33, %v5168, 0
    %v5355 = vsel %vm33, %v5169, 0
    %v5358 = vsel %vm33, %v5170, 0
    %v5361 = vsel %vm33, %v5171, 0
    %v5364 = vsel %vm33, %v5172, 0
    %v5367 = vsel %vm594, %v5173, 0
    %5369 = vmatprep.subr.mxu0 0.0
    %5370 = vmatpush1.msra.mxu0 0.0
    %5371 = vmatprep.subr.mxu0 0.0
    %5372 = vmatpush1.msra.mxu0 0.0
    %5373 = vmatprep.subr.mxu0 0.0
    %5374 = vmatpush1.msra.mxu0 0.0
    %5375 = vmatprep.subr.mxu0 0.0
    %5376 = vmatpush1.msra.mxu0 0.0
    %5377 = vmatprep.subr.mxu0 0.0
    %5378 = vmatpush1.msra.mxu0 0.0
    %5379 = vmatprep.subr.mxu0 0.0
    %5380 = vmatpush1.msra.mxu0 0.0
    %5381 = vmatprep.subr.mxu0 0.0
    %5382 = vmatpush1.msra.mxu0 0.0
    %5383 = vmatprep.subr.mxu0 0.0
    %5384 = vmatpush1.msra.mxu0 0.0
    %5385 = vmatprep.subr.mxu0 0.0
    %5386 = vmatpush1.msra.mxu0 0.0
    %5387 = vmatprep.subr.mxu0 0.0
    %5388 = vmatpush1.msra.mxu0 0.0
    %5389 = vmatprep.subr.mxu0 0.0
    %5390 = vmatpush1.msra.mxu0 0.0
    %5391 = vmatprep.subr.mxu0 0.0
    %5392 = vmatpush1.msra.mxu0 0.0
    %5393 = vmatprep.subr.mxu0 0.0
    %5394 = vmatpush1.msra.mxu0 0.0
    %5395 = vmatprep.subr.mxu0 0.0
    %5396 = vmatpush1.msra.mxu0 0.0
    %5397 = vmatprep.subr.mxu0 0.0
    %5398 = vmatpush1.msra.mxu0 0.0
    %5399 = vmatprep.subr.mxu0 0.0
    %5400 = vmatpush1.msra.mxu0 %v5367
    %5401 = vmatprep.subr.mxu0 0.0
    %5402 = vmatpush2.msra.mxu0 0.0
    %5403 = vmatprep.subr.mxu0 0.0
    %5404 = vmatpush2.msra.mxu0 0.0
    %5405 = vmatprep.subr.mxu0 0.0
    %5406 = vmatpush2.msra.mxu0 0.0
    %5407 = vmatprep.subr.mxu0 0.0
    %5408 = vmatpush2.msra.mxu0 0.0
    %5409 = vmatprep.subr.mxu0 0.0
    %5410 = vmatpush2.msra.mxu0 0.0
    %5411 = vmatprep.subr.mxu0 0.0
    %5412 = vmatpush2.msra.mxu0 0.0
    %5413 = vmatprep.subr.mxu0 0.0
    %5414 = vmatpush2.msra.mxu0 0.0
    %5415 = vmatprep.subr.mxu0 0.0
    %5416 = vmatpush2.msra.mxu0 0.0
    %5417 = vmatprep.subr.mxu0 0.0
    %5418 = vmatpush2.msra.mxu0 0.0
    %5419 = vmatprep.subr.mxu0 0.0
    %5420 = vmatpush2.msra.mxu0 0.0
    %5421 = vmatprep.subr.mxu0 0.0
    %5422 = vmatpush2.msra.mxu0 0.0
    %5423 = vmatprep.subr.mxu0 0.0
    %5424 = vmatpush2.msra.mxu0 0.0
    %5425 = vmatprep.subr.mxu0 0.0
    %5426 = vmatpush2.msra.mxu0 0.0
    %5427 = vmatprep.subr.mxu0 0.0
    %5428 = vmatpush2.msra.mxu0 0.0
    %5429 = vmatprep.subr.mxu0 0.0
    %5430 = vmatpush2.msra.mxu0 0.0
    %5431 = vmatprep.subr.mxu0 0.0
    %5432 = vmatpush2.msra.mxu0 0.0
    %5433 = vmatprep.mubr.f32.mxu0 0.0
    %5434 = vmatmul.mubr.f32.gmra.mxu0 %v5175
    %v5435 = vpop.f32.mrf.mxu0
    %v5436 = vadd.f32 0.0, %v5435
    %v5437 = vpop.f32.mrf.mxu0
    %5438 = vmatprep.mubr.f32.mxu0 0.0
    %5439 = vmatmul.mubr.f32.gmra.mxu0 %v5178
    %v5440 = vpop.f32.mrf.mxu0
    %v5441 = vadd.f32 0.0, %v5440
    %v5442 = vpop.f32.mrf.mxu0
    %5443 = vmatprep.mubr.f32.mxu0 0.0
    %5444 = vmatmul.mubr.f32.gmra.mxu0 %v5181
    %v5445 = vpop.f32.mrf.mxu0
    %v5446 = vadd.f32 0.0, %v5445
    %v5447 = vpop.f32.mrf.mxu0
    %5448 = vmatprep.mubr.f32.mxu0 0.0
    %5449 = vmatmul.mubr.f32.gmra.mxu0 %v5184
    %v5450 = vpop.f32.mrf.mxu0
    %v5451 = vadd.f32 0.0, %v5450
    %v5452 = vpop.f32.mrf.mxu0
    %5453 = vmatprep.mubr.f32.mxu0 0.0
    %5454 = vmatmul.mubr.f32.gmra.mxu0 %v5187
    %v5455 = vpop.f32.mrf.mxu0
    %v5456 = vadd.f32 0.0, %v5455
    %v5457 = vpop.f32.mrf.mxu0
    %5458 = vmatprep.mubr.f32.mxu0 0.0
    %5459 = vmatmul.mubr.f32.gmra.mxu0 %v5190
    %v5460 = vpop.f32.mrf.mxu0
    %v5461 = vadd.f32 0.0, %v5460
    %v5462 = vpop.f32.mrf.mxu0
    %5463 = vmatprep.mubr.f32.mxu0 0.0
    %5464 = vmatmul.mubr.f32.gmra.mxu0 %v5193
    %v5465 = vpop.f32.mrf.mxu0
    %v5466 = vadd.f32 0.0, %v5465
    %v5467 = vpop.f32.mrf.mxu0
    %5468 = vmatprep.mubr.f32.mxu0 0.0
    %5469 = vmatmul.mubr.f32.gmra.mxu0 %v5196
    %v5470 = vpop.f32.mrf.mxu0
    %v5471 = vadd.f32 0.0, %v5470
    %v5472 = vpop.f32.mrf.mxu0
    %5473 = vmatprep.mubr.f32.mxu0 0.0
    %5474 = vmatmul.mubr.f32.gmra.mxu0 %v5199
    %v5475 = vpop.f32.mrf.mxu0
    %v5476 = vadd.f32 0.0, %v5475
    %v5477 = vpop.f32.mrf.mxu0
    %5478 = vmatprep.mubr.f32.mxu0 0.0
    %5479 = vmatmul.mubr.f32.gmra.mxu0 %v5202
    %v5480 = vpop.f32.mrf.mxu0
    %v5481 = vadd.f32 0.0, %v5480
    %v5482 = vpop.f32.mrf.mxu0
    %5483 = vmatprep.mubr.f32.mxu0 0.0
    %5484 = vmatmul.mubr.f32.gmra.mxu0 %v5205
    %v5485 = vpop.f32.mrf.mxu0
    %v5486 = vadd.f32 0.0, %v5485
    %v5487 = vpop.f32.mrf.mxu0
    %5488 = vmatprep.mubr.f32.mxu0 0.0
    %5489 = vmatmul.mubr.f32.gmra.mxu0 %v5208
    %v5490 = vpop.f32.mrf.mxu0
    %v5491 = vadd.f32 0.0, %v5490
    %v5492 = vpop.f32.mrf.mxu0
    %5493 = vmatprep.mubr.f32.mxu0 0.0
    %5494 = vmatmul.mubr.f32.gmra.mxu0 %v5211
    %v5495 = vpop.f32.mrf.mxu0
    %v5496 = vadd.f32 0.0, %v5495
    %v5497 = vpop.f32.mrf.mxu0
    %5498 = vmatprep.mubr.f32.mxu0 0.0
    %5499 = vmatmul.mubr.f32.gmra.mxu0 %v5214
    %v5500 = vpop.f32.mrf.mxu0
    %v5501 = vadd.f32 0.0, %v5500
    %v5502 = vpop.f32.mrf.mxu0
    %5503 = vmatprep.mubr.f32.mxu0 0.0
    %5504 = vmatmul.mubr.f32.gmra.mxu0 %v5217
    %v5505 = vpop.f32.mrf.mxu0
    %v5506 = vadd.f32 0.0, %v5505
    %v5507 = vpop.f32.mrf.mxu0
    %5508 = vmatprep.mubr.f32.mxu0 0.0
    %5509 = vmatmul.mubr.f32.gmra.mxu0 %v5220
    %v5510 = vpop.f32.mrf.mxu0
    %v5511 = vadd.f32 0.0, %v5510
    %v5512 = vpop.f32.mrf.mxu0
    %5513 = vmatprep.mubr.f32.mxu0 0.0
    %5514 = vmatmul.mubr.f32.gmra.mxu0 %v5223
    %v5515 = vpop.f32.mrf.mxu0
    %v5516 = vadd.f32 0.0, %v5515
    %v5517 = vpop.f32.mrf.mxu0
    %5518 = vmatprep.mubr.f32.mxu0 0.0
    %5519 = vmatmul.mubr.f32.gmra.mxu0 %v5226
    %v5520 = vpop.f32.mrf.mxu0
    %v5521 = vadd.f32 0.0, %v5520
    %v5522 = vpop.f32.mrf.mxu0
    %5523 = vmatprep.mubr.f32.mxu0 0.0
    %5524 = vmatmul.mubr.f32.gmra.mxu0 %v5229
    %v5525 = vpop.f32.mrf.mxu0
    %v5526 = vadd.f32 0.0, %v5525
    %v5527 = vpop.f32.mrf.mxu0
    %5528 = vmatprep.mubr.f32.mxu0 0.0
    %5529 = vmatmul.mubr.f32.gmra.mxu0 %v5232
    %v5530 = vpop.f32.mrf.mxu0
    %v5531 = vadd.f32 0.0, %v5530
    %v5532 = vpop.f32.mrf.mxu0
    %5533 = vmatprep.mubr.f32.mxu0 0.0
    %5534 = vmatmul.mubr.f32.gmra.mxu0 %v5235
    %v5535 = vpop.f32.mrf.mxu0
    %v5536 = vadd.f32 0.0, %v5535
    %v5537 = vpop.f32.mrf.mxu0
    %5538 = vmatprep.mubr.f32.mxu0 0.0
    %5539 = vmatmul.mubr.f32.gmra.mxu0 %v5238
    %v5540 = vpop.f32.mrf.mxu0
    %v5541 = vadd.f32 0.0, %v5540
    %v5542 = vpop.f32.mrf.mxu0
    %5543 = vmatprep.mubr.f32.mxu0 0.0
    %5544 = vmatmul.mubr.f32.gmra.mxu0 %v5241
    %v5545 = vpop.f32.mrf.mxu0
    %v5546 = vadd.f32 0.0, %v5545
    %v5547 = vpop.f32.mrf.mxu0
    %5548 = vmatprep.mubr.f32.mxu0 0.0
    %5549 = vmatmul.mubr.f32.gmra.mxu0 %v5244
    %v5550 = vpop.f32.mrf.mxu0
    %v5551 = vadd.f32 0.0, %v5550
    %v5552 = vpop.f32.mrf.mxu0
    %5553 = vmatprep.mubr.f32.mxu0 0.0
    %5554 = vmatmul.mubr.f32.gmra.mxu0 %v5247
    %v5555 = vpop.f32.mrf.mxu0
    %v5556 = vadd.f32 0.0, %v5555
    %v5557 = vpop.f32.mrf.mxu0
    %5558 = vmatprep.mubr.f32.mxu0 0.0
    %5559 = vmatmul.mubr.f32.gmra.mxu0 %v5250
    %v5560 = vpop.f32.mrf.mxu0
    %v5561 = vadd.f32 0.0, %v5560
    %v5562 = vpop.f32.mrf.mxu0
    %5563 = vmatprep.mubr.f32.mxu0 0.0
    %5564 = vmatmul.mubr.f32.gmra.mxu0 %v5253
    %v5565 = vpop.f32.mrf.mxu0
    %v5566 = vadd.f32 0.0, %v5565
    %v5567 = vpop.f32.mrf.mxu0
    %5568 = vmatprep.mubr.f32.mxu0 0.0
    %5569 = vmatmul.mubr.f32.gmra.mxu0 %v5256
    %v5570 = vpop.f32.mrf.mxu0
    %v5571 = vadd.f32 0.0, %v5570
    %v5572 = vpop.f32.mrf.mxu0
    %5573 = vmatprep.mubr.f32.mxu0 0.0
    %5574 = vmatmul.mubr.f32.gmra.mxu0 %v5259
    %v5575 = vpop.f32.mrf.mxu0
    %v5576 = vadd.f32 0.0, %v5575
    %v5577 = vpop.f32.mrf.mxu0
    %5578 = vmatprep.mubr.f32.mxu0 0.0
    %5579 = vmatmul.mubr.f32.gmra.mxu0 %v5262
    %v5580 = vpop.f32.mrf.mxu0
    %v5581 = vadd.f32 0.0, %v5580
    %v5582 = vpop.f32.mrf.mxu0
    %5583 = vmatprep.mubr.f32.mxu0 0.0
    %5584 = vmatmul.mubr.f32.gmra.mxu0 %v5265
    %v5585 = vpop.f32.mrf.mxu0
    %v5586 = vadd.f32 0.0, %v5585
    %v5587 = vpop.f32.mrf.mxu0
    %5588 = vmatprep.mubr.f32.mxu0 0.0
    %5589 = vmatmul.mubr.f32.gmra.mxu0 %v5268
    %v5590 = vpop.f32.mrf.mxu0
    %v5591 = vadd.f32 0.0, %v5590
    %v5592 = vpop.f32.mrf.mxu0
    %5593 = vmatprep.mubr.f32.mxu0 0.0
    %5594 = vmatmul.mubr.f32.gmra.mxu0 %v5271
    %v5595 = vpop.f32.mrf.mxu0
    %v5596 = vadd.f32 0.0, %v5595
    %v5597 = vpop.f32.mrf.mxu0
    %5598 = vmatprep.mubr.f32.mxu0 0.0
    %5599 = vmatmul.mubr.f32.gmra.mxu0 %v5274
    %v5600 = vpop.f32.mrf.mxu0
    %v5601 = vadd.f32 0.0, %v5600
    %v5602 = vpop.f32.mrf.mxu0
    %5603 = vmatprep.mubr.f32.mxu0 0.0
    %5604 = vmatmul.mubr.f32.gmra.mxu0 %v5277
    %v5605 = vpop.f32.mrf.mxu0
    %v5606 = vadd.f32 0.0, %v5605
    %v5607 = vpop.f32.mrf.mxu0
    %5608 = vmatprep.mubr.f32.mxu0 0.0
    %5609 = vmatmul.mubr.f32.gmra.mxu0 %v5280
    %v5610 = vpop.f32.mrf.mxu0
    %v5611 = vadd.f32 0.0, %v5610
    %v5612 = vpop.f32.mrf.mxu0
    %5613 = vmatprep.mubr.f32.mxu0 0.0
    %5614 = vmatmul.mubr.f32.gmra.mxu0 %v5283
    %v5615 = vpop.f32.mrf.mxu0
    %v5616 = vadd.f32 0.0, %v5615
    %v5617 = vpop.f32.mrf.mxu0
    %5618 = vmatprep.mubr.f32.mxu0 0.0
    %5619 = vmatmul.mubr.f32.gmra.mxu0 %v5286
    %v5620 = vpop.f32.mrf.mxu0
    %v5621 = vadd.f32 0.0, %v5620
    %v5622 = vpop.f32.mrf.mxu0
    %5623 = vmatprep.mubr.f32.mxu0 0.0
    %5624 = vmatmul.mubr.f32.gmra.mxu0 %v5289
    %v5625 = vpop.f32.mrf.mxu0
    %v5626 = vadd.f32 0.0, %v5625
    %v5627 = vpop.f32.mrf.mxu0
    %5628 = vmatprep.mubr.f32.mxu0 0.0
    %5629 = vmatmul.mubr.f32.gmra.mxu0 %v5292
    %v5630 = vpop.f32.mrf.mxu0
    %v5631 = vadd.f32 0.0, %v5630
    %v5632 = vpop.f32.mrf.mxu0
    %5633 = vmatprep.mubr.f32.mxu0 0.0
    %5634 = vmatmul.mubr.f32.gmra.mxu0 %v5295
    %v5635 = vpop.f32.mrf.mxu0
    %v5636 = vadd.f32 0.0, %v5635
    %v5637 = vpop.f32.mrf.mxu0
    %5638 = vmatprep.mubr.f32.mxu0 0.0
    %5639 = vmatmul.mubr.f32.gmra.mxu0 %v5298
    %v5640 = vpop.f32.mrf.mxu0
    %v5641 = vadd.f32 0.0, %v5640
    %v5642 = vpop.f32.mrf.mxu0
    %5643 = vmatprep.mubr.f32.mxu0 0.0
    %5644 = vmatmul.mubr.f32.gmra.mxu0 %v5301
    %v5645 = vpop.f32.mrf.mxu0
    %v5646 = vadd.f32 0.0, %v5645
    %v5647 = vpop.f32.mrf.mxu0
    %5648 = vmatprep.mubr.f32.mxu0 0.0
    %5649 = vmatmul.mubr.f32.gmra.mxu0 %v5304
    %v5650 = vpop.f32.mrf.mxu0
    %v5651 = vadd.f32 0.0, %v5650
    %v5652 = vpop.f32.mrf.mxu0
    %5653 = vmatprep.mubr.f32.mxu0 0.0
    %5654 = vmatmul.mubr.f32.gmra.mxu0 %v5307
    %v5655 = vpop.f32.mrf.mxu0
    %v5656 = vadd.f32 0.0, %v5655
    %v5657 = vpop.f32.mrf.mxu0
    %5658 = vmatprep.mubr.f32.mxu0 0.0
    %5659 = vmatmul.mubr.f32.gmra.mxu0 %v5310
    %v5660 = vpop.f32.mrf.mxu0
    %v5661 = vadd.f32 0.0, %v5660
    %v5662 = vpop.f32.mrf.mxu0
    %5663 = vmatprep.mubr.f32.mxu0 0.0
    %5664 = vmatmul.mubr.f32.gmra.mxu0 %v5313
    %v5665 = vpop.f32.mrf.mxu0
    %v5666 = vadd.f32 0.0, %v5665
    %v5667 = vpop.f32.mrf.mxu0
    %5668 = vmatprep.mubr.f32.mxu0 0.0
    %5669 = vmatmul.mubr.f32.gmra.mxu0 %v5316
    %v5670 = vpop.f32.mrf.mxu0
    %v5671 = vadd.f32 0.0, %v5670
    %v5672 = vpop.f32.mrf.mxu0
    %5673 = vmatprep.mubr.f32.mxu0 0.0
    %5674 = vmatmul.mubr.f32.gmra.mxu0 %v5319
    %v5675 = vpop.f32.mrf.mxu0
    %v5676 = vadd.f32 0.0, %v5675
    %v5677 = vpop.f32.mrf.mxu0
    %5678 = vmatprep.mubr.f32.mxu0 0.0
    %5679 = vmatmul.mubr.f32.gmra.mxu0 %v5322
    %v5680 = vpop.f32.mrf.mxu0
    %v5681 = vadd.f32 0.0, %v5680
    %v5682 = vpop.f32.mrf.mxu0
    %5683 = vmatprep.mubr.f32.mxu0 0.0
    %5684 = vmatmul.mubr.f32.gmra.mxu0 %v5325
    %v5685 = vpop.f32.mrf.mxu0
    %v5686 = vadd.f32 0.0, %v5685
    %v5687 = vpop.f32.mrf.mxu0
    %5688 = vmatprep.mubr.f32.mxu0 0.0
    %5689 = vmatmul.mubr.f32.gmra.mxu0 %v5328
    %v5690 = vpop.f32.mrf.mxu0
    %v5691 = vadd.f32 0.0, %v5690
    %v5692 = vpop.f32.mrf.mxu0
    %5693 = vmatprep.mubr.f32.mxu0 0.0
    %5694 = vmatmul.mubr.f32.gmra.mxu0 %v5331
    %v5695 = vpop.f32.mrf.mxu0
    %v5696 = vadd.f32 0.0, %v5695
    %v5697 = vpop.f32.mrf.mxu0
    %5698 = vmatprep.mubr.f32.mxu0 0.0
    %5699 = vmatmul.mubr.f32.gmra.mxu0 %v5334
    %v5700 = vpop.f32.mrf.mxu0
    %v5701 = vadd.f32 0.0, %v5700
    %v5702 = vpop.f32.mrf.mxu0
    %5703 = vmatprep.mubr.f32.mxu0 0.0
    %5704 = vmatmul.mubr.f32.gmra.mxu0 %v5337
    %v5705 = vpop.f32.mrf.mxu0
    %v5706 = vadd.f32 0.0, %v5705
    %v5707 = vpop.f32.mrf.mxu0
    %5708 = vmatprep.mubr.f32.mxu0 0.0
    %5709 = vmatmul.mubr.f32.gmra.mxu0 %v5340
    %v5710 = vpop.f32.mrf.mxu0
    %v5711 = vadd.f32 0.0, %v5710
    %v5712 = vpop.f32.mrf.mxu0
    %5713 = vmatprep.mubr.f32.mxu0 0.0
    %5714 = vmatmul.mubr.f32.gmra.mxu0 %v5343
    %v5715 = vpop.f32.mrf.mxu0
    %v5716 = vadd.f32 0.0, %v5715
    %v5717 = vpop.f32.mrf.mxu0
    %5718 = vmatprep.mubr.f32.mxu0 0.0
    %5719 = vmatmul.mubr.f32.gmra.mxu0 %v5346
    %v5720 = vpop.f32.mrf.mxu0
    %v5721 = vadd.f32 0.0, %v5720
    %v5722 = vpop.f32.mrf.mxu0
    %5723 = vmatprep.mubr.f32.mxu0 0.0
    %5724 = vmatmul.mubr.f32.gmra.mxu0 %v5349
    %v5725 = vpop.f32.mrf.mxu0
    %v5726 = vadd.f32 0.0, %v5725
    %v5727 = vpop.f32.mrf.mxu0
    %5728 = vmatprep.mubr.f32.mxu0 0.0
    %5729 = vmatmul.mubr.f32.gmra.mxu0 %v5352
    %v5730 = vpop.f32.mrf.mxu0
    %v5731 = vadd.f32 0.0, %v5730
    %v5732 = vpop.f32.mrf.mxu0
    %5733 = vmatprep.mubr.f32.mxu0 0.0
    %5734 = vmatmul.mubr.f32.gmra.mxu0 %v5355
    %v5735 = vpop.f32.mrf.mxu0
    %v5736 = vadd.f32 0.0, %v5735
    %v5737 = vpop.f32.mrf.mxu0
    %5738 = vmatprep.mubr.f32.mxu0 0.0
    %5739 = vmatmul.mubr.f32.gmra.mxu0 %v5358
    %v5740 = vpop.f32.mrf.mxu0
    %v5741 = vadd.f32 0.0, %v5740
    %v5742 = vpop.f32.mrf.mxu0
    %5743 = vmatprep.mubr.f32.mxu0 0.0
    %5744 = vmatmul.mubr.f32.gmra.mxu0 %v5361
    %v5745 = vpop.f32.mrf.mxu0
    %v5746 = vadd.f32 0.0, %v5745
    %v5747 = vpop.f32.mrf.mxu0
    %5748 = vmatprep.mubr.f32.mxu0 0.0
    %5749 = vmatmul.mubr.f32.gmra.mxu0 %v5364
    %v5750 = vpop.f32.mrf.mxu0
    %v5751 = vadd.f32 0.0, %v5750
    %v5752 = vpop.f32.mrf.mxu0
    %5753 = vdwg.mxu0
    %v5754 = vadd.f32 %v5045, %v5436
    %v5755 = vadd.f32 %v5046, %v5441
    %v5756 = vadd.f32 %v5047, %v5446
    %v5757 = vadd.f32 %v5048, %v5451
    %v5758 = vadd.f32 %v5049, %v5456
    %v5759 = vadd.f32 %v5050, %v5461
    %v5760 = vadd.f32 %v5051, %v5466
    %v5761 = vadd.f32 %v5052, %v5471
    %v5762 = vadd.f32 %v5053, %v5476
    %v5763 = vadd.f32 %v5054, %v5481
    %v5764 = vadd.f32 %v5055, %v5486
    %v5765 = vadd.f32 %v5056, %v5491
    %v5766 = vadd.f32 %v5057, %v5496
    %v5767 = vadd.f32 %v5058, %v5501
    %v5768 = vadd.f32 %v5059, %v5506
    %v5769 = vadd.f32 %v5060, %v5511
    %v5770 = vadd.f32 %v5061, %v5516
    %v5771 = vadd.f32 %v5062, %v5521
    %v5772 = vadd.f32 %v5063, %v5526
    %v5773 = vadd.f32 %v5064, %v5531
    %v5774 = vadd.f32 %v5065, %v5536
    %v5775 = vadd.f32 %v5066, %v5541
    %v5776 = vadd.f32 %v5067, %v5546
    %v5777 = vadd.f32 %v5068, %v5551
    %v5778 = vadd.f32 %v5069, %v5556
    %v5779 = vadd.f32 %v5070, %v5561
    %v5780 = vadd.f32 %v5071, %v5566
    %v5781 = vadd.f32 %v5072, %v5571
    %v5782 = vadd.f32 %v5073, %v5576
    %v5783 = vadd.f32 %v5074, %v5581
    %v5784 = vadd.f32 %v5075, %v5586
    %v5785 = vadd.f32 %v5076, %v5591
    %v5786 = vadd.f32 %v5077, %v5596
    %v5787 = vadd.f32 %v5078, %v5601
    %v5788 = vadd.f32 %v5079, %v5606
    %v5789 = vadd.f32 %v5080, %v5611
    %v5790 = vadd.f32 %v5081, %v5616
    %v5791 = vadd.f32 %v5082, %v5621
    %v5792 = vadd.f32 %v5083, %v5626
    %v5793 = vadd.f32 %v5084, %v5631
    %v5794 = vadd.f32 %v5085, %v5636
    %v5795 = vadd.f32 %v5086, %v5641
    %v5796 = vadd.f32 %v5087, %v5646
    %v5797 = vadd.f32 %v5088, %v5651
    %v5798 = vadd.f32 %v5089, %v5656
    %v5799 = vadd.f32 %v5090, %v5661
    %v5800 = vadd.f32 %v5091, %v5666
    %v5801 = vadd.f32 %v5092, %v5671
    %v5802 = vadd.f32 %v5093, %v5676
    %v5803 = vadd.f32 %v5094, %v5681
    %v5804 = vadd.f32 %v5095, %v5686
    %v5805 = vadd.f32 %v5096, %v5691
    %v5806 = vadd.f32 %v5097, %v5696
    %v5807 = vadd.f32 %v5098, %v5701
    %v5808 = vadd.f32 %v5099, %v5706
    %v5809 = vadd.f32 %v5100, %v5711
    %v5810 = vadd.f32 %v5101, %v5716
    %v5811 = vadd.f32 %v5102, %v5721
    %v5812 = vadd.f32 %v5103, %v5726
    %v5813 = vadd.f32 %v5104, %v5731
    %v5814 = vadd.f32 %v5105, %v5736
    %v5815 = vadd.f32 %v5106, %v5741
    %v5816 = vadd.f32 %v5107, %v5746
    %v5817 = vadd.f32 %v5108, %v5751
    %v5818 = vld [vmem:[%s4399 + $0x2] sm:$0xff]
    %v5819 = vld [vmem:[%s4399 + $0xa] sm:$0xff]
    %v5820 = vld [vmem:[%s4399 + $0x1a] sm:$0xff]
    %v5821 = vld [vmem:[%s4399 + $0x22] sm:$0xff]
    %v5822 = vld [vmem:[%s4399 + $0x32] sm:$0xff]
    %v5823 = vld [vmem:[%s4399 + $0x3a] sm:$0xff]
    %v5824 = vld [vmem:[%s4399 + $0x4a] sm:$0xff]
    %v5825 = vld [vmem:[%s4399 + $0x52] sm:$0xff]
    %v5826 = vld [vmem:[%s4399 + $0x62] sm:$0xff]
    %v5827 = vld [vmem:[%s4399 + $0x6a] sm:$0xff]
    %v5828 = vld [vmem:[%s4399 + $0x7a] sm:$0xff]
    %v5829 = vld [vmem:[%s4399 + $0x82] sm:$0xff]
    %v5830 = vld [vmem:[%s4399 + $0x92] sm:$0xff]
    %v5831 = vld [vmem:[%s4399 + $0x9a] sm:$0xff]
    %v5832 = vld [vmem:[%s4399 + $0xaa] sm:$0xff]
    %v5833 = vld [vmem:[%s4399 + $0xb2] sm:$0xff]
    %v5834 = vld [vmem:[%s4399 + $0xc2] sm:$0xff]
    %v5835 = vld [vmem:[%s4399 + $0xca] sm:$0xff]
    %v5836 = vld [vmem:[%s4399 + $0xda] sm:$0xff]
    %v5837 = vld [vmem:[%s4399 + $0xe2] sm:$0xff]
    %v5838 = vld [vmem:[%s4399 + $0xf2] sm:$0xff]
    %v5839 = vld [vmem:[%s4399 + $0xfa] sm:$0xff]
    %v5840 = vld [vmem:[%s4399 + $0x10a] sm:$0xff]
    %v5841 = vld [vmem:[%s4399 + $0x112] sm:$0xff]
    %v5842 = vld [vmem:[%s4399 + $0x122] sm:$0xff]
    %v5843 = vld [vmem:[%s4399 + $0x12a] sm:$0xff]
    %v5844 = vld [vmem:[%s4399 + $0x13a] sm:$0xff]
    %v5845 = vld [vmem:[%s4399 + $0x142] sm:$0xff]
    %v5846 = vld [vmem:[%s4399 + $0x152] sm:$0xff]
    %v5847 = vld [vmem:[%s4399 + $0x15a] sm:$0xff]
    %v5848 = vld [vmem:[%s4399 + $0x16a] sm:$0xff]
    %v5849 = vld [vmem:[%s4399 + $0x172] sm:$0xff]
    %v5850 = vld [vmem:[%s4399 + $0x1b2] sm:$0xff]
    %v5851 = vld [vmem:[%s4399 + $0x1ba] sm:$0xff]
    %v5852 = vld [vmem:[%s4399 + $0x1ca] sm:$0xff]
    %v5853 = vld [vmem:[%s4399 + $0x1d2] sm:$0xff]
    %v5854 = vld [vmem:[%s4399 + $0x1e2] sm:$0xff]
    %v5855 = vld [vmem:[%s4399 + $0x1ea] sm:$0xff]
    %v5856 = vld [vmem:[%s4399 + $0x1fa] sm:$0xff]
    %v5857 = vld [vmem:[%s4399 + $0x202] sm:$0xff]
    %v5858 = vld [vmem:[%s4399 + $0x212] sm:$0xff]
    %v5859 = vld [vmem:[%s4399 + $0x21a] sm:$0xff]
    %v5860 = vld [vmem:[%s4399 + $0x22a] sm:$0xff]
    %v5861 = vld [vmem:[%s4399 + $0x232] sm:$0xff]
    %v5862 = vld [vmem:[%s4399 + $0x242] sm:$0xff]
    %v5863 = vld [vmem:[%s4399 + $0x24a] sm:$0xff]
    %v5864 = vld [vmem:[%s4399 + $0x25a] sm:$0xff]
    %v5865 = vld [vmem:[%s4399 + $0x262] sm:$0xff]
    %v5866 = vld [vmem:[%s4399 + $0x272] sm:$0xff]
    %v5867 = vld [vmem:[%s4399 + $0x27a] sm:$0xff]
    %v5868 = vld [vmem:[%s4399 + $0x28a] sm:$0xff]
    %v5869 = vld [vmem:[%s4399 + $0x292] sm:$0xff]
    %v5870 = vld [vmem:[%s4399 + $0x2a2] sm:$0xff]
    %v5871 = vld [vmem:[%s4399 + $0x2aa] sm:$0xff]
    %v5872 = vld [vmem:[%s4399 + $0x2ba] sm:$0xff]
    %v5873 = vld [vmem:[%s4399 + $0x2c2] sm:$0xff]
    %v5874 = vld [vmem:[%s4399 + $0x2d2] sm:$0xff]
    %v5875 = vld [vmem:[%s4399 + $0x2da] sm:$0xff]
    %v5876 = vld [vmem:[%s4399 + $0x2ea] sm:$0xff]
    %v5877 = vld [vmem:[%s4399 + $0x2f2] sm:$0xff]
    %v5878 = vld [vmem:[%s4399 + $0x302] sm:$0xff]
    %v5879 = vld [vmem:[%s4399 + $0x30a] sm:$0xff]
    %v5880 = vld [vmem:[%s4399 + $0x31a] sm:$0xff]
    %v5881 = vld [vmem:[%s4399 + $0x322] sm:$0xff]
    %v5882 = vld [vmem:[%s1 + $0x18] sm:$0x7]
    %v5884 = vsel %vm33, %v5818, 0
    %v5887 = vsel %vm33, %v5819, 0
    %v5890 = vsel %vm33, %v5820, 0
    %v5893 = vsel %vm33, %v5821, 0
    %v5896 = vsel %vm33, %v5822, 0
    %v5899 = vsel %vm33, %v5823, 0
    %v5902 = vsel %vm33, %v5824, 0
    %v5905 = vsel %vm33, %v5825, 0
    %v5908 = vsel %vm33, %v5826, 0
    %v5911 = vsel %vm33, %v5827, 0
    %v5914 = vsel %vm33, %v5828, 0
    %v5917 = vsel %vm33, %v5829, 0
    %v5920 = vsel %vm33, %v5830, 0
    %v5923 = vsel %vm33, %v5831, 0
    %v5926 = vsel %vm33, %v5832, 0
    %v5929 = vsel %vm33, %v5833, 0
    %v5932 = vsel %vm33, %v5834, 0
    %v5935 = vsel %vm33, %v5835, 0
    %v5938 = vsel %vm33, %v5836, 0
    %v5941 = vsel %vm33, %v5837, 0
    %v5944 = vsel %vm33, %v5838, 0
    %v5947 = vsel %vm33, %v5839, 0
    %v5950 = vsel %vm33, %v5840, 0
    %v5953 = vsel %vm33, %v5841, 0
    %v5956 = vsel %vm33, %v5842, 0
    %v5959 = vsel %vm33, %v5843, 0
    %v5962 = vsel %vm33, %v5844, 0
    %v5965 = vsel %vm33, %v5845, 0
    %v5968 = vsel %vm33, %v5846, 0
    %v5971 = vsel %vm33, %v5847, 0
    %v5974 = vsel %vm33, %v5848, 0
    %v5977 = vsel %vm33, %v5849, 0
    %v5980 = vsel %vm33, %v5850, 0
    %v5983 = vsel %vm33, %v5851, 0
    %v5986 = vsel %vm33, %v5852, 0
    %v5989 = vsel %vm33, %v5853, 0
    %v5992 = vsel %vm33, %v5854, 0
    %v5995 = vsel %vm33, %v5855, 0
    %v5998 = vsel %vm33, %v5856, 0
    %v6001 = vsel %vm33, %v5857, 0
    %v6004 = vsel %vm33, %v5858, 0
    %v6007 = vsel %vm33, %v5859, 0
    %v6010 = vsel %vm33, %v5860, 0
    %v6013 = vsel %vm33, %v5861, 0
    %v6016 = vsel %vm33, %v5862, 0
    %v6019 = vsel %vm33, %v5863, 0
    %v6022 = vsel %vm33, %v5864, 0
    %v6025 = vsel %vm33, %v5865, 0
    %v6028 = vsel %vm33, %v5866, 0
    %v6031 = vsel %vm33, %v5867, 0
    %v6034 = vsel %vm33, %v5868, 0
    %v6037 = vsel %vm33, %v5869, 0
    %v6040 = vsel %vm33, %v5870, 0
    %v6043 = vsel %vm33, %v5871, 0
    %v6046 = vsel %vm33, %v5872, 0
    %v6049 = vsel %vm33, %v5873, 0
    %v6052 = vsel %vm33, %v5874, 0
    %v6055 = vsel %vm33, %v5875, 0
    %v6058 = vsel %vm33, %v5876, 0
    %v6061 = vsel %vm33, %v5877, 0
    %v6064 = vsel %vm33, %v5878, 0
    %v6067 = vsel %vm33, %v5879, 0
    %v6070 = vsel %vm33, %v5880, 0
    %v6073 = vsel %vm33, %v5881, 0
    %v6076 = vsel %vm594, %v5882, 0
    %6078 = vmatprep.subr.mxu0 0.0
    %6079 = vmatpush1.msra.mxu0 0.0
    %6080 = vmatprep.subr.mxu0 0.0
    %6081 = vmatpush1.msra.mxu0 0.0
    %6082 = vmatprep.subr.mxu0 0.0
    %6083 = vmatpush1.msra.mxu0 0.0
    %6084 = vmatprep.subr.mxu0 0.0
    %6085 = vmatpush1.msra.mxu0 0.0
    %6086 = vmatprep.subr.mxu0 0.0
    %6087 = vmatpush1.msra.mxu0 0.0
    %6088 = vmatprep.subr.mxu0 0.0
    %6089 = vmatpush1.msra.mxu0 0.0
    %6090 = vmatprep.subr.mxu0 0.0
    %6091 = vmatpush1.msra.mxu0 0.0
    %6092 = vmatprep.subr.mxu0 0.0
    %6093 = vmatpush1.msra.mxu0 0.0
    %6094 = vmatprep.subr.mxu0 0.0
    %6095 = vmatpush1.msra.mxu0 0.0
    %6096 = vmatprep.subr.mxu0 0.0
    %6097 = vmatpush1.msra.mxu0 0.0
    %6098 = vmatprep.subr.mxu0 0.0
    %6099 = vmatpush1.msra.mxu0 0.0
    %6100 = vmatprep.subr.mxu0 0.0
    %6101 = vmatpush1.msra.mxu0 0.0
    %6102 = vmatprep.subr.mxu0 0.0
    %6103 = vmatpush1.msra.mxu0 0.0
    %6104 = vmatprep.subr.mxu0 0.0
    %6105 = vmatpush1.msra.mxu0 0.0
    %6106 = vmatprep.subr.mxu0 0.0
    %6107 = vmatpush1.msra.mxu0 0.0
    %6108 = vmatprep.subr.mxu0 0.0
    %6109 = vmatpush1.msra.mxu0 %v6076
    %6110 = vmatprep.subr.mxu0 0.0
    %6111 = vmatpush2.msra.mxu0 0.0
    %6112 = vmatprep.subr.mxu0 0.0
    %6113 = vmatpush2.msra.mxu0 0.0
    %6114 = vmatprep.subr.mxu0 0.0
    %6115 = vmatpush2.msra.mxu0 0.0
    %6116 = vmatprep.subr.mxu0 0.0
    %6117 = vmatpush2.msra.mxu0 0.0
    %6118 = vmatprep.subr.mxu0 0.0
    %6119 = vmatpush2.msra.mxu0 0.0
    %6120 = vmatprep.subr.mxu0 0.0
    %6121 = vmatpush2.msra.mxu0 0.0
    %6122 = vmatprep.subr.mxu0 0.0
    %6123 = vmatpush2.msra.mxu0 0.0
    %6124 = vmatprep.subr.mxu0 0.0
    %6125 = vmatpush2.msra.mxu0 0.0
    %6126 = vmatprep.subr.mxu0 0.0
    %6127 = vmatpush2.msra.mxu0 0.0
    %6128 = vmatprep.subr.mxu0 0.0
    %6129 = vmatpush2.msra.mxu0 0.0
    %6130 = vmatprep.subr.mxu0 0.0
    %6131 = vmatpush2.msra.mxu0 0.0
    %6132 = vmatprep.subr.mxu0 0.0
    %6133 = vmatpush2.msra.mxu0 0.0
    %6134 = vmatprep.subr.mxu0 0.0
    %6135 = vmatpush2.msra.mxu0 0.0
    %6136 = vmatprep.subr.mxu0 0.0
    %6137 = vmatpush2.msra.mxu0 0.0
    %6138 = vmatprep.subr.mxu0 0.0
    %6139 = vmatpush2.msra.mxu0 0.0
    %6140 = vmatprep.subr.mxu0 0.0
    %6141 = vmatpush2.msra.mxu0 0.0
    %6142 = vmatprep.mubr.f32.mxu0 0.0
    %6143 = vmatmul.mubr.f32.gmra.mxu0 %v5884
    %v6144 = vpop.f32.mrf.mxu0
    %v6145 = vadd.f32 0.0, %v6144
    %v6146 = vpop.f32.mrf.mxu0
    %6147 = vmatprep.mubr.f32.mxu0 0.0
    %6148 = vmatmul.mubr.f32.gmra.mxu0 %v5887
    %v6149 = vpop.f32.mrf.mxu0
    %v6150 = vadd.f32 0.0, %v6149
    %v6151 = vpop.f32.mrf.mxu0
    %6152 = vmatprep.mubr.f32.mxu0 0.0
    %6153 = vmatmul.mubr.f32.gmra.mxu0 %v5890
    %v6154 = vpop.f32.mrf.mxu0
    %v6155 = vadd.f32 0.0, %v6154
    %v6156 = vpop.f32.mrf.mxu0
    %6157 = vmatprep.mubr.f32.mxu0 0.0
    %6158 = vmatmul.mubr.f32.gmra.mxu0 %v5893
    %v6159 = vpop.f32.mrf.mxu0
    %v6160 = vadd.f32 0.0, %v6159
    %v6161 = vpop.f32.mrf.mxu0
    %6162 = vmatprep.mubr.f32.mxu0 0.0
    %6163 = vmatmul.mubr.f32.gmra.mxu0 %v5896
    %v6164 = vpop.f32.mrf.mxu0
    %v6165 = vadd.f32 0.0, %v6164
    %v6166 = vpop.f32.mrf.mxu0
    %6167 = vmatprep.mubr.f32.mxu0 0.0
    %6168 = vmatmul.mubr.f32.gmra.mxu0 %v5899
    %v6169 = vpop.f32.mrf.mxu0
    %v6170 = vadd.f32 0.0, %v6169
    %v6171 = vpop.f32.mrf.mxu0
    %6172 = vmatprep.mubr.f32.mxu0 0.0
    %6173 = vmatmul.mubr.f32.gmra.mxu0 %v5902
    %v6174 = vpop.f32.mrf.mxu0
    %v6175 = vadd.f32 0.0, %v6174
    %v6176 = vpop.f32.mrf.mxu0
    %6177 = vmatprep.mubr.f32.mxu0 0.0
    %6178 = vmatmul.mubr.f32.gmra.mxu0 %v5905
    %v6179 = vpop.f32.mrf.mxu0
    %v6180 = vadd.f32 0.0, %v6179
    %v6181 = vpop.f32.mrf.mxu0
    %6182 = vmatprep.mubr.f32.mxu0 0.0
    %6183 = vmatmul.mubr.f32.gmra.mxu0 %v5908
    %v6184 = vpop.f32.mrf.mxu0
    %v6185 = vadd.f32 0.0, %v6184
    %v6186 = vpop.f32.mrf.mxu0
    %6187 = vmatprep.mubr.f32.mxu0 0.0
    %6188 = vmatmul.mubr.f32.gmra.mxu0 %v5911
    %v6189 = vpop.f32.mrf.mxu0
    %v6190 = vadd.f32 0.0, %v6189
    %v6191 = vpop.f32.mrf.mxu0
    %6192 = vmatprep.mubr.f32.mxu0 0.0
    %6193 = vmatmul.mubr.f32.gmra.mxu0 %v5914
    %v6194 = vpop.f32.mrf.mxu0
    %v6195 = vadd.f32 0.0, %v6194
    %v6196 = vpop.f32.mrf.mxu0
    %6197 = vmatprep.mubr.f32.mxu0 0.0
    %6198 = vmatmul.mubr.f32.gmra.mxu0 %v5917
    %v6199 = vpop.f32.mrf.mxu0
    %v6200 = vadd.f32 0.0, %v6199
    %v6201 = vpop.f32.mrf.mxu0
    %6202 = vmatprep.mubr.f32.mxu0 0.0
    %6203 = vmatmul.mubr.f32.gmra.mxu0 %v5920
    %v6204 = vpop.f32.mrf.mxu0
    %v6205 = vadd.f32 0.0, %v6204
    %v6206 = vpop.f32.mrf.mxu0
    %6207 = vmatprep.mubr.f32.mxu0 0.0
    %6208 = vmatmul.mubr.f32.gmra.mxu0 %v5923
    %v6209 = vpop.f32.mrf.mxu0
    %v6210 = vadd.f32 0.0, %v6209
    %v6211 = vpop.f32.mrf.mxu0
    %6212 = vmatprep.mubr.f32.mxu0 0.0
    %6213 = vmatmul.mubr.f32.gmra.mxu0 %v5926
    %v6214 = vpop.f32.mrf.mxu0
    %v6215 = vadd.f32 0.0, %v6214
    %v6216 = vpop.f32.mrf.mxu0
    %6217 = vmatprep.mubr.f32.mxu0 0.0
    %6218 = vmatmul.mubr.f32.gmra.mxu0 %v5929
    %v6219 = vpop.f32.mrf.mxu0
    %v6220 = vadd.f32 0.0, %v6219
    %v6221 = vpop.f32.mrf.mxu0
    %6222 = vmatprep.mubr.f32.mxu0 0.0
    %6223 = vmatmul.mubr.f32.gmra.mxu0 %v5932
    %v6224 = vpop.f32.mrf.mxu0
    %v6225 = vadd.f32 0.0, %v6224
    %v6226 = vpop.f32.mrf.mxu0
    %6227 = vmatprep.mubr.f32.mxu0 0.0
    %6228 = vmatmul.mubr.f32.gmra.mxu0 %v5935
    %v6229 = vpop.f32.mrf.mxu0
    %v6230 = vadd.f32 0.0, %v6229
    %v6231 = vpop.f32.mrf.mxu0
    %6232 = vmatprep.mubr.f32.mxu0 0.0
    %6233 = vmatmul.mubr.f32.gmra.mxu0 %v5938
    %v6234 = vpop.f32.mrf.mxu0
    %v6235 = vadd.f32 0.0, %v6234
    %v6236 = vpop.f32.mrf.mxu0
    %6237 = vmatprep.mubr.f32.mxu0 0.0
    %6238 = vmatmul.mubr.f32.gmra.mxu0 %v5941
    %v6239 = vpop.f32.mrf.mxu0
    %v6240 = vadd.f32 0.0, %v6239
    %v6241 = vpop.f32.mrf.mxu0
    %6242 = vmatprep.mubr.f32.mxu0 0.0
    %6243 = vmatmul.mubr.f32.gmra.mxu0 %v5944
    %v6244 = vpop.f32.mrf.mxu0
    %v6245 = vadd.f32 0.0, %v6244
    %v6246 = vpop.f32.mrf.mxu0
    %6247 = vmatprep.mubr.f32.mxu0 0.0
    %6248 = vmatmul.mubr.f32.gmra.mxu0 %v5947
    %v6249 = vpop.f32.mrf.mxu0
    %v6250 = vadd.f32 0.0, %v6249
    %v6251 = vpop.f32.mrf.mxu0
    %6252 = vmatprep.mubr.f32.mxu0 0.0
    %6253 = vmatmul.mubr.f32.gmra.mxu0 %v5950
    %v6254 = vpop.f32.mrf.mxu0
    %v6255 = vadd.f32 0.0, %v6254
    %v6256 = vpop.f32.mrf.mxu0
    %6257 = vmatprep.mubr.f32.mxu0 0.0
    %6258 = vmatmul.mubr.f32.gmra.mxu0 %v5953
    %v6259 = vpop.f32.mrf.mxu0
    %v6260 = vadd.f32 0.0, %v6259
    %v6261 = vpop.f32.mrf.mxu0
    %6262 = vmatprep.mubr.f32.mxu0 0.0
    %6263 = vmatmul.mubr.f32.gmra.mxu0 %v5956
    %v6264 = vpop.f32.mrf.mxu0
    %v6265 = vadd.f32 0.0, %v6264
    %v6266 = vpop.f32.mrf.mxu0
    %6267 = vmatprep.mubr.f32.mxu0 0.0
    %6268 = vmatmul.mubr.f32.gmra.mxu0 %v5959
    %v6269 = vpop.f32.mrf.mxu0
    %v6270 = vadd.f32 0.0, %v6269
    %v6271 = vpop.f32.mrf.mxu0
    %6272 = vmatprep.mubr.f32.mxu0 0.0
    %6273 = vmatmul.mubr.f32.gmra.mxu0 %v5962
    %v6274 = vpop.f32.mrf.mxu0
    %v6275 = vadd.f32 0.0, %v6274
    %v6276 = vpop.f32.mrf.mxu0
    %6277 = vmatprep.mubr.f32.mxu0 0.0
    %6278 = vmatmul.mubr.f32.gmra.mxu0 %v5965
    %v6279 = vpop.f32.mrf.mxu0
    %v6280 = vadd.f32 0.0, %v6279
    %v6281 = vpop.f32.mrf.mxu0
    %6282 = vmatprep.mubr.f32.mxu0 0.0
    %6283 = vmatmul.mubr.f32.gmra.mxu0 %v5968
    %v6284 = vpop.f32.mrf.mxu0
    %v6285 = vadd.f32 0.0, %v6284
    %v6286 = vpop.f32.mrf.mxu0
    %6287 = vmatprep.mubr.f32.mxu0 0.0
    %6288 = vmatmul.mubr.f32.gmra.mxu0 %v5971
    %v6289 = vpop.f32.mrf.mxu0
    %v6290 = vadd.f32 0.0, %v6289
    %v6291 = vpop.f32.mrf.mxu0
    %6292 = vmatprep.mubr.f32.mxu0 0.0
    %6293 = vmatmul.mubr.f32.gmra.mxu0 %v5974
    %v6294 = vpop.f32.mrf.mxu0
    %v6295 = vadd.f32 0.0, %v6294
    %v6296 = vpop.f32.mrf.mxu0
    %6297 = vmatprep.mubr.f32.mxu0 0.0
    %6298 = vmatmul.mubr.f32.gmra.mxu0 %v5977
    %v6299 = vpop.f32.mrf.mxu0
    %v6300 = vadd.f32 0.0, %v6299
    %v6301 = vpop.f32.mrf.mxu0
    %6302 = vmatprep.mubr.f32.mxu0 0.0
    %6303 = vmatmul.mubr.f32.gmra.mxu0 %v5980
    %v6304 = vpop.f32.mrf.mxu0
    %v6305 = vadd.f32 0.0, %v6304
    %v6306 = vpop.f32.mrf.mxu0
    %6307 = vmatprep.mubr.f32.mxu0 0.0
    %6308 = vmatmul.mubr.f32.gmra.mxu0 %v5983
    %v6309 = vpop.f32.mrf.mxu0
    %v6310 = vadd.f32 0.0, %v6309
    %v6311 = vpop.f32.mrf.mxu0
    %6312 = vmatprep.mubr.f32.mxu0 0.0
    %6313 = vmatmul.mubr.f32.gmra.mxu0 %v5986
    %v6314 = vpop.f32.mrf.mxu0
    %v6315 = vadd.f32 0.0, %v6314
    %v6316 = vpop.f32.mrf.mxu0
    %6317 = vmatprep.mubr.f32.mxu0 0.0
    %6318 = vmatmul.mubr.f32.gmra.mxu0 %v5989
    %v6319 = vpop.f32.mrf.mxu0
    %v6320 = vadd.f32 0.0, %v6319
    %v6321 = vpop.f32.mrf.mxu0
    %6322 = vmatprep.mubr.f32.mxu0 0.0
    %6323 = vmatmul.mubr.f32.gmra.mxu0 %v5992
    %v6324 = vpop.f32.mrf.mxu0
    %v6325 = vadd.f32 0.0, %v6324
    %v6326 = vpop.f32.mrf.mxu0
    %6327 = vmatprep.mubr.f32.mxu0 0.0
    %6328 = vmatmul.mubr.f32.gmra.mxu0 %v5995
    %v6329 = vpop.f32.mrf.mxu0
    %v6330 = vadd.f32 0.0, %v6329
    %v6331 = vpop.f32.mrf.mxu0
    %6332 = vmatprep.mubr.f32.mxu0 0.0
    %6333 = vmatmul.mubr.f32.gmra.mxu0 %v5998
    %v6334 = vpop.f32.mrf.mxu0
    %v6335 = vadd.f32 0.0, %v6334
    %v6336 = vpop.f32.mrf.mxu0
    %6337 = vmatprep.mubr.f32.mxu0 0.0
    %6338 = vmatmul.mubr.f32.gmra.mxu0 %v6001
    %v6339 = vpop.f32.mrf.mxu0
    %v6340 = vadd.f32 0.0, %v6339
    %v6341 = vpop.f32.mrf.mxu0
    %6342 = vmatprep.mubr.f32.mxu0 0.0
    %6343 = vmatmul.mubr.f32.gmra.mxu0 %v6004
    %v6344 = vpop.f32.mrf.mxu0
    %v6345 = vadd.f32 0.0, %v6344
    %v6346 = vpop.f32.mrf.mxu0
    %6347 = vmatprep.mubr.f32.mxu0 0.0
    %6348 = vmatmul.mubr.f32.gmra.mxu0 %v6007
    %v6349 = vpop.f32.mrf.mxu0
    %v6350 = vadd.f32 0.0, %v6349
    %v6351 = vpop.f32.mrf.mxu0
    %6352 = vmatprep.mubr.f32.mxu0 0.0
    %6353 = vmatmul.mubr.f32.gmra.mxu0 %v6010
    %v6354 = vpop.f32.mrf.mxu0
    %v6355 = vadd.f32 0.0, %v6354
    %v6356 = vpop.f32.mrf.mxu0
    %6357 = vmatprep.mubr.f32.mxu0 0.0
    %6358 = vmatmul.mubr.f32.gmra.mxu0 %v6013
    %v6359 = vpop.f32.mrf.mxu0
    %v6360 = vadd.f32 0.0, %v6359
    %v6361 = vpop.f32.mrf.mxu0
    %6362 = vmatprep.mubr.f32.mxu0 0.0
    %6363 = vmatmul.mubr.f32.gmra.mxu0 %v6016
    %v6364 = vpop.f32.mrf.mxu0
    %v6365 = vadd.f32 0.0, %v6364
    %v6366 = vpop.f32.mrf.mxu0
    %6367 = vmatprep.mubr.f32.mxu0 0.0
    %6368 = vmatmul.mubr.f32.gmra.mxu0 %v6019
    %v6369 = vpop.f32.mrf.mxu0
    %v6370 = vadd.f32 0.0, %v6369
    %v6371 = vpop.f32.mrf.mxu0
    %6372 = vmatprep.mubr.f32.mxu0 0.0
    %6373 = vmatmul.mubr.f32.gmra.mxu0 %v6022
    %v6374 = vpop.f32.mrf.mxu0
    %v6375 = vadd.f32 0.0, %v6374
    %v6376 = vpop.f32.mrf.mxu0
    %6377 = vmatprep.mubr.f32.mxu0 0.0
    %6378 = vmatmul.mubr.f32.gmra.mxu0 %v6025
    %v6379 = vpop.f32.mrf.mxu0
    %v6380 = vadd.f32 0.0, %v6379
    %v6381 = vpop.f32.mrf.mxu0
    %6382 = vmatprep.mubr.f32.mxu0 0.0
    %6383 = vmatmul.mubr.f32.gmra.mxu0 %v6028
    %v6384 = vpop.f32.mrf.mxu0
    %v6385 = vadd.f32 0.0, %v6384
    %v6386 = vpop.f32.mrf.mxu0
    %6387 = vmatprep.mubr.f32.mxu0 0.0
    %6388 = vmatmul.mubr.f32.gmra.mxu0 %v6031
    %v6389 = vpop.f32.mrf.mxu0
    %v6390 = vadd.f32 0.0, %v6389
    %v6391 = vpop.f32.mrf.mxu0
    %6392 = vmatprep.mubr.f32.mxu0 0.0
    %6393 = vmatmul.mubr.f32.gmra.mxu0 %v6034
    %v6394 = vpop.f32.mrf.mxu0
    %v6395 = vadd.f32 0.0, %v6394
    %v6396 = vpop.f32.mrf.mxu0
    %6397 = vmatprep.mubr.f32.mxu0 0.0
    %6398 = vmatmul.mubr.f32.gmra.mxu0 %v6037
    %v6399 = vpop.f32.mrf.mxu0
    %v6400 = vadd.f32 0.0, %v6399
    %v6401 = vpop.f32.mrf.mxu0
    %6402 = vmatprep.mubr.f32.mxu0 0.0
    %6403 = vmatmul.mubr.f32.gmra.mxu0 %v6040
    %v6404 = vpop.f32.mrf.mxu0
    %v6405 = vadd.f32 0.0, %v6404
    %v6406 = vpop.f32.mrf.mxu0
    %6407 = vmatprep.mubr.f32.mxu0 0.0
    %6408 = vmatmul.mubr.f32.gmra.mxu0 %v6043
    %v6409 = vpop.f32.mrf.mxu0
    %v6410 = vadd.f32 0.0, %v6409
    %v6411 = vpop.f32.mrf.mxu0
    %6412 = vmatprep.mubr.f32.mxu0 0.0
    %6413 = vmatmul.mubr.f32.gmra.mxu0 %v6046
    %v6414 = vpop.f32.mrf.mxu0
    %v6415 = vadd.f32 0.0, %v6414
    %v6416 = vpop.f32.mrf.mxu0
    %6417 = vmatprep.mubr.f32.mxu0 0.0
    %6418 = vmatmul.mubr.f32.gmra.mxu0 %v6049
    %v6419 = vpop.f32.mrf.mxu0
    %v6420 = vadd.f32 0.0, %v6419
    %v6421 = vpop.f32.mrf.mxu0
    %6422 = vmatprep.mubr.f32.mxu0 0.0
    %6423 = vmatmul.mubr.f32.gmra.mxu0 %v6052
    %v6424 = vpop.f32.mrf.mxu0
    %v6425 = vadd.f32 0.0, %v6424
    %v6426 = vpop.f32.mrf.mxu0
    %6427 = vmatprep.mubr.f32.mxu0 0.0
    %6428 = vmatmul.mubr.f32.gmra.mxu0 %v6055
    %v6429 = vpop.f32.mrf.mxu0
    %v6430 = vadd.f32 0.0, %v6429
    %v6431 = vpop.f32.mrf.mxu0
    %6432 = vmatprep.mubr.f32.mxu0 0.0
    %6433 = vmatmul.mubr.f32.gmra.mxu0 %v6058
    %v6434 = vpop.f32.mrf.mxu0
    %v6435 = vadd.f32 0.0, %v6434
    %v6436 = vpop.f32.mrf.mxu0
    %6437 = vmatprep.mubr.f32.mxu0 0.0
    %6438 = vmatmul.mubr.f32.gmra.mxu0 %v6061
    %v6439 = vpop.f32.mrf.mxu0
    %v6440 = vadd.f32 0.0, %v6439
    %v6441 = vpop.f32.mrf.mxu0
    %6442 = vmatprep.mubr.f32.mxu0 0.0
    %6443 = vmatmul.mubr.f32.gmra.mxu0 %v6064
    %v6444 = vpop.f32.mrf.mxu0
    %v6445 = vadd.f32 0.0, %v6444
    %v6446 = vpop.f32.mrf.mxu0
    %6447 = vmatprep.mubr.f32.mxu0 0.0
    %6448 = vmatmul.mubr.f32.gmra.mxu0 %v6067
    %v6449 = vpop.f32.mrf.mxu0
    %v6450 = vadd.f32 0.0, %v6449
    %v6451 = vpop.f32.mrf.mxu0
    %6452 = vmatprep.mubr.f32.mxu0 0.0
    %6453 = vmatmul.mubr.f32.gmra.mxu0 %v6070
    %v6454 = vpop.f32.mrf.mxu0
    %v6455 = vadd.f32 0.0, %v6454
    %v6456 = vpop.f32.mrf.mxu0
    %6457 = vmatprep.mubr.f32.mxu0 0.0
    %6458 = vmatmul.mubr.f32.gmra.mxu0 %v6073
    %v6459 = vpop.f32.mrf.mxu0
    %v6460 = vadd.f32 0.0, %v6459
    %v6461 = vpop.f32.mrf.mxu0
    %6462 = vdwg.mxu0
    %v6463 = vadd.f32 %v5754, %v6145
    %v6464 = vadd.f32 %v5755, %v6150
    %v6465 = vadd.f32 %v5756, %v6155
    %v6466 = vadd.f32 %v5757, %v6160
    %v6467 = vadd.f32 %v5758, %v6165
    %v6468 = vadd.f32 %v5759, %v6170
    %v6469 = vadd.f32 %v5760, %v6175
    %v6470 = vadd.f32 %v5761, %v6180
    %v6471 = vadd.f32 %v5762, %v6185
    %v6472 = vadd.f32 %v5763, %v6190
    %v6473 = vadd.f32 %v5764, %v6195
    %v6474 = vadd.f32 %v5765, %v6200
    %v6475 = vadd.f32 %v5766, %v6205
    %v6476 = vadd.f32 %v5767, %v6210
    %v6477 = vadd.f32 %v5768, %v6215
    %v6478 = vadd.f32 %v5769, %v6220
    %v6479 = vadd.f32 %v5770, %v6225
    %v6480 = vadd.f32 %v5771, %v6230
    %v6481 = vadd.f32 %v5772, %v6235
    %v6482 = vadd.f32 %v5773, %v6240
    %v6483 = vadd.f32 %v5774, %v6245
    %v6484 = vadd.f32 %v5775, %v6250
    %v6485 = vadd.f32 %v5776, %v6255
    %v6486 = vadd.f32 %v5777, %v6260
    %v6487 = vadd.f32 %v5778, %v6265
    %v6488 = vadd.f32 %v5779, %v6270
    %v6489 = vadd.f32 %v5780, %v6275
    %v6490 = vadd.f32 %v5781, %v6280
    %v6491 = vadd.f32 %v5782, %v6285
    %v6492 = vadd.f32 %v5783, %v6290
    %v6493 = vadd.f32 %v5784, %v6295
    %v6494 = vadd.f32 %v5785, %v6300
    %v6495 = vadd.f32 %v5786, %v6305
    %v6496 = vadd.f32 %v5787, %v6310
    %v6497 = vadd.f32 %v5788, %v6315
    %v6498 = vadd.f32 %v5789, %v6320
    %v6499 = vadd.f32 %v5790, %v6325
    %v6500 = vadd.f32 %v5791, %v6330
    %v6501 = vadd.f32 %v5792, %v6335
    %v6502 = vadd.f32 %v5793, %v6340
    %v6503 = vadd.f32 %v5794, %v6345
    %v6504 = vadd.f32 %v5795, %v6350
    %v6505 = vadd.f32 %v5796, %v6355
    %v6506 = vadd.f32 %v5797, %v6360
    %v6507 = vadd.f32 %v5798, %v6365
    %v6508 = vadd.f32 %v5799, %v6370
    %v6509 = vadd.f32 %v5800, %v6375
    %v6510 = vadd.f32 %v5801, %v6380
    %v6511 = vadd.f32 %v5802, %v6385
    %v6512 = vadd.f32 %v5803, %v6390
    %v6513 = vadd.f32 %v5804, %v6395
    %v6514 = vadd.f32 %v5805, %v6400
    %v6515 = vadd.f32 %v5806, %v6405
    %v6516 = vadd.f32 %v5807, %v6410
    %v6517 = vadd.f32 %v5808, %v6415
    %v6518 = vadd.f32 %v5809, %v6420
    %v6519 = vadd.f32 %v5810, %v6425
    %v6520 = vadd.f32 %v5811, %v6430
    %v6521 = vadd.f32 %v5812, %v6435
    %v6522 = vadd.f32 %v5813, %v6440
    %v6523 = vadd.f32 %v5814, %v6445
    %v6524 = vadd.f32 %v5815, %v6450
    %v6525 = vadd.f32 %v5816, %v6455
    %v6526 = vadd.f32 %v5817, %v6460
    %v6527 = vld [vmem:[%s2] sm:$0x1]
    %v6529 = vlaneseq
    %v6530 = vshrl.u32 %v6529, 7
    %v6531 = vsub.s32 0, %v6530
    %v6532 = vrot.slane %v6527, %v6531
    %v6534 = vadd.f32 %v6463, %v6532
    %v6535 = vadd.f32 %v6464, %v6532
    %v6536 = vadd.f32 %v6465, %v6532
    %v6537 = vadd.f32 %v6466, %v6532
    %v6538 = vadd.f32 %v6467, %v6532
    %v6539 = vadd.f32 %v6468, %v6532
    %v6540 = vadd.f32 %v6469, %v6532
    %v6541 = vadd.f32 %v6470, %v6532
    %v6542 = vadd.f32 %v6471, %v6532
    %v6543 = vadd.f32 %v6472, %v6532
    %v6544 = vadd.f32 %v6473, %v6532
    %v6545 = vadd.f32 %v6474, %v6532
    %v6546 = vadd.f32 %v6475, %v6532
    %v6547 = vadd.f32 %v6476, %v6532
    %v6548 = vadd.f32 %v6477, %v6532
    %v6549 = vadd.f32 %v6478, %v6532
    %v6550 = vadd.f32 %v6479, %v6532
    %v6551 = vadd.f32 %v6480, %v6532
    %v6552 = vadd.f32 %v6481, %v6532
    %v6553 = vadd.f32 %v6482, %v6532
    %v6554 = vadd.f32 %v6483, %v6532
    %v6555 = vadd.f32 %v6484, %v6532
    %v6556 = vadd.f32 %v6485, %v6532
    %v6557 = vadd.f32 %v6486, %v6532
    %v6558 = vadd.f32 %v6487, %v6532
    %v6559 = vadd.f32 %v6488, %v6532
    %v6560 = vadd.f32 %v6489, %v6532
    %v6561 = vadd.f32 %v6490, %v6532
    %v6562 = vadd.f32 %v6491, %v6532
    %v6563 = vadd.f32 %v6492, %v6532
    %v6564 = vadd.f32 %v6493, %v6532
    %v6565 = vadd.f32 %v6494, %v6532
    %v6566 = vadd.f32 %v6495, %v6532
    %v6567 = vadd.f32 %v6496, %v6532
    %v6568 = vadd.f32 %v6497, %v6532
    %v6569 = vadd.f32 %v6498, %v6532
    %v6570 = vadd.f32 %v6499, %v6532
    %v6571 = vadd.f32 %v6500, %v6532
    %v6572 = vadd.f32 %v6501, %v6532
    %v6573 = vadd.f32 %v6502, %v6532
    %v6574 = vadd.f32 %v6503, %v6532
    %v6575 = vadd.f32 %v6504, %v6532
    %v6576 = vadd.f32 %v6505, %v6532
    %v6577 = vadd.f32 %v6506, %v6532
    %v6578 = vadd.f32 %v6507, %v6532
    %v6579 = vadd.f32 %v6508, %v6532
    %v6580 = vadd.f32 %v6509, %v6532
    %v6581 = vadd.f32 %v6510, %v6532
    %v6582 = vadd.f32 %v6511, %v6532
    %v6583 = vadd.f32 %v6512, %v6532
    %v6584 = vadd.f32 %v6513, %v6532
    %v6585 = vadd.f32 %v6514, %v6532
    %v6586 = vadd.f32 %v6515, %v6532
    %v6587 = vadd.f32 %v6516, %v6532
    %v6588 = vadd.f32 %v6517, %v6532
    %v6589 = vadd.f32 %v6518, %v6532
    %v6590 = vadd.f32 %v6519, %v6532
    %v6591 = vadd.f32 %v6520, %v6532
    %v6592 = vadd.f32 %v6521, %v6532
    %v6593 = vadd.f32 %v6522, %v6532
    %v6594 = vadd.f32 %v6523, %v6532
    %v6595 = vadd.f32 %v6524, %v6532
    %v6596 = vadd.f32 %v6525, %v6532
    %v6597 = vadd.f32 %v6526, %v6532
    %v6598 = vmax.f32 %v6534, 0.0
    %v6599 = vmax.f32 %v6535, 0.0
    %v6600 = vmax.f32 %v6536, 0.0
    %v6601 = vmax.f32 %v6537, 0.0
    %v6602 = vmax.f32 %v6538, 0.0
    %v6603 = vmax.f32 %v6539, 0.0
    %v6604 = vmax.f32 %v6540, 0.0
    %v6605 = vmax.f32 %v6541, 0.0
    %v6606 = vmax.f32 %v6542, 0.0
    %v6607 = vmax.f32 %v6543, 0.0
    %v6608 = vmax.f32 %v6544, 0.0
    %v6609 = vmax.f32 %v6545, 0.0
    %v6610 = vmax.f32 %v6546, 0.0
    %v6611 = vmax.f32 %v6547, 0.0
    %v6612 = vmax.f32 %v6548, 0.0
    %v6613 = vmax.f32 %v6549, 0.0
    %v6614 = vmax.f32 %v6550, 0.0
    %v6615 = vmax.f32 %v6551, 0.0
    %v6616 = vmax.f32 %v6552, 0.0
    %v6617 = vmax.f32 %v6553, 0.0
    %v6618 = vmax.f32 %v6554, 0.0
    %v6619 = vmax.f32 %v6555, 0.0
    %v6620 = vmax.f32 %v6556, 0.0
    %v6621 = vmax.f32 %v6557, 0.0
    %v6622 = vmax.f32 %v6558, 0.0
    %v6623 = vmax.f32 %v6559, 0.0
    %v6624 = vmax.f32 %v6560, 0.0
    %v6625 = vmax.f32 %v6561, 0.0
    %v6626 = vmax.f32 %v6562, 0.0
    %v6627 = vmax.f32 %v6563, 0.0
    %v6628 = vmax.f32 %v6564, 0.0
    %v6629 = vmax.f32 %v6565, 0.0
    %v6630 = vmax.f32 %v6566, 0.0
    %v6631 = vmax.f32 %v6567, 0.0
    %v6632 = vmax.f32 %v6568, 0.0
    %v6633 = vmax.f32 %v6569, 0.0
    %v6634 = vmax.f32 %v6570, 0.0
    %v6635 = vmax.f32 %v6571, 0.0
    %v6636 = vmax.f32 %v6572, 0.0
    %v6637 = vmax.f32 %v6573, 0.0
    %v6638 = vmax.f32 %v6574, 0.0
    %v6639 = vmax.f32 %v6575, 0.0
    %v6640 = vmax.f32 %v6576, 0.0
    %v6641 = vmax.f32 %v6577, 0.0
    %v6642 = vmax.f32 %v6578, 0.0
    %v6643 = vmax.f32 %v6579, 0.0
    %v6644 = vmax.f32 %v6580, 0.0
    %v6645 = vmax.f32 %v6581, 0.0
    %v6646 = vmax.f32 %v6582, 0.0
    %v6647 = vmax.f32 %v6583, 0.0
    %v6648 = vmax.f32 %v6584, 0.0
    %v6649 = vmax.f32 %v6585, 0.0
    %v6650 = vmax.f32 %v6586, 0.0
    %v6651 = vmax.f32 %v6587, 0.0
    %v6652 = vmax.f32 %v6588, 0.0
    %v6653 = vmax.f32 %v6589, 0.0
    %v6654 = vmax.f32 %v6590, 0.0
    %v6655 = vmax.f32 %v6591, 0.0
    %v6656 = vmax.f32 %v6592, 0.0
    %v6657 = vmax.f32 %v6593, 0.0
    %v6658 = vmax.f32 %v6594, 0.0
    %v6659 = vmax.f32 %v6595, 0.0
    %v6660 = vmax.f32 %v6596, 0.0
    %v6661 = vmax.f32 %v6597, 0.0
    %v6662 = vmax.f32 %v6598, %v6600
    %v6663 = vmax.f32 %v6599, %v6601
    %v6664 = vmax.f32 %v6602, %v6604
    %v6665 = vmax.f32 %v6603, %v6605
    %v6666 = vmax.f32 %v6606, %v6608
    %v6667 = vmax.f32 %v6607, %v6609
    %v6668 = vmax.f32 %v6610, %v6612
    %v6669 = vmax.f32 %v6611, %v6613
    %v6670 = vmax.f32 %v6614, %v6616
    %v6671 = vmax.f32 %v6615, %v6617
    %v6672 = vmax.f32 %v6618, %v6620
    %v6673 = vmax.f32 %v6619, %v6621
    %v6674 = vmax.f32 %v6622, %v6624
    %v6675 = vmax.f32 %v6623, %v6625
    %v6676 = vmax.f32 %v6626, %v6628
    %v6677 = vmax.f32 %v6627, %v6629
    %v6678 = vmax.f32 %v6630, %v6632
    %v6679 = vmax.f32 %v6631, %v6633
    %v6680 = vmax.f32 %v6634, %v6636
    %v6681 = vmax.f32 %v6635, %v6637
    %v6682 = vmax.f32 %v6638, %v6640
    %v6683 = vmax.f32 %v6639, %v6641
    %v6684 = vmax.f32 %v6642, %v6644
    %v6685 = vmax.f32 %v6643, %v6645
    %v6686 = vmax.f32 %v6646, %v6648
    %v6687 = vmax.f32 %v6647, %v6649
    %v6688 = vmax.f32 %v6650, %v6652
    %v6689 = vmax.f32 %v6651, %v6653
    %v6690 = vmax.f32 %v6654, %v6656
    %v6691 = vmax.f32 %v6655, %v6657
    %v6692 = vmax.f32 %v6658, %v6660
    %v6693 = vmax.f32 %v6659, %v6661
    %vm6694 = vcmask 64512
    %6695 = vst.msk [vmem:[#allocation3] sm:$0xff] %vm6694, 0.0
    %vm6696 = vcmask 58368
    %6697 = vst.msk [vmem:[#allocation3 + $0x8] sm:$0x3] %vm6696, 0.0
    %6698 = vst.msk [vmem:[#allocation3 + $0x10] sm:$0xff] %vm6694, 0.0
    %6699 = vst.msk [vmem:[#allocation3 + $0x18] sm:$0x3] %vm6696, 0.0
    %6700 = vst.msk [vmem:[#allocation3 + $0x20] sm:$0xff] %vm6694, 0.0
    %6701 = vst.msk [vmem:[#allocation3 + $0x28] sm:$0x3] %vm6696, 0.0
    %6702 = vst.msk [vmem:[#allocation3 + $0x30] sm:$0xff] %vm6694, 0.0
    %6703 = vst.msk [vmem:[#allocation3 + $0x38] sm:$0x3] %vm6696, 0.0
    %6704 = vst.msk [vmem:[#allocation3 + $0x40] sm:$0xff] %vm6694, 0.0
    %6705 = vst.msk [vmem:[#allocation3 + $0x48] sm:$0x3] %vm6696, 0.0
    %6706 = vst.msk [vmem:[#allocation3 + $0x50] sm:$0xff] %vm6694, 0.0
    %6707 = vst.msk [vmem:[#allocation3 + $0x58] sm:$0x3] %vm6696, 0.0
    %6708 = vst.msk [vmem:[#allocation3 + $0x60] sm:$0xff] %vm6694, 0.0
    %6709 = vst.msk [vmem:[#allocation3 + $0x68] sm:$0x3] %vm6696, 0.0
    %6710 = vst.msk [vmem:[#allocation3 + $0x70] sm:$0xff] %vm6694, 0.0
    %6711 = vst.msk [vmem:[#allocation3 + $0x78] sm:$0x3] %vm6696, 0.0
    %6712 = vst.msk [vmem:[#allocation3 + $0x80] sm:$0xff] %vm6694, 0.0
    %6713 = vst.msk [vmem:[#allocation3 + $0x88] sm:$0x3] %vm6696, 0.0
    %6714 = vst.msk [vmem:[#allocation3 + $0x90] sm:$0xff] %vm6694, 0.0
    %6715 = vst.msk [vmem:[#allocation3 + $0x98] sm:$0x3] %vm6696, 0.0
    %6716 = vst.msk [vmem:[#allocation3 + $0xa0] sm:$0xff] %vm6694, 0.0
    %6717 = vst.msk [vmem:[#allocation3 + $0xa8] sm:$0x3] %vm6696, 0.0
    %6718 = vst.msk [vmem:[#allocation3 + $0xb0] sm:$0xff] %vm6694, 0.0
    %6719 = vst.msk [vmem:[#allocation3 + $0xb8] sm:$0x3] %vm6696, 0.0
    %6720 = vst.msk [vmem:[#allocation3 + $0xc0] sm:$0xff] %vm6694, 0.0
    %6721 = vst.msk [vmem:[#allocation3 + $0xc8] sm:$0x3] %vm6696, 0.0
    %6722 = vst.msk [vmem:[#allocation3 + $0xd0] sm:$0xff] %vm6694, 0.0
    %6723 = vst.msk [vmem:[#allocation3 + $0xd8] sm:$0x3] %vm6696, 0.0
    %6724 = vst.msk [vmem:[#allocation3 + $0xe0] sm:$0xff] %vm6694, 0.0
    %6725 = vst.msk [vmem:[#allocation3 + $0xe8] sm:$0x3] %vm6696, 0.0
    %6726 = vst.msk [vmem:[#allocation3 + $0xf0] sm:$0xff] %vm6694, 0.0
    %6727 = vst.msk [vmem:[#allocation3 + $0xf8] sm:$0x3] %vm6696, 0.0
    %6728 = vst.msk [vmem:[#allocation3 + $0x100] sm:$0xff] %vm6694, 0.0
    %6729 = vst.msk [vmem:[#allocation3 + $0x108] sm:$0x3] %vm6696, 0.0
    %6730 = vst.msk [vmem:[#allocation3 + $0x110] sm:$0xff] %vm6694, 0.0
    %6731 = vst.msk [vmem:[#allocation3 + $0x118] sm:$0x3] %vm6696, 0.0
    %6732 = vst.msk [vmem:[#allocation3 + $0x120] sm:$0xff] %vm6694, 0.0
    %6733 = vst.msk [vmem:[#allocation3 + $0x128] sm:$0x3] %vm6696, 0.0
    %6734 = vst.msk [vmem:[#allocation3 + $0x130] sm:$0xff] %vm6694, 0.0
    %6735 = vst.msk [vmem:[#allocation3 + $0x138] sm:$0x3] %vm6696, 0.0
    %v6752 = vrot.slane %v6662, 1
    %v6753 = vrot.slane %v6664, 1
    %v6754 = vrot.slane %v6666, 1
    %v6755 = vrot.slane %v6668, 1
    %v6756 = vrot.slane %v6670, 1
    %v6757 = vrot.slane %v6672, 1
    %v6758 = vrot.slane %v6674, 1
    %v6759 = vrot.slane %v6676, 1
    %v6760 = vrot.slane %v6678, 1
    %v6761 = vrot.slane %v6680, 1
    %v6762 = vrot.slane %v6682, 1
    %v6763 = vrot.slane %v6684, 1
    %v6764 = vrot.slane %v6686, 1
    %v6765 = vrot.slane %v6688, 1
    %v6766 = vrot.slane %v6690, 1
    %v6767 = vrot.slane %v6692, 1
    %v6784 = vmax.f32 %v6662, %v6752
    %v6785 = vmax.f32 %v6664, %v6753
    %v6786 = vmax.f32 %v6666, %v6754
    %v6787 = vmax.f32 %v6668, %v6755
    %v6788 = vmax.f32 %v6670, %v6756
    %v6789 = vmax.f32 %v6672, %v6757
    %v6790 = vmax.f32 %v6674, %v6758
    %v6791 = vmax.f32 %v6676, %v6759
    %v6792 = vmax.f32 %v6678, %v6760
    %v6793 = vmax.f32 %v6680, %v6761
    %v6794 = vmax.f32 %v6682, %v6762
    %v6795 = vmax.f32 %v6684, %v6763
    %v6796 = vmax.f32 %v6686, %v6764
    %v6797 = vmax.f32 %v6688, %v6765
    %v6798 = vmax.f32 %v6690, %v6766
    %v6799 = vmax.f32 %v6692, %v6767
    %s6800 = scalar_lea.vmem [#allocation3], 16
    %vm6801 = vcmask 57344
    %6802 = vst.msk [vmem:[%s6800 + $0x1] sm:$0x1] %vm6801, %v6784
    %6803 = vst.msk [vmem:[%s6800 + $0x11] sm:$0x1] %vm6801, %v6785
    %6804 = vst.msk [vmem:[%s6800 + $0x21] sm:$0x1] %vm6801, %v6786
    %6805 = vst.msk [vmem:[%s6800 + $0x31] sm:$0x1] %vm6801, %v6787
    %6806 = vst.msk [vmem:[%s6800 + $0x41] sm:$0x1] %vm6801, %v6788
    %6807 = vst.msk [vmem:[%s6800 + $0x51] sm:$0x1] %vm6801, %v6789
    %6808 = vst.msk [vmem:[%s6800 + $0x61] sm:$0x1] %vm6801, %v6790
    %6809 = vst.msk [vmem:[%s6800 + $0x71] sm:$0x1] %vm6801, %v6791
    %6810 = vst.msk [vmem:[%s6800 + $0xa1] sm:$0x1] %vm6801, %v6792
    %6811 = vst.msk [vmem:[%s6800 + $0xb1] sm:$0x1] %vm6801, %v6793
    %6812 = vst.msk [vmem:[%s6800 + $0xc1] sm:$0x1] %vm6801, %v6794
    %6813 = vst.msk [vmem:[%s6800 + $0xd1] sm:$0x1] %vm6801, %v6795
    %6814 = vst.msk [vmem:[%s6800 + $0xe1] sm:$0x1] %vm6801, %v6796
    %6815 = vst.msk [vmem:[%s6800 + $0xf1] sm:$0x1] %vm6801, %v6797
    %6816 = vst.msk [vmem:[%s6800 + $0x101] sm:$0x1] %vm6801, %v6798
    %6817 = vst.msk [vmem:[%s6800 + $0x111] sm:$0x1] %vm6801, %v6799
    %vm6818 = vcmask 59394
    %6819 = vst.msk [vmem:[%s6800] sm:$0x4] %vm6818, %v6784
    %6820 = vst.msk [vmem:[%s6800 + $0x10] sm:$0x4] %vm6818, %v6785
    %6821 = vst.msk [vmem:[%s6800 + $0x20] sm:$0x4] %vm6818, %v6786
    %6822 = vst.msk [vmem:[%s6800 + $0x30] sm:$0x4] %vm6818, %v6787
    %6823 = vst.msk [vmem:[%s6800 + $0x40] sm:$0x4] %vm6818, %v6788
    %6824 = vst.msk [vmem:[%s6800 + $0x50] sm:$0x4] %vm6818, %v6789
    %6825 = vst.msk [vmem:[%s6800 + $0x60] sm:$0x4] %vm6818, %v6790
    %6826 = vst.msk [vmem:[%s6800 + $0x70] sm:$0x4] %vm6818, %v6791
    %6827 = vst.msk [vmem:[%s6800 + $0xa0] sm:$0x4] %vm6818, %v6792
    %6828 = vst.msk [vmem:[%s6800 + $0xb0] sm:$0x4] %vm6818, %v6793
    %6829 = vst.msk [vmem:[%s6800 + $0xc0] sm:$0x4] %vm6818, %v6794
    %6830 = vst.msk [vmem:[%s6800 + $0xd0] sm:$0x4] %vm6818, %v6795
    %6831 = vst.msk [vmem:[%s6800 + $0xe0] sm:$0x4] %vm6818, %v6796
    %6832 = vst.msk [vmem:[%s6800 + $0xf0] sm:$0x4] %vm6818, %v6797
    %6833 = vst.msk [vmem:[%s6800 + $0x100] sm:$0x4] %vm6818, %v6798
    %6834 = vst.msk [vmem:[%s6800 + $0x110] sm:$0x4] %vm6818, %v6799
    %vm6835 = vcmask 61444
    %6836 = vst.msk [vmem:[%s6800 - $0x1] sm:$0x10] %vm6835, %v6784
    %6837 = vst.msk [vmem:[%s6800 + $0xf] sm:$0x10] %vm6835, %v6785
    %6838 = vst.msk [vmem:[%s6800 + $0x1f] sm:$0x10] %vm6835, %v6786
    %6839 = vst.msk [vmem:[%s6800 + $0x2f] sm:$0x10] %vm6835, %v6787
    %6840 = vst.msk [vmem:[%s6800 + $0x3f] sm:$0x10] %vm6835, %v6788
    %6841 = vst.msk [vmem:[%s6800 + $0x4f] sm:$0x10] %vm6835, %v6789
    %6842 = vst.msk [vmem:[%s6800 + $0x5f] sm:$0x10] %vm6835, %v6790
    %6843 = vst.msk [vmem:[%s6800 + $0x6f] sm:$0x10] %vm6835, %v6791
    %6844 = vst.msk [vmem:[%s6800 + $0x9f] sm:$0x10] %vm6835, %v6792
    %6845 = vst.msk [vmem:[%s6800 + $0xaf] sm:$0x10] %vm6835, %v6793
    %6846 = vst.msk [vmem:[%s6800 + $0xbf] sm:$0x10] %vm6835, %v6794
    %6847 = vst.msk [vmem:[%s6800 + $0xcf] sm:$0x10] %vm6835, %v6795
    %6848 = vst.msk [vmem:[%s6800 + $0xdf] sm:$0x10] %vm6835, %v6796
    %6849 = vst.msk [vmem:[%s6800 + $0xef] sm:$0x10] %vm6835, %v6797
    %6850 = vst.msk [vmem:[%s6800 + $0xff] sm:$0x10] %vm6835, %v6798
    %6851 = vst.msk [vmem:[%s6800 + $0x10f] sm:$0x10] %vm6835, %v6799
    %vm6852 = vcmask 63494
    %6853 = vst.msk [vmem:[%s6800 - $0x2] sm:$0x40] %vm6852, %v6784
    %6854 = vst.msk [vmem:[%s6800 + $0xe] sm:$0x40] %vm6852, %v6785
    %6855 = vst.msk [vmem:[%s6800 + $0x1e] sm:$0x40] %vm6852, %v6786
    %6856 = vst.msk [vmem:[%s6800 + $0x2e] sm:$0x40] %vm6852, %v6787
    %6857 = vst.msk [vmem:[%s6800 + $0x3e] sm:$0x40] %vm6852, %v6788
    %6858 = vst.msk [vmem:[%s6800 + $0x4e] sm:$0x40] %vm6852, %v6789
    %6859 = vst.msk [vmem:[%s6800 + $0x5e] sm:$0x40] %vm6852, %v6790
    %6860 = vst.msk [vmem:[%s6800 + $0x6e] sm:$0x40] %vm6852, %v6791
    %6861 = vst.msk [vmem:[%s6800 + $0x9e] sm:$0x40] %vm6852, %v6792
    %6862 = vst.msk [vmem:[%s6800 + $0xae] sm:$0x40] %vm6852, %v6793
    %6863 = vst.msk [vmem:[%s6800 + $0xbe] sm:$0x40] %vm6852, %v6794
    %6864 = vst.msk [vmem:[%s6800 + $0xce] sm:$0x40] %vm6852, %v6795
    %6865 = vst.msk [vmem:[%s6800 + $0xde] sm:$0x40] %vm6852, %v6796
    %6866 = vst.msk [vmem:[%s6800 + $0xee] sm:$0x40] %vm6852, %v6797
    %6867 = vst.msk [vmem:[%s6800 + $0xfe] sm:$0x40] %vm6852, %v6798
    %6868 = vst.msk [vmem:[%s6800 + $0x10e] sm:$0x40] %vm6852, %v6799
    %v6885 = vrot.slane %v6663, 1
    %v6886 = vrot.slane %v6665, 1
    %v6887 = vrot.slane %v6667, 1
    %v6888 = vrot.slane %v6669, 1
    %v6889 = vrot.slane %v6671, 1
    %v6890 = vrot.slane %v6673, 1
    %v6891 = vrot.slane %v6675, 1
    %v6892 = vrot.slane %v6677, 1
    %v6893 = vrot.slane %v6679, 1
    %v6894 = vrot.slane %v6681, 1
    %v6895 = vrot.slane %v6683, 1
    %v6896 = vrot.slane %v6685, 1
    %v6897 = vrot.slane %v6687, 1
    %v6898 = vrot.slane %v6689, 1
    %v6899 = vrot.slane %v6691, 1
    %v6900 = vrot.slane %v6693, 1
    %v6917 = vmax.f32 %v6663, %v6885
    %v6918 = vmax.f32 %v6665, %v6886
    %v6919 = vmax.f32 %v6667, %v6887
    %v6920 = vmax.f32 %v6669, %v6888
    %v6921 = vmax.f32 %v6671, %v6889
    %v6922 = vmax.f32 %v6673, %v6890
    %v6923 = vmax.f32 %v6675, %v6891
    %v6924 = vmax.f32 %v6677, %v6892
    %v6925 = vmax.f32 %v6679, %v6893
    %v6926 = vmax.f32 %v6681, %v6894
    %v6927 = vmax.f32 %v6683, %v6895
    %v6928 = vmax.f32 %v6685, %v6896
    %v6929 = vmax.f32 %v6687, %v6897
    %v6930 = vmax.f32 %v6689, %v6898
    %v6931 = vmax.f32 %v6691, %v6899
    %v6932 = vmax.f32 %v6693, %v6900
    %6933 = vst.msk [vmem:[%s6800 + $0x5] sm:$0x1] %vm6801, %v6917
    %6934 = vst.msk [vmem:[%s6800 + $0x15] sm:$0x1] %vm6801, %v6918
    %6935 = vst.msk [vmem:[%s6800 + $0x25] sm:$0x1] %vm6801, %v6919
    %6936 = vst.msk [vmem:[%s6800 + $0x35] sm:$0x1] %vm6801, %v6920
    %6937 = vst.msk [vmem:[%s6800 + $0x45] sm:$0x1] %vm6801, %v6921
    %6938 = vst.msk [vmem:[%s6800 + $0x55] sm:$0x1] %vm6801, %v6922
    %6939 = vst.msk [vmem:[%s6800 + $0x65] sm:$0x1] %vm6801, %v6923
    %6940 = vst.msk [vmem:[%s6800 + $0x75] sm:$0x1] %vm6801, %v6924
    %6941 = vst.msk [vmem:[%s6800 + $0xa5] sm:$0x1] %vm6801, %v6925
    %6942 = vst.msk [vmem:[%s6800 + $0xb5] sm:$0x1] %vm6801, %v6926
    %6943 = vst.msk [vmem:[%s6800 + $0xc5] sm:$0x1] %vm6801, %v6927
    %6944 = vst.msk [vmem:[%s6800 + $0xd5] sm:$0x1] %vm6801, %v6928
    %6945 = vst.msk [vmem:[%s6800 + $0xe5] sm:$0x1] %vm6801, %v6929
    %6946 = vst.msk [vmem:[%s6800 + $0xf5] sm:$0x1] %vm6801, %v6930
    %6947 = vst.msk [vmem:[%s6800 + $0x105] sm:$0x1] %vm6801, %v6931
    %6948 = vst.msk [vmem:[%s6800 + $0x115] sm:$0x1] %vm6801, %v6932
    %6949 = vst.msk [vmem:[%s6800 + $0x4] sm:$0x4] %vm6818, %v6917
    %6950 = vst.msk [vmem:[%s6800 + $0x14] sm:$0x4] %vm6818, %v6918
    %6951 = vst.msk [vmem:[%s6800 + $0x24] sm:$0x4] %vm6818, %v6919
    %6952 = vst.msk [vmem:[%s6800 + $0x34] sm:$0x4] %vm6818, %v6920
    %6953 = vst.msk [vmem:[%s6800 + $0x44] sm:$0x4] %vm6818, %v6921
    %6954 = vst.msk [vmem:[%s6800 + $0x54] sm:$0x4] %vm6818, %v6922
    %6955 = vst.msk [vmem:[%s6800 + $0x64] sm:$0x4] %vm6818, %v6923
    %6956 = vst.msk [vmem:[%s6800 + $0x74] sm:$0x4] %vm6818, %v6924
    %6957 = vst.msk [vmem:[%s6800 + $0xa4] sm:$0x4] %vm6818, %v6925
    %6958 = vst.msk [vmem:[%s6800 + $0xb4] sm:$0x4] %vm6818, %v6926
    %6959 = vst.msk [vmem:[%s6800 + $0xc4] sm:$0x4] %vm6818, %v6927
    %6960 = vst.msk [vmem:[%s6800 + $0xd4] sm:$0x4] %vm6818, %v6928
    %6961 = vst.msk [vmem:[%s6800 + $0xe4] sm:$0x4] %vm6818, %v6929
    %6962 = vst.msk [vmem:[%s6800 + $0xf4] sm:$0x4] %vm6818, %v6930
    %6963 = vst.msk [vmem:[%s6800 + $0x104] sm:$0x4] %vm6818, %v6931
    %6964 = vst.msk [vmem:[%s6800 + $0x114] sm:$0x4] %vm6818, %v6932
    %6965 = vst.msk [vmem:[%s6800 + $0x3] sm:$0x10] %vm6835, %v6917
    %6966 = vst.msk [vmem:[%s6800 + $0x13] sm:$0x10] %vm6835, %v6918
    %6967 = vst.msk [vmem:[%s6800 + $0x23] sm:$0x10] %vm6835, %v6919
    %6968 = vst.msk [vmem:[%s6800 + $0x33] sm:$0x10] %vm6835, %v6920
    %6969 = vst.msk [vmem:[%s6800 + $0x43] sm:$0x10] %vm6835, %v6921
    %6970 = vst.msk [vmem:[%s6800 + $0x53] sm:$0x10] %vm6835, %v6922
    %6971 = vst.msk [vmem:[%s6800 + $0x63] sm:$0x10] %vm6835, %v6923
    %6972 = vst.msk [vmem:[%s6800 + $0x73] sm:$0x10] %vm6835, %v6924
    %6973 = vst.msk [vmem:[%s6800 + $0xa3] sm:$0x10] %vm6835, %v6925
    %6974 = vst.msk [vmem:[%s6800 + $0xb3] sm:$0x10] %vm6835, %v6926
    %6975 = vst.msk [vmem:[%s6800 + $0xc3] sm:$0x10] %vm6835, %v6927
    %6976 = vst.msk [vmem:[%s6800 + $0xd3] sm:$0x10] %vm6835, %v6928
    %6977 = vst.msk [vmem:[%s6800 + $0xe3] sm:$0x10] %vm6835, %v6929
    %6978 = vst.msk [vmem:[%s6800 + $0xf3] sm:$0x10] %vm6835, %v6930
    %6979 = vst.msk [vmem:[%s6800 + $0x103] sm:$0x10] %vm6835, %v6931
    %6980 = vst.msk [vmem:[%s6800 + $0x113] sm:$0x10] %vm6835, %v6932
    %6981 = vst.msk [vmem:[%s6800 + $0x2] sm:$0x40] %vm6852, %v6917
    %6982 = vst.msk [vmem:[%s6800 + $0x12] sm:$0x40] %vm6852, %v6918
    %6983 = vst.msk [vmem:[%s6800 + $0x22] sm:$0x40] %vm6852, %v6919
    %6984 = vst.msk [vmem:[%s6800 + $0x32] sm:$0x40] %vm6852, %v6920
    %6985 = vst.msk [vmem:[%s6800 + $0x42] sm:$0x40] %vm6852, %v6921
    %6986 = vst.msk [vmem:[%s6800 + $0x52] sm:$0x40] %vm6852, %v6922
    %6987 = vst.msk [vmem:[%s6800 + $0x62] sm:$0x40] %vm6852, %v6923
    %6988 = vst.msk [vmem:[%s6800 + $0x72] sm:$0x40] %vm6852, %v6924
    %6989 = vst.msk [vmem:[%s6800 + $0xa2] sm:$0x40] %vm6852, %v6925
    %6990 = vst.msk [vmem:[%s6800 + $0xb2] sm:$0x40] %vm6852, %v6926
    %6991 = vst.msk [vmem:[%s6800 + $0xc2] sm:$0x40] %vm6852, %v6927
    %6992 = vst.msk [vmem:[%s6800 + $0xd2] sm:$0x40] %vm6852, %v6928
    %6993 = vst.msk [vmem:[%s6800 + $0xe2] sm:$0x40] %vm6852, %v6929
    %6994 = vst.msk [vmem:[%s6800 + $0xf2] sm:$0x40] %vm6852, %v6930
    %6995 = vst.msk [vmem:[%s6800 + $0x102] sm:$0x40] %vm6852, %v6931
    %6996 = vst.msk [vmem:[%s6800 + $0x112] sm:$0x40] %vm6852, %v6932
    %v6997 = vld [vmem:[#allocation3] sm:$0xff]
    %v6998 = vld [vmem:[#allocation3 + $0x10] sm:$0xff]
    %v6999 = vld [vmem:[#allocation3 + $0x20] sm:$0xff]
    %v7000 = vld [vmem:[#allocation3 + $0x30] sm:$0xff]
    %v7001 = vld [vmem:[#allocation3 + $0x40] sm:$0xff]
    %v7002 = vld [vmem:[#allocation3 + $0x50] sm:$0xff]
    %v7003 = vld [vmem:[#allocation3 + $0x60] sm:$0xff]
    %v7004 = vld [vmem:[#allocation3 + $0x70] sm:$0xff]
    %v7005 = vld [vmem:[#allocation3 + $0xa0] sm:$0xff]
    %v7006 = vld [vmem:[#allocation3 + $0xb0] sm:$0xff]
    %v7007 = vld [vmem:[#allocation3 + $0xc0] sm:$0xff]
    %v7008 = vld [vmem:[#allocation3 + $0xd0] sm:$0xff]
    %v7009 = vld [vmem:[#allocation3 + $0xe0] sm:$0xff]
    %v7010 = vld [vmem:[#allocation3 + $0xf0] sm:$0xff]
    %v7011 = vld [vmem:[#allocation3 + $0x100] sm:$0xff]
    %v7012 = vld [vmem:[#allocation3 + $0x110] sm:$0xff]
    %v7013 = vld [vmem:[%s3] sm:$0xff]
    %v7014 = vld [vmem:[#allocation3 + $0x1] sm:$0xff]
    %v7015 = vld [vmem:[#allocation3 + $0x11] sm:$0xff]
    %v7016 = vld [vmem:[#allocation3 + $0x21] sm:$0xff]
    %v7017 = vld [vmem:[#allocation3 + $0x31] sm:$0xff]
    %v7018 = vld [vmem:[#allocation3 + $0x41] sm:$0xff]
    %v7019 = vld [vmem:[#allocation3 + $0x51] sm:$0xff]
    %v7020 = vld [vmem:[#allocation3 + $0x61] sm:$0xff]
    %v7021 = vld [vmem:[#allocation3 + $0x71] sm:$0xff]
    %v7022 = vld [vmem:[#allocation3 + $0xa1] sm:$0xff]
    %v7023 = vld [vmem:[#allocation3 + $0xb1] sm:$0xff]
    %v7024 = vld [vmem:[#allocation3 + $0xc1] sm:$0xff]
    %v7025 = vld [vmem:[#allocation3 + $0xd1] sm:$0xff]
    %v7026 = vld [vmem:[#allocation3 + $0xe1] sm:$0xff]
    %v7027 = vld [vmem:[#allocation3 + $0xf1] sm:$0xff]
    %v7028 = vld [vmem:[#allocation3 + $0x101] sm:$0xff]
    %v7029 = vld [vmem:[#allocation3 + $0x111] sm:$0xff]
    %v7030 = vld [vmem:[%s3 + $0x8] sm:$0xff]
    %v7032 = vsel %vm6694, %v7014, 0
    %v7035 = vsel %vm6694, %v7015, 0
    %v7038 = vsel %vm6694, %v7016, 0
    %v7041 = vsel %vm6694, %v7017, 0
    %v7044 = vsel %vm6694, %v7018, 0
    %v7047 = vsel %vm6694, %v7019, 0
    %v7050 = vsel %vm6694, %v7020, 0
    %v7053 = vsel %vm6694, %v7021, 0
    %v7056 = vsel %vm6694, %v7022, 0
    %v7059 = vsel %vm6694, %v7023, 0
    %v7062 = vsel %vm6694, %v7024, 0
    %v7065 = vsel %vm6694, %v7025, 0
    %v7068 = vsel %vm6694, %v7026, 0
    %v7071 = vsel %vm6694, %v7027, 0
    %v7074 = vsel %vm6694, %v7028, 0
    %v7077 = vsel %vm6694, %v7029, 0
    %7079 = vmatprep.subr.mxu0 0.0
    %7080 = vmatpush1.msra.mxu0 0.0
    %7081 = vmatprep.subr.mxu0 0.0
    %7082 = vmatpush1.msra.mxu0 0.0
    %7083 = vmatprep.subr.mxu0 0.0
    %7084 = vmatpush1.msra.mxu0 0.0
    %7085 = vmatprep.subr.mxu0 0.0
    %7086 = vmatpush1.msra.mxu0 0.0
    %7087 = vmatprep.subr.mxu0 0.0
    %7088 = vmatpush1.msra.mxu0 0.0
    %7089 = vmatprep.subr.mxu0 0.0
    %7090 = vmatpush1.msra.mxu0 0.0
    %7091 = vmatprep.subr.mxu0 0.0
    %7092 = vmatpush1.msra.mxu0 0.0
    %7093 = vmatprep.subr.mxu0 0.0
    %7094 = vmatpush1.msra.mxu0 0.0
    %7095 = vmatprep.subr.mxu0 0.0
    %7096 = vmatpush1.msra.mxu0 0.0
    %7097 = vmatprep.subr.mxu0 0.0
    %7098 = vmatpush1.msra.mxu0 0.0
    %7099 = vmatprep.subr.mxu0 0.0
    %7100 = vmatpush1.msra.mxu0 0.0
    %7101 = vmatprep.subr.mxu0 0.0
    %7102 = vmatpush1.msra.mxu0 0.0
    %7103 = vmatprep.subr.mxu0 0.0
    %7104 = vmatpush1.msra.mxu0 0.0
    %7105 = vmatprep.subr.mxu0 0.0
    %7106 = vmatpush1.msra.mxu0 0.0
    %7107 = vmatprep.subr.mxu0 0.0
    %7108 = vmatpush1.msra.mxu0 0.0
    %7109 = vmatprep.subr.mxu0 0.0
    %7110 = vmatpush1.msra.mxu0 %v7030
    %7111 = vmatprep.subr.mxu0 0.0
    %7112 = vmatpush2.msra.mxu0 0.0
    %7113 = vmatprep.subr.mxu0 0.0
    %7114 = vmatpush2.msra.mxu0 0.0
    %7115 = vmatprep.subr.mxu0 0.0
    %7116 = vmatpush2.msra.mxu0 0.0
    %7117 = vmatprep.subr.mxu0 0.0
    %7118 = vmatpush2.msra.mxu0 0.0
    %7119 = vmatprep.subr.mxu0 0.0
    %7120 = vmatpush2.msra.mxu0 0.0
    %7121 = vmatprep.subr.mxu0 0.0
    %7122 = vmatpush2.msra.mxu0 0.0
    %7123 = vmatprep.subr.mxu0 0.0
    %7124 = vmatpush2.msra.mxu0 0.0
    %7125 = vmatprep.subr.mxu0 0.0
    %7126 = vmatpush2.msra.mxu0 0.0
    %7127 = vmatprep.subr.mxu0 0.0
    %7128 = vmatpush2.msra.mxu0 0.0
    %7129 = vmatprep.subr.mxu0 0.0
    %7130 = vmatpush2.msra.mxu0 0.0
    %7131 = vmatprep.subr.mxu0 0.0
    %7132 = vmatpush2.msra.mxu0 0.0
    %7133 = vmatprep.subr.mxu0 0.0
    %7134 = vmatpush2.msra.mxu0 0.0
    %7135 = vmatprep.subr.mxu0 0.0
    %7136 = vmatpush2.msra.mxu0 0.0
    %7137 = vmatprep.subr.mxu0 0.0
    %7138 = vmatpush2.msra.mxu0 0.0
    %7139 = vmatprep.subr.mxu0 0.0
    %7140 = vmatpush2.msra.mxu0 0.0
    %7141 = vmatprep.subr.mxu0 0.0
    %7142 = vmatpush2.msra.mxu0 0.0
    %7143 = vmatprep.mubr.f32.mxu0 0.0
    %7144 = vmatmul.mubr.f32.gmra.mxu0 %v7032
    %v7145 = vpop.f32.mrf.mxu0
    %v7146 = vadd.f32 0.0, %v7145
    %v7147 = vpop.f32.mrf.mxu0
    %7148 = vmatprep.mubr.f32.mxu0 0.0
    %7149 = vmatmul.mubr.f32.gmra.mxu0 %v7035
    %v7150 = vpop.f32.mrf.mxu0
    %v7151 = vadd.f32 0.0, %v7150
    %v7152 = vpop.f32.mrf.mxu0
    %7153 = vmatprep.mubr.f32.mxu0 0.0
    %7154 = vmatmul.mubr.f32.gmra.mxu0 %v7038
    %v7155 = vpop.f32.mrf.mxu0
    %v7156 = vadd.f32 0.0, %v7155
    %v7157 = vpop.f32.mrf.mxu0
    %7158 = vmatprep.mubr.f32.mxu0 0.0
    %7159 = vmatmul.mubr.f32.gmra.mxu0 %v7041
    %v7160 = vpop.f32.mrf.mxu0
    %v7161 = vadd.f32 0.0, %v7160
    %v7162 = vpop.f32.mrf.mxu0
    %7163 = vmatprep.mubr.f32.mxu0 0.0
    %7164 = vmatmul.mubr.f32.gmra.mxu0 %v7044
    %v7165 = vpop.f32.mrf.mxu0
    %v7166 = vadd.f32 0.0, %v7165
    %v7167 = vpop.f32.mrf.mxu0
    %7168 = vmatprep.mubr.f32.mxu0 0.0
    %7169 = vmatmul.mubr.f32.gmra.mxu0 %v7047
    %v7170 = vpop.f32.mrf.mxu0
    %v7171 = vadd.f32 0.0, %v7170
    %v7172 = vpop.f32.mrf.mxu0
    %7173 = vmatprep.mubr.f32.mxu0 0.0
    %7174 = vmatmul.mubr.f32.gmra.mxu0 %v7050
    %v7175 = vpop.f32.mrf.mxu0
    %v7176 = vadd.f32 0.0, %v7175
    %v7177 = vpop.f32.mrf.mxu0
    %7178 = vmatprep.mubr.f32.mxu0 0.0
    %7179 = vmatmul.mubr.f32.gmra.mxu0 %v7053
    %v7180 = vpop.f32.mrf.mxu0
    %v7181 = vadd.f32 0.0, %v7180
    %v7182 = vpop.f32.mrf.mxu0
    %7183 = vmatprep.mubr.f32.mxu0 0.0
    %7184 = vmatmul.mubr.f32.gmra.mxu0 %v7056
    %v7185 = vpop.f32.mrf.mxu0
    %v7186 = vadd.f32 0.0, %v7185
    %v7187 = vpop.f32.mrf.mxu0
    %7188 = vmatprep.mubr.f32.mxu0 0.0
    %7189 = vmatmul.mubr.f32.gmra.mxu0 %v7059
    %v7190 = vpop.f32.mrf.mxu0
    %v7191 = vadd.f32 0.0, %v7190
    %v7192 = vpop.f32.mrf.mxu0
    %7193 = vmatprep.mubr.f32.mxu0 0.0
    %7194 = vmatmul.mubr.f32.gmra.mxu0 %v7062
    %v7195 = vpop.f32.mrf.mxu0
    %v7196 = vadd.f32 0.0, %v7195
    %v7197 = vpop.f32.mrf.mxu0
    %7198 = vmatprep.mubr.f32.mxu0 0.0
    %7199 = vmatmul.mubr.f32.gmra.mxu0 %v7065
    %v7200 = vpop.f32.mrf.mxu0
    %v7201 = vadd.f32 0.0, %v7200
    %v7202 = vpop.f32.mrf.mxu0
    %7203 = vmatprep.mubr.f32.mxu0 0.0
    %7204 = vmatmul.mubr.f32.gmra.mxu0 %v7068
    %v7205 = vpop.f32.mrf.mxu0
    %v7206 = vadd.f32 0.0, %v7205
    %v7207 = vpop.f32.mrf.mxu0
    %7208 = vmatprep.mubr.f32.mxu0 0.0
    %7209 = vmatmul.mubr.f32.gmra.mxu0 %v7071
    %v7210 = vpop.f32.mrf.mxu0
    %v7211 = vadd.f32 0.0, %v7210
    %v7212 = vpop.f32.mrf.mxu0
    %7213 = vmatprep.mubr.f32.mxu0 0.0
    %7214 = vmatmul.mubr.f32.gmra.mxu0 %v7074
    %v7215 = vpop.f32.mrf.mxu0
    %v7216 = vadd.f32 0.0, %v7215
    %v7217 = vpop.f32.mrf.mxu0
    %7218 = vmatprep.mubr.f32.mxu0 0.0
    %7219 = vmatmul.mubr.f32.gmra.mxu0 %v7077
    %v7220 = vpop.f32.mrf.mxu0
    %v7221 = vadd.f32 0.0, %v7220
    %v7222 = vpop.f32.mrf.mxu0
    %7223 = vdwg.mxu0
    %v7225 = vsel %vm6694, %v6997, 0
    %v7228 = vsel %vm6694, %v6998, 0
    %v7231 = vsel %vm6694, %v6999, 0
    %v7234 = vsel %vm6694, %v7000, 0
    %v7237 = vsel %vm6694, %v7001, 0
    %v7240 = vsel %vm6694, %v7002, 0
    %v7243 = vsel %vm6694, %v7003, 0
    %v7246 = vsel %vm6694, %v7004, 0
    %v7249 = vsel %vm6694, %v7005, 0
    %v7252 = vsel %vm6694, %v7006, 0
    %v7255 = vsel %vm6694, %v7007, 0
    %v7258 = vsel %vm6694, %v7008, 0
    %v7261 = vsel %vm6694, %v7009, 0
    %v7264 = vsel %vm6694, %v7010, 0
    %v7267 = vsel %vm6694, %v7011, 0
    %v7270 = vsel %vm6694, %v7012, 0
    %7272 = vmatprep.subr.mxu0 0.0
    %7273 = vmatpush1.msra.mxu0 0.0
    %7274 = vmatprep.subr.mxu0 0.0
    %7275 = vmatpush1.msra.mxu0 0.0
    %7276 = vmatprep.subr.mxu0 0.0
    %7277 = vmatpush1.msra.mxu0 0.0
    %7278 = vmatprep.subr.mxu0 0.0
    %7279 = vmatpush1.msra.mxu0 0.0
    %7280 = vmatprep.subr.mxu0 0.0
    %7281 = vmatpush1.msra.mxu0 0.0
    %7282 = vmatprep.subr.mxu0 0.0
    %7283 = vmatpush1.msra.mxu0 0.0
    %7284 = vmatprep.subr.mxu0 0.0
    %7285 = vmatpush1.msra.mxu0 0.0
    %7286 = vmatprep.subr.mxu0 0.0
    %7287 = vmatpush1.msra.mxu0 0.0
    %7288 = vmatprep.subr.mxu0 0.0
    %7289 = vmatpush1.msra.mxu0 0.0
    %7290 = vmatprep.subr.mxu0 0.0
    %7291 = vmatpush1.msra.mxu0 0.0
    %7292 = vmatprep.subr.mxu0 0.0
    %7293 = vmatpush1.msra.mxu0 0.0
    %7294 = vmatprep.subr.mxu0 0.0
    %7295 = vmatpush1.msra.mxu0 0.0
    %7296 = vmatprep.subr.mxu0 0.0
    %7297 = vmatpush1.msra.mxu0 0.0
    %7298 = vmatprep.subr.mxu0 0.0
    %7299 = vmatpush1.msra.mxu0 0.0
    %7300 = vmatprep.subr.mxu0 0.0
    %7301 = vmatpush1.msra.mxu0 0.0
    %7302 = vmatprep.subr.mxu0 0.0
    %7303 = vmatpush1.msra.mxu0 %v7013
    %7304 = vmatprep.subr.mxu0 0.0
    %7305 = vmatpush2.msra.mxu0 0.0
    %7306 = vmatprep.subr.mxu0 0.0
    %7307 = vmatpush2.msra.mxu0 0.0
    %7308 = vmatprep.subr.mxu0 0.0
    %7309 = vmatpush2.msra.mxu0 0.0
    %7310 = vmatprep.subr.mxu0 0.0
    %7311 = vmatpush2.msra.mxu0 0.0
    %7312 = vmatprep.subr.mxu0 0.0
    %7313 = vmatpush2.msra.mxu0 0.0
    %7314 = vmatprep.subr.mxu0 0.0
    %7315 = vmatpush2.msra.mxu0 0.0
    %7316 = vmatprep.subr.mxu0 0.0
    %7317 = vmatpush2.msra.mxu0 0.0
    %7318 = vmatprep.subr.mxu0 0.0
    %7319 = vmatpush2.msra.mxu0 0.0
    %7320 = vmatprep.subr.mxu0 0.0
    %7321 = vmatpush2.msra.mxu0 0.0
    %7322 = vmatprep.subr.mxu0 0.0
    %7323 = vmatpush2.msra.mxu0 0.0
    %7324 = vmatprep.subr.mxu0 0.0
    %7325 = vmatpush2.msra.mxu0 0.0
    %7326 = vmatprep.subr.mxu0 0.0
    %7327 = vmatpush2.msra.mxu0 0.0
    %7328 = vmatprep.subr.mxu0 0.0
    %7329 = vmatpush2.msra.mxu0 0.0
    %7330 = vmatprep.subr.mxu0 0.0
    %7331 = vmatpush2.msra.mxu0 0.0
    %7332 = vmatprep.subr.mxu0 0.0
    %7333 = vmatpush2.msra.mxu0 0.0
    %7334 = vmatprep.subr.mxu0 0.0
    %7335 = vmatpush2.msra.mxu0 0.0
    %7336 = vmatprep.mubr.f32.mxu0 0.0
    %7337 = vmatmul.mubr.f32.gmra.mxu0 %v7225
    %v7338 = vpop.f32.mrf.mxu0
    %v7339 = vadd.f32 %v7146, %v7338
    %v7340 = vpop.f32.mrf.mxu0
    %7341 = vmatprep.mubr.f32.mxu0 0.0
    %7342 = vmatmul.mubr.f32.gmra.mxu0 %v7228
    %v7343 = vpop.f32.mrf.mxu0
    %v7344 = vadd.f32 %v7151, %v7343
    %v7345 = vpop.f32.mrf.mxu0
    %7346 = vmatprep.mubr.f32.mxu0 0.0
    %7347 = vmatmul.mubr.f32.gmra.mxu0 %v7231
    %v7348 = vpop.f32.mrf.mxu0
    %v7349 = vadd.f32 %v7156, %v7348
    %v7350 = vpop.f32.mrf.mxu0
    %7351 = vmatprep.mubr.f32.mxu0 0.0
    %7352 = vmatmul.mubr.f32.gmra.mxu0 %v7234
    %v7353 = vpop.f32.mrf.mxu0
    %v7354 = vadd.f32 %v7161, %v7353
    %v7355 = vpop.f32.mrf.mxu0
    %7356 = vmatprep.mubr.f32.mxu0 0.0
    %7357 = vmatmul.mubr.f32.gmra.mxu0 %v7237
    %v7358 = vpop.f32.mrf.mxu0
    %v7359 = vadd.f32 %v7166, %v7358
    %v7360 = vpop.f32.mrf.mxu0
    %7361 = vmatprep.mubr.f32.mxu0 0.0
    %7362 = vmatmul.mubr.f32.gmra.mxu0 %v7240
    %v7363 = vpop.f32.mrf.mxu0
    %v7364 = vadd.f32 %v7171, %v7363
    %v7365 = vpop.f32.mrf.mxu0
    %7366 = vmatprep.mubr.f32.mxu0 0.0
    %7367 = vmatmul.mubr.f32.gmra.mxu0 %v7243
    %v7368 = vpop.f32.mrf.mxu0
    %v7369 = vadd.f32 %v7176, %v7368
    %v7370 = vpop.f32.mrf.mxu0
    %7371 = vmatprep.mubr.f32.mxu0 0.0
    %7372 = vmatmul.mubr.f32.gmra.mxu0 %v7246
    %v7373 = vpop.f32.mrf.mxu0
    %v7374 = vadd.f32 %v7181, %v7373
    %v7375 = vpop.f32.mrf.mxu0
    %7376 = vmatprep.mubr.f32.mxu0 0.0
    %7377 = vmatmul.mubr.f32.gmra.mxu0 %v7249
    %v7378 = vpop.f32.mrf.mxu0
    %v7379 = vadd.f32 %v7186, %v7378
    %v7380 = vpop.f32.mrf.mxu0
    %7381 = vmatprep.mubr.f32.mxu0 0.0
    %7382 = vmatmul.mubr.f32.gmra.mxu0 %v7252
    %v7383 = vpop.f32.mrf.mxu0
    %v7384 = vadd.f32 %v7191, %v7383
    %v7385 = vpop.f32.mrf.mxu0
    %7386 = vmatprep.mubr.f32.mxu0 0.0
    %7387 = vmatmul.mubr.f32.gmra.mxu0 %v7255
    %v7388 = vpop.f32.mrf.mxu0
    %v7389 = vadd.f32 %v7196, %v7388
    %v7390 = vpop.f32.mrf.mxu0
    %7391 = vmatprep.mubr.f32.mxu0 0.0
    %7392 = vmatmul.mubr.f32.gmra.mxu0 %v7258
    %v7393 = vpop.f32.mrf.mxu0
    %v7394 = vadd.f32 %v7201, %v7393
    %v7395 = vpop.f32.mrf.mxu0
    %7396 = vmatprep.mubr.f32.mxu0 0.0
    %7397 = vmatmul.mubr.f32.gmra.mxu0 %v7261
    %v7398 = vpop.f32.mrf.mxu0
    %v7399 = vadd.f32 %v7206, %v7398
    %v7400 = vpop.f32.mrf.mxu0
    %7401 = vmatprep.mubr.f32.mxu0 0.0
    %7402 = vmatmul.mubr.f32.gmra.mxu0 %v7264
    %v7403 = vpop.f32.mrf.mxu0
    %v7404 = vadd.f32 %v7211, %v7403
    %v7405 = vpop.f32.mrf.mxu0
    %7406 = vmatprep.mubr.f32.mxu0 0.0
    %7407 = vmatmul.mubr.f32.gmra.mxu0 %v7267
    %v7408 = vpop.f32.mrf.mxu0
    %v7409 = vadd.f32 %v7216, %v7408
    %v7410 = vpop.f32.mrf.mxu0
    %7411 = vmatprep.mubr.f32.mxu0 0.0
    %7412 = vmatmul.mubr.f32.gmra.mxu0 %v7270
    %v7413 = vpop.f32.mrf.mxu0
    %v7414 = vadd.f32 %v7221, %v7413
    %v7415 = vpop.f32.mrf.mxu0
    %7416 = vdwg.mxu0
    %v7417 = vld [vmem:[#allocation3 + $0x2] sm:$0xff]
    %v7418 = vld [vmem:[#allocation3 + $0x12] sm:$0xff]
    %v7419 = vld [vmem:[#allocation3 + $0x22] sm:$0xff]
    %v7420 = vld [vmem:[#allocation3 + $0x32] sm:$0xff]
    %v7421 = vld [vmem:[#allocation3 + $0x42] sm:$0xff]
    %v7422 = vld [vmem:[#allocation3 + $0x52] sm:$0xff]
    %v7423 = vld [vmem:[#allocation3 + $0x62] sm:$0xff]
    %v7424 = vld [vmem:[#allocation3 + $0x72] sm:$0xff]
    %v7425 = vld [vmem:[#allocation3 + $0xa2] sm:$0xff]
    %v7426 = vld [vmem:[#allocation3 + $0xb2] sm:$0xff]
    %v7427 = vld [vmem:[#allocation3 + $0xc2] sm:$0xff]
    %v7428 = vld [vmem:[#allocation3 + $0xd2] sm:$0xff]
    %v7429 = vld [vmem:[#allocation3 + $0xe2] sm:$0xff]
    %v7430 = vld [vmem:[#allocation3 + $0xf2] sm:$0xff]
    %v7431 = vld [vmem:[#allocation3 + $0x102] sm:$0xff]
    %v7432 = vld [vmem:[#allocation3 + $0x112] sm:$0xff]
    %v7433 = vld [vmem:[%s3 + $0x10] sm:$0xff]
    %v7435 = vsel %vm6694, %v7417, 0
    %v7438 = vsel %vm6694, %v7418, 0
    %v7441 = vsel %vm6694, %v7419, 0
    %v7444 = vsel %vm6694, %v7420, 0
    %v7447 = vsel %vm6694, %v7421, 0
    %v7450 = vsel %vm6694, %v7422, 0
    %v7453 = vsel %vm6694, %v7423, 0
    %v7456 = vsel %vm6694, %v7424, 0
    %v7459 = vsel %vm6694, %v7425, 0
    %v7462 = vsel %vm6694, %v7426, 0
    %v7465 = vsel %vm6694, %v7427, 0
    %v7468 = vsel %vm6694, %v7428, 0
    %v7471 = vsel %vm6694, %v7429, 0
    %v7474 = vsel %vm6694, %v7430, 0
    %v7477 = vsel %vm6694, %v7431, 0
    %v7480 = vsel %vm6694, %v7432, 0
    %7482 = vmatprep.subr.mxu0 0.0
    %7483 = vmatpush1.msra.mxu0 0.0
    %7484 = vmatprep.subr.mxu0 0.0
    %7485 = vmatpush1.msra.mxu0 0.0
    %7486 = vmatprep.subr.mxu0 0.0
    %7487 = vmatpush1.msra.mxu0 0.0
    %7488 = vmatprep.subr.mxu0 0.0
    %7489 = vmatpush1.msra.mxu0 0.0
    %7490 = vmatprep.subr.mxu0 0.0
    %7491 = vmatpush1.msra.mxu0 0.0
    %7492 = vmatprep.subr.mxu0 0.0
    %7493 = vmatpush1.msra.mxu0 0.0
    %7494 = vmatprep.subr.mxu0 0.0
    %7495 = vmatpush1.msra.mxu0 0.0
    %7496 = vmatprep.subr.mxu0 0.0
    %7497 = vmatpush1.msra.mxu0 0.0
    %7498 = vmatprep.subr.mxu0 0.0
    %7499 = vmatpush1.msra.mxu0 0.0
    %7500 = vmatprep.subr.mxu0 0.0
    %7501 = vmatpush1.msra.mxu0 0.0
    %7502 = vmatprep.subr.mxu0 0.0
    %7503 = vmatpush1.msra.mxu0 0.0
    %7504 = vmatprep.subr.mxu0 0.0
    %7505 = vmatpush1.msra.mxu0 0.0
    %7506 = vmatprep.subr.mxu0 0.0
    %7507 = vmatpush1.msra.mxu0 0.0
    %7508 = vmatprep.subr.mxu0 0.0
    %7509 = vmatpush1.msra.mxu0 0.0
    %7510 = vmatprep.subr.mxu0 0.0
    %7511 = vmatpush1.msra.mxu0 0.0
    %7512 = vmatprep.subr.mxu0 0.0
    %7513 = vmatpush1.msra.mxu0 %v7433
    %7514 = vmatprep.subr.mxu0 0.0
    %7515 = vmatpush2.msra.mxu0 0.0
    %7516 = vmatprep.subr.mxu0 0.0
    %7517 = vmatpush2.msra.mxu0 0.0
    %7518 = vmatprep.subr.mxu0 0.0
    %7519 = vmatpush2.msra.mxu0 0.0
    %7520 = vmatprep.subr.mxu0 0.0
    %7521 = vmatpush2.msra.mxu0 0.0
    %7522 = vmatprep.subr.mxu0 0.0
    %7523 = vmatpush2.msra.mxu0 0.0
    %7524 = vmatprep.subr.mxu0 0.0
    %7525 = vmatpush2.msra.mxu0 0.0
    %7526 = vmatprep.subr.mxu0 0.0
    %7527 = vmatpush2.msra.mxu0 0.0
    %7528 = vmatprep.subr.mxu0 0.0
    %7529 = vmatpush2.msra.mxu0 0.0
    %7530 = vmatprep.subr.mxu0 0.0
    %7531 = vmatpush2.msra.mxu0 0.0
    %7532 = vmatprep.subr.mxu0 0.0
    %7533 = vmatpush2.msra.mxu0 0.0
    %7534 = vmatprep.subr.mxu0 0.0
    %7535 = vmatpush2.msra.mxu0 0.0
    %7536 = vmatprep.subr.mxu0 0.0
    %7537 = vmatpush2.msra.mxu0 0.0
    %7538 = vmatprep.subr.mxu0 0.0
    %7539 = vmatpush2.msra.mxu0 0.0
    %7540 = vmatprep.subr.mxu0 0.0
    %7541 = vmatpush2.msra.mxu0 0.0
    %7542 = vmatprep.subr.mxu0 0.0
    %7543 = vmatpush2.msra.mxu0 0.0
    %7544 = vmatprep.subr.mxu0 0.0
    %7545 = vmatpush2.msra.mxu0 0.0
    %7546 = vmatprep.mubr.f32.mxu0 0.0
    %7547 = vmatmul.mubr.f32.gmra.mxu0 %v7435
    %v7548 = vpop.f32.mrf.mxu0
    %v7549 = vadd.f32 0.0, %v7548
    %v7550 = vpop.f32.mrf.mxu0
    %7551 = vmatprep.mubr.f32.mxu0 0.0
    %7552 = vmatmul.mubr.f32.gmra.mxu0 %v7438
    %v7553 = vpop.f32.mrf.mxu0
    %v7554 = vadd.f32 0.0, %v7553
    %v7555 = vpop.f32.mrf.mxu0
    %7556 = vmatprep.mubr.f32.mxu0 0.0
    %7557 = vmatmul.mubr.f32.gmra.mxu0 %v7441
    %v7558 = vpop.f32.mrf.mxu0
    %v7559 = vadd.f32 0.0, %v7558
    %v7560 = vpop.f32.mrf.mxu0
    %7561 = vmatprep.mubr.f32.mxu0 0.0
    %7562 = vmatmul.mubr.f32.gmra.mxu0 %v7444
    %v7563 = vpop.f32.mrf.mxu0
    %v7564 = vadd.f32 0.0, %v7563
    %v7565 = vpop.f32.mrf.mxu0
    %7566 = vmatprep.mubr.f32.mxu0 0.0
    %7567 = vmatmul.mubr.f32.gmra.mxu0 %v7447
    %v7568 = vpop.f32.mrf.mxu0
    %v7569 = vadd.f32 0.0, %v7568
    %v7570 = vpop.f32.mrf.mxu0
    %7571 = vmatprep.mubr.f32.mxu0 0.0
    %7572 = vmatmul.mubr.f32.gmra.mxu0 %v7450
    %v7573 = vpop.f32.mrf.mxu0
    %v7574 = vadd.f32 0.0, %v7573
    %v7575 = vpop.f32.mrf.mxu0
    %7576 = vmatprep.mubr.f32.mxu0 0.0
    %7577 = vmatmul.mubr.f32.gmra.mxu0 %v7453
    %v7578 = vpop.f32.mrf.mxu0
    %v7579 = vadd.f32 0.0, %v7578
    %v7580 = vpop.f32.mrf.mxu0
    %7581 = vmatprep.mubr.f32.mxu0 0.0
    %7582 = vmatmul.mubr.f32.gmra.mxu0 %v7456
    %v7583 = vpop.f32.mrf.mxu0
    %v7584 = vadd.f32 0.0, %v7583
    %v7585 = vpop.f32.mrf.mxu0
    %7586 = vmatprep.mubr.f32.mxu0 0.0
    %7587 = vmatmul.mubr.f32.gmra.mxu0 %v7459
    %v7588 = vpop.f32.mrf.mxu0
    %v7589 = vadd.f32 0.0, %v7588
    %v7590 = vpop.f32.mrf.mxu0
    %7591 = vmatprep.mubr.f32.mxu0 0.0
    %7592 = vmatmul.mubr.f32.gmra.mxu0 %v7462
    %v7593 = vpop.f32.mrf.mxu0
    %v7594 = vadd.f32 0.0, %v7593
    %v7595 = vpop.f32.mrf.mxu0
    %7596 = vmatprep.mubr.f32.mxu0 0.0
    %7597 = vmatmul.mubr.f32.gmra.mxu0 %v7465
    %v7598 = vpop.f32.mrf.mxu0
    %v7599 = vadd.f32 0.0, %v7598
    %v7600 = vpop.f32.mrf.mxu0
    %7601 = vmatprep.mubr.f32.mxu0 0.0
    %7602 = vmatmul.mubr.f32.gmra.mxu0 %v7468
    %v7603 = vpop.f32.mrf.mxu0
    %v7604 = vadd.f32 0.0, %v7603
    %v7605 = vpop.f32.mrf.mxu0
    %7606 = vmatprep.mubr.f32.mxu0 0.0
    %7607 = vmatmul.mubr.f32.gmra.mxu0 %v7471
    %v7608 = vpop.f32.mrf.mxu0
    %v7609 = vadd.f32 0.0, %v7608
    %v7610 = vpop.f32.mrf.mxu0
    %7611 = vmatprep.mubr.f32.mxu0 0.0
    %7612 = vmatmul.mubr.f32.gmra.mxu0 %v7474
    %v7613 = vpop.f32.mrf.mxu0
    %v7614 = vadd.f32 0.0, %v7613
    %v7615 = vpop.f32.mrf.mxu0
    %7616 = vmatprep.mubr.f32.mxu0 0.0
    %7617 = vmatmul.mubr.f32.gmra.mxu0 %v7477
    %v7618 = vpop.f32.mrf.mxu0
    %v7619 = vadd.f32 0.0, %v7618
    %v7620 = vpop.f32.mrf.mxu0
    %7621 = vmatprep.mubr.f32.mxu0 0.0
    %7622 = vmatmul.mubr.f32.gmra.mxu0 %v7480
    %v7623 = vpop.f32.mrf.mxu0
    %v7624 = vadd.f32 0.0, %v7623
    %v7625 = vpop.f32.mrf.mxu0
    %7626 = vdwg.mxu0
    %v7627 = vadd.f32 %v7339, %v7549
    %v7628 = vadd.f32 %v7344, %v7554
    %v7629 = vadd.f32 %v7349, %v7559
    %v7630 = vadd.f32 %v7354, %v7564
    %v7631 = vadd.f32 %v7359, %v7569
    %v7632 = vadd.f32 %v7364, %v7574
    %v7633 = vadd.f32 %v7369, %v7579
    %v7634 = vadd.f32 %v7374, %v7584
    %v7635 = vadd.f32 %v7379, %v7589
    %v7636 = vadd.f32 %v7384, %v7594
    %v7637 = vadd.f32 %v7389, %v7599
    %v7638 = vadd.f32 %v7394, %v7604
    %v7639 = vadd.f32 %v7399, %v7609
    %v7640 = vadd.f32 %v7404, %v7614
    %v7641 = vadd.f32 %v7409, %v7619
    %v7642 = vadd.f32 %v7414, %v7624
    %v7643 = vld [vmem:[%s6800] sm:$0xff]
    %v7644 = vld [vmem:[%s6800 + $0x10] sm:$0xff]
    %v7645 = vld [vmem:[%s6800 + $0x20] sm:$0xff]
    %v7646 = vld [vmem:[%s6800 + $0x30] sm:$0xff]
    %v7647 = vld [vmem:[%s6800 + $0x40] sm:$0xff]
    %v7648 = vld [vmem:[%s6800 + $0x50] sm:$0xff]
    %v7649 = vld [vmem:[%s6800 + $0x60] sm:$0xff]
    %v7650 = vld [vmem:[%s6800 + $0x70] sm:$0xff]
    %v7651 = vld [vmem:[%s6800 + $0xa0] sm:$0xff]
    %v7652 = vld [vmem:[%s6800 + $0xb0] sm:$0xff]
    %v7653 = vld [vmem:[%s6800 + $0xc0] sm:$0xff]
    %v7654 = vld [vmem:[%s6800 + $0xd0] sm:$0xff]
    %v7655 = vld [vmem:[%s6800 + $0xe0] sm:$0xff]
    %v7656 = vld [vmem:[%s6800 + $0xf0] sm:$0xff]
    %v7657 = vld [vmem:[%s6800 + $0x100] sm:$0xff]
    %v7658 = vld [vmem:[%s6800 + $0x110] sm:$0xff]
    %v7659 = vld [vmem:[%s3 + $0x18] sm:$0xff]
    %v7661 = vsel %vm6694, %v7643, 0
    %v7664 = vsel %vm6694, %v7644, 0
    %v7667 = vsel %vm6694, %v7645, 0
    %v7670 = vsel %vm6694, %v7646, 0
    %v7673 = vsel %vm6694, %v7647, 0
    %v7676 = vsel %vm6694, %v7648, 0
    %v7679 = vsel %vm6694, %v7649, 0
    %v7682 = vsel %vm6694, %v7650, 0
    %v7685 = vsel %vm6694, %v7651, 0
    %v7688 = vsel %vm6694, %v7652, 0
    %v7691 = vsel %vm6694, %v7653, 0
    %v7694 = vsel %vm6694, %v7654, 0
    %v7697 = vsel %vm6694, %v7655, 0
    %v7700 = vsel %vm6694, %v7656, 0
    %v7703 = vsel %vm6694, %v7657, 0
    %v7706 = vsel %vm6694, %v7658, 0
    %7708 = vmatprep.subr.mxu0 0.0
    %7709 = vmatpush1.msra.mxu0 0.0
    %7710 = vmatprep.subr.mxu0 0.0
    %7711 = vmatpush1.msra.mxu0 0.0
    %7712 = vmatprep.subr.mxu0 0.0
    %7713 = vmatpush1.msra.mxu0 0.0
    %7714 = vmatprep.subr.mxu0 0.0
    %7715 = vmatpush1.msra.mxu0 0.0
    %7716 = vmatprep.subr.mxu0 0.0
    %7717 = vmatpush1.msra.mxu0 0.0
    %7718 = vmatprep.subr.mxu0 0.0
    %7719 = vmatpush1.msra.mxu0 0.0
    %7720 = vmatprep.subr.mxu0 0.0
    %7721 = vmatpush1.msra.mxu0 0.0
    %7722 = vmatprep.subr.mxu0 0.0
    %7723 = vmatpush1.msra.mxu0 0.0
    %7724 = vmatprep.subr.mxu0 0.0
    %7725 = vmatpush1.msra.mxu0 0.0
    %7726 = vmatprep.subr.mxu0 0.0
    %7727 = vmatpush1.msra.mxu0 0.0
    %7728 = vmatprep.subr.mxu0 0.0
    %7729 = vmatpush1.msra.mxu0 0.0
    %7730 = vmatprep.subr.mxu0 0.0
    %7731 = vmatpush1.msra.mxu0 0.0
    %7732 = vmatprep.subr.mxu0 0.0
    %7733 = vmatpush1.msra.mxu0 0.0
    %7734 = vmatprep.subr.mxu0 0.0
    %7735 = vmatpush1.msra.mxu0 0.0
    %7736 = vmatprep.subr.mxu0 0.0
    %7737 = vmatpush1.msra.mxu0 0.0
    %7738 = vmatprep.subr.mxu0 0.0
    %7739 = vmatpush1.msra.mxu0 %v7659
    %7740 = vmatprep.subr.mxu0 0.0
    %7741 = vmatpush2.msra.mxu0 0.0
    %7742 = vmatprep.subr.mxu0 0.0
    %7743 = vmatpush2.msra.mxu0 0.0
    %7744 = vmatprep.subr.mxu0 0.0
    %7745 = vmatpush2.msra.mxu0 0.0
    %7746 = vmatprep.subr.mxu0 0.0
    %7747 = vmatpush2.msra.mxu0 0.0
    %7748 = vmatprep.subr.mxu0 0.0
    %7749 = vmatpush2.msra.mxu0 0.0
    %7750 = vmatprep.subr.mxu0 0.0
    %7751 = vmatpush2.msra.mxu0 0.0
    %7752 = vmatprep.subr.mxu0 0.0
    %7753 = vmatpush2.msra.mxu0 0.0
    %7754 = vmatprep.subr.mxu0 0.0
    %7755 = vmatpush2.msra.mxu0 0.0
    %7756 = vmatprep.subr.mxu0 0.0
    %7757 = vmatpush2.msra.mxu0 0.0
    %7758 = vmatprep.subr.mxu0 0.0
    %7759 = vmatpush2.msra.mxu0 0.0
    %7760 = vmatprep.subr.mxu0 0.0
    %7761 = vmatpush2.msra.mxu0 0.0
    %7762 = vmatprep.subr.mxu0 0.0
    %7763 = vmatpush2.msra.mxu0 0.0
    %7764 = vmatprep.subr.mxu0 0.0
    %7765 = vmatpush2.msra.mxu0 0.0
    %7766 = vmatprep.subr.mxu0 0.0
    %7767 = vmatpush2.msra.mxu0 0.0
    %7768 = vmatprep.subr.mxu0 0.0
    %7769 = vmatpush2.msra.mxu0 0.0
    %7770 = vmatprep.subr.mxu0 0.0
    %7771 = vmatpush2.msra.mxu0 0.0
    %7772 = vmatprep.mubr.f32.mxu0 0.0
    %7773 = vmatmul.mubr.f32.gmra.mxu0 %v7661
    %v7774 = vpop.f32.mrf.mxu0
    %v7775 = vadd.f32 0.0, %v7774
    %v7776 = vpop.f32.mrf.mxu0
    %7777 = vmatprep.mubr.f32.mxu0 0.0
    %7778 = vmatmul.mubr.f32.gmra.mxu0 %v7664
    %v7779 = vpop.f32.mrf.mxu0
    %v7780 = vadd.f32 0.0, %v7779
    %v7781 = vpop.f32.mrf.mxu0
    %7782 = vmatprep.mubr.f32.mxu0 0.0
    %7783 = vmatmul.mubr.f32.gmra.mxu0 %v7667
    %v7784 = vpop.f32.mrf.mxu0
    %v7785 = vadd.f32 0.0, %v7784
    %v7786 = vpop.f32.mrf.mxu0
    %7787 = vmatprep.mubr.f32.mxu0 0.0
    %7788 = vmatmul.mubr.f32.gmra.mxu0 %v7670
    %v7789 = vpop.f32.mrf.mxu0
    %v7790 = vadd.f32 0.0, %v7789
    %v7791 = vpop.f32.mrf.mxu0
    %7792 = vmatprep.mubr.f32.mxu0 0.0
    %7793 = vmatmul.mubr.f32.gmra.mxu0 %v7673
    %v7794 = vpop.f32.mrf.mxu0
    %v7795 = vadd.f32 0.0, %v7794
    %v7796 = vpop.f32.mrf.mxu0
    %7797 = vmatprep.mubr.f32.mxu0 0.0
    %7798 = vmatmul.mubr.f32.gmra.mxu0 %v7676
    %v7799 = vpop.f32.mrf.mxu0
    %v7800 = vadd.f32 0.0, %v7799
    %v7801 = vpop.f32.mrf.mxu0
    %7802 = vmatprep.mubr.f32.mxu0 0.0
    %7803 = vmatmul.mubr.f32.gmra.mxu0 %v7679
    %v7804 = vpop.f32.mrf.mxu0
    %v7805 = vadd.f32 0.0, %v7804
    %v7806 = vpop.f32.mrf.mxu0
    %7807 = vmatprep.mubr.f32.mxu0 0.0
    %7808 = vmatmul.mubr.f32.gmra.mxu0 %v7682
    %v7809 = vpop.f32.mrf.mxu0
    %v7810 = vadd.f32 0.0, %v7809
    %v7811 = vpop.f32.mrf.mxu0
    %7812 = vmatprep.mubr.f32.mxu0 0.0
    %7813 = vmatmul.mubr.f32.gmra.mxu0 %v7685
    %v7814 = vpop.f32.mrf.mxu0
    %v7815 = vadd.f32 0.0, %v7814
    %v7816 = vpop.f32.mrf.mxu0
    %7817 = vmatprep.mubr.f32.mxu0 0.0
    %7818 = vmatmul.mubr.f32.gmra.mxu0 %v7688
    %v7819 = vpop.f32.mrf.mxu0
    %v7820 = vadd.f32 0.0, %v7819
    %v7821 = vpop.f32.mrf.mxu0
    %7822 = vmatprep.mubr.f32.mxu0 0.0
    %7823 = vmatmul.mubr.f32.gmra.mxu0 %v7691
    %v7824 = vpop.f32.mrf.mxu0
    %v7825 = vadd.f32 0.0, %v7824
    %v7826 = vpop.f32.mrf.mxu0
    %7827 = vmatprep.mubr.f32.mxu0 0.0
    %7828 = vmatmul.mubr.f32.gmra.mxu0 %v7694
    %v7829 = vpop.f32.mrf.mxu0
    %v7830 = vadd.f32 0.0, %v7829
    %v7831 = vpop.f32.mrf.mxu0
    %7832 = vmatprep.mubr.f32.mxu0 0.0
    %7833 = vmatmul.mubr.f32.gmra.mxu0 %v7697
    %v7834 = vpop.f32.mrf.mxu0
    %v7835 = vadd.f32 0.0, %v7834
    %v7836 = vpop.f32.mrf.mxu0
    %7837 = vmatprep.mubr.f32.mxu0 0.0
    %7838 = vmatmul.mubr.f32.gmra.mxu0 %v7700
    %v7839 = vpop.f32.mrf.mxu0
    %v7840 = vadd.f32 0.0, %v7839
    %v7841 = vpop.f32.mrf.mxu0
    %7842 = vmatprep.mubr.f32.mxu0 0.0
    %7843 = vmatmul.mubr.f32.gmra.mxu0 %v7703
    %v7844 = vpop.f32.mrf.mxu0
    %v7845 = vadd.f32 0.0, %v7844
    %v7846 = vpop.f32.mrf.mxu0
    %7847 = vmatprep.mubr.f32.mxu0 0.0
    %7848 = vmatmul.mubr.f32.gmra.mxu0 %v7706
    %v7849 = vpop.f32.mrf.mxu0
    %v7850 = vadd.f32 0.0, %v7849
    %v7851 = vpop.f32.mrf.mxu0
    %7852 = vdwg.mxu0
    %v7853 = vadd.f32 %v7627, %v7775
    %v7854 = vadd.f32 %v7628, %v7780
    %v7855 = vadd.f32 %v7629, %v7785
    %v7856 = vadd.f32 %v7630, %v7790
    %v7857 = vadd.f32 %v7631, %v7795
    %v7858 = vadd.f32 %v7632, %v7800
    %v7859 = vadd.f32 %v7633, %v7805
    %v7860 = vadd.f32 %v7634, %v7810
    %v7861 = vadd.f32 %v7635, %v7815
    %v7862 = vadd.f32 %v7636, %v7820
    %v7863 = vadd.f32 %v7637, %v7825
    %v7864 = vadd.f32 %v7638, %v7830
    %v7865 = vadd.f32 %v7639, %v7835
    %v7866 = vadd.f32 %v7640, %v7840
    %v7867 = vadd.f32 %v7641, %v7845
    %v7868 = vadd.f32 %v7642, %v7850
    %v7869 = vld [vmem:[%s6800 + $0x1] sm:$0xff]
    %v7870 = vld [vmem:[%s6800 + $0x11] sm:$0xff]
    %v7871 = vld [vmem:[%s6800 + $0x21] sm:$0xff]
    %v7872 = vld [vmem:[%s6800 + $0x31] sm:$0xff]
    %v7873 = vld [vmem:[%s6800 + $0x41] sm:$0xff]
    %v7874 = vld [vmem:[%s6800 + $0x51] sm:$0xff]
    %v7875 = vld [vmem:[%s6800 + $0x61] sm:$0xff]
    %v7876 = vld [vmem:[%s6800 + $0x71] sm:$0xff]
    %v7877 = vld [vmem:[%s6800 + $0xa1] sm:$0xff]
    %v7878 = vld [vmem:[%s6800 + $0xb1] sm:$0xff]
    %v7879 = vld [vmem:[%s6800 + $0xc1] sm:$0xff]
    %v7880 = vld [vmem:[%s6800 + $0xd1] sm:$0xff]
    %v7881 = vld [vmem:[%s6800 + $0xe1] sm:$0xff]
    %v7882 = vld [vmem:[%s6800 + $0xf1] sm:$0xff]
    %v7883 = vld [vmem:[%s6800 + $0x101] sm:$0xff]
    %v7884 = vld [vmem:[%s6800 + $0x111] sm:$0xff]
    %v7885 = vld [vmem:[%s3 + $0x20] sm:$0xff]
    %v7887 = vsel %vm6694, %v7869, 0
    %v7890 = vsel %vm6694, %v7870, 0
    %v7893 = vsel %vm6694, %v7871, 0
    %v7896 = vsel %vm6694, %v7872, 0
    %v7899 = vsel %vm6694, %v7873, 0
    %v7902 = vsel %vm6694, %v7874, 0
    %v7905 = vsel %vm6694, %v7875, 0
    %v7908 = vsel %vm6694, %v7876, 0
    %v7911 = vsel %vm6694, %v7877, 0
    %v7914 = vsel %vm6694, %v7878, 0
    %v7917 = vsel %vm6694, %v7879, 0
    %v7920 = vsel %vm6694, %v7880, 0
    %v7923 = vsel %vm6694, %v7881, 0
    %v7926 = vsel %vm6694, %v7882, 0
    %v7929 = vsel %vm6694, %v7883, 0
    %v7932 = vsel %vm6694, %v7884, 0
    %7934 = vmatprep.subr.mxu0 0.0
    %7935 = vmatpush1.msra.mxu0 0.0
    %7936 = vmatprep.subr.mxu0 0.0
    %7937 = vmatpush1.msra.mxu0 0.0
    %7938 = vmatprep.subr.mxu0 0.0
    %7939 = vmatpush1.msra.mxu0 0.0
    %7940 = vmatprep.subr.mxu0 0.0
    %7941 = vmatpush1.msra.mxu0 0.0
    %7942 = vmatprep.subr.mxu0 0.0
    %7943 = vmatpush1.msra.mxu0 0.0
    %7944 = vmatprep.subr.mxu0 0.0
    %7945 = vmatpush1.msra.mxu0 0.0
    %7946 = vmatprep.subr.mxu0 0.0
    %7947 = vmatpush1.msra.mxu0 0.0
    %7948 = vmatprep.subr.mxu0 0.0
    %7949 = vmatpush1.msra.mxu0 0.0
    %7950 = vmatprep.subr.mxu0 0.0
    %7951 = vmatpush1.msra.mxu0 0.0
    %7952 = vmatprep.subr.mxu0 0.0
    %7953 = vmatpush1.msra.mxu0 0.0
    %7954 = vmatprep.subr.mxu0 0.0
    %7955 = vmatpush1.msra.mxu0 0.0
    %7956 = vmatprep.subr.mxu0 0.0
    %7957 = vmatpush1.msra.mxu0 0.0
    %7958 = vmatprep.subr.mxu0 0.0
    %7959 = vmatpush1.msra.mxu0 0.0
    %7960 = vmatprep.subr.mxu0 0.0
    %7961 = vmatpush1.msra.mxu0 0.0
    %7962 = vmatprep.subr.mxu0 0.0
    %7963 = vmatpush1.msra.mxu0 0.0
    %7964 = vmatprep.subr.mxu0 0.0
    %7965 = vmatpush1.msra.mxu0 %v7885
    %7966 = vmatprep.subr.mxu0 0.0
    %7967 = vmatpush2.msra.mxu0 0.0
    %7968 = vmatprep.subr.mxu0 0.0
    %7969 = vmatpush2.msra.mxu0 0.0
    %7970 = vmatprep.subr.mxu0 0.0
    %7971 = vmatpush2.msra.mxu0 0.0
    %7972 = vmatprep.subr.mxu0 0.0
    %7973 = vmatpush2.msra.mxu0 0.0
    %7974 = vmatprep.subr.mxu0 0.0
    %7975 = vmatpush2.msra.mxu0 0.0
    %7976 = vmatprep.subr.mxu0 0.0
    %7977 = vmatpush2.msra.mxu0 0.0
    %7978 = vmatprep.subr.mxu0 0.0
    %7979 = vmatpush2.msra.mxu0 0.0
    %7980 = vmatprep.subr.mxu0 0.0
    %7981 = vmatpush2.msra.mxu0 0.0
    %7982 = vmatprep.subr.mxu0 0.0
    %7983 = vmatpush2.msra.mxu0 0.0
    %7984 = vmatprep.subr.mxu0 0.0
    %7985 = vmatpush2.msra.mxu0 0.0
    %7986 = vmatprep.subr.mxu0 0.0
    %7987 = vmatpush2.msra.mxu0 0.0
    %7988 = vmatprep.subr.mxu0 0.0
    %7989 = vmatpush2.msra.mxu0 0.0
    %7990 = vmatprep.subr.mxu0 0.0
    %7991 = vmatpush2.msra.mxu0 0.0
    %7992 = vmatprep.subr.mxu0 0.0
    %7993 = vmatpush2.msra.mxu0 0.0
    %7994 = vmatprep.subr.mxu0 0.0
    %7995 = vmatpush2.msra.mxu0 0.0
    %7996 = vmatprep.subr.mxu0 0.0
    %7997 = vmatpush2.msra.mxu0 0.0
    %7998 = vmatprep.mubr.f32.mxu0 0.0
    %7999 = vmatmul.mubr.f32.gmra.mxu0 %v7887
    %v8000 = vpop.f32.mrf.mxu0
    %v8001 = vadd.f32 0.0, %v8000
    %v8002 = vpop.f32.mrf.mxu0
    %8003 = vmatprep.mubr.f32.mxu0 0.0
    %8004 = vmatmul.mubr.f32.gmra.mxu0 %v7890
    %v8005 = vpop.f32.mrf.mxu0
    %v8006 = vadd.f32 0.0, %v8005
    %v8007 = vpop.f32.mrf.mxu0
    %8008 = vmatprep.mubr.f32.mxu0 0.0
    %8009 = vmatmul.mubr.f32.gmra.mxu0 %v7893
    %v8010 = vpop.f32.mrf.mxu0
    %v8011 = vadd.f32 0.0, %v8010
    %v8012 = vpop.f32.mrf.mxu0
    %8013 = vmatprep.mubr.f32.mxu0 0.0
    %8014 = vmatmul.mubr.f32.gmra.mxu0 %v7896
    %v8015 = vpop.f32.mrf.mxu0
    %v8016 = vadd.f32 0.0, %v8015
    %v8017 = vpop.f32.mrf.mxu0
    %8018 = vmatprep.mubr.f32.mxu0 0.0
    %8019 = vmatmul.mubr.f32.gmra.mxu0 %v7899
    %v8020 = vpop.f32.mrf.mxu0
    %v8021 = vadd.f32 0.0, %v8020
    %v8022 = vpop.f32.mrf.mxu0
    %8023 = vmatprep.mubr.f32.mxu0 0.0
    %8024 = vmatmul.mubr.f32.gmra.mxu0 %v7902
    %v8025 = vpop.f32.mrf.mxu0
    %v8026 = vadd.f32 0.0, %v8025
    %v8027 = vpop.f32.mrf.mxu0
    %8028 = vmatprep.mubr.f32.mxu0 0.0
    %8029 = vmatmul.mubr.f32.gmra.mxu0 %v7905
    %v8030 = vpop.f32.mrf.mxu0
    %v8031 = vadd.f32 0.0, %v8030
    %v8032 = vpop.f32.mrf.mxu0
    %8033 = vmatprep.mubr.f32.mxu0 0.0
    %8034 = vmatmul.mubr.f32.gmra.mxu0 %v7908
    %v8035 = vpop.f32.mrf.mxu0
    %v8036 = vadd.f32 0.0, %v8035
    %v8037 = vpop.f32.mrf.mxu0
    %8038 = vmatprep.mubr.f32.mxu0 0.0
    %8039 = vmatmul.mubr.f32.gmra.mxu0 %v7911
    %v8040 = vpop.f32.mrf.mxu0
    %v8041 = vadd.f32 0.0, %v8040
    %v8042 = vpop.f32.mrf.mxu0
    %8043 = vmatprep.mubr.f32.mxu0 0.0
    %8044 = vmatmul.mubr.f32.gmra.mxu0 %v7914
    %v8045 = vpop.f32.mrf.mxu0
    %v8046 = vadd.f32 0.0, %v8045
    %v8047 = vpop.f32.mrf.mxu0
    %8048 = vmatprep.mubr.f32.mxu0 0.0
    %8049 = vmatmul.mubr.f32.gmra.mxu0 %v7917
    %v8050 = vpop.f32.mrf.mxu0
    %v8051 = vadd.f32 0.0, %v8050
    %v8052 = vpop.f32.mrf.mxu0
    %8053 = vmatprep.mubr.f32.mxu0 0.0
    %8054 = vmatmul.mubr.f32.gmra.mxu0 %v7920
    %v8055 = vpop.f32.mrf.mxu0
    %v8056 = vadd.f32 0.0, %v8055
    %v8057 = vpop.f32.mrf.mxu0
    %8058 = vmatprep.mubr.f32.mxu0 0.0
    %8059 = vmatmul.mubr.f32.gmra.mxu0 %v7923
    %v8060 = vpop.f32.mrf.mxu0
    %v8061 = vadd.f32 0.0, %v8060
    %v8062 = vpop.f32.mrf.mxu0
    %8063 = vmatprep.mubr.f32.mxu0 0.0
    %8064 = vmatmul.mubr.f32.gmra.mxu0 %v7926
    %v8065 = vpop.f32.mrf.mxu0
    %v8066 = vadd.f32 0.0, %v8065
    %v8067 = vpop.f32.mrf.mxu0
    %8068 = vmatprep.mubr.f32.mxu0 0.0
    %8069 = vmatmul.mubr.f32.gmra.mxu0 %v7929
    %v8070 = vpop.f32.mrf.mxu0
    %v8071 = vadd.f32 0.0, %v8070
    %v8072 = vpop.f32.mrf.mxu0
    %8073 = vmatprep.mubr.f32.mxu0 0.0
    %8074 = vmatmul.mubr.f32.gmra.mxu0 %v7932
    %v8075 = vpop.f32.mrf.mxu0
    %v8076 = vadd.f32 0.0, %v8075
    %v8077 = vpop.f32.mrf.mxu0
    %8078 = vdwg.mxu0
    %v8079 = vadd.f32 %v7853, %v8001
    %v8080 = vadd.f32 %v7854, %v8006
    %v8081 = vadd.f32 %v7855, %v8011
    %v8082 = vadd.f32 %v7856, %v8016
    %v8083 = vadd.f32 %v7857, %v8021
    %v8084 = vadd.f32 %v7858, %v8026
    %v8085 = vadd.f32 %v7859, %v8031
    %v8086 = vadd.f32 %v7860, %v8036
    %v8087 = vadd.f32 %v7861, %v8041
    %v8088 = vadd.f32 %v7862, %v8046
    %v8089 = vadd.f32 %v7863, %v8051
    %v8090 = vadd.f32 %v7864, %v8056
    %v8091 = vadd.f32 %v7865, %v8061
    %v8092 = vadd.f32 %v7866, %v8066
    %v8093 = vadd.f32 %v7867, %v8071
    %v8094 = vadd.f32 %v7868, %v8076
    %v8095 = vld [vmem:[%s6800 + $0x2] sm:$0xff]
    %v8096 = vld [vmem:[%s6800 + $0x12] sm:$0xff]
    %v8097 = vld [vmem:[%s6800 + $0x22] sm:$0xff]
    %v8098 = vld [vmem:[%s6800 + $0x32] sm:$0xff]
    %v8099 = vld [vmem:[%s6800 + $0x42] sm:$0xff]
    %v8100 = vld [vmem:[%s6800 + $0x52] sm:$0xff]
    %v8101 = vld [vmem:[%s6800 + $0x62] sm:$0xff]
    %v8102 = vld [vmem:[%s6800 + $0x72] sm:$0xff]
    %v8103 = vld [vmem:[%s6800 + $0xa2] sm:$0xff]
    %v8104 = vld [vmem:[%s6800 + $0xb2] sm:$0xff]
    %v8105 = vld [vmem:[%s6800 + $0xc2] sm:$0xff]
    %v8106 = vld [vmem:[%s6800 + $0xd2] sm:$0xff]
    %v8107 = vld [vmem:[%s6800 + $0xe2] sm:$0xff]
    %v8108 = vld [vmem:[%s6800 + $0xf2] sm:$0xff]
    %v8109 = vld [vmem:[%s6800 + $0x102] sm:$0xff]
    %v8110 = vld [vmem:[%s6800 + $0x112] sm:$0xff]
    %v8111 = vld [vmem:[%s3 + $0x28] sm:$0xff]
    %v8113 = vsel %vm6694, %v8095, 0
    %v8116 = vsel %vm6694, %v8096, 0
    %v8119 = vsel %vm6694, %v8097, 0
    %v8122 = vsel %vm6694, %v8098, 0
    %v8125 = vsel %vm6694, %v8099, 0
    %v8128 = vsel %vm6694, %v8100, 0
    %v8131 = vsel %vm6694, %v8101, 0
    %v8134 = vsel %vm6694, %v8102, 0
    %v8137 = vsel %vm6694, %v8103, 0
    %v8140 = vsel %vm6694, %v8104, 0
    %v8143 = vsel %vm6694, %v8105, 0
    %v8146 = vsel %vm6694, %v8106, 0
    %v8149 = vsel %vm6694, %v8107, 0
    %v8152 = vsel %vm6694, %v8108, 0
    %v8155 = vsel %vm6694, %v8109, 0
    %v8158 = vsel %vm6694, %v8110, 0
    %8160 = vmatprep.subr.mxu0 0.0
    %8161 = vmatpush1.msra.mxu0 0.0
    %8162 = vmatprep.subr.mxu0 0.0
    %8163 = vmatpush1.msra.mxu0 0.0
    %8164 = vmatprep.subr.mxu0 0.0
    %8165 = vmatpush1.msra.mxu0 0.0
    %8166 = vmatprep.subr.mxu0 0.0
    %8167 = vmatpush1.msra.mxu0 0.0
    %8168 = vmatprep.subr.mxu0 0.0
    %8169 = vmatpush1.msra.mxu0 0.0
    %8170 = vmatprep.subr.mxu0 0.0
    %8171 = vmatpush1.msra.mxu0 0.0
    %8172 = vmatprep.subr.mxu0 0.0
    %8173 = vmatpush1.msra.mxu0 0.0
    %8174 = vmatprep.subr.mxu0 0.0
    %8175 = vmatpush1.msra.mxu0 0.0
    %8176 = vmatprep.subr.mxu0 0.0
    %8177 = vmatpush1.msra.mxu0 0.0
    %8178 = vmatprep.subr.mxu0 0.0
    %8179 = vmatpush1.msra.mxu0 0.0
    %8180 = vmatprep.subr.mxu0 0.0
    %8181 = vmatpush1.msra.mxu0 0.0
    %8182 = vmatprep.subr.mxu0 0.0
    %8183 = vmatpush1.msra.mxu0 0.0
    %8184 = vmatprep.subr.mxu0 0.0
    %8185 = vmatpush1.msra.mxu0 0.0
    %8186 = vmatprep.subr.mxu0 0.0
    %8187 = vmatpush1.msra.mxu0 0.0
    %8188 = vmatprep.subr.mxu0 0.0
    %8189 = vmatpush1.msra.mxu0 0.0
    %8190 = vmatprep.subr.mxu0 0.0
    %8191 = vmatpush1.msra.mxu0 %v8111
    %8192 = vmatprep.subr.mxu0 0.0
    %8193 = vmatpush2.msra.mxu0 0.0
    %8194 = vmatprep.subr.mxu0 0.0
    %8195 = vmatpush2.msra.mxu0 0.0
    %8196 = vmatprep.subr.mxu0 0.0
    %8197 = vmatpush2.msra.mxu0 0.0
    %8198 = vmatprep.subr.mxu0 0.0
    %8199 = vmatpush2.msra.mxu0 0.0
    %8200 = vmatprep.subr.mxu0 0.0
    %8201 = vmatpush2.msra.mxu0 0.0
    %8202 = vmatprep.subr.mxu0 0.0
    %8203 = vmatpush2.msra.mxu0 0.0
    %8204 = vmatprep.subr.mxu0 0.0
    %8205 = vmatpush2.msra.mxu0 0.0
    %8206 = vmatprep.subr.mxu0 0.0
    %8207 = vmatpush2.msra.mxu0 0.0
    %8208 = vmatprep.subr.mxu0 0.0
    %8209 = vmatpush2.msra.mxu0 0.0
    %8210 = vmatprep.subr.mxu0 0.0
    %8211 = vmatpush2.msra.mxu0 0.0
    %8212 = vmatprep.subr.mxu0 0.0
    %8213 = vmatpush2.msra.mxu0 0.0
    %8214 = vmatprep.subr.mxu0 0.0
    %8215 = vmatpush2.msra.mxu0 0.0
    %8216 = vmatprep.subr.mxu0 0.0
    %8217 = vmatpush2.msra.mxu0 0.0
    %8218 = vmatprep.subr.mxu0 0.0
    %8219 = vmatpush2.msra.mxu0 0.0
    %8220 = vmatprep.subr.mxu0 0.0
    %8221 = vmatpush2.msra.mxu0 0.0
    %8222 = vmatprep.subr.mxu0 0.0
    %8223 = vmatpush2.msra.mxu0 0.0
    %8224 = vmatprep.mubr.f32.mxu0 0.0
    %8225 = vmatmul.mubr.f32.gmra.mxu0 %v8113
    %v8226 = vpop.f32.mrf.mxu0
    %v8227 = vadd.f32 0.0, %v8226
    %v8228 = vpop.f32.mrf.mxu0
    %8229 = vmatprep.mubr.f32.mxu0 0.0
    %8230 = vmatmul.mubr.f32.gmra.mxu0 %v8116
    %v8231 = vpop.f32.mrf.mxu0
    %v8232 = vadd.f32 0.0, %v8231
    %v8233 = vpop.f32.mrf.mxu0
    %8234 = vmatprep.mubr.f32.mxu0 0.0
    %8235 = vmatmul.mubr.f32.gmra.mxu0 %v8119
    %v8236 = vpop.f32.mrf.mxu0
    %v8237 = vadd.f32 0.0, %v8236
    %v8238 = vpop.f32.mrf.mxu0
    %8239 = vmatprep.mubr.f32.mxu0 0.0
    %8240 = vmatmul.mubr.f32.gmra.mxu0 %v8122
    %v8241 = vpop.f32.mrf.mxu0
    %v8242 = vadd.f32 0.0, %v8241
    %v8243 = vpop.f32.mrf.mxu0
    %8244 = vmatprep.mubr.f32.mxu0 0.0
    %8245 = vmatmul.mubr.f32.gmra.mxu0 %v8125
    %v8246 = vpop.f32.mrf.mxu0
    %v8247 = vadd.f32 0.0, %v8246
    %v8248 = vpop.f32.mrf.mxu0
    %8249 = vmatprep.mubr.f32.mxu0 0.0
    %8250 = vmatmul.mubr.f32.gmra.mxu0 %v8128
    %v8251 = vpop.f32.mrf.mxu0
    %v8252 = vadd.f32 0.0, %v8251
    %v8253 = vpop.f32.mrf.mxu0
    %8254 = vmatprep.mubr.f32.mxu0 0.0
    %8255 = vmatmul.mubr.f32.gmra.mxu0 %v8131
    %v8256 = vpop.f32.mrf.mxu0
    %v8257 = vadd.f32 0.0, %v8256
    %v8258 = vpop.f32.mrf.mxu0
    %8259 = vmatprep.mubr.f32.mxu0 0.0
    %8260 = vmatmul.mubr.f32.gmra.mxu0 %v8134
    %v8261 = vpop.f32.mrf.mxu0
    %v8262 = vadd.f32 0.0, %v8261
    %v8263 = vpop.f32.mrf.mxu0
    %8264 = vmatprep.mubr.f32.mxu0 0.0
    %8265 = vmatmul.mubr.f32.gmra.mxu0 %v8137
    %v8266 = vpop.f32.mrf.mxu0
    %v8267 = vadd.f32 0.0, %v8266
    %v8268 = vpop.f32.mrf.mxu0
    %8269 = vmatprep.mubr.f32.mxu0 0.0
    %8270 = vmatmul.mubr.f32.gmra.mxu0 %v8140
    %v8271 = vpop.f32.mrf.mxu0
    %v8272 = vadd.f32 0.0, %v8271
    %v8273 = vpop.f32.mrf.mxu0
    %8274 = vmatprep.mubr.f32.mxu0 0.0
    %8275 = vmatmul.mubr.f32.gmra.mxu0 %v8143
    %v8276 = vpop.f32.mrf.mxu0
    %v8277 = vadd.f32 0.0, %v8276
    %v8278 = vpop.f32.mrf.mxu0
    %8279 = vmatprep.mubr.f32.mxu0 0.0
    %8280 = vmatmul.mubr.f32.gmra.mxu0 %v8146
    %v8281 = vpop.f32.mrf.mxu0
    %v8282 = vadd.f32 0.0, %v8281
    %v8283 = vpop.f32.mrf.mxu0
    %8284 = vmatprep.mubr.f32.mxu0 0.0
    %8285 = vmatmul.mubr.f32.gmra.mxu0 %v8149
    %v8286 = vpop.f32.mrf.mxu0
    %v8287 = vadd.f32 0.0, %v8286
    %v8288 = vpop.f32.mrf.mxu0
    %8289 = vmatprep.mubr.f32.mxu0 0.0
    %8290 = vmatmul.mubr.f32.gmra.mxu0 %v8152
    %v8291 = vpop.f32.mrf.mxu0
    %v8292 = vadd.f32 0.0, %v8291
    %v8293 = vpop.f32.mrf.mxu0
    %8294 = vmatprep.mubr.f32.mxu0 0.0
    %8295 = vmatmul.mubr.f32.gmra.mxu0 %v8155
    %v8296 = vpop.f32.mrf.mxu0
    %v8297 = vadd.f32 0.0, %v8296
    %v8298 = vpop.f32.mrf.mxu0
    %8299 = vmatprep.mubr.f32.mxu0 0.0
    %8300 = vmatmul.mubr.f32.gmra.mxu0 %v8158
    %v8301 = vpop.f32.mrf.mxu0
    %v8302 = vadd.f32 0.0, %v8301
    %v8303 = vpop.f32.mrf.mxu0
    %8304 = vdwg.mxu0
    %v8305 = vadd.f32 %v8079, %v8227
    %v8306 = vadd.f32 %v8080, %v8232
    %v8307 = vadd.f32 %v8081, %v8237
    %v8308 = vadd.f32 %v8082, %v8242
    %v8309 = vadd.f32 %v8083, %v8247
    %v8310 = vadd.f32 %v8084, %v8252
    %v8311 = vadd.f32 %v8085, %v8257
    %v8312 = vadd.f32 %v8086, %v8262
    %v8313 = vadd.f32 %v8087, %v8267
    %v8314 = vadd.f32 %v8088, %v8272
    %v8315 = vadd.f32 %v8089, %v8277
    %v8316 = vadd.f32 %v8090, %v8282
    %v8317 = vadd.f32 %v8091, %v8287
    %v8318 = vadd.f32 %v8092, %v8292
    %v8319 = vadd.f32 %v8093, %v8297
    %v8320 = vadd.f32 %v8094, %v8302
    %s8321 = scalar_lea.vmem [#allocation3], 32
    %v8322 = vld [vmem:[%s8321] sm:$0xff]
    %v8323 = vld [vmem:[%s8321 + $0x10] sm:$0xff]
    %v8324 = vld [vmem:[%s8321 + $0x20] sm:$0xff]
    %v8325 = vld [vmem:[%s8321 + $0x30] sm:$0xff]
    %v8326 = vld [vmem:[%s8321 + $0x40] sm:$0xff]
    %v8327 = vld [vmem:[%s8321 + $0x50] sm:$0xff]
    %v8328 = vld [vmem:[%s8321 + $0x60] sm:$0xff]
    %v8329 = vld [vmem:[%s8321 + $0x70] sm:$0xff]
    %v8330 = vld [vmem:[%s8321 + $0xa0] sm:$0xff]
    %v8331 = vld [vmem:[%s8321 + $0xb0] sm:$0xff]
    %v8332 = vld [vmem:[%s8321 + $0xc0] sm:$0xff]
    %v8333 = vld [vmem:[%s8321 + $0xd0] sm:$0xff]
    %v8334 = vld [vmem:[%s8321 + $0xe0] sm:$0xff]
    %v8335 = vld [vmem:[%s8321 + $0xf0] sm:$0xff]
    %v8336 = vld [vmem:[%s8321 + $0x100] sm:$0xff]
    %v8337 = vld [vmem:[%s8321 + $0x110] sm:$0xff]
    %v8338 = vld [vmem:[%s3 + $0x30] sm:$0xff]
    %v8340 = vsel %vm6694, %v8322, 0
    %v8343 = vsel %vm6694, %v8323, 0
    %v8346 = vsel %vm6694, %v8324, 0
    %v8349 = vsel %vm6694, %v8325, 0
    %v8352 = vsel %vm6694, %v8326, 0
    %v8355 = vsel %vm6694, %v8327, 0
    %v8358 = vsel %vm6694, %v8328, 0
    %v8361 = vsel %vm6694, %v8329, 0
    %v8364 = vsel %vm6694, %v8330, 0
    %v8367 = vsel %vm6694, %v8331, 0
    %v8370 = vsel %vm6694, %v8332, 0
    %v8373 = vsel %vm6694, %v8333, 0
    %v8376 = vsel %vm6694, %v8334, 0
    %v8379 = vsel %vm6694, %v8335, 0
    %v8382 = vsel %vm6694, %v8336, 0
    %v8385 = vsel %vm6694, %v8337, 0
    %8387 = vmatprep.subr.mxu0 0.0
    %8388 = vmatpush1.msra.mxu0 0.0
    %8389 = vmatprep.subr.mxu0 0.0
    %8390 = vmatpush1.msra.mxu0 0.0
    %8391 = vmatprep.subr.mxu0 0.0
    %8392 = vmatpush1.msra.mxu0 0.0
    %8393 = vmatprep.subr.mxu0 0.0
    %8394 = vmatpush1.msra.mxu0 0.0
    %8395 = vmatprep.subr.mxu0 0.0
    %8396 = vmatpush1.msra.mxu0 0.0
    %8397 = vmatprep.subr.mxu0 0.0
    %8398 = vmatpush1.msra.mxu0 0.0
    %8399 = vmatprep.subr.mxu0 0.0
    %8400 = vmatpush1.msra.mxu0 0.0
    %8401 = vmatprep.subr.mxu0 0.0
    %8402 = vmatpush1.msra.mxu0 0.0
    %8403 = vmatprep.subr.mxu0 0.0
    %8404 = vmatpush1.msra.mxu0 0.0
    %8405 = vmatprep.subr.mxu0 0.0
    %8406 = vmatpush1.msra.mxu0 0.0
    %8407 = vmatprep.subr.mxu0 0.0
    %8408 = vmatpush1.msra.mxu0 0.0
    %8409 = vmatprep.subr.mxu0 0.0
    %8410 = vmatpush1.msra.mxu0 0.0
    %8411 = vmatprep.subr.mxu0 0.0
    %8412 = vmatpush1.msra.mxu0 0.0
    %8413 = vmatprep.subr.mxu0 0.0
    %8414 = vmatpush1.msra.mxu0 0.0
    %8415 = vmatprep.subr.mxu0 0.0
    %8416 = vmatpush1.msra.mxu0 0.0
    %8417 = vmatprep.subr.mxu0 0.0
    %8418 = vmatpush1.msra.mxu0 %v8338
    %8419 = vmatprep.subr.mxu0 0.0
    %8420 = vmatpush2.msra.mxu0 0.0
    %8421 = vmatprep.subr.mxu0 0.0
    %8422 = vmatpush2.msra.mxu0 0.0
    %8423 = vmatprep.subr.mxu0 0.0
    %8424 = vmatpush2.msra.mxu0 0.0
    %8425 = vmatprep.subr.mxu0 0.0
    %8426 = vmatpush2.msra.mxu0 0.0
    %8427 = vmatprep.subr.mxu0 0.0
    %8428 = vmatpush2.msra.mxu0 0.0
    %8429 = vmatprep.subr.mxu0 0.0
    %8430 = vmatpush2.msra.mxu0 0.0
    %8431 = vmatprep.subr.mxu0 0.0
    %8432 = vmatpush2.msra.mxu0 0.0
    %8433 = vmatprep.subr.mxu0 0.0
    %8434 = vmatpush2.msra.mxu0 0.0
    %8435 = vmatprep.subr.mxu0 0.0
    %8436 = vmatpush2.msra.mxu0 0.0
    %8437 = vmatprep.subr.mxu0 0.0
    %8438 = vmatpush2.msra.mxu0 0.0
    %8439 = vmatprep.subr.mxu0 0.0
    %8440 = vmatpush2.msra.mxu0 0.0
    %8441 = vmatprep.subr.mxu0 0.0
    %8442 = vmatpush2.msra.mxu0 0.0
    %8443 = vmatprep.subr.mxu0 0.0
    %8444 = vmatpush2.msra.mxu0 0.0
    %8445 = vmatprep.subr.mxu0 0.0
    %8446 = vmatpush2.msra.mxu0 0.0
    %8447 = vmatprep.subr.mxu0 0.0
    %8448 = vmatpush2.msra.mxu0 0.0
    %8449 = vmatprep.subr.mxu0 0.0
    %8450 = vmatpush2.msra.mxu0 0.0
    %8451 = vmatprep.mubr.f32.mxu0 0.0
    %8452 = vmatmul.mubr.f32.gmra.mxu0 %v8340
    %v8453 = vpop.f32.mrf.mxu0
    %v8454 = vadd.f32 0.0, %v8453
    %v8455 = vpop.f32.mrf.mxu0
    %8456 = vmatprep.mubr.f32.mxu0 0.0
    %8457 = vmatmul.mubr.f32.gmra.mxu0 %v8343
    %v8458 = vpop.f32.mrf.mxu0
    %v8459 = vadd.f32 0.0, %v8458
    %v8460 = vpop.f32.mrf.mxu0
    %8461 = vmatprep.mubr.f32.mxu0 0.0
    %8462 = vmatmul.mubr.f32.gmra.mxu0 %v8346
    %v8463 = vpop.f32.mrf.mxu0
    %v8464 = vadd.f32 0.0, %v8463
    %v8465 = vpop.f32.mrf.mxu0
    %8466 = vmatprep.mubr.f32.mxu0 0.0
    %8467 = vmatmul.mubr.f32.gmra.mxu0 %v8349
    %v8468 = vpop.f32.mrf.mxu0
    %v8469 = vadd.f32 0.0, %v8468
    %v8470 = vpop.f32.mrf.mxu0
    %8471 = vmatprep.mubr.f32.mxu0 0.0
    %8472 = vmatmul.mubr.f32.gmra.mxu0 %v8352
    %v8473 = vpop.f32.mrf.mxu0
    %v8474 = vadd.f32 0.0, %v8473
    %v8475 = vpop.f32.mrf.mxu0
    %8476 = vmatprep.mubr.f32.mxu0 0.0
    %8477 = vmatmul.mubr.f32.gmra.mxu0 %v8355
    %v8478 = vpop.f32.mrf.mxu0
    %v8479 = vadd.f32 0.0, %v8478
    %v8480 = vpop.f32.mrf.mxu0
    %8481 = vmatprep.mubr.f32.mxu0 0.0
    %8482 = vmatmul.mubr.f32.gmra.mxu0 %v8358
    %v8483 = vpop.f32.mrf.mxu0
    %v8484 = vadd.f32 0.0, %v8483
    %v8485 = vpop.f32.mrf.mxu0
    %8486 = vmatprep.mubr.f32.mxu0 0.0
    %8487 = vmatmul.mubr.f32.gmra.mxu0 %v8361
    %v8488 = vpop.f32.mrf.mxu0
    %v8489 = vadd.f32 0.0, %v8488
    %v8490 = vpop.f32.mrf.mxu0
    %8491 = vmatprep.mubr.f32.mxu0 0.0
    %8492 = vmatmul.mubr.f32.gmra.mxu0 %v8364
    %v8493 = vpop.f32.mrf.mxu0
    %v8494 = vadd.f32 0.0, %v8493
    %v8495 = vpop.f32.mrf.mxu0
    %8496 = vmatprep.mubr.f32.mxu0 0.0
    %8497 = vmatmul.mubr.f32.gmra.mxu0 %v8367
    %v8498 = vpop.f32.mrf.mxu0
    %v8499 = vadd.f32 0.0, %v8498
    %v8500 = vpop.f32.mrf.mxu0
    %8501 = vmatprep.mubr.f32.mxu0 0.0
    %8502 = vmatmul.mubr.f32.gmra.mxu0 %v8370
    %v8503 = vpop.f32.mrf.mxu0
    %v8504 = vadd.f32 0.0, %v8503
    %v8505 = vpop.f32.mrf.mxu0
    %8506 = vmatprep.mubr.f32.mxu0 0.0
    %8507 = vmatmul.mubr.f32.gmra.mxu0 %v8373
    %v8508 = vpop.f32.mrf.mxu0
    %v8509 = vadd.f32 0.0, %v8508
    %v8510 = vpop.f32.mrf.mxu0
    %8511 = vmatprep.mubr.f32.mxu0 0.0
    %8512 = vmatmul.mubr.f32.gmra.mxu0 %v8376
    %v8513 = vpop.f32.mrf.mxu0
    %v8514 = vadd.f32 0.0, %v8513
    %v8515 = vpop.f32.mrf.mxu0
    %8516 = vmatprep.mubr.f32.mxu0 0.0
    %8517 = vmatmul.mubr.f32.gmra.mxu0 %v8379
    %v8518 = vpop.f32.mrf.mxu0
    %v8519 = vadd.f32 0.0, %v8518
    %v8520 = vpop.f32.mrf.mxu0
    %8521 = vmatprep.mubr.f32.mxu0 0.0
    %8522 = vmatmul.mubr.f32.gmra.mxu0 %v8382
    %v8523 = vpop.f32.mrf.mxu0
    %v8524 = vadd.f32 0.0, %v8523
    %v8525 = vpop.f32.mrf.mxu0
    %8526 = vmatprep.mubr.f32.mxu0 0.0
    %8527 = vmatmul.mubr.f32.gmra.mxu0 %v8385
    %v8528 = vpop.f32.mrf.mxu0
    %v8529 = vadd.f32 0.0, %v8528
    %v8530 = vpop.f32.mrf.mxu0
    %8531 = vdwg.mxu0
    %v8532 = vadd.f32 %v8305, %v8454
    %v8533 = vadd.f32 %v8306, %v8459
    %v8534 = vadd.f32 %v8307, %v8464
    %v8535 = vadd.f32 %v8308, %v8469
    %v8536 = vadd.f32 %v8309, %v8474
    %v8537 = vadd.f32 %v8310, %v8479
    %v8538 = vadd.f32 %v8311, %v8484
    %v8539 = vadd.f32 %v8312, %v8489
    %v8540 = vadd.f32 %v8313, %v8494
    %v8541 = vadd.f32 %v8314, %v8499
    %v8542 = vadd.f32 %v8315, %v8504
    %v8543 = vadd.f32 %v8316, %v8509
    %v8544 = vadd.f32 %v8317, %v8514
    %v8545 = vadd.f32 %v8318, %v8519
    %v8546 = vadd.f32 %v8319, %v8524
    %v8547 = vadd.f32 %v8320, %v8529
    %v8548 = vld [vmem:[%s8321 + $0x1] sm:$0xff]
    %v8549 = vld [vmem:[%s8321 + $0x11] sm:$0xff]
    %v8550 = vld [vmem:[%s8321 + $0x21] sm:$0xff]
    %v8551 = vld [vmem:[%s8321 + $0x31] sm:$0xff]
    %v8552 = vld [vmem:[%s8321 + $0x41] sm:$0xff]
    %v8553 = vld [vmem:[%s8321 + $0x51] sm:$0xff]
    %v8554 = vld [vmem:[%s8321 + $0x61] sm:$0xff]
    %v8555 = vld [vmem:[%s8321 + $0x71] sm:$0xff]
    %v8556 = vld [vmem:[%s8321 + $0xa1] sm:$0xff]
    %v8557 = vld [vmem:[%s8321 + $0xb1] sm:$0xff]
    %v8558 = vld [vmem:[%s8321 + $0xc1] sm:$0xff]
    %v8559 = vld [vmem:[%s8321 + $0xd1] sm:$0xff]
    %v8560 = vld [vmem:[%s8321 + $0xe1] sm:$0xff]
    %v8561 = vld [vmem:[%s8321 + $0xf1] sm:$0xff]
    %v8562 = vld [vmem:[%s8321 + $0x101] sm:$0xff]
    %v8563 = vld [vmem:[%s8321 + $0x111] sm:$0xff]
    %v8564 = vld [vmem:[%s3 + $0x38] sm:$0xff]
    %v8566 = vsel %vm6694, %v8548, 0
    %v8569 = vsel %vm6694, %v8549, 0
    %v8572 = vsel %vm6694, %v8550, 0
    %v8575 = vsel %vm6694, %v8551, 0
    %v8578 = vsel %vm6694, %v8552, 0
    %v8581 = vsel %vm6694, %v8553, 0
    %v8584 = vsel %vm6694, %v8554, 0
    %v8587 = vsel %vm6694, %v8555, 0
    %v8590 = vsel %vm6694, %v8556, 0
    %v8593 = vsel %vm6694, %v8557, 0
    %v8596 = vsel %vm6694, %v8558, 0
    %v8599 = vsel %vm6694, %v8559, 0
    %v8602 = vsel %vm6694, %v8560, 0
    %v8605 = vsel %vm6694, %v8561, 0
    %v8608 = vsel %vm6694, %v8562, 0
    %v8611 = vsel %vm6694, %v8563, 0
    %8613 = vmatprep.subr.mxu0 0.0
    %8614 = vmatpush1.msra.mxu0 0.0
    %8615 = vmatprep.subr.mxu0 0.0
    %8616 = vmatpush1.msra.mxu0 0.0
    %8617 = vmatprep.subr.mxu0 0.0
    %8618 = vmatpush1.msra.mxu0 0.0
    %8619 = vmatprep.subr.mxu0 0.0
    %8620 = vmatpush1.msra.mxu0 0.0
    %8621 = vmatprep.subr.mxu0 0.0
    %8622 = vmatpush1.msra.mxu0 0.0
    %8623 = vmatprep.subr.mxu0 0.0
    %8624 = vmatpush1.msra.mxu0 0.0
    %8625 = vmatprep.subr.mxu0 0.0
    %8626 = vmatpush1.msra.mxu0 0.0
    %8627 = vmatprep.subr.mxu0 0.0
    %8628 = vmatpush1.msra.mxu0 0.0
    %8629 = vmatprep.subr.mxu0 0.0
    %8630 = vmatpush1.msra.mxu0 0.0
    %8631 = vmatprep.subr.mxu0 0.0
    %8632 = vmatpush1.msra.mxu0 0.0
    %8633 = vmatprep.subr.mxu0 0.0
    %8634 = vmatpush1.msra.mxu0 0.0
    %8635 = vmatprep.subr.mxu0 0.0
    %8636 = vmatpush1.msra.mxu0 0.0
    %8637 = vmatprep.subr.mxu0 0.0
    %8638 = vmatpush1.msra.mxu0 0.0
    %8639 = vmatprep.subr.mxu0 0.0
    %8640 = vmatpush1.msra.mxu0 0.0
    %8641 = vmatprep.subr.mxu0 0.0
    %8642 = vmatpush1.msra.mxu0 0.0
    %8643 = vmatprep.subr.mxu0 0.0
    %8644 = vmatpush1.msra.mxu0 %v8564
    %8645 = vmatprep.subr.mxu0 0.0
    %8646 = vmatpush2.msra.mxu0 0.0
    %8647 = vmatprep.subr.mxu0 0.0
    %8648 = vmatpush2.msra.mxu0 0.0
    %8649 = vmatprep.subr.mxu0 0.0
    %8650 = vmatpush2.msra.mxu0 0.0
    %8651 = vmatprep.subr.mxu0 0.0
    %8652 = vmatpush2.msra.mxu0 0.0
    %8653 = vmatprep.subr.mxu0 0.0
    %8654 = vmatpush2.msra.mxu0 0.0
    %8655 = vmatprep.subr.mxu0 0.0
    %8656 = vmatpush2.msra.mxu0 0.0
    %8657 = vmatprep.subr.mxu0 0.0
    %8658 = vmatpush2.msra.mxu0 0.0
    %8659 = vmatprep.subr.mxu0 0.0
    %8660 = vmatpush2.msra.mxu0 0.0
    %8661 = vmatprep.subr.mxu0 0.0
    %8662 = vmatpush2.msra.mxu0 0.0
    %8663 = vmatprep.subr.mxu0 0.0
    %8664 = vmatpush2.msra.mxu0 0.0
    %8665 = vmatprep.subr.mxu0 0.0
    %8666 = vmatpush2.msra.mxu0 0.0
    %8667 = vmatprep.subr.mxu0 0.0
    %8668 = vmatpush2.msra.mxu0 0.0
    %8669 = vmatprep.subr.mxu0 0.0
    %8670 = vmatpush2.msra.mxu0 0.0
    %8671 = vmatprep.subr.mxu0 0.0
    %8672 = vmatpush2.msra.mxu0 0.0
    %8673 = vmatprep.subr.mxu0 0.0
    %8674 = vmatpush2.msra.mxu0 0.0
    %8675 = vmatprep.subr.mxu0 0.0
    %8676 = vmatpush2.msra.mxu0 0.0
    %8677 = vmatprep.mubr.f32.mxu0 0.0
    %8678 = vmatmul.mubr.f32.gmra.mxu0 %v8566
    %v8679 = vpop.f32.mrf.mxu0
    %v8680 = vadd.f32 0.0, %v8679
    %v8681 = vpop.f32.mrf.mxu0
    %8682 = vmatprep.mubr.f32.mxu0 0.0
    %8683 = vmatmul.mubr.f32.gmra.mxu0 %v8569
    %v8684 = vpop.f32.mrf.mxu0
    %v8685 = vadd.f32 0.0, %v8684
    %v8686 = vpop.f32.mrf.mxu0
    %8687 = vmatprep.mubr.f32.mxu0 0.0
    %8688 = vmatmul.mubr.f32.gmra.mxu0 %v8572
    %v8689 = vpop.f32.mrf.mxu0
    %v8690 = vadd.f32 0.0, %v8689
    %v8691 = vpop.f32.mrf.mxu0
    %8692 = vmatprep.mubr.f32.mxu0 0.0
    %8693 = vmatmul.mubr.f32.gmra.mxu0 %v8575
    %v8694 = vpop.f32.mrf.mxu0
    %v8695 = vadd.f32 0.0, %v8694
    %v8696 = vpop.f32.mrf.mxu0
    %8697 = vmatprep.mubr.f32.mxu0 0.0
    %8698 = vmatmul.mubr.f32.gmra.mxu0 %v8578
    %v8699 = vpop.f32.mrf.mxu0
    %v8700 = vadd.f32 0.0, %v8699
    %v8701 = vpop.f32.mrf.mxu0
    %8702 = vmatprep.mubr.f32.mxu0 0.0
    %8703 = vmatmul.mubr.f32.gmra.mxu0 %v8581
    %v8704 = vpop.f32.mrf.mxu0
    %v8705 = vadd.f32 0.0, %v8704
    %v8706 = vpop.f32.mrf.mxu0
    %8707 = vmatprep.mubr.f32.mxu0 0.0
    %8708 = vmatmul.mubr.f32.gmra.mxu0 %v8584
    %v8709 = vpop.f32.mrf.mxu0
    %v8710 = vadd.f32 0.0, %v8709
    %v8711 = vpop.f32.mrf.mxu0
    %8712 = vmatprep.mubr.f32.mxu0 0.0
    %8713 = vmatmul.mubr.f32.gmra.mxu0 %v8587
    %v8714 = vpop.f32.mrf.mxu0
    %v8715 = vadd.f32 0.0, %v8714
    %v8716 = vpop.f32.mrf.mxu0
    %8717 = vmatprep.mubr.f32.mxu0 0.0
    %8718 = vmatmul.mubr.f32.gmra.mxu0 %v8590
    %v8719 = vpop.f32.mrf.mxu0
    %v8720 = vadd.f32 0.0, %v8719
    %v8721 = vpop.f32.mrf.mxu0
    %8722 = vmatprep.mubr.f32.mxu0 0.0
    %8723 = vmatmul.mubr.f32.gmra.mxu0 %v8593
    %v8724 = vpop.f32.mrf.mxu0
    %v8725 = vadd.f32 0.0, %v8724
    %v8726 = vpop.f32.mrf.mxu0
    %8727 = vmatprep.mubr.f32.mxu0 0.0
    %8728 = vmatmul.mubr.f32.gmra.mxu0 %v8596
    %v8729 = vpop.f32.mrf.mxu0
    %v8730 = vadd.f32 0.0, %v8729
    %v8731 = vpop.f32.mrf.mxu0
    %8732 = vmatprep.mubr.f32.mxu0 0.0
    %8733 = vmatmul.mubr.f32.gmra.mxu0 %v8599
    %v8734 = vpop.f32.mrf.mxu0
    %v8735 = vadd.f32 0.0, %v8734
    %v8736 = vpop.f32.mrf.mxu0
    %8737 = vmatprep.mubr.f32.mxu0 0.0
    %8738 = vmatmul.mubr.f32.gmra.mxu0 %v8602
    %v8739 = vpop.f32.mrf.mxu0
    %v8740 = vadd.f32 0.0, %v8739
    %v8741 = vpop.f32.mrf.mxu0
    %8742 = vmatprep.mubr.f32.mxu0 0.0
    %8743 = vmatmul.mubr.f32.gmra.mxu0 %v8605
    %v8744 = vpop.f32.mrf.mxu0
    %v8745 = vadd.f32 0.0, %v8744
    %v8746 = vpop.f32.mrf.mxu0
    %8747 = vmatprep.mubr.f32.mxu0 0.0
    %8748 = vmatmul.mubr.f32.gmra.mxu0 %v8608
    %v8749 = vpop.f32.mrf.mxu0
    %v8750 = vadd.f32 0.0, %v8749
    %v8751 = vpop.f32.mrf.mxu0
    %8752 = vmatprep.mubr.f32.mxu0 0.0
    %8753 = vmatmul.mubr.f32.gmra.mxu0 %v8611
    %v8754 = vpop.f32.mrf.mxu0
    %v8755 = vadd.f32 0.0, %v8754
    %v8756 = vpop.f32.mrf.mxu0
    %8757 = vdwg.mxu0
    %v8758 = vadd.f32 %v8532, %v8680
    %v8759 = vadd.f32 %v8533, %v8685
    %v8760 = vadd.f32 %v8534, %v8690
    %v8761 = vadd.f32 %v8535, %v8695
    %v8762 = vadd.f32 %v8536, %v8700
    %v8763 = vadd.f32 %v8537, %v8705
    %v8764 = vadd.f32 %v8538, %v8710
    %v8765 = vadd.f32 %v8539, %v8715
    %v8766 = vadd.f32 %v8540, %v8720
    %v8767 = vadd.f32 %v8541, %v8725
    %v8768 = vadd.f32 %v8542, %v8730
    %v8769 = vadd.f32 %v8543, %v8735
    %v8770 = vadd.f32 %v8544, %v8740
    %v8771 = vadd.f32 %v8545, %v8745
    %v8772 = vadd.f32 %v8546, %v8750
    %v8773 = vadd.f32 %v8547, %v8755
    %v8774 = vld [vmem:[%s8321 + $0x2] sm:$0xff]
    %v8775 = vld [vmem:[%s8321 + $0x12] sm:$0xff]
    %v8776 = vld [vmem:[%s8321 + $0x22] sm:$0xff]
    %v8777 = vld [vmem:[%s8321 + $0x32] sm:$0xff]
    %v8778 = vld [vmem:[%s8321 + $0x42] sm:$0xff]
    %v8779 = vld [vmem:[%s8321 + $0x52] sm:$0xff]
    %v8780 = vld [vmem:[%s8321 + $0x62] sm:$0xff]
    %v8781 = vld [vmem:[%s8321 + $0x72] sm:$0xff]
    %v8782 = vld [vmem:[%s8321 + $0xa2] sm:$0xff]
    %v8783 = vld [vmem:[%s8321 + $0xb2] sm:$0xff]
    %v8784 = vld [vmem:[%s8321 + $0xc2] sm:$0xff]
    %v8785 = vld [vmem:[%s8321 + $0xd2] sm:$0xff]
    %v8786 = vld [vmem:[%s8321 + $0xe2] sm:$0xff]
    %v8787 = vld [vmem:[%s8321 + $0xf2] sm:$0xff]
    %v8788 = vld [vmem:[%s8321 + $0x102] sm:$0xff]
    %v8789 = vld [vmem:[%s8321 + $0x112] sm:$0xff]
    %v8790 = vld [vmem:[%s3 + $0x40] sm:$0xff]
    %v8792 = vsel %vm6694, %v8774, 0
    %v8795 = vsel %vm6694, %v8775, 0
    %v8798 = vsel %vm6694, %v8776, 0
    %v8801 = vsel %vm6694, %v8777, 0
    %v8804 = vsel %vm6694, %v8778, 0
    %v8807 = vsel %vm6694, %v8779, 0
    %v8810 = vsel %vm6694, %v8780, 0
    %v8813 = vsel %vm6694, %v8781, 0
    %v8816 = vsel %vm6694, %v8782, 0
    %v8819 = vsel %vm6694, %v8783, 0
    %v8822 = vsel %vm6694, %v8784, 0
    %v8825 = vsel %vm6694, %v8785, 0
    %v8828 = vsel %vm6694, %v8786, 0
    %v8831 = vsel %vm6694, %v8787, 0
    %v8834 = vsel %vm6694, %v8788, 0
    %v8837 = vsel %vm6694, %v8789, 0
    %8839 = vmatprep.subr.mxu0 0.0
    %8840 = vmatpush1.msra.mxu0 0.0
    %8841 = vmatprep.subr.mxu0 0.0
    %8842 = vmatpush1.msra.mxu0 0.0
    %8843 = vmatprep.subr.mxu0 0.0
    %8844 = vmatpush1.msra.mxu0 0.0
    %8845 = vmatprep.subr.mxu0 0.0
    %8846 = vmatpush1.msra.mxu0 0.0
    %8847 = vmatprep.subr.mxu0 0.0
    %8848 = vmatpush1.msra.mxu0 0.0
    %8849 = vmatprep.subr.mxu0 0.0
    %8850 = vmatpush1.msra.mxu0 0.0
    %8851 = vmatprep.subr.mxu0 0.0
    %8852 = vmatpush1.msra.mxu0 0.0
    %8853 = vmatprep.subr.mxu0 0.0
    %8854 = vmatpush1.msra.mxu0 0.0
    %8855 = vmatprep.subr.mxu0 0.0
    %8856 = vmatpush1.msra.mxu0 0.0
    %8857 = vmatprep.subr.mxu0 0.0
    %8858 = vmatpush1.msra.mxu0 0.0
    %8859 = vmatprep.subr.mxu0 0.0
    %8860 = vmatpush1.msra.mxu0 0.0
    %8861 = vmatprep.subr.mxu0 0.0
    %8862 = vmatpush1.msra.mxu0 0.0
    %8863 = vmatprep.subr.mxu0 0.0
    %8864 = vmatpush1.msra.mxu0 0.0
    %8865 = vmatprep.subr.mxu0 0.0
    %8866 = vmatpush1.msra.mxu0 0.0
    %8867 = vmatprep.subr.mxu0 0.0
    %8868 = vmatpush1.msra.mxu0 0.0
    %8869 = vmatprep.subr.mxu0 0.0
    %8870 = vmatpush1.msra.mxu0 %v8790
    %8871 = vmatprep.subr.mxu0 0.0
    %8872 = vmatpush2.msra.mxu0 0.0
    %8873 = vmatprep.subr.mxu0 0.0
    %8874 = vmatpush2.msra.mxu0 0.0
    %8875 = vmatprep.subr.mxu0 0.0
    %8876 = vmatpush2.msra.mxu0 0.0
    %8877 = vmatprep.subr.mxu0 0.0
    %8878 = vmatpush2.msra.mxu0 0.0
    %8879 = vmatprep.subr.mxu0 0.0
    %8880 = vmatpush2.msra.mxu0 0.0
    %8881 = vmatprep.subr.mxu0 0.0
    %8882 = vmatpush2.msra.mxu0 0.0
    %8883 = vmatprep.subr.mxu0 0.0
    %8884 = vmatpush2.msra.mxu0 0.0
    %8885 = vmatprep.subr.mxu0 0.0
    %8886 = vmatpush2.msra.mxu0 0.0
    %8887 = vmatprep.subr.mxu0 0.0
    %8888 = vmatpush2.msra.mxu0 0.0
    %8889 = vmatprep.subr.mxu0 0.0
    %8890 = vmatpush2.msra.mxu0 0.0
    %8891 = vmatprep.subr.mxu0 0.0
    %8892 = vmatpush2.msra.mxu0 0.0
    %8893 = vmatprep.subr.mxu0 0.0
    %8894 = vmatpush2.msra.mxu0 0.0
    %8895 = vmatprep.subr.mxu0 0.0
    %8896 = vmatpush2.msra.mxu0 0.0
    %8897 = vmatprep.subr.mxu0 0.0
    %8898 = vmatpush2.msra.mxu0 0.0
    %8899 = vmatprep.subr.mxu0 0.0
    %8900 = vmatpush2.msra.mxu0 0.0
    %8901 = vmatprep.subr.mxu0 0.0
    %8902 = vmatpush2.msra.mxu0 0.0
    %8903 = vmatprep.mubr.f32.mxu0 0.0
    %8904 = vmatmul.mubr.f32.gmra.mxu0 %v8792
    %v8905 = vpop.f32.mrf.mxu0
    %v8906 = vadd.f32 0.0, %v8905
    %v8907 = vpop.f32.mrf.mxu0
    %8908 = vmatprep.mubr.f32.mxu0 0.0
    %8909 = vmatmul.mubr.f32.gmra.mxu0 %v8795
    %v8910 = vpop.f32.mrf.mxu0
    %v8911 = vadd.f32 0.0, %v8910
    %v8912 = vpop.f32.mrf.mxu0
    %8913 = vmatprep.mubr.f32.mxu0 0.0
    %8914 = vmatmul.mubr.f32.gmra.mxu0 %v8798
    %v8915 = vpop.f32.mrf.mxu0
    %v8916 = vadd.f32 0.0, %v8915
    %v8917 = vpop.f32.mrf.mxu0
    %8918 = vmatprep.mubr.f32.mxu0 0.0
    %8919 = vmatmul.mubr.f32.gmra.mxu0 %v8801
    %v8920 = vpop.f32.mrf.mxu0
    %v8921 = vadd.f32 0.0, %v8920
    %v8922 = vpop.f32.mrf.mxu0
    %8923 = vmatprep.mubr.f32.mxu0 0.0
    %8924 = vmatmul.mubr.f32.gmra.mxu0 %v8804
    %v8925 = vpop.f32.mrf.mxu0
    %v8926 = vadd.f32 0.0, %v8925
    %v8927 = vpop.f32.mrf.mxu0
    %8928 = vmatprep.mubr.f32.mxu0 0.0
    %8929 = vmatmul.mubr.f32.gmra.mxu0 %v8807
    %v8930 = vpop.f32.mrf.mxu0
    %v8931 = vadd.f32 0.0, %v8930
    %v8932 = vpop.f32.mrf.mxu0
    %8933 = vmatprep.mubr.f32.mxu0 0.0
    %8934 = vmatmul.mubr.f32.gmra.mxu0 %v8810
    %v8935 = vpop.f32.mrf.mxu0
    %v8936 = vadd.f32 0.0, %v8935
    %v8937 = vpop.f32.mrf.mxu0
    %8938 = vmatprep.mubr.f32.mxu0 0.0
    %8939 = vmatmul.mubr.f32.gmra.mxu0 %v8813
    %v8940 = vpop.f32.mrf.mxu0
    %v8941 = vadd.f32 0.0, %v8940
    %v8942 = vpop.f32.mrf.mxu0
    %8943 = vmatprep.mubr.f32.mxu0 0.0
    %8944 = vmatmul.mubr.f32.gmra.mxu0 %v8816
    %v8945 = vpop.f32.mrf.mxu0
    %v8946 = vadd.f32 0.0, %v8945
    %v8947 = vpop.f32.mrf.mxu0
    %8948 = vmatprep.mubr.f32.mxu0 0.0
    %8949 = vmatmul.mubr.f32.gmra.mxu0 %v8819
    %v8950 = vpop.f32.mrf.mxu0
    %v8951 = vadd.f32 0.0, %v8950
    %v8952 = vpop.f32.mrf.mxu0
    %8953 = vmatprep.mubr.f32.mxu0 0.0
    %8954 = vmatmul.mubr.f32.gmra.mxu0 %v8822
    %v8955 = vpop.f32.mrf.mxu0
    %v8956 = vadd.f32 0.0, %v8955
    %v8957 = vpop.f32.mrf.mxu0
    %8958 = vmatprep.mubr.f32.mxu0 0.0
    %8959 = vmatmul.mubr.f32.gmra.mxu0 %v8825
    %v8960 = vpop.f32.mrf.mxu0
    %v8961 = vadd.f32 0.0, %v8960
    %v8962 = vpop.f32.mrf.mxu0
    %8963 = vmatprep.mubr.f32.mxu0 0.0
    %8964 = vmatmul.mubr.f32.gmra.mxu0 %v8828
    %v8965 = vpop.f32.mrf.mxu0
    %v8966 = vadd.f32 0.0, %v8965
    %v8967 = vpop.f32.mrf.mxu0
    %8968 = vmatprep.mubr.f32.mxu0 0.0
    %8969 = vmatmul.mubr.f32.gmra.mxu0 %v8831
    %v8970 = vpop.f32.mrf.mxu0
    %v8971 = vadd.f32 0.0, %v8970
    %v8972 = vpop.f32.mrf.mxu0
    %8973 = vmatprep.mubr.f32.mxu0 0.0
    %8974 = vmatmul.mubr.f32.gmra.mxu0 %v8834
    %v8975 = vpop.f32.mrf.mxu0
    %v8976 = vadd.f32 0.0, %v8975
    %v8977 = vpop.f32.mrf.mxu0
    %8978 = vmatprep.mubr.f32.mxu0 0.0
    %8979 = vmatmul.mubr.f32.gmra.mxu0 %v8837
    %v8980 = vpop.f32.mrf.mxu0
    %v8981 = vadd.f32 0.0, %v8980
    %v8982 = vpop.f32.mrf.mxu0
    %8983 = vdwg.mxu0
    %v8984 = vadd.f32 %v8758, %v8906
    %v8985 = vadd.f32 %v8759, %v8911
    %v8986 = vadd.f32 %v8760, %v8916
    %v8987 = vadd.f32 %v8761, %v8921
    %v8988 = vadd.f32 %v8762, %v8926
    %v8989 = vadd.f32 %v8763, %v8931
    %v8990 = vadd.f32 %v8764, %v8936
    %v8991 = vadd.f32 %v8765, %v8941
    %v8992 = vadd.f32 %v8766, %v8946
    %v8993 = vadd.f32 %v8767, %v8951
    %v8994 = vadd.f32 %v8768, %v8956
    %v8995 = vadd.f32 %v8769, %v8961
    %v8996 = vadd.f32 %v8770, %v8966
    %v8997 = vadd.f32 %v8771, %v8971
    %v8998 = vadd.f32 %v8772, %v8976
    %v8999 = vadd.f32 %v8773, %v8981
    %v9000 = vld [vmem:[%s4] sm:$0x1]
    %v9002 = vlaneseq
    %v9003 = vshrl.u32 %v9002, 7
    %v9004 = vsub.s32 0, %v9003
    %v9005 = vrot.slane %v9000, %v9004
    %v9007 = vadd.f32 %v8984, %v9005
    %v9008 = vadd.f32 %v8985, %v9005
    %v9009 = vadd.f32 %v8986, %v9005
    %v9010 = vadd.f32 %v8987, %v9005
    %v9011 = vadd.f32 %v8988, %v9005
    %v9012 = vadd.f32 %v8989, %v9005
    %v9013 = vadd.f32 %v8990, %v9005
    %v9014 = vadd.f32 %v8991, %v9005
    %v9015 = vadd.f32 %v8992, %v9005
    %v9016 = vadd.f32 %v8993, %v9005
    %v9017 = vadd.f32 %v8994, %v9005
    %v9018 = vadd.f32 %v8995, %v9005
    %v9019 = vadd.f32 %v8996, %v9005
    %v9020 = vadd.f32 %v8997, %v9005
    %v9021 = vadd.f32 %v8998, %v9005
    %v9022 = vadd.f32 %v8999, %v9005
    %v9023 = vmax.f32 %v9007, 0.0
    %v9024 = vmax.f32 %v9008, 0.0
    %v9025 = vmax.f32 %v9009, 0.0
    %v9026 = vmax.f32 %v9010, 0.0
    %v9027 = vmax.f32 %v9011, 0.0
    %v9028 = vmax.f32 %v9012, 0.0
    %v9029 = vmax.f32 %v9013, 0.0
    %v9030 = vmax.f32 %v9014, 0.0
    %v9031 = vmax.f32 %v9015, 0.0
    %v9032 = vmax.f32 %v9016, 0.0
    %v9033 = vmax.f32 %v9017, 0.0
    %v9034 = vmax.f32 %v9018, 0.0
    %v9035 = vmax.f32 %v9019, 0.0
    %v9036 = vmax.f32 %v9020, 0.0
    %v9037 = vmax.f32 %v9021, 0.0
    %v9038 = vmax.f32 %v9022, 0.0
    %v9039 = vmax.f32 %v9023, %v9024
    %v9040 = vmax.f32 %v9025, %v9026
    %v9041 = vmax.f32 %v9027, %v9028
    %v9042 = vmax.f32 %v9029, %v9030
    %v9043 = vmax.f32 %v9031, %v9032
    %v9044 = vmax.f32 %v9033, %v9034
    %v9045 = vmax.f32 %v9035, %v9036
    %v9046 = vmax.f32 %v9037, %v9038
    %v9049 = vrot.slane %v9039, 1
    %v9050 = vrot.slane %v9043, 1
    %v9053 = vmax.f32 %v9039, %v9049
    %v9054 = vmax.f32 %v9043, %v9050
    %v9058 = vunpack.c.l.s4 1983009808
    %v9059 = vunpack.c.0.s8 %v9058
    %v9060 = vlaneseq
    %v9061 = vshrl.u32 %v9060, 7
    %v9062 = vsub.s32 %v9059, %v9061
    %v9063 = vrot.slane %v9053, %v9062
    %v9065 = vunpack.c.l.s4 1983009808
    %v9066 = vunpack.c.0.s8 %v9065
    %v9067 = vlaneseq
    %v9068 = vshrl.u32 %v9067, 7
    %v9069 = vsub.s32 %v9066, %v9068
    %v9070 = vrot.slane %v9054, %v9069
    %vm9071 = vcmask 1044484
    %v9072 = vsel %vm9071, %v9063, %v9063
    %vm9073 = vcmask 1046534
    %v9074 = vsel %vm9073, %v9063, %v9072
    %v9075 = vrot.slane %v9070, 7
    %vm9076 = vcmask 1041409
    %v9077 = vsel %vm9076, %v9075, %v9074
    %vm9078 = vcmask 1043459
    %v9079 = vsel %vm9078, %v9075, %v9077
    %vm9080 = vcmask 1045509
    %v9081 = vsel %vm9080, %v9075, %v9079
    %vm9082 = vcmask 1047559
    %v9083 = vsel %vm9082, %v9075, %v9081
    %vm9085 = vcmask 123904
    %9086 = vst.msk [vmem:[#allocation4] sm:$0x3] %vm9085, %v9083
    %v9087 = vcombine.high %v9063, %v9063
    %v9088 = vcombine.high %v9070, %v9070
    %v9089 = vsel %vm9071, %v9087, %v9087
    %v9090 = vsel %vm9073, %v9087, %v9089
    %v9091 = vrot.slane %v9088, 7
    %v9092 = vsel %vm9076, %v9091, %v9090
    %v9093 = vsel %vm9078, %v9091, %v9092
    %v9094 = vsel %vm9080, %v9091, %v9093
    %v9095 = vsel %vm9082, %v9091, %v9094
    %9096 = vrot.lane.b32.xlu0 %v9095, 16
    %v9097 = vpop.permute.xlu0 %9096
    %vm9099 = vcmask 255104
    %9100 = vst.msk [vmem:[#allocation4] sm:$0x3] %vm9099, %v9097
    %v9101 = vcombine.high %v9053, %v9053
    %v9103 = vunpack.c.l.s4 1983009808
    %v9104 = vunpack.c.0.s8 %v9103
    %v9105 = vlaneseq
    %v9106 = vshrl.u32 %v9105, 7
    %v9107 = vsub.s32 %v9104, %v9106
    %v9108 = vrot.slane %v9101, %v9107
    %v9109 = vcombine.high %v9054, %v9054
    %v9111 = vunpack.c.l.s4 1983009808
    %v9112 = vunpack.c.0.s8 %v9111
    %v9113 = vlaneseq
    %v9114 = vshrl.u32 %v9113, 7
    %v9115 = vsub.s32 %v9112, %v9114
    %v9116 = vrot.slane %v9109, %v9115
    %v9117 = vsel %vm9071, %v9108, %v9108
    %v9118 = vsel %vm9073, %v9108, %v9117
    %v9119 = vrot.slane %v9116, 7
    %v9120 = vsel %vm9076, %v9119, %v9118
    %v9121 = vsel %vm9078, %v9119, %v9120
    %v9122 = vsel %vm9080, %v9119, %v9121
    %v9123 = vsel %vm9082, %v9119, %v9122
    %9124 = vrot.lane.b32.xlu0 %v9123, 32
    %v9125 = vpop.permute.xlu0 %9124
    %vm9127 = vcmask 386304
    %9128 = vst.msk [vmem:[#allocation4] sm:$0x3] %vm9127, %v9125
    %v9129 = vcombine.high %v9108, %v9108
    %v9130 = vcombine.high %v9116, %v9116
    %v9131 = vsel %vm9071, %v9129, %v9129
    %v9132 = vsel %vm9073, %v9129, %v9131
    %v9133 = vrot.slane %v9130, 7
    %v9134 = vsel %vm9076, %v9133, %v9132
    %v9135 = vsel %vm9078, %v9133, %v9134
    %v9136 = vsel %vm9080, %v9133, %v9135
    %v9137 = vsel %vm9082, %v9133, %v9136
    %9138 = vrot.lane.b32.xlu0 %v9137, 48
    %v9139 = vpop.permute.xlu0 %9138
    %vm9141 = vcmask 517504
    %9142 = vst.msk [vmem:[#allocation4] sm:$0x3] %vm9141, %v9139
    %v9145 = vrot.slane %v9040, 1
    %v9146 = vrot.slane %v9044, 1
    %v9149 = vmax.f32 %v9040, %v9145
    %v9150 = vmax.f32 %v9044, %v9146
    %v9154 = vunpack.c.l.s4 1983009808
    %v9155 = vunpack.c.0.s8 %v9154
    %v9156 = vlaneseq
    %v9157 = vshrl.u32 %v9156, 7
    %v9158 = vsub.s32 %v9155, %v9157
    %v9159 = vrot.slane %v9149, %v9158
    %v9161 = vunpack.c.l.s4 1983009808
    %v9162 = vunpack.c.0.s8 %v9161
    %v9163 = vlaneseq
    %v9164 = vshrl.u32 %v9163, 7
    %v9165 = vsub.s32 %v9162, %v9164
    %v9166 = vrot.slane %v9150, %v9165
    %v9167 = vsel %vm9071, %v9159, %v9159
    %v9168 = vsel %vm9073, %v9159, %v9167
    %v9169 = vrot.slane %v9166, 7
    %v9170 = vsel %vm9076, %v9169, %v9168
    %v9171 = vsel %vm9078, %v9169, %v9170
    %v9172 = vsel %vm9080, %v9169, %v9171
    %v9173 = vsel %vm9082, %v9169, %v9172
    %9174 = vrot.lane.b32.xlu0 %v9173, 64
    %v9175 = vpop.permute.xlu0 %9174
    %vm9177 = vcmask 648704
    %9178 = vst.msk [vmem:[#allocation4] sm:$0x3] %vm9177, %v9175
    %v9179 = vcombine.high %v9159, %v9159
    %v9180 = vcombine.high %v9166, %v9166
    %v9181 = vsel %vm9071, %v9179, %v9179
    %v9182 = vsel %vm9073, %v9179, %v9181
    %v9183 = vrot.slane %v9180, 7
    %v9184 = vsel %vm9076, %v9183, %v9182
    %v9185 = vsel %vm9078, %v9183, %v9184
    %v9186 = vsel %vm9080, %v9183, %v9185
    %v9187 = vsel %vm9082, %v9183, %v9186
    %9188 = vrot.lane.b32.xlu0 %v9187, 80
    %v9189 = vpop.permute.xlu0 %9188
    %vm9191 = vcmask 779904
    %9192 = vst.msk [vmem:[#allocation4] sm:$0x3] %vm9191, %v9189
    %v9193 = vcombine.high %v9149, %v9149
    %v9195 = vunpack.c.l.s4 1983009808
    %v9196 = vunpack.c.0.s8 %v9195
    %v9197 = vlaneseq
    %v9198 = vshrl.u32 %v9197, 7
    %v9199 = vsub.s32 %v9196, %v9198
    %v9200 = vrot.slane %v9193, %v9199
    %v9201 = vcombine.high %v9150, %v9150
    %v9203 = vunpack.c.l.s4 1983009808
    %v9204 = vunpack.c.0.s8 %v9203
    %v9205 = vlaneseq
    %v9206 = vshrl.u32 %v9205, 7
    %v9207 = vsub.s32 %v9204, %v9206
    %v9208 = vrot.slane %v9201, %v9207
    %v9209 = vsel %vm9071, %v9200, %v9200
    %v9210 = vsel %vm9073, %v9200, %v9209
    %v9211 = vrot.slane %v9208, 7
    %v9212 = vsel %vm9076, %v9211, %v9210
    %v9213 = vsel %vm9078, %v9211, %v9212
    %v9214 = vsel %vm9080, %v9211, %v9213
    %v9215 = vsel %vm9082, %v9211, %v9214
    %9216 = vrot.lane.b32.xlu0 %v9215, 96
    %v9217 = vpop.permute.xlu0 %9216
    %vm9219 = vcmask 911104
    %9220 = vst.msk [vmem:[#allocation4] sm:$0x3] %vm9219, %v9217
    %v9221 = vcombine.high %v9200, %v9200
    %v9222 = vcombine.high %v9208, %v9208
    %v9223 = vsel %vm9071, %v9221, %v9221
    %v9224 = vsel %vm9073, %v9221, %v9223
    %v9225 = vrot.slane %v9222, 7
    %v9226 = vsel %vm9076, %v9225, %v9224
    %v9227 = vsel %vm9078, %v9225, %v9226
    %v9228 = vsel %vm9080, %v9225, %v9227
    %v9229 = vsel %vm9082, %v9225, %v9228
    %9230 = vrot.lane.b32.xlu0 %v9229, 112
    %v9231 = vpop.permute.xlu0 %9230
    %vm9233 = vcmask 1042304
    %9234 = vst.msk [vmem:[#allocation4] sm:$0x3] %vm9233, %v9231
    %v9237 = vrot.slane %v9041, 1
    %v9238 = vrot.slane %v9045, 1
    %v9241 = vmax.f32 %v9041, %v9237
    %v9242 = vmax.f32 %v9045, %v9238
    %v9246 = vunpack.c.l.s4 1983009808
    %v9247 = vunpack.c.0.s8 %v9246
    %v9248 = vlaneseq
    %v9249 = vshrl.u32 %v9248, 7
    %v9250 = vsub.s32 %v9247, %v9249
    %v9251 = vrot.slane %v9241, %v9250
    %v9253 = vunpack.c.l.s4 1983009808
    %v9254 = vunpack.c.0.s8 %v9253
    %v9255 = vlaneseq
    %v9256 = vshrl.u32 %v9255, 7
    %v9257 = vsub.s32 %v9254, %v9256
    %v9258 = vrot.slane %v9242, %v9257
    %v9259 = vsel %vm9071, %v9251, %v9251
    %v9260 = vsel %vm9073, %v9251, %v9259
    %v9261 = vrot.slane %v9258, 7
    %v9262 = vsel %vm9076, %v9261, %v9260
    %v9263 = vsel %vm9078, %v9261, %v9262
    %v9264 = vsel %vm9080, %v9261, %v9263
    %v9265 = vsel %vm9082, %v9261, %v9264
    %9267 = vst.msk [vmem:[#allocation4 + $0x2] sm:$0x3] %vm9085, %v9265
    %v9268 = vcombine.high %v9251, %v9251
    %v9269 = vcombine.high %v9258, %v9258
    %v9270 = vsel %vm9071, %v9268, %v9268
    %v9271 = vsel %vm9073, %v9268, %v9270
    %v9272 = vrot.slane %v9269, 7
    %v9273 = vsel %vm9076, %v9272, %v9271
    %v9274 = vsel %vm9078, %v9272, %v9273
    %v9275 = vsel %vm9080, %v9272, %v9274
    %v9276 = vsel %vm9082, %v9272, %v9275
    %9277 = vrot.lane.b32.xlu0 %v9276, 16
    %v9278 = vpop.permute.xlu0 %9277
    %9280 = vst.msk [vmem:[#allocation4 + $0x2] sm:$0x3] %vm9099, %v9278
    %v9281 = vcombine.high %v9241, %v9241
    %v9283 = vunpack.c.l.s4 1983009808
    %v9284 = vunpack.c.0.s8 %v9283
    %v9285 = vlaneseq
    %v9286 = vshrl.u32 %v9285, 7
    %v9287 = vsub.s32 %v9284, %v9286
    %v9288 = vrot.slane %v9281, %v9287
    %v9289 = vcombine.high %v9242, %v9242
    %v9291 = vunpack.c.l.s4 1983009808
    %v9292 = vunpack.c.0.s8 %v9291
    %v9293 = vlaneseq
    %v9294 = vshrl.u32 %v9293, 7
    %v9295 = vsub.s32 %v9292, %v9294
    %v9296 = vrot.slane %v9289, %v9295
    %v9297 = vsel %vm9071, %v9288, %v9288
    %v9298 = vsel %vm9073, %v9288, %v9297
    %v9299 = vrot.slane %v9296, 7
    %v9300 = vsel %vm9076, %v9299, %v9298
    %v9301 = vsel %vm9078, %v9299, %v9300
    %v9302 = vsel %vm9080, %v9299, %v9301
    %v9303 = vsel %vm9082, %v9299, %v9302
    %9304 = vrot.lane.b32.xlu0 %v9303, 32
    %v9305 = vpop.permute.xlu0 %9304
    %9307 = vst.msk [vmem:[#allocation4 + $0x2] sm:$0x3] %vm9127, %v9305
    %v9308 = vcombine.high %v9288, %v9288
    %v9309 = vcombine.high %v9296, %v9296
    %v9310 = vsel %vm9071, %v9308, %v9308
    %v9311 = vsel %vm9073, %v9308, %v9310
    %v9312 = vrot.slane %v9309, 7
    %v9313 = vsel %vm9076, %v9312, %v9311
    %v9314 = vsel %vm9078, %v9312, %v9313
    %v9315 = vsel %vm9080, %v9312, %v9314
    %v9316 = vsel %vm9082, %v9312, %v9315
    %9317 = vrot.lane.b32.xlu0 %v9316, 48
    %v9318 = vpop.permute.xlu0 %9317
    %9320 = vst.msk [vmem:[#allocation4 + $0x2] sm:$0x3] %vm9141, %v9318
    %v9323 = vrot.slane %v9042, 1
    %v9324 = vrot.slane %v9046, 1
    %v9327 = vmax.f32 %v9042, %v9323
    %v9328 = vmax.f32 %v9046, %v9324
    %v9332 = vunpack.c.l.s4 1983009808
    %v9333 = vunpack.c.0.s8 %v9332
    %v9334 = vlaneseq
    %v9335 = vshrl.u32 %v9334, 7
    %v9336 = vsub.s32 %v9333, %v9335
    %v9337 = vrot.slane %v9327, %v9336
    %v9339 = vunpack.c.l.s4 1983009808
    %v9340 = vunpack.c.0.s8 %v9339
    %v9341 = vlaneseq
    %v9342 = vshrl.u32 %v9341, 7
    %v9343 = vsub.s32 %v9340, %v9342
    %v9344 = vrot.slane %v9328, %v9343
    %v9345 = vsel %vm9071, %v9337, %v9337
    %v9346 = vsel %vm9073, %v9337, %v9345
    %v9347 = vrot.slane %v9344, 7
    %v9348 = vsel %vm9076, %v9347, %v9346
    %v9349 = vsel %vm9078, %v9347, %v9348
    %v9350 = vsel %vm9080, %v9347, %v9349
    %v9351 = vsel %vm9082, %v9347, %v9350
    %9352 = vrot.lane.b32.xlu0 %v9351, 64
    %v9353 = vpop.permute.xlu0 %9352
    %9355 = vst.msk [vmem:[#allocation4 + $0x2] sm:$0x3] %vm9177, %v9353
    %v9356 = vcombine.high %v9337, %v9337
    %v9357 = vcombine.high %v9344, %v9344
    %v9358 = vsel %vm9071, %v9356, %v9356
    %v9359 = vsel %vm9073, %v9356, %v9358
    %v9360 = vrot.slane %v9357, 7
    %v9361 = vsel %vm9076, %v9360, %v9359
    %v9362 = vsel %vm9078, %v9360, %v9361
    %v9363 = vsel %vm9080, %v9360, %v9362
    %v9364 = vsel %vm9082, %v9360, %v9363
    %9365 = vrot.lane.b32.xlu0 %v9364, 80
    %v9366 = vpop.permute.xlu0 %9365
    %9368 = vst.msk [vmem:[#allocation4 + $0x2] sm:$0x3] %vm9191, %v9366
    %v9369 = vcombine.high %v9327, %v9327
    %v9371 = vunpack.c.l.s4 1983009808
    %v9372 = vunpack.c.0.s8 %v9371
    %v9373 = vlaneseq
    %v9374 = vshrl.u32 %v9373, 7
    %v9375 = vsub.s32 %v9372, %v9374
    %v9376 = vrot.slane %v9369, %v9375
    %v9377 = vcombine.high %v9328, %v9328
    %v9379 = vunpack.c.l.s4 1983009808
    %v9380 = vunpack.c.0.s8 %v9379
    %v9381 = vlaneseq
    %v9382 = vshrl.u32 %v9381, 7
    %v9383 = vsub.s32 %v9380, %v9382
    %v9384 = vrot.slane %v9377, %v9383
    %v9385 = vsel %vm9071, %v9376, %v9376
    %v9386 = vsel %vm9073, %v9376, %v9385
    %v9387 = vrot.slane %v9384, 7
    %v9388 = vsel %vm9076, %v9387, %v9386
    %v9389 = vsel %vm9078, %v9387, %v9388
    %v9390 = vsel %vm9080, %v9387, %v9389
    %v9391 = vsel %vm9082, %v9387, %v9390
    %9392 = vrot.lane.b32.xlu0 %v9391, 96
    %v9393 = vpop.permute.xlu0 %9392
    %9395 = vst.msk [vmem:[#allocation4 + $0x2] sm:$0x3] %vm9219, %v9393
    %v9396 = vcombine.high %v9376, %v9376
    %v9397 = vcombine.high %v9384, %v9384
    %v9398 = vsel %vm9071, %v9396, %v9396
    %v9399 = vsel %vm9073, %v9396, %v9398
    %v9400 = vrot.slane %v9397, 7
    %v9401 = vsel %vm9076, %v9400, %v9399
    %v9402 = vsel %vm9078, %v9400, %v9401
    %v9403 = vsel %vm9080, %v9400, %v9402
    %v9404 = vsel %vm9082, %v9400, %v9403
    %9405 = vrot.lane.b32.xlu0 %v9404, 112
    %v9406 = vpop.permute.xlu0 %9405
    %9408 = vst.msk [vmem:[#allocation4 + $0x2] sm:$0x3] %vm9233, %v9406
    %v9409 = vld [vmem:[#allocation4] sm:$0xf]
    %v9410 = vld [vmem:[%s5] sm:$0xff]
    %v9411 = vld [vmem:[%s5 + $0x8] sm:$0xff]
    %v9412 = vld [vmem:[%s5 + $0x10] sm:$0xff]
    %v9413 = vld [vmem:[%s5 + $0x18] sm:$0xff]
    %v9414 = vld [vmem:[%s5 + $0x20] sm:$0xff]
    %v9415 = vld [vmem:[%s5 + $0x28] sm:$0xff]
    %v9416 = vld [vmem:[%s5 + $0x30] sm:$0xff]
    %v9417 = vld [vmem:[%s5 + $0x38] sm:$0xff]
    %v9418 = vld [vmem:[%s5 + $0x40] sm:$0xff]
    %v9419 = vld [vmem:[%s5 + $0x48] sm:$0xff]
    %v9420 = vld [vmem:[%s5 + $0x50] sm:$0xff]
    %v9421 = vld [vmem:[%s5 + $0x58] sm:$0xff]
    %v9422 = vld [vmem:[%s5 + $0x60] sm:$0xff]
    %v9423 = vld [vmem:[%s5 + $0x68] sm:$0xff]
    %v9424 = vld [vmem:[%s5 + $0x70] sm:$0xff]
    %v9425 = vld [vmem:[%s5 + $0x78] sm:$0xff]
    %v9426 = vld [vmem:[%s5 + $0x80] sm:$0xff]
    %v9427 = vld [vmem:[%s5 + $0x88] sm:$0xff]
    %v9428 = vld [vmem:[%s5 + $0x90] sm:$0xff]
    %v9429 = vld [vmem:[%s5 + $0x98] sm:$0xff]
    %v9430 = vld [vmem:[%s5 + $0xa0] sm:$0xff]
    %v9431 = vld [vmem:[%s5 + $0xa8] sm:$0xff]
    %v9432 = vld [vmem:[%s5 + $0xb0] sm:$0xff]
    %v9433 = vld [vmem:[%s5 + $0xb8] sm:$0xff]
    %v9434 = vld [vmem:[%s5 + $0xc0] sm:$0xff]
    %v9435 = vld [vmem:[%s5 + $0xc8] sm:$0xff]
    %v9436 = vld [vmem:[%s5 + $0xd0] sm:$0xff]
    %v9437 = vld [vmem:[%s5 + $0xd8] sm:$0xff]
    %v9438 = vld [vmem:[%s5 + $0xe0] sm:$0xff]
    %v9439 = vld [vmem:[%s5 + $0xe8] sm:$0xff]
    %v9440 = vld [vmem:[%s5 + $0xf0] sm:$0xff]
    %v9441 = vld [vmem:[%s5 + $0xf8] sm:$0xff]
    %v9442 = vld [vmem:[%s6] sm:$0x1]
    %v9444 = vlaneseq
    %v9445 = vshrl.u32 %v9444, 7
    %v9446 = vsub.s32 0, %v9445
    %v9447 = vrot.slane %v9442, %v9446
    %v9451 = vunpack.c.l.s4 1983009808
    %v9452 = vunpack.c.0.s8 %v9451
    %v9453 = vlaneseq
    %v9454 = vshrl.u32 %v9453, 7
    %v9455 = vsub.s32 %v9452, %v9454
    %v9456 = vrot.slane %v9409, %v9455
    %v9457 = vcombine.high %v9456, %v9456
    %9460 = vmatprep.subr.mxu0 0.0
    %9461 = vmatpush1.msra.mxu0 %v9425
    %9462 = vmatprep.subr.mxu0 0.0
    %9463 = vmatpush1.msra.mxu0 %v9424
    %9464 = vmatprep.subr.mxu0 0.0
    %9465 = vmatpush1.msra.mxu0 %v9423
    %9466 = vmatprep.subr.mxu0 0.0
    %9467 = vmatpush1.msra.mxu0 %v9422
    %9468 = vmatprep.subr.mxu0 0.0
    %9469 = vmatpush1.msra.mxu0 %v9421
    %9470 = vmatprep.subr.mxu0 0.0
    %9471 = vmatpush1.msra.mxu0 %v9420
    %9472 = vmatprep.subr.mxu0 0.0
    %9473 = vmatpush1.msra.mxu0 %v9419
    %9474 = vmatprep.subr.mxu0 0.0
    %9475 = vmatpush1.msra.mxu0 %v9418
    %9476 = vmatprep.subr.mxu0 0.0
    %9477 = vmatpush1.msra.mxu0 %v9417
    %9478 = vmatprep.subr.mxu0 0.0
    %9479 = vmatpush1.msra.mxu0 %v9416
    %9480 = vmatprep.subr.mxu0 0.0
    %9481 = vmatpush1.msra.mxu0 %v9415
    %9482 = vmatprep.subr.mxu0 0.0
    %9483 = vmatpush1.msra.mxu0 %v9414
    %9484 = vmatprep.subr.mxu0 0.0
    %9485 = vmatpush1.msra.mxu0 %v9413
    %9486 = vmatprep.subr.mxu0 0.0
    %9487 = vmatpush1.msra.mxu0 %v9412
    %9488 = vmatprep.subr.mxu0 0.0
    %9489 = vmatpush1.msra.mxu0 %v9411
    %9490 = vmatprep.subr.mxu0 0.0
    %9491 = vmatpush1.msra.mxu0 %v9410
    %9492 = vmatprep.subr.mxu0 0.0
    %9493 = vmatpush2.msra.mxu0 %v9441
    %9494 = vmatprep.subr.mxu0 0.0
    %9495 = vmatpush2.msra.mxu0 %v9440
    %9496 = vmatprep.subr.mxu0 0.0
    %9497 = vmatpush2.msra.mxu0 %v9439
    %9498 = vmatprep.subr.mxu0 0.0
    %9499 = vmatpush2.msra.mxu0 %v9438
    %9500 = vmatprep.subr.mxu0 0.0
    %9501 = vmatpush2.msra.mxu0 %v9437
    %9502 = vmatprep.subr.mxu0 0.0
    %9503 = vmatpush2.msra.mxu0 %v9436
    %9504 = vmatprep.subr.mxu0 0.0
    %9505 = vmatpush2.msra.mxu0 %v9435
    %9506 = vmatprep.subr.mxu0 0.0
    %9507 = vmatpush2.msra.mxu0 %v9434
    %9508 = vmatprep.subr.mxu0 0.0
    %9509 = vmatpush2.msra.mxu0 %v9433
    %9510 = vmatprep.subr.mxu0 0.0
    %9511 = vmatpush2.msra.mxu0 %v9432
    %9512 = vmatprep.subr.mxu0 0.0
    %9513 = vmatpush2.msra.mxu0 %v9431
    %9514 = vmatprep.subr.mxu0 0.0
    %9515 = vmatpush2.msra.mxu0 %v9430
    %9516 = vmatprep.subr.mxu0 0.0
    %9517 = vmatpush2.msra.mxu0 %v9429
    %9518 = vmatprep.subr.mxu0 0.0
    %9519 = vmatpush2.msra.mxu0 %v9428
    %9520 = vmatprep.subr.mxu0 0.0
    %9521 = vmatpush2.msra.mxu0 %v9427
    %9522 = vmatprep.subr.mxu0 0.0
    %9523 = vmatpush2.msra.mxu0 %v9426
    %9524 = vmatprep.mubr.f32.mxu0 %v9457
    %9525 = vmatmul.mubr.f32.gmra.mxu0 %v9456
    %v9526 = vpop.f32.mrf.mxu0
    %v9527 = vadd.f32 %v9447, %v9526
    %v9528 = vpop.f32.mrf.mxu0
    %9529 = vdwg.mxu0
    %v9530 = vmax.f32 %v9527, 0.0
    %v9531 = vld [vmem:[%s7] sm:$0xff]
    %v9532 = vld [vmem:[%s7 + $0x8] sm:$0xff]
    %v9533 = vld [vmem:[%s7 + $0x10] sm:$0xff]
    %v9534 = vld [vmem:[%s7 + $0x18] sm:$0xff]
    %v9535 = vld [vmem:[%s8] sm:$0x1]
    %v9537 = vlaneseq
    %v9538 = vshrl.u32 %v9537, 7
    %v9539 = vsub.s32 0, %v9538
    %v9540 = vrot.slane %v9535, %v9539
    %vm9542 = vcmask 261120
    %v9544 = vsel %vm9542, %v9530, 0
    %9546 = vmatprep.subr.mxu0 0.0
    %9547 = vmatpush1.msra.mxu0 0.0
    %9548 = vmatprep.subr.mxu0 0.0
    %9549 = vmatpush1.msra.mxu0 0.0
    %9550 = vmatprep.subr.mxu0 0.0
    %9551 = vmatpush1.msra.mxu0 0.0
    %9552 = vmatprep.subr.mxu0 0.0
    %9553 = vmatpush1.msra.mxu0 0.0
    %9554 = vmatprep.subr.mxu0 0.0
    %9555 = vmatpush1.msra.mxu0 0.0
    %9556 = vmatprep.subr.mxu0 0.0
    %9557 = vmatpush1.msra.mxu0 0.0
    %9558 = vmatprep.subr.mxu0 0.0
    %9559 = vmatpush1.msra.mxu0 0.0
    %9560 = vmatprep.subr.mxu0 0.0
    %9561 = vmatpush1.msra.mxu0 0.0
    %9562 = vmatprep.subr.mxu0 0.0
    %9563 = vmatpush1.msra.mxu0 0.0
    %9564 = vmatprep.subr.mxu0 0.0
    %9565 = vmatpush1.msra.mxu0 0.0
    %9566 = vmatprep.subr.mxu0 0.0
    %9567 = vmatpush1.msra.mxu0 0.0
    %9568 = vmatprep.subr.mxu0 0.0
    %9569 = vmatpush1.msra.mxu0 0.0
    %9570 = vmatprep.subr.mxu0 0.0
    %9571 = vmatpush1.msra.mxu0 %v9534
    %9572 = vmatprep.subr.mxu0 0.0
    %9573 = vmatpush1.msra.mxu0 %v9533
    %9574 = vmatprep.subr.mxu0 0.0
    %9575 = vmatpush1.msra.mxu0 %v9532
    %9576 = vmatprep.subr.mxu0 0.0
    %9577 = vmatpush1.msra.mxu0 %v9531
    %9578 = vmatprep.subr.mxu0 0.0
    %9579 = vmatpush2.msra.mxu0 0.0
    %9580 = vmatprep.subr.mxu0 0.0
    %9581 = vmatpush2.msra.mxu0 0.0
    %9582 = vmatprep.subr.mxu0 0.0
    %9583 = vmatpush2.msra.mxu0 0.0
    %9584 = vmatprep.subr.mxu0 0.0
    %9585 = vmatpush2.msra.mxu0 0.0
    %9586 = vmatprep.subr.mxu0 0.0
    %9587 = vmatpush2.msra.mxu0 0.0
    %9588 = vmatprep.subr.mxu0 0.0
    %9589 = vmatpush2.msra.mxu0 0.0
    %9590 = vmatprep.subr.mxu0 0.0
    %9591 = vmatpush2.msra.mxu0 0.0
    %9592 = vmatprep.subr.mxu0 0.0
    %9593 = vmatpush2.msra.mxu0 0.0
    %9594 = vmatprep.subr.mxu0 0.0
    %9595 = vmatpush2.msra.mxu0 0.0
    %9596 = vmatprep.subr.mxu0 0.0
    %9597 = vmatpush2.msra.mxu0 0.0
    %9598 = vmatprep.subr.mxu0 0.0
    %9599 = vmatpush2.msra.mxu0 0.0
    %9600 = vmatprep.subr.mxu0 0.0
    %9601 = vmatpush2.msra.mxu0 0.0
    %9602 = vmatprep.subr.mxu0 0.0
    %9603 = vmatpush2.msra.mxu0 0.0
    %9604 = vmatprep.subr.mxu0 0.0
    %9605 = vmatpush2.msra.mxu0 0.0
    %9606 = vmatprep.subr.mxu0 0.0
    %9607 = vmatpush2.msra.mxu0 0.0
    %9608 = vmatprep.subr.mxu0 0.0
    %9609 = vmatpush2.msra.mxu0 0.0
    %9610 = vmatprep.mubr.f32.mxu0 0.0
    %9611 = vmatmul.mubr.f32.gmra.mxu0 %v9544
    %v9612 = vpop.f32.mrf.mxu0
    %v9613 = vadd.f32 %v9540, %v9612
    %v9614 = vpop.f32.mrf.mxu0
    %9615 = vdwg.mxu0
    %vm9616 = vcmask 9216
    %9617 = vst.msk [vmem:[#allocation5] sm:$0x3] %vm9616, %v9613
    // Predicated region
    $region38: #{simple_cnn_forward.1} parent=1 // pred_check
      _
    $region39: #{simple_cnn_forward.1} parent=1 // pred_check_branch
      %9619 = sbr.rel (0) target = $region41
    $region40: #{simple_cnn_forward.1} parent=1 // pred_region
      %s9621 = ssub.s32 32, 32
      %9622 = vsyncadd [#allocation6], %s9621
      %s9624 = sshll.u32 [#allocation5], 4
      %s9625 = int_to_ptr.vmem [resolvable:$true] %s9624
      %9627 = dma.vmem_to_hbm [thread:$0]  %s9625, 32, %s9, [#allocation6]
    $region41: #{simple_cnn_forward.1} parent=1 // pred_fallthru
      _
    // Predicated region
    $region42: #{simple_cnn_forward.1} parent=1 // pred_check
      _
    $region43: #{simple_cnn_forward.1} parent=1 // pred_check_branch
      %9629 = sbr.rel (0) target = $region45
    $region44: #{simple_cnn_forward.1} parent=1 // pred_region
      %9630 = dma.done [#allocation6], 32
    $region45: #{simple_cnn_forward.1} parent=1 // pred_fallthru
      _
    %9631 = vsyncpa [#allocation6], 1

</llo_original>
